<compile_context>
chip_gen: v5e
topology: v5e:2x2
jax: 0.10.0
libtpu: 0.0.40
codegen_flags: <defaults>
</compile_context>

<pallas_src>
import jax
import jax.numpy as jnp
from jax import lax
from jax.experimental import pallas as pl
from jax.experimental.pallas import tpu as pltpu


def basicblock_kernel(x_hbm, w1_ref, b1_ref, w2_ref, b2_ref, o_ref,
                      xpad_ref, cat1_ref, cat2_ref, dma_sem):
    # x_hbm   : (N, H, W, C)      full input, left in HBM (memory_space=ANY)
    # w*_ref  : (3, 3C, C)        im2col conv weights (BN scale folded), per dy
    # b*_ref  : (1, C)            BN shift (f32)
    # o_ref   : (1, TH, W, C)     output row strip
    # xpad_ref: (H+4, W, C)       row-padded input plane (VMEM scratch)
    # cat1_ref: (TH+4, W, 3C)     dx-concatenated input rows for conv1
    # cat2_ref: (TH+2, W, 3C)     dx-concatenated conv1 output rows for conv2
    _, TH, W, C = o_ref.shape
    H = xpad_ref.shape[0] - 4
    cdtype = xpad_ref.dtype
    n = pl.program_id(0)
    s = pl.program_id(1)

    # ---- per batch element: DMA the plane from HBM into the padded scratch ---
    @pl.when(s == 0)
    def _():
        # zero only the 2-row top/bottom halo (never touched by the DMA)
        xpad_ref[0:2, :, :] = jnp.zeros((2, W, C), cdtype)
        xpad_ref[H + 2:H + 4, :, :] = jnp.zeros((2, W, C), cdtype)
        cp = pltpu.make_async_copy(x_hbm.at[n],
                                   xpad_ref.at[pl.ds(2, H)],
                                   dma_sem.at[0])
        cp.start()
        cp.wait()

    row0 = pl.multiple_of(s * TH, TH)

    # ---- conv1: build dx-concat (K = 3C), accumulate 3 dy matmuls ------------
    # cat1[t, w, dx*C + c] = xpad[row0 + t, w + dx - 1, c]  (zero column pad)
    xc = xpad_ref[pl.ds(row0, TH + 4), :, :]                      # (TH+4, W, C)
    xf = xc.reshape((TH + 4) * W, C)
    cat1_ref[:, :, C:2 * C] = xc
    cat1_ref[:, :, 0:C] = pltpu.roll(xf, 1, axis=0).reshape(TH + 4, W, C)
    cat1_ref[:, :, 2 * C:3 * C] = pltpu.roll(
        xf, (TH + 4) * W - 1, axis=0).reshape(TH + 4, W, C)
    # zero-fill the image's left / right column padding (also kills roll wrap)
    cat1_ref[:, 0:1, 0:C] = jnp.zeros((TH + 4, 1, C), cdtype)
    cat1_ref[:, W - 1:W, 2 * C:3 * C] = jnp.zeros((TH + 4, 1, C), cdtype)

    p0 = cat1_ref[0:TH + 2, :, :].reshape((TH + 2) * W, 3 * C)
    acc1 = jnp.dot(p0, w1_ref[0], preferred_element_type=jnp.float32)
    for dy in (1, 2):
        p = cat1_ref[dy:dy + TH + 2, :, :].reshape((TH + 2) * W, 3 * C)
        acc1 = acc1 + jnp.dot(p, w1_ref[dy], preferred_element_type=jnp.float32)

    # BN shift + ReLU (scale already folded into w1)
    y3 = jnp.maximum(acc1 + b1_ref[...], 0.0).reshape(TH + 2, W, C).astype(cdtype)

    # ---- conv2: same dx-concat trick on the conv1 output strip ---------------
    yf = y3.reshape((TH + 2) * W, C)
    cat2_ref[:, :, C:2 * C] = y3
    cat2_ref[:, :, 0:C] = pltpu.roll(yf, 1, axis=0).reshape(TH + 2, W, C)
    cat2_ref[:, :, 2 * C:3 * C] = pltpu.roll(
        yf, (TH + 2) * W - 1, axis=0).reshape(TH + 2, W, C)
    cat2_ref[:, 0:1, 0:C] = jnp.zeros((TH + 2, 1, C), cdtype)
    cat2_ref[:, W - 1:W, 2 * C:3 * C] = jnp.zeros((TH + 2, 1, C), cdtype)

    # conv2's zero-row padding at the image top / bottom boundary
    @pl.when(s == 0)
    def _():
        cat2_ref[0:1, :, :] = jnp.zeros((1, W, 3 * C), cdtype)

    @pl.when(s == pl.num_programs(1) - 1)
    def _():
        cat2_ref[TH + 1:TH + 2, :, :] = jnp.zeros((1, W, 3 * C), cdtype)

    q0 = cat2_ref[0:TH, :, :].reshape(TH * W, 3 * C)
    acc2 = jnp.dot(q0, w2_ref[0], preferred_element_type=jnp.float32)
    for dy in (1, 2):
        q = cat2_ref[dy:dy + TH, :, :].reshape(TH * W, 3 * C)
        acc2 = acc2 + jnp.dot(q, w2_ref[dy], preferred_element_type=jnp.float32)

    # ---- BN shift + residual add + ReLU ---------------------------------------
    identity = xpad_ref[pl.ds(row0 + 2, TH), :, :].reshape(TH * W, C)
    z = jnp.maximum(acc2 + b2_ref[...] + identity.astype(jnp.float32), 0.0)
    o_ref[0] = z.reshape(TH, W, C).astype(o_ref.dtype)


def _vmem_bytes(H, W, C, th, itemsize):
    """Rough per-core VMEM footprint of the kernel at strip height `th`."""
    xpad = (H + 4) * W * C * itemsize
    cat1 = (th + 4) * W * 3 * C * itemsize
    cat2 = (th + 2) * W * 3 * C * itemsize
    wts = 2 * 3 * 3 * C * C * itemsize + 2 * C * 4        # single-buffered consts
    outb = 2 * th * W * C * itemsize                       # double-buffered output
    accs = ((th + 2) + th) * W * C * 4                     # f32 matmul accumulators
    tmps = 3 * (th + 4) * W * C * itemsize                 # rolled slabs / relu temp
    return xpad + cat1 + cat2 + wts + outb + accs + tmps


def _pick_tile_h(H, W, C, itemsize, max_rows=2048, vmem_cap=40 << 20):
    """Largest divisor of H whose strip keeps matmul M <= max_rows and fits VMEM."""
    best = 1
    for d in range(1, H + 1):
        if H % d:
            continue
        if d * W <= max_rows and _vmem_bytes(H, W, C, d, itemsize) <= vmem_cap:
            best = d
    return best


def basicblock_pallas(x_nhwc, w1_hwio, g1, beta1, m1, v1,
                      w2_hwio, g2, beta2, m2, v2, eps=1e-5, tile_h=None):
    N, H, W, C = x_nhwc.shape
    dtype = x_nhwc.dtype
    # MXU operands follow the activation dtype: feed bf16 activations in
    # production for full MXU throughput (the f32 path is the exact one).
    cdtype = dtype

    # Inference BN: y = conv(x) * scale + shift; fold scale into the conv's
    # output channels, keep only the shift for the kernel (f32).
    scale1 = g1 / jnp.sqrt(v1 + eps)
    shift1 = (beta1 - m1 * scale1).reshape(1, C).astype(jnp.float32)
    scale2 = g2 / jnp.sqrt(v2 + eps)
    shift2 = (beta2 - m2 * scale2).reshape(1, C).astype(jnp.float32)

    # (3,3,Cin,Cout) -> (3, 3*Cin, Cout): one K=3C matmul per dy, accumulated.
    w1f = (w1_hwio * scale1.reshape(1, 1, 1, C)).reshape(3, 3 * C, C).astype(cdtype)
    w2f = (w2_hwio * scale2.reshape(1, 1, 1, C)).reshape(3, 3 * C, C).astype(cdtype)

    itemsize = x_nhwc.dtype.itemsize
    if tile_h is None:
        tile_h = _pick_tile_h(H, W, C, itemsize)
    assert H % tile_h == 0, "tile_h must divide H"
    n_strips = H // tile_h

    est = _vmem_bytes(H, W, C, tile_h, itemsize)
    vmem_limit = max(24 << 20, min(64 << 20, int(est * 1.4) + (2 << 20)))

    flops = 2 * 2 * N * H * W * 9 * C * C                  # two 3x3 convs, MACs*2
    bytes_accessed = (2 * x_nhwc.size * itemsize
                      + (w1f.size + w2f.size) * itemsize
                      + (shift1.size + shift2.size) * 4)
    cost = pl.CostEstimate(flops=int(flops), transcendentals=0,
                           bytes_accessed=int(bytes_accessed))

    def build(single_buffer_consts):
        const_kw = (dict(pipeline_mode=pl.Buffered(1))
                    if single_buffer_consts else {})
        return pl.pallas_call(
            basicblock_kernel,
            out_shape=jax.ShapeDtypeStruct((N, H, W, C), dtype),
            grid_spec=pltpu.PrefetchScalarGridSpec(
                num_scalar_prefetch=0,
                grid=(N, n_strips),
                in_specs=[
                    # x stays in HBM; the kernel DMAs one plane per batch element
                    pl.BlockSpec(memory_space=pl.ANY),
                    # constants: resident for the whole grid, single-buffered
                    pl.BlockSpec((3, 3 * C, C), lambda nn, ss: (0, 0, 0), **const_kw),
                    pl.BlockSpec((1, C), lambda nn, ss: (0, 0), **const_kw),
                    pl.BlockSpec((3, 3 * C, C), lambda nn, ss: (0, 0, 0), **const_kw),
                    pl.BlockSpec((1, C), lambda nn, ss: (0, 0), **const_kw),
                ],
                out_specs=pl.BlockSpec((1, tile_h, W, C),
                                       lambda nn, ss: (nn, ss, 0, 0)),
                scratch_shapes=[
                    pltpu.VMEM((H + 4, W, C), cdtype),            # padded input plane
                    pltpu.VMEM((tile_h + 4, W, 3 * C), cdtype),   # conv1 dx-concat
                    pltpu.VMEM((tile_h + 2, W, 3 * C), cdtype),   # conv2 dx-concat
                    pltpu.SemaphoreType.DMA((1,)),
                ],
            ),
            compiler_params=pltpu.CompilerParams(
                dimension_semantics=("parallel", "arbitrary"),
                vmem_limit_bytes=vmem_limit),
            cost_estimate=cost,
        )

    args = (x_nhwc, w1f, shift1, w2f, shift2)
    try:
        return build(True)(*args)
    except Exception:
        # Fallback if this jax build rejects Buffered(1): accept double-buffered
        # constants (perf-only difference).
        return build(False)(*args)


def reference_block(x, w1, g1, b1, m1, v1, w2, g2, b2, m2, v2, eps=1e-5):
    y = lax.conv_general_dilated(x, w1, (1, 1), 'SAME',
                                 dimension_numbers=('NHWC', 'HWIO', 'NHWC'))
    y = (y - m1) / jnp.sqrt(v1 + eps) * g1 + b1
    y = jnp.maximum(y, 0.0)
    z = lax.conv_general_dilated(y, w2, (1, 1), 'SAME',
                                 dimension_numbers=('NHWC', 'HWIO', 'NHWC'))
    z = (z - m2) / jnp.sqrt(v2 + eps) * g2 + b2
    return jnp.maximum(z + x, 0.0)


if __name__ == "__main__":
    # Small, module-consistent shapes: C=128 is the backbone's layer2 width and
    # keeps lane accesses 128-aligned.
    N, H, W, C = 2, 16, 8, 128
    eps = 1e-5
    key = jax.random.PRNGKey(0)
    keys = jax.random.split(key, 12)

    x = jax.random.normal(keys[0], (N, H, W, C), jnp.float32)

    # HWIO conv weights (bias=False, as in nn.Conv2d(..., bias=False))
    w1 = jax.random.normal(keys[1], (3, 3, C, C), jnp.float32) * 0.05
    w2 = jax.random.normal(keys[2], (3, 3, C, C), jnp.float32) * 0.05

    # BatchNorm (inference) parameters
    g1 = jax.random.uniform(keys[3], (C,), jnp.float32, 0.5, 1.5)
    b1 = jax.random.normal(keys[4], (C,), jnp.float32) * 0.1
    m1 = jax.random.normal(keys[5], (C,), jnp.float32) * 0.1
    v1 = jax.random.uniform(keys[6], (C,), jnp.float32, 0.5, 1.5)
    g2 = jax.random.uniform(keys[7], (C,), jnp.float32, 0.5, 1.5)
    b2 = jax.random.normal(keys[8], (C,), jnp.float32) * 0.1
    m2 = jax.random.normal(keys[9], (C,), jnp.float32) * 0.1
    v2 = jax.random.uniform(keys[10], (C,), jnp.float32, 0.5, 1.5)

    ref = jax.block_until_ready(
        reference_block(x, w1, g1, b1, m1, v1, w2, g2, b2, m2, v2, eps))

    # default tiling (single strip at this H) ...
    out_a = jax.block_until_ready(
        basicblock_pallas(x, w1, g1, b1, m1, v1, w2, g2, b2, m2, v2, eps=eps))
    # ... and an explicit 2-strip tiling to exercise the strip-halo logic.
    out_b = jax.block_until_ready(
        basicblock_pallas(x, w1, g1, b1, m1, v1, w2, g2, b2, m2, v2, eps=eps,
                          tile_h=8))

    for out in (out_a, out_b):
        assert out.shape == (N, H, W, C)
        max_err = float(jnp.max(jnp.abs(out - ref)))
        assert jnp.allclose(out, ref, rtol=1e-3, atol=1e-3), (
            f"mismatch vs JAX reference (max abs err = {max_err})")
    print("KERNEL_OK")
</pallas_src>

<mosaic_0001>
module attributes {stable_mosaic.version = 11 : i64} {
  func.func @basicblock_kernel(%arg0: i32, %arg1: i32, %arg2: memref<2x16x8x128xf32, #tpu.memory_space<any>>, %arg3: memref<3x384x128xf32, #tpu.memory_space<vmem>>, %arg4: memref<1x128xf32, #tpu.memory_space<vmem>>, %arg5: memref<3x384x128xf32, #tpu.memory_space<vmem>>, %arg6: memref<1x128xf32, #tpu.memory_space<vmem>>, %arg7: memref<1x16x8x128xf32, #tpu.memory_space<vmem>>, %arg8: memref<20x8x128xf32, #tpu.memory_space<vmem>>, %arg9: memref<20x8x384xf32, #tpu.memory_space<vmem>>, %arg10: memref<18x8x384xf32, #tpu.memory_space<vmem>>, %arg11: memref<1x!tpu.dma_semaphore, #tpu.memory_space<semaphore_mem>>) attributes {dimension_semantics = [#tpu.dimension_semantics<parallel>, #tpu.dimension_semantics<arbitrary>], iteration_bounds = array<i64: 2, 1>, scalar_prefetch = 0 : i64, scratch_operands = 4 : i64, tpu.core_type = #tpu.core_type<tc>, window_params = [{}, {pipeline_mode = #tpu.pipeline_mode<synchronous>, transform_indices = @transform_1, window_bounds = array<i64: 3, 384, 128>}, {pipeline_mode = #tpu.pipeline_mode<synchronous>, transform_indices = @transform_2, window_bounds = array<i64: 1, 128>}, {pipeline_mode = #tpu.pipeline_mode<synchronous>, transform_indices = @transform_3, window_bounds = array<i64: 3, 384, 128>}, {pipeline_mode = #tpu.pipeline_mode<synchronous>, transform_indices = @transform_4, window_bounds = array<i64: 1, 128>}, {transform_indices = @transform_5, window_bounds = array<i64: 1, 16, 8, 128>}]} {
    %c0_i32 = arith.constant 0 : i32
    %0 = arith.cmpi eq, %arg1, %c0_i32 : i32
    %1 = arith.extui %0 : i1 to i32
    %c0_i32_0 = arith.constant 0 : i32
    %2 = arith.cmpi ne, %1, %c0_i32_0 : i32
    scf.if %2 {
      %cst_89 = arith.constant 0.000000e+00 : f32
      %91 = vector.broadcast %cst_89 : f32 to vector<2x8x128xf32>
      %c0_90 = arith.constant 0 : index
      %c0_91 = arith.constant 0 : index
      %c0_92 = arith.constant 0 : index
      %92 = vector.load %arg8[%c0_90, %c0_91, %c0_92] : memref<20x8x128xf32, #tpu.memory_space<vmem>>, vector<2x8x128xf32>
      tpu.vector_store %arg8[%c0_90, %c0_91, %c0_92], %91 {strides = array<i32>} : memref<20x8x128xf32, #tpu.memory_space<vmem>>, vector<2x8x128xf32>,
      %cst_93 = arith.constant 0.000000e+00 : f32
      %93 = vector.broadcast %cst_93 : f32 to vector<2x8x128xf32>
      %c18 = arith.constant 18 : index
      %c0_94 = arith.constant 0 : index
      %c0_95 = arith.constant 0 : index
      %94 = vector.load %arg8[%c18, %c0_94, %c0_95] : memref<20x8x128xf32, #tpu.memory_space<vmem>>, vector<2x8x128xf32>
      tpu.vector_store %arg8[%c18, %c0_94, %c0_95], %93 {strides = array<i32>} : memref<20x8x128xf32, #tpu.memory_space<vmem>>, vector<2x8x128xf32>,
      %c0_i32_96 = arith.constant 0 : i32
      %c0_i32_97 = arith.constant 0 : i32
      %c0_i32_98 = arith.constant 0 : i32
      %c0_i32_99 = arith.constant 0 : i32
      %95 = tpu.memref_slice %arg2[%arg0, %c0_i32_97, %c0_i32_98, %c0_i32_99] : memref<2x16x8x128xf32, #tpu.memory_space<any>> -> memref<1x16x8x128xf32, #tpu.memory_space<any>>
      %96 = tpu.memref_squeeze %95 : memref<1x16x8x128xf32, #tpu.memory_space<any>> -> memref<16x8x128xf32, #tpu.memory_space<any>>
      %c2_i32_100 = arith.constant 2 : i32
      %c0_i32_101 = arith.constant 0 : i32
      %c0_i32_102 = arith.constant 0 : i32
      %97 = tpu.memref_slice %arg8[%c2_i32_100, %c0_i32_101, %c0_i32_102] : memref<20x8x128xf32, #tpu.memory_space<vmem>> -> memref<16x8x128xf32, #tpu.memory_space<vmem>>
      %98 = tpu.memref_slice %arg11[%c0_i32_96] : memref<1x!tpu.dma_semaphore, #tpu.memory_space<semaphore_mem>> -> memref<1x!tpu.dma_semaphore, #tpu.memory_space<semaphore_mem>>
      %99 = tpu.memref_squeeze %98 : memref<1x!tpu.dma_semaphore, #tpu.memory_space<semaphore_mem>> -> memref<!tpu.dma_semaphore, #tpu.memory_space<semaphore_mem>>
      tpu.enqueue_dma source(%96 : memref<16x8x128xf32, #tpu.memory_space<any>>) target(%97 : memref<16x8x128xf32, #tpu.memory_space<vmem>>) target_semaphore(%99 : memref<!tpu.dma_semaphore, #tpu.memory_space<semaphore_mem>>)
      %c0_i32_103 = arith.constant 0 : i32
      %c0_i32_104 = arith.constant 0 : i32
      %c0_i32_105 = arith.constant 0 : i32
      %c0_i32_106 = arith.constant 0 : i32
      %100 = tpu.memref_slice %arg2[%arg0, %c0_i32_104, %c0_i32_105, %c0_i32_106] : memref<2x16x8x128xf32, #tpu.memory_space<any>> -> memref<1x16x8x128xf32, #tpu.memory_space<any>>
      %101 = tpu.memref_squeeze %100 : memref<1x16x8x128xf32, #tpu.memory_space<any>> -> memref<16x8x128xf32, #tpu.memory_space<any>>
      %c2_i32_107 = arith.constant 2 : i32
      %c0_i32_108 = arith.constant 0 : i32
      %c0_i32_109 = arith.constant 0 : i32
      %102 = tpu.memref_slice %arg8[%c2_i32_107, %c0_i32_108, %c0_i32_109] : memref<20x8x128xf32, #tpu.memory_space<vmem>> -> memref<16x8x128xf32, #tpu.memory_space<vmem>>
      %103 = tpu.memref_slice %arg11[%c0_i32_103] : memref<1x!tpu.dma_semaphore, #tpu.memory_space<semaphore_mem>> -> memref<1x!tpu.dma_semaphore, #tpu.memory_space<semaphore_mem>>
      %104 = tpu.memref_squeeze %103 : memref<1x!tpu.dma_semaphore, #tpu.memory_space<semaphore_mem>> -> memref<!tpu.dma_semaphore, #tpu.memory_space<semaphore_mem>>
      tpu.wait_dma2 semaphore(%104 : memref<!tpu.dma_semaphore, #tpu.memory_space<semaphore_mem>>) src(%101 : memref<16x8x128xf32, #tpu.memory_space<any>>) dst(%102 : memref<16x8x128xf32, #tpu.memory_space<vmem>>)
    } else {
    }
    %c16_i32 = arith.constant 16 : i32
    %3 = arith.muli %arg1, %c16_i32 : i32
    %4 = tpu.assume_multiple %3, 16 : i32
    %5 = arith.index_cast %4 : i32 to index
    %c0 = arith.constant 0 : index
    %c0_1 = arith.constant 0 : index
    %6 = vector.load %arg8[%5, %c0, %c0_1] : memref<20x8x128xf32, #tpu.memory_space<vmem>>, vector<20x8x128xf32>
    %7 = vector.shape_cast %6 : vector<20x8x128xf32> to vector<160x128xf32>
    %c0_2 = arith.constant 0 : index
    %c0_3 = arith.constant 0 : index
    %c128 = arith.constant 128 : index
    %8 = vector.load %arg9[%c0_2, %c0_3, %c128] : memref<20x8x384xf32, #tpu.memory_space<vmem>>, vector<20x8x128xf32>
    tpu.vector_store %arg9[%c0_2, %c0_3, %c128], %6 {strides = array<i32>} : memref<20x8x384xf32, #tpu.memory_space<vmem>>, vector<20x8x128xf32>,
    %c1_i32 = arith.constant 1 : i32
    %9 = tpu.dynamic_rotate %7 by %c1_i32 dim 0 : vector<160x128xf32>, i32 -> vector<160x128xf32>
    %10 = vector.shape_cast %9 : vector<160x128xf32> to vector<20x8x128xf32>
    %c0_4 = arith.constant 0 : index
    %c0_5 = arith.constant 0 : index
    %c0_6 = arith.constant 0 : index
    %11 = vector.load %arg9[%c0_4, %c0_5, %c0_6] : memref<20x8x384xf32, #tpu.memory_space<vmem>>, vector<20x8x128xf32>
    tpu.vector_store %arg9[%c0_4, %c0_5, %c0_6], %10 {strides = array<i32>} : memref<20x8x384xf32, #tpu.memory_space<vmem>>, vector<20x8x128xf32>,
    %c159_i32 = arith.constant 159 : i32
    %12 = tpu.dynamic_rotate %7 by %c159_i32 dim 0 : vector<160x128xf32>, i32 -> vector<160x128xf32>
    %13 = vector.shape_cast %12 : vector<160x128xf32> to vector<20x8x128xf32>
    %c0_7 = arith.constant 0 : index
    %c0_8 = arith.constant 0 : index
    %c256 = arith.constant 256 : index
    %14 = vector.load %arg9[%c0_7, %c0_8, %c256] : memref<20x8x384xf32, #tpu.memory_space<vmem>>, vector<20x8x128xf32>
    tpu.vector_store %arg9[%c0_7, %c0_8, %c256], %13 {strides = array<i32>} : memref<20x8x384xf32, #tpu.memory_space<vmem>>, vector<20x8x128xf32>,
    %cst = arith.constant 0.000000e+00 : f32
    %15 = vector.broadcast %cst : f32 to vector<20x1x128xf32>
    %c0_9 = arith.constant 0 : index
    %c0_10 = arith.constant 0 : index
    %c0_11 = arith.constant 0 : index
    %16 = vector.load %arg9[%c0_9, %c0_10, %c0_11] : memref<20x8x384xf32, #tpu.memory_space<vmem>>, vector<20x1x128xf32>
    tpu.vector_store %arg9[%c0_9, %c0_10, %c0_11], %15 {strides = array<i32>} : memref<20x8x384xf32, #tpu.memory_space<vmem>>, vector<20x1x128xf32>,
    %cst_12 = arith.constant 0.000000e+00 : f32
    %17 = vector.broadcast %cst_12 : f32 to vector<20x1x128xf32>
    %c0_13 = arith.constant 0 : index
    %c7 = arith.constant 7 : index
    %c256_14 = arith.constant 256 : index
    %18 = vector.load %arg9[%c0_13, %c7, %c256_14] : memref<20x8x384xf32, #tpu.memory_space<vmem>>, vector<20x1x128xf32>
    tpu.vector_store %arg9[%c0_13, %c7, %c256_14], %17 {strides = array<i32>} : memref<20x8x384xf32, #tpu.memory_space<vmem>>, vector<20x1x128xf32>,
    %c0_15 = arith.constant 0 : index
    %c0_16 = arith.constant 0 : index
    %c0_17 = arith.constant 0 : index
    %19 = vector.load %arg9[%c0_15, %c0_16, %c0_17] : memref<20x8x384xf32, #tpu.memory_space<vmem>>, vector<18x8x384xf32>
    %20 = vector.shape_cast %19 : vector<18x8x384xf32> to vector<144x384xf32>
    %c0_18 = arith.constant 0 : index
    %c0_19 = arith.constant 0 : index
    %c0_20 = arith.constant 0 : index
    %21 = vector.load %arg3[%c0_18, %c0_19, %c0_20] : memref<3x384x128xf32, #tpu.memory_space<vmem>>, vector<1x384x128xf32>
    %22 = vector.shape_cast %21 : vector<1x384x128xf32> to vector<384x128xf32>
    %cst_21 = arith.constant dense<0.000000e+00> : vector<144x128xf32>
    %23 = tpu.matmul %20, %22, %cst_21 {dimension_numbers = #tpu.dot_dimension_numbers<[1], [0], [0], [1], [0, 0, 1, 1], [], []>} : vector<144x384xf32>, vector<384x128xf32>, vector<144x128xf32> -> vector<144x128xf32>
    %c1 = arith.constant 1 : index
    %c0_22 = arith.constant 0 : index
    %c0_23 = arith.constant 0 : index
    %24 = vector.load %arg9[%c1, %c0_22, %c0_23] : memref<20x8x384xf32, #tpu.memory_space<vmem>>, vector<18x8x384xf32>
    %25 = vector.shape_cast %24 : vector<18x8x384xf32> to vector<144x384xf32>
    %c1_24 = arith.constant 1 : index
    %c0_25 = arith.constant 0 : index
    %c0_26 = arith.constant 0 : index
    %26 = vector.load %arg3[%c1_24, %c0_25, %c0_26] : memref<3x384x128xf32, #tpu.memory_space<vmem>>, vector<1x384x128xf32>
    %27 = vector.shape_cast %26 : vector<1x384x128xf32> to vector<384x128xf32>
    %cst_27 = arith.constant dense<0.000000e+00> : vector<144x128xf32>
    %28 = tpu.matmul %25, %27, %cst_27 {dimension_numbers = #tpu.dot_dimension_numbers<[1], [0], [0], [1], [0, 0, 1, 1], [], []>} : vector<144x384xf32>, vector<384x128xf32>, vector<144x128xf32> -> vector<144x128xf32>
    %29 = arith.addf %23, %28 : vector<144x128xf32>
    %c2 = arith.constant 2 : index
    %c0_28 = arith.constant 0 : index
    %c0_29 = arith.constant 0 : index
    %30 = vector.load %arg9[%c2, %c0_28, %c0_29] : memref<20x8x384xf32, #tpu.memory_space<vmem>>, vector<18x8x384xf32>
    %31 = vector.shape_cast %30 : vector<18x8x384xf32> to vector<144x384xf32>
    %c2_30 = arith.constant 2 : index
    %c0_31 = arith.constant 0 : index
    %c0_32 = arith.constant 0 : index
    %32 = vector.load %arg3[%c2_30, %c0_31, %c0_32] : memref<3x384x128xf32, #tpu.memory_space<vmem>>, vector<1x384x128xf32>
    %33 = vector.shape_cast %32 : vector<1x384x128xf32> to vector<384x128xf32>
    %cst_33 = arith.constant dense<0.000000e+00> : vector<144x128xf32>
    %34 = tpu.matmul %31, %33, %cst_33 {dimension_numbers = #tpu.dot_dimension_numbers<[1], [0], [0], [1], [0, 0, 1, 1], [], []>} : vector<144x384xf32>, vector<384x128xf32>, vector<144x128xf32> -> vector<144x128xf32>
    %35 = arith.addf %29, %34 : vector<144x128xf32>
    %c0_34 = arith.constant 0 : index
    %c0_35 = arith.constant 0 : index
    %36 = vector.load %arg4[%c0_34, %c0_35] : memref<1x128xf32, #tpu.memory_space<vmem>>, vector<1x128xf32>
    %37 = vector.broadcast %36 : vector<1x128xf32> to vector<144x128xf32>
    %38 = arith.addf %35, %37 : vector<144x128xf32>
    %cst_36 = arith.constant 0.000000e+00 : f32
    %39 = vector.broadcast %cst_36 : f32 to vector<144x128xf32>
    %40 = arith.maximumf %38, %39 : vector<144x128xf32>
    %41 = vector.shape_cast %40 : vector<144x128xf32> to vector<18x8x128xf32>
    %42 = vector.shape_cast %41 : vector<18x8x128xf32> to vector<144x128xf32>
    %c0_37 = arith.constant 0 : index
    %c0_38 = arith.constant 0 : index
    %c128_39 = arith.constant 128 : index
    %43 = vector.load %arg10[%c0_37, %c0_38, %c128_39] : memref<18x8x384xf32, #tpu.memory_space<vmem>>, vector<18x8x128xf32>
    tpu.vector_store %arg10[%c0_37, %c0_38, %c128_39], %41 {strides = array<i32>} : memref<18x8x384xf32, #tpu.memory_space<vmem>>, vector<18x8x128xf32>,
    %c1_i32_40 = arith.constant 1 : i32
    %44 = tpu.dynamic_rotate %42 by %c1_i32_40 dim 0 : vector<144x128xf32>, i32 -> vector<144x128xf32>
    %45 = vector.shape_cast %44 : vector<144x128xf32> to vector<18x8x128xf32>
    %c0_41 = arith.constant 0 : index
    %c0_42 = arith.constant 0 : index
    %c0_43 = arith.constant 0 : index
    %46 = vector.load %arg10[%c0_41, %c0_42, %c0_43] : memref<18x8x384xf32, #tpu.memory_space<vmem>>, vector<18x8x128xf32>
    tpu.vector_store %arg10[%c0_41, %c0_42, %c0_43], %45 {strides = array<i32>} : memref<18x8x384xf32, #tpu.memory_space<vmem>>, vector<18x8x128xf32>,
    %c143_i32 = arith.constant 143 : i32
    %47 = tpu.dynamic_rotate %42 by %c143_i32 dim 0 : vector<144x128xf32>, i32 -> vector<144x128xf32>
    %48 = vector.shape_cast %47 : vector<144x128xf32> to vector<18x8x128xf32>
    %c0_44 = arith.constant 0 : index
    %c0_45 = arith.constant 0 : index
    %c256_46 = arith.constant 256 : index
    %49 = vector.load %arg10[%c0_44, %c0_45, %c256_46] : memref<18x8x384xf32, #tpu.memory_space<vmem>>, vector<18x8x128xf32>
    tpu.vector_store %arg10[%c0_44, %c0_45, %c256_46], %48 {strides = array<i32>} : memref<18x8x384xf32, #tpu.memory_space<vmem>>, vector<18x8x128xf32>,
    %cst_47 = arith.constant 0.000000e+00 : f32
    %50 = vector.broadcast %cst_47 : f32 to vector<18x1x128xf32>
    %c0_48 = arith.constant 0 : index
    %c0_49 = arith.constant 0 : index
    %c0_50 = arith.constant 0 : index
    %51 = vector.load %arg10[%c0_48, %c0_49, %c0_50] : memref<18x8x384xf32, #tpu.memory_space<vmem>>, vector<18x1x128xf32>
    tpu.vector_store %arg10[%c0_48, %c0_49, %c0_50], %50 {strides = array<i32>} : memref<18x8x384xf32, #tpu.memory_space<vmem>>, vector<18x1x128xf32>,
    %cst_51 = arith.constant 0.000000e+00 : f32
    %52 = vector.broadcast %cst_51 : f32 to vector<18x1x128xf32>
    %c0_52 = arith.constant 0 : index
    %c7_53 = arith.constant 7 : index
    %c256_54 = arith.constant 256 : index
    %53 = vector.load %arg10[%c0_52, %c7_53, %c256_54] : memref<18x8x384xf32, #tpu.memory_space<vmem>>, vector<18x1x128xf32>
    tpu.vector_store %arg10[%c0_52, %c7_53, %c256_54], %52 {strides = array<i32>} : memref<18x8x384xf32, #tpu.memory_space<vmem>>, vector<18x1x128xf32>,
    %c0_i32_55 = arith.constant 0 : i32
    %54 = arith.cmpi eq, %arg1, %c0_i32_55 : i32
    %55 = arith.extui %54 : i1 to i32
    %c0_i32_56 = arith.constant 0 : i32
    %56 = arith.cmpi ne, %55, %c0_i32_56 : i32
    scf.if %56 {
      %cst_89 = arith.constant 0.000000e+00 : f32
      %91 = vector.broadcast %cst_89 : f32 to vector<1x8x384xf32>
      %c0_90 = arith.constant 0 : index
      %c0_91 = arith.constant 0 : index
      %c0_92 = arith.constant 0 : index
      %92 = vector.load %arg10[%c0_90, %c0_91, %c0_92] : memref<18x8x384xf32, #tpu.memory_space<vmem>>, vector<1x8x384xf32>
      tpu.vector_store %arg10[%c0_90, %c0_91, %c0_92], %91 {strides = array<i32>} : memref<18x8x384xf32, #tpu.memory_space<vmem>>, vector<1x8x384xf32>,
    } else {
    }
    %c0_i32_57 = arith.constant 0 : i32
    %57 = arith.cmpi eq, %arg1, %c0_i32_57 : i32
    %58 = arith.extui %57 : i1 to i32
    %c0_i32_58 = arith.constant 0 : i32
    %59 = arith.cmpi ne, %58, %c0_i32_58 : i32
    scf.if %59 {
      %cst_89 = arith.constant 0.000000e+00 : f32
      %91 = vector.broadcast %cst_89 : f32 to vector<1x8x384xf32>
      %c17 = arith.constant 17 : index
      %c0_90 = arith.constant 0 : index
      %c0_91 = arith.constant 0 : index
      %92 = vector.load %arg10[%c17, %c0_90, %c0_91] : memref<18x8x384xf32, #tpu.memory_space<vmem>>, vector<1x8x384xf32>
      tpu.vector_store %arg10[%c17, %c0_90, %c0_91], %91 {strides = array<i32>} : memref<18x8x384xf32, #tpu.memory_space<vmem>>, vector<1x8x384xf32>,
    } else {
    }
    %c0_59 = arith.constant 0 : index
    %c0_60 = arith.constant 0 : index
    %c0_61 = arith.constant 0 : index
    %60 = vector.load %arg10[%c0_59, %c0_60, %c0_61] : memref<18x8x384xf32, #tpu.memory_space<vmem>>, vector<16x8x384xf32>
    %61 = vector.shape_cast %60 : vector<16x8x384xf32> to vector<128x384xf32>
    %c0_62 = arith.constant 0 : index
    %c0_63 = arith.constant 0 : index
    %c0_64 = arith.constant 0 : index
    %62 = vector.load %arg5[%c0_62, %c0_63, %c0_64] : memref<3x384x128xf32, #tpu.memory_space<vmem>>, vector<1x384x128xf32>
    %63 = vector.shape_cast %62 : vector<1x384x128xf32> to vector<384x128xf32>
    %cst_65 = arith.constant dense<0.000000e+00> : vector<128x128xf32>
    %64 = tpu.matmul %61, %63, %cst_65 {dimension_numbers = #tpu.dot_dimension_numbers<[1], [0], [0], [1], [0, 0, 1, 1], [], []>} : vector<128x384xf32>, vector<384x128xf32>, vector<128x128xf32> -> vector<128x128xf32>
    %c1_66 = arith.constant 1 : index
    %c0_67 = arith.constant 0 : index
    %c0_68 = arith.constant 0 : index
    %65 = vector.load %arg10[%c1_66, %c0_67, %c0_68] : memref<18x8x384xf32, #tpu.memory_space<vmem>>, vector<16x8x384xf32>
    %66 = vector.shape_cast %65 : vector<16x8x384xf32> to vector<128x384xf32>
    %c1_69 = arith.constant 1 : index
    %c0_70 = arith.constant 0 : index
    %c0_71 = arith.constant 0 : index
    %67 = vector.load %arg5[%c1_69, %c0_70, %c0_71] : memref<3x384x128xf32, #tpu.memory_space<vmem>>, vector<1x384x128xf32>
    %68 = vector.shape_cast %67 : vector<1x384x128xf32> to vector<384x128xf32>
    %cst_72 = arith.constant dense<0.000000e+00> : vector<128x128xf32>
    %69 = tpu.matmul %66, %68, %cst_72 {dimension_numbers = #tpu.dot_dimension_numbers<[1], [0], [0], [1], [0, 0, 1, 1], [], []>} : vector<128x384xf32>, vector<384x128xf32>, vector<128x128xf32> -> vector<128x128xf32>
    %70 = arith.addf %64, %69 : vector<128x128xf32>
    %c2_73 = arith.constant 2 : index
    %c0_74 = arith.constant 0 : index
    %c0_75 = arith.constant 0 : index
    %71 = vector.load %arg10[%c2_73, %c0_74, %c0_75] : memref<18x8x384xf32, #tpu.memory_space<vmem>>, vector<16x8x384xf32>
    %72 = vector.shape_cast %71 : vector<16x8x384xf32> to vector<128x384xf32>
    %c2_76 = arith.constant 2 : index
    %c0_77 = arith.constant 0 : index
    %c0_78 = arith.constant 0 : index
    %73 = vector.load %arg5[%c2_76, %c0_77, %c0_78] : memref<3x384x128xf32, #tpu.memory_space<vmem>>, vector<1x384x128xf32>
    %74 = vector.shape_cast %73 : vector<1x384x128xf32> to vector<384x128xf32>
    %cst_79 = arith.constant dense<0.000000e+00> : vector<128x128xf32>
    %75 = tpu.matmul %72, %74, %cst_79 {dimension_numbers = #tpu.dot_dimension_numbers<[1], [0], [0], [1], [0, 0, 1, 1], [], []>} : vector<128x384xf32>, vector<384x128xf32>, vector<128x128xf32> -> vector<128x128xf32>
    %76 = arith.addf %70, %75 : vector<128x128xf32>
    %c2_i32 = arith.constant 2 : i32
    %77 = arith.addi %4, %c2_i32 : i32
    %78 = arith.index_cast %77 : i32 to index
    %c0_80 = arith.constant 0 : index
    %c0_81 = arith.constant 0 : index
    %79 = vector.load %arg8[%78, %c0_80, %c0_81] : memref<20x8x128xf32, #tpu.memory_space<vmem>>, vector<16x8x128xf32>
    %80 = vector.shape_cast %79 : vector<16x8x128xf32> to vector<128x128xf32>
    %c0_82 = arith.constant 0 : index
    %c0_83 = arith.constant 0 : index
    %81 = vector.load %arg6[%c0_82, %c0_83] : memref<1x128xf32, #tpu.memory_space<vmem>>, vector<1x128xf32>
    %82 = vector.broadcast %81 : vector<1x128xf32> to vector<128x128xf32>
    %83 = arith.addf %76, %82 : vector<128x128xf32>
    %84 = arith.addf %83, %80 : vector<128x128xf32>
    %cst_84 = arith.constant 0.000000e+00 : f32
    %85 = vector.broadcast %cst_84 : f32 to vector<128x128xf32>
    %86 = arith.maximumf %84, %85 : vector<128x128xf32>
    %87 = vector.shape_cast %86 : vector<128x128xf32> to vector<16x8x128xf32>
    %c0_85 = arith.constant 0 : index
    %c0_86 = arith.constant 0 : index
    %c0_87 = arith.constant 0 : index
    %c0_88 = arith.constant 0 : index
    %88 = vector.load %arg7[%c0_85, %c0_86, %c0_87, %c0_88] : memref<1x16x8x128xf32, #tpu.memory_space<vmem>>, vector<1x16x8x128xf32>
    %89 = vector.shape_cast %88 : vector<1x16x8x128xf32> to vector<16x8x128xf32>
    %90 = vector.shape_cast %87 : vector<16x8x128xf32> to vector<1x16x8x128xf32>
    tpu.vector_store %arg7[%c0_85, %c0_86, %c0_87, %c0_88], %90 {strides = array<i32>} : memref<1x16x8x128xf32, #tpu.memory_space<vmem>>, vector<1x16x8x128xf32>,
    return
  }
  func.func @transform_1(%arg0: i32, %arg1: i32) -> (i32, i32, i32) {
    %c0_i32 = arith.constant 0 : i32
    %c0_i32_0 = arith.constant 0 : i32
    %c0_i32_1 = arith.constant 0 : i32
    %c0_i32_2 = arith.constant 0 : i32
    return %c0_i32, %c0_i32_0, %c0_i32_1 : i32, i32, i32
  }
  func.func @transform_2(%arg0: i32, %arg1: i32) -> (i32, i32) {
    %c0_i32 = arith.constant 0 : i32
    %c0_i32_0 = arith.constant 0 : i32
    %c0_i32_1 = arith.constant 0 : i32
    return %c0_i32, %c0_i32_0 : i32, i32
  }
  func.func @transform_3(%arg0: i32, %arg1: i32) -> (i32, i32, i32) {
    %c0_i32 = arith.constant 0 : i32
    %c0_i32_0 = arith.constant 0 : i32
    %c0_i32_1 = arith.constant 0 : i32
    %c0_i32_2 = arith.constant 0 : i32
    return %c0_i32, %c0_i32_0, %c0_i32_1 : i32, i32, i32
  }
  func.func @transform_4(%arg0: i32, %arg1: i32) -> (i32, i32) {
    %c0_i32 = arith.constant 0 : i32
    %c0_i32_0 = arith.constant 0 : i32
    %c0_i32_1 = arith.constant 0 : i32
    return %c0_i32, %c0_i32_0 : i32, i32
  }
  func.func @transform_5(%arg0: i32, %arg1: i32) -> (i32, i32, i32, i32) {
    %c0_i32 = arith.constant 0 : i32
    %c0_i32_0 = arith.constant 0 : i32
    %c0_i32_1 = arith.constant 0 : i32
    return %arg0, %arg1, %c0_i32, %c0_i32_0 : i32, i32, i32, i32
  }
}

module attributes {stable_mosaic.version = 11 : i64} {
  func.func @basicblock_kernel(%arg0: i32, %arg1: i32, %arg2: memref<2x16x8x128xf32, #tpu.memory_space<any>>, %arg3: memref<3x384x128xf32, #tpu.memory_space<vmem>>, %arg4: memref<1x128xf32, #tpu.memory_space<vmem>>, %arg5: memref<3x384x128xf32, #tpu.memory_space<vmem>>, %arg6: memref<1x128xf32, #tpu.memory_space<vmem>>, %arg7: memref<1x16x8x128xf32, #tpu.memory_space<vmem>>, %arg8: memref<20x8x128xf32, #tpu.memory_space<vmem>>, %arg9: memref<20x8x384xf32, #tpu.memory_space<vmem>>, %arg10: memref<18x8x384xf32, #tpu.memory_space<vmem>>, %arg11: memref<1x!tpu.dma_semaphore, #tpu.memory_space<semaphore_mem>>) attributes {dimension_semantics = [#tpu.dimension_semantics<parallel>, #tpu.dimension_semantics<arbitrary>], iteration_bounds = array<i64: 2, 1>, scalar_prefetch = 0 : i64, scratch_operands = 4 : i64, tpu.core_type = #tpu.core_type<tc>, window_params = [{}, {pipeline_mode = #tpu.pipeline_mode<synchronous>, transform_indices = @transform_1, window_bounds = array<i64: 3, 384, 128>}, {pipeline_mode = #tpu.pipeline_mode<synchronous>, transform_indices = @transform_2, window_bounds = array<i64: 1, 128>}, {pipeline_mode = #tpu.pipeline_mode<synchronous>, transform_indices = @transform_3, window_bounds = array<i64: 3, 384, 128>}, {pipeline_mode = #tpu.pipeline_mode<synchronous>, transform_indices = @transform_4, window_bounds = array<i64: 1, 128>}, {transform_indices = @transform_5, window_bounds = array<i64: 1, 16, 8, 128>}]} {
    %c0_i32 = arith.constant 0 : i32
    %0 = arith.cmpi eq, %arg1, %c0_i32 : i32
    %1 = arith.extui %0 : i1 to i32
    %c0_i32_0 = arith.constant 0 : i32
    %2 = arith.cmpi ne, %1, %c0_i32_0 : i32
    scf.if %2 {
      %cst_89 = arith.constant 0.000000e+00 : f32
      %91 = vector.broadcast %cst_89 : f32 to vector<2x8x128xf32>
      %c0_90 = arith.constant 0 : index
      %c0_91 = arith.constant 0 : index
      %c0_92 = arith.constant 0 : index
      %92 = vector.load %arg8[%c0_90, %c0_91, %c0_92] : memref<20x8x128xf32, #tpu.memory_space<vmem>>, vector<2x8x128xf32>
      tpu.vector_store %arg8[%c0_90, %c0_91, %c0_92], %91 {strides = array<i32>} : memref<20x8x128xf32, #tpu.memory_space<vmem>>, vector<2x8x128xf32>,
      %cst_93 = arith.constant 0.000000e+00 : f32
      %93 = vector.broadcast %cst_93 : f32 to vector<2x8x128xf32>
      %c18 = arith.constant 18 : index
      %c0_94 = arith.constant 0 : index
      %c0_95 = arith.constant 0 : index
      %94 = vector.load %arg8[%c18, %c0_94, %c0_95] : memref<20x8x128xf32, #tpu.memory_space<vmem>>, vector<2x8x128xf32>
      tpu.vector_store %arg8[%c18, %c0_94, %c0_95], %93 {strides = array<i32>} : memref<20x8x128xf32, #tpu.memory_space<vmem>>, vector<2x8x128xf32>,
      %c0_i32_96 = arith.constant 0 : i32
      %c0_i32_97 = arith.constant 0 : i32
      %c0_i32_98 = arith.constant 0 : i32
      %c0_i32_99 = arith.constant 0 : i32
      %95 = tpu.memref_slice %arg2[%arg0, %c0_i32_97, %c0_i32_98, %c0_i32_99] : memref<2x16x8x128xf32, #tpu.memory_space<any>> -> memref<1x16x8x128xf32, #tpu.memory_space<any>>
      %96 = tpu.memref_squeeze %95 : memref<1x16x8x128xf32, #tpu.memory_space<any>> -> memref<16x8x128xf32, #tpu.memory_space<any>>
      %c2_i32_100 = arith.constant 2 : i32
      %c0_i32_101 = arith.constant 0 : i32
      %c0_i32_102 = arith.constant 0 : i32
      %97 = tpu.memref_slice %arg8[%c2_i32_100, %c0_i32_101, %c0_i32_102] : memref<20x8x128xf32, #tpu.memory_space<vmem>> -> memref<16x8x128xf32, #tpu.memory_space<vmem>>
      %98 = tpu.memref_slice %arg11[%c0_i32_96] : memref<1x!tpu.dma_semaphore, #tpu.memory_space<semaphore_mem>> -> memref<1x!tpu.dma_semaphore, #tpu.memory_space<semaphore_mem>>
      %99 = tpu.memref_squeeze %98 : memref<1x!tpu.dma_semaphore, #tpu.memory_space<semaphore_mem>> -> memref<!tpu.dma_semaphore, #tpu.memory_space<semaphore_mem>>
      tpu.enqueue_dma source(%96 : memref<16x8x128xf32, #tpu.memory_space<any>>) target(%97 : memref<16x8x128xf32, #tpu.memory_space<vmem>>) target_semaphore(%99 : memref<!tpu.dma_semaphore, #tpu.memory_space<semaphore_mem>>)
      %c0_i32_103 = arith.constant 0 : i32
      %c0_i32_104 = arith.constant 0 : i32
      %c0_i32_105 = arith.constant 0 : i32
      %c0_i32_106 = arith.constant 0 : i32
      %100 = tpu.memref_slice %arg2[%arg0, %c0_i32_104, %c0_i32_105, %c0_i32_106] : memref<2x16x8x128xf32, #tpu.memory_space<any>> -> memref<1x16x8x128xf32, #tpu.memory_space<any>>
      %101 = tpu.memref_squeeze %100 : memref<1x16x8x128xf32, #tpu.memory_space<any>> -> memref<16x8x128xf32, #tpu.memory_space<any>>
      %c2_i32_107 = arith.constant 2 : i32
      %c0_i32_108 = arith.constant 0 : i32
      %c0_i32_109 = arith.constant 0 : i32
      %102 = tpu.memref_slice %arg8[%c2_i32_107, %c0_i32_108, %c0_i32_109] : memref<20x8x128xf32, #tpu.memory_space<vmem>> -> memref<16x8x128xf32, #tpu.memory_space<vmem>>
      %103 = tpu.memref_slice %arg11[%c0_i32_103] : memref<1x!tpu.dma_semaphore, #tpu.memory_space<semaphore_mem>> -> memref<1x!tpu.dma_semaphore, #tpu.memory_space<semaphore_mem>>
      %104 = tpu.memref_squeeze %103 : memref<1x!tpu.dma_semaphore, #tpu.memory_space<semaphore_mem>> -> memref<!tpu.dma_semaphore, #tpu.memory_space<semaphore_mem>>
      tpu.wait_dma2 semaphore(%104 : memref<!tpu.dma_semaphore, #tpu.memory_space<semaphore_mem>>) src(%101 : memref<16x8x128xf32, #tpu.memory_space<any>>) dst(%102 : memref<16x8x128xf32, #tpu.memory_space<vmem>>)
    } else {
    }
    %c16_i32 = arith.constant 16 : i32
    %3 = arith.muli %arg1, %c16_i32 : i32
    %4 = tpu.assume_multiple %3, 16 : i32
    %5 = arith.index_cast %4 : i32 to index
    %c0 = arith.constant 0 : index
    %c0_1 = arith.constant 0 : index
    %6 = vector.load %arg8[%5, %c0, %c0_1] : memref<20x8x128xf32, #tpu.memory_space<vmem>>, vector<20x8x128xf32>
    %7 = vector.shape_cast %6 : vector<20x8x128xf32> to vector<160x128xf32>
    %c0_2 = arith.constant 0 : index
    %c0_3 = arith.constant 0 : index
    %c128 = arith.constant 128 : index
    %8 = vector.load %arg9[%c0_2, %c0_3, %c128] : memref<20x8x384xf32, #tpu.memory_space<vmem>>, vector<20x8x128xf32>
    tpu.vector_store %arg9[%c0_2, %c0_3, %c128], %6 {strides = array<i32>} : memref<20x8x384xf32, #tpu.memory_space<vmem>>, vector<20x8x128xf32>,
    %c1_i32 = arith.constant 1 : i32
    %9 = tpu.dynamic_rotate %7 by %c1_i32 dim 0 : vector<160x128xf32>, i32 -> vector<160x128xf32>
    %10 = vector.shape_cast %9 : vector<160x128xf32> to vector<20x8x128xf32>
    %c0_4 = arith.constant 0 : index
    %c0_5 = arith.constant 0 : index
    %c0_6 = arith.constant 0 : index
    %11 = vector.load %arg9[%c0_4, %c0_5, %c0_6] : memref<20x8x384xf32, #tpu.memory_space<vmem>>, vector<20x8x128xf32>
    tpu.vector_store %arg9[%c0_4, %c0_5, %c0_6], %10 {strides = array<i32>} : memref<20x8x384xf32, #tpu.memory_space<vmem>>, vector<20x8x128xf32>,
    %c159_i32 = arith.constant 159 : i32
    %12 = tpu.dynamic_rotate %7 by %c159_i32 dim 0 : vector<160x128xf32>, i32 -> vector<160x128xf32>
    %13 = vector.shape_cast %12 : vector<160x128xf32> to vector<20x8x128xf32>
    %c0_7 = arith.constant 0 : index
    %c0_8 = arith.constant 0 : index
    %c256 = arith.constant 256 : index
    %14 = vector.load %arg9[%c0_7, %c0_8, %c256] : memref<20x8x384xf32, #tpu.memory_space<vmem>>, vector<20x8x128xf32>
    tpu.vector_store %arg9[%c0_7, %c0_8, %c256], %13 {strides = array<i32>} : memref<20x8x384xf32, #tpu.memory_space<vmem>>, vector<20x8x128xf32>,
    %cst = arith.constant 0.000000e+00 : f32
    %15 = vector.broadcast %cst : f32 to vector<20x1x128xf32>
    %c0_9 = arith.constant 0 : index
    %c0_10 = arith.constant 0 : index
    %c0_11 = arith.constant 0 : index
    %16 = vector.load %arg9[%c0_9, %c0_10, %c0_11] : memref<20x8x384xf32, #tpu.memory_space<vmem>>, vector<20x1x128xf32>
    tpu.vector_store %arg9[%c0_9, %c0_10, %c0_11], %15 {strides = array<i32>} : memref<20x8x384xf32, #tpu.memory_space<vmem>>, vector<20x1x128xf32>,
    %cst_12 = arith.constant 0.000000e+00 : f32
    %17 = vector.broadcast %cst_12 : f32 to vector<20x1x128xf32>
    %c0_13 = arith.constant 0 : index
    %c7 = arith.constant 7 : index
    %c256_14 = arith.constant 256 : index
    %18 = vector.load %arg9[%c0_13, %c7, %c256_14] : memref<20x8x384xf32, #tpu.memory_space<vmem>>, vector<20x1x128xf32>
    tpu.vector_store %arg9[%c0_13, %c7, %c256_14], %17 {strides = array<i32>} : memref<20x8x384xf32, #tpu.memory_space<vmem>>, vector<20x1x128xf32>,
    %c0_15 = arith.constant 0 : index
    %c0_16 = arith.constant 0 : index
    %c0_17 = arith.constant 0 : index
    %19 = vector.load %arg9[%c0_15, %c0_16, %c0_17] : memref<20x8x384xf32, #tpu.memory_space<vmem>>, vector<18x8x384xf32>
    %20 = vector.shape_cast %19 : vector<18x8x384xf32> to vector<144x384xf32>
    %c0_18 = arith.constant 0 : index
    %c0_19 = arith.constant 0 : index
    %c0_20 = arith.constant 0 : index
    %21 = vector.load %arg3[%c0_18, %c0_19, %c0_20] : memref<3x384x128xf32, #tpu.memory_space<vmem>>, vector<1x384x128xf32>
    %22 = vector.shape_cast %21 : vector<1x384x128xf32> to vector<384x128xf32>
    %cst_21 = arith.constant dense<0.000000e+00> : vector<144x128xf32>
    %23 = tpu.matmul %20, %22, %cst_21 {dimension_numbers = #tpu.dot_dimension_numbers<[1], [0], [0], [1], [0, 0, 1, 1], [], []>} : vector<144x384xf32>, vector<384x128xf32>, vector<144x128xf32> -> vector<144x128xf32>
    %c1 = arith.constant 1 : index
    %c0_22 = arith.constant 0 : index
    %c0_23 = arith.constant 0 : index
    %24 = vector.load %arg9[%c1, %c0_22, %c0_23] : memref<20x8x384xf32, #tpu.memory_space<vmem>>, vector<18x8x384xf32>
    %25 = vector.shape_cast %24 : vector<18x8x384xf32> to vector<144x384xf32>
    %c1_24 = arith.constant 1 : index
    %c0_25 = arith.constant 0 : index
    %c0_26 = arith.constant 0 : index
    %26 = vector.load %arg3[%c1_24, %c0_25, %c0_26] : memref<3x384x128xf32, #tpu.memory_space<vmem>>, vector<1x384x128xf32>
    %27 = vector.shape_cast %26 : vector<1x384x128xf32> to vector<384x128xf32>
    %cst_27 = arith.constant dense<0.000000e+00> : vector<144x128xf32>
    %28 = tpu.matmul %25, %27, %cst_27 {dimension_numbers = #tpu.dot_dimension_numbers<[1], [0], [0], [1], [0, 0, 1, 1], [], []>} : vector<144x384xf32>, vector<384x128xf32>, vector<144x128xf32> -> vector<144x128xf32>
    %29 = arith.addf %23, %28 : vector<144x128xf32>
    %c2 = arith.constant 2 : index
    %c0_28 = arith.constant 0 : index
    %c0_29 = arith.constant 0 : index
    %30 = vector.load %arg9[%c2, %c0_28, %c0_29] : memref<20x8x384xf32, #tpu.memory_space<vmem>>, vector<18x8x384xf32>
    %31 = vector.shape_cast %30 : vector<18x8x384xf32> to vector<144x384xf32>
    %c2_30 = arith.constant 2 : index
    %c0_31 = arith.constant 0 : index
    %c0_32 = arith.constant 0 : index
    %32 = vector.load %arg3[%c2_30, %c0_31, %c0_32] : memref<3x384x128xf32, #tpu.memory_space<vmem>>, vector<1x384x128xf32>
    %33 = vector.shape_cast %32 : vector<1x384x128xf32> to vector<384x128xf32>
    %cst_33 = arith.constant dense<0.000000e+00> : vector<144x128xf32>
    %34 = tpu.matmul %31, %33, %cst_33 {dimension_numbers = #tpu.dot_dimension_numbers<[1], [0], [0], [1], [0, 0, 1, 1], [], []>} : vector<144x384xf32>, vector<384x128xf32>, vector<144x128xf32> -> vector<144x128xf32>
    %35 = arith.addf %29, %34 : vector<144x128xf32>
    %c0_34 = arith.constant 0 : index
    %c0_35 = arith.constant 0 : index
    %36 = vector.load %arg4[%c0_34, %c0_35] : memref<1x128xf32, #tpu.memory_space<vmem>>, vector<1x128xf32>
    %37 = vector.broadcast %36 : vector<1x128xf32> to vector<144x128xf32>
    %38 = arith.addf %35, %37 : vector<144x128xf32>
    %cst_36 = arith.constant 0.000000e+00 : f32
    %39 = vector.broadcast %cst_36 : f32 to vector<144x128xf32>
    %40 = arith.maximumf %38, %39 : vector<144x128xf32>
    %41 = vector.shape_cast %40 : vector<144x128xf32> to vector<18x8x128xf32>
    %42 = vector.shape_cast %41 : vector<18x8x128xf32> to vector<144x128xf32>
    %c0_37 = arith.constant 0 : index
    %c0_38 = arith.constant 0 : index
    %c128_39 = arith.constant 128 : index
    %43 = vector.load %arg10[%c0_37, %c0_38, %c128_39] : memref<18x8x384xf32, #tpu.memory_space<vmem>>, vector<18x8x128xf32>
    tpu.vector_store %arg10[%c0_37, %c0_38, %c128_39], %41 {strides = array<i32>} : memref<18x8x384xf32, #tpu.memory_space<vmem>>, vector<18x8x128xf32>,
    %c1_i32_40 = arith.constant 1 : i32
    %44 = tpu.dynamic_rotate %42 by %c1_i32_40 dim 0 : vector<144x128xf32>, i32 -> vector<144x128xf32>
    %45 = vector.shape_cast %44 : vector<144x128xf32> to vector<18x8x128xf32>
    %c0_41 = arith.constant 0 : index
    %c0_42 = arith.constant 0 : index
    %c0_43 = arith.constant 0 : index
    %46 = vector.load %arg10[%c0_41, %c0_42, %c0_43] : memref<18x8x384xf32, #tpu.memory_space<vmem>>, vector<18x8x128xf32>
    tpu.vector_store %arg10[%c0_41, %c0_42, %c0_43], %45 {strides = array<i32>} : memref<18x8x384xf32, #tpu.memory_space<vmem>>, vector<18x8x128xf32>,
    %c143_i32 = arith.constant 143 : i32
    %47 = tpu.dynamic_rotate %42 by %c143_i32 dim 0 : vector<144x128xf32>, i32 -> vector<144x128xf32>
    %48 = vector.shape_cast %47 : vector<144x128xf32> to vector<18x8x128xf32>
    %c0_44 = arith.constant 0 : index
    %c0_45 = arith.constant 0 : index
    %c256_46 = arith.constant 256 : index
    %49 = vector.load %arg10[%c0_44, %c0_45, %c256_46] : memref<18x8x384xf32, #tpu.memory_space<vmem>>, vector<18x8x128xf32>
    tpu.vector_store %arg10[%c0_44, %c0_45, %c256_46], %48 {strides = array<i32>} : memref<18x8x384xf32, #tpu.memory_space<vmem>>, vector<18x8x128xf32>,
    %cst_47 = arith.constant 0.000000e+00 : f32
    %50 = vector.broadcast %cst_47 : f32 to vector<18x1x128xf32>
    %c0_48 = arith.constant 0 : index
    %c0_49 = arith.constant 0 : index
    %c0_50 = arith.constant 0 : index
    %51 = vector.load %arg10[%c0_48, %c0_49, %c0_50] : memref<18x8x384xf32, #tpu.memory_space<vmem>>, vector<18x1x128xf32>
    tpu.vector_store %arg10[%c0_48, %c0_49, %c0_50], %50 {strides = array<i32>} : memref<18x8x384xf32, #tpu.memory_space<vmem>>, vector<18x1x128xf32>,
    %cst_51 = arith.constant 0.000000e+00 : f32
    %52 = vector.broadcast %cst_51 : f32 to vector<18x1x128xf32>
    %c0_52 = arith.constant 0 : index
    %c7_53 = arith.constant 7 : index
    %c256_54 = arith.constant 256 : index
    %53 = vector.load %arg10[%c0_52, %c7_53, %c256_54] : memref<18x8x384xf32, #tpu.memory_space<vmem>>, vector<18x1x128xf32>
    tpu.vector_store %arg10[%c0_52, %c7_53, %c256_54], %52 {strides = array<i32>} : memref<18x8x384xf32, #tpu.memory_space<vmem>>, vector<18x1x128xf32>,
    %c0_i32_55 = arith.constant 0 : i32
    %54 = arith.cmpi eq, %arg1, %c0_i32_55 : i32
    %55 = arith.extui %54 : i1 to i32
    %c0_i32_56 = arith.constant 0 : i32
    %56 = arith.cmpi ne, %55, %c0_i32_56 : i32
    scf.if %56 {
      %cst_89 = arith.constant 0.000000e+00 : f32
      %91 = vector.broadcast %cst_89 : f32 to vector<1x8x384xf32>
      %c0_90 = arith.constant 0 : index
      %c0_91 = arith.constant 0 : index
      %c0_92 = arith.constant 0 : index
      %92 = vector.load %arg10[%c0_90, %c0_91, %c0_92] : memref<18x8x384xf32, #tpu.memory_space<vmem>>, vector<1x8x384xf32>
      tpu.vector_store %arg10[%c0_90, %c0_91, %c0_92], %91 {strides = array<i32>} : memref<18x8x384xf32, #tpu.memory_space<vmem>>, vector<1x8x384xf32>,
    } else {
    }
    %c0_i32_57 = arith.constant 0 : i32
    %57 = arith.cmpi eq, %arg1, %c0_i32_57 : i32
    %58 = arith.extui %57 : i1 to i32
    %c0_i32_58 = arith.constant 0 : i32
    %59 = arith.cmpi ne, %58, %c0_i32_58 : i32
    scf.if %59 {
      %cst_89 = arith.constant 0.000000e+00 : f32
      %91 = vector.broadcast %cst_89 : f32 to vector<1x8x384xf32>
      %c17 = arith.constant 17 : index
      %c0_90 = arith.constant 0 : index
      %c0_91 = arith.constant 0 : index
      %92 = vector.load %arg10[%c17, %c0_90, %c0_91] : memref<18x8x384xf32, #tpu.memory_space<vmem>>, vector<1x8x384xf32>
      tpu.vector_store %arg10[%c17, %c0_90, %c0_91], %91 {strides = array<i32>} : memref<18x8x384xf32, #tpu.memory_space<vmem>>, vector<1x8x384xf32>,
    } else {
    }
    %c0_59 = arith.constant 0 : index
    %c0_60 = arith.constant 0 : index
    %c0_61 = arith.constant 0 : index
    %60 = vector.load %arg10[%c0_59, %c0_60, %c0_61] : memref<18x8x384xf32, #tpu.memory_space<vmem>>, vector<16x8x384xf32>
    %61 = vector.shape_cast %60 : vector<16x8x384xf32> to vector<128x384xf32>
    %c0_62 = arith.constant 0 : index
    %c0_63 = arith.constant 0 : index
    %c0_64 = arith.constant 0 : index
    %62 = vector.load %arg5[%c0_62, %c0_63, %c0_64] : memref<3x384x128xf32, #tpu.memory_space<vmem>>, vector<1x384x128xf32>
    %63 = vector.shape_cast %62 : vector<1x384x128xf32> to vector<384x128xf32>
    %cst_65 = arith.constant dense<0.000000e+00> : vector<128x128xf32>
    %64 = tpu.matmul %61, %63, %cst_65 {dimension_numbers = #tpu.dot_dimension_numbers<[1], [0], [0], [1], [0, 0, 1, 1], [], []>} : vector<128x384xf32>, vector<384x128xf32>, vector<128x128xf32> -> vector<128x128xf32>
    %c1_66 = arith.constant 1 : index
    %c0_67 = arith.constant 0 : index
    %c0_68 = arith.constant 0 : index
    %65 = vector.load %arg10[%c1_66, %c0_67, %c0_68] : memref<18x8x384xf32, #tpu.memory_space<vmem>>, vector<16x8x384xf32>
    %66 = vector.shape_cast %65 : vector<16x8x384xf32> to vector<128x384xf32>
    %c1_69 = arith.constant 1 : index
    %c0_70 = arith.constant 0 : index
    %c0_71 = arith.constant 0 : index
    %67 = vector.load %arg5[%c1_69, %c0_70, %c0_71] : memref<3x384x128xf32, #tpu.memory_space<vmem>>, vector<1x384x128xf32>
    %68 = vector.shape_cast %67 : vector<1x384x128xf32> to vector<384x128xf32>
    %cst_72 = arith.constant dense<0.000000e+00> : vector<128x128xf32>
    %69 = tpu.matmul %66, %68, %cst_72 {dimension_numbers = #tpu.dot_dimension_numbers<[1], [0], [0], [1], [0, 0, 1, 1], [], []>} : vector<128x384xf32>, vector<384x128xf32>, vector<128x128xf32> -> vector<128x128xf32>
    %70 = arith.addf %64, %69 : vector<128x128xf32>
    %c2_73 = arith.constant 2 : index
    %c0_74 = arith.constant 0 : index
    %c0_75 = arith.constant 0 : index
    %71 = vector.load %arg10[%c2_73, %c0_74, %c0_75] : memref<18x8x384xf32, #tpu.memory_space<vmem>>, vector<16x8x384xf32>
    %72 = vector.shape_cast %71 : vector<16x8x384xf32> to vector<128x384xf32>
    %c2_76 = arith.constant 2 : index
    %c0_77 = arith.constant 0 : index
    %c0_78 = arith.constant 0 : index
    %73 = vector.load %arg5[%c2_76, %c0_77, %c0_78] : memref<3x384x128xf32, #tpu.memory_space<vmem>>, vector<1x384x128xf32>
    %74 = vector.shape_cast %73 : vector<1x384x128xf32> to vector<384x128xf32>
    %cst_79 = arith.constant dense<0.000000e+00> : vector<128x128xf32>
    %75 = tpu.matmul %72, %74, %cst_79 {dimension_numbers = #tpu.dot_dimension_numbers<[1], [0], [0], [1], [0, 0, 1, 1], [], []>} : vector<128x384xf32>, vector<384x128xf32>, vector<128x128xf32> -> vector<128x128xf32>
    %76 = arith.addf %70, %75 : vector<128x128xf32>
    %c2_i32 = arith.constant 2 : i32
    %77 = arith.addi %4, %c2_i32 : i32
    %78 = arith.index_cast %77 : i32 to index
    %c0_80 = arith.constant 0 : index
    %c0_81 = arith.constant 0 : index
    %79 = vector.load %arg8[%78, %c0_80, %c0_81] : memref<20x8x128xf32, #tpu.memory_space<vmem>>, vector<16x8x128xf32>
    %80 = vector.shape_cast %79 : vector<16x8x128xf32> to vector<128x128xf32>
    %c0_82 = arith.constant 0 : index
    %c0_83 = arith.constant 0 : index
    %81 = vector.load %arg6[%c0_82, %c0_83] : memref<1x128xf32, #tpu.memory_space<vmem>>, vector<1x128xf32>
    %82 = vector.broadcast %81 : vector<1x128xf32> to vector<128x128xf32>
    %83 = arith.addf %76, %82 : vector<128x128xf32>
    %84 = arith.addf %83, %80 : vector<128x128xf32>
    %cst_84 = arith.constant 0.000000e+00 : f32
    %85 = vector.broadcast %cst_84 : f32 to vector<128x128xf32>
    %86 = arith.maximumf %84, %85 : vector<128x128xf32>
    %87 = vector.shape_cast %86 : vector<128x128xf32> to vector<16x8x128xf32>
    %c0_85 = arith.constant 0 : index
    %c0_86 = arith.constant 0 : index
    %c0_87 = arith.constant 0 : index
    %c0_88 = arith.constant 0 : index
    %88 = vector.load %arg7[%c0_85, %c0_86, %c0_87, %c0_88] : memref<1x16x8x128xf32, #tpu.memory_space<vmem>>, vector<1x16x8x128xf32>
    %89 = vector.shape_cast %88 : vector<1x16x8x128xf32> to vector<16x8x128xf32>
    %90 = vector.shape_cast %87 : vector<16x8x128xf32> to vector<1x16x8x128xf32>
    tpu.vector_store %arg7[%c0_85, %c0_86, %c0_87, %c0_88], %90 {strides = array<i32>} : memref<1x16x8x128xf32, #tpu.memory_space<vmem>>, vector<1x16x8x128xf32>,
    return
  }
  func.func @transform_1(%arg0: i32, %arg1: i32) -> (i32, i32, i32) {
    %c0_i32 = arith.constant 0 : i32
    %c0_i32_0 = arith.constant 0 : i32
    %c0_i32_1 = arith.constant 0 : i32
    %c0_i32_2 = arith.constant 0 : i32
    return %c0_i32, %c0_i32_0, %c0_i32_1 : i32, i32, i32
  }
  func.func @transform_2(%arg0: i32, %arg1: i32) -> (i32, i32) {
    %c0_i32 = arith.constant 0 : i32
    %c0_i32_0 = arith.constant 0 : i32
    %c0_i32_1 = arith.constant 0 : i32
    return %c0_i32, %c0_i32_0 : i32, i32
  }
  func.func @transform_3(%arg0: i32, %arg1: i32) -> (i32, i32, i32) {
    %c0_i32 = arith.constant 0 : i32
    %c0_i32_0 = arith.constant 0 : i32
    %c0_i32_1 = arith.constant 0 : i32
    %c0_i32_2 = arith.constant 0 : i32
    return %c0_i32, %c0_i32_0, %c0_i32_1 : i32, i32, i32
  }
  func.func @transform_4(%arg0: i32, %arg1: i32) -> (i32, i32) {
    %c0_i32 = arith.constant 0 : i32
    %c0_i32_0 = arith.constant 0 : i32
    %c0_i32_1 = arith.constant 0 : i32
    return %c0_i32, %c0_i32_0 : i32, i32
  }
  func.func @transform_5(%arg0: i32, %arg1: i32) -> (i32, i32, i32, i32) {
    %c0_i32 = arith.constant 0 : i32
    %c0_i32_0 = arith.constant 0 : i32
    %c0_i32_1 = arith.constant 0 : i32
    return %arg0, %arg1, %c0_i32, %c0_i32_0 : i32, i32, i32, i32
  }
}

</mosaic_0001>

<llo_original>
// kernel: tpu_custom_call.1
$region0: #{tpu_custom_call.1}
  #allocation0 [shape = 'u32[]', space=smem, size = 0x4, offset = 0x4, fixed_abs, tag = 'smem constant byte address 0x4 - core index']
  #allocation1 [shape = 'u32[72,128]{1,0:T(1,128)}', space=vmem, size = 0x9000, scoped, tag = 'internal scratch']
  #allocation2 [shape = 'f32[20,8,128]{2,1,0:T(8,128)}', space=vmem, size = 0x14000, scoped, tag = 'scratch operand']
  #allocation3 [shape = 'f32[20,8,384]{2,1,0:T(8,128)}', space=vmem, size = 0x3c000, scoped, tag = 'scratch operand']
  #allocation4 [shape = 'f32[18,8,384]{2,1,0:T(8,128)}', space=vmem, size = 0x36000, scoped, tag = 'scratch operand']
  #allocation5 [shape = 's32[1]{0}', space=sflag, size = 0x4, scoped, tag = 'scratch operand']
  #allocation12 [shape = 's32[]', space=sflag, size = 0x4, offset = 0, fixed_abs, tag = 'sflag constant byte address 0x0 - dummy sync flag']
  #allocation13 [shape = 's32[]', space=sflag, size = 0x4, offset = 0, fixed_abs, tag = 'sflag constant byte address 0x0 - dummy sync flag']
  #allocation14 [shape = 'u32[]', space=smem, size = 0x4, offset = 0x44, fixed_abs, tag = 'smem constant byte address 0x44 - assertion arg 0']
  #allocation15 [shape = 'u32[]', space=smem, size = 0x4, offset = 0x48, fixed_abs, tag = 'smem constant byte address 0x48 - assertion arg 1']
  %s0 = inlined_call_operand.hbm [shape: f32[2,16,8,128], index: 0, kind: input, shape index: {}]
  %s1 = inlined_call_operand.hbm [shape: f32[3,384,128], index: 1, kind: input, shape index: {}]
  %s2 = inlined_call_operand.vmem [shape: f32[1,128], index: 2, kind: input, shape index: {}]
  %s3 = inlined_call_operand.hbm [shape: f32[3,384,128], index: 3, kind: input, shape index: {}]
  %s4 = inlined_call_operand.vmem [shape: f32[1,128], index: 4, kind: input, shape index: {}]
  %s5 = inlined_call_operand.hbm [shape: f32[2,16,8,128], index: 5, kind: output, shape index: {}]
  %s6 = sld [smem:[#allocation0]]
  $region69: #{tpu_custom_call.1} parent=0
    _
  %s8 = ssub.s32 1, %s6
  %s9 = scalar_select 0, %s8, %s6
  $region1: #{tpu_custom_call.1} parent=0
    #allocation6 [shape = 'u8[589824]{0}', space=vmem, size = 0x90000, scoped, tag = 'input window, operand 1, single buffered']
    #allocation7 [shape = 's32[2]{0}', space=sflag, size = 0x8, scoped, tag = 'scoped memory for tpu_custom_call.1']
    #allocation8 [shape = 's32[2]{0}', space=sflag, size = 0x8, scoped, tag = 'scoped memory for tpu_custom_call.1']
    #allocation9 [shape = 'u8[589824]{0}', space=vmem, size = 0x90000, scoped, tag = 'input window, operand 3, single buffered']
    #allocation10 [shape = 's32[1]{0}', space=sflag, size = 0x4, scoped, tag = 'scoped memory for tpu_custom_call.1']
    #allocation11 [shape = 'u8[131072]{0}', space=vmem, size = 0x20000, scoped, tag = 'output window, operand 0']
    %10 = vsyncpa [#allocation7], 0
    %11 = vsyncpa [#allocation10], 0
    %12 = vsyncpa [#allocation8], 0
    %s13 = scalar_lea.sflag [#allocation8], 1
    %14 = vsyncpa %s13, 0
    loop: start=0, step=1, limit=4
    $region2: #{tpu_custom_call.1} parent=1 // loop_pre_header
      _
    $region3: #{tpu_custom_call.1} parent=1 // loop_header
      %s16 = sphi 0, %s20
      %p17 = scmp.ge.s32.totalorder %s16, 4
      %s23 = sphi 0, %s35
      %s24 = sphi 0, %s31
      %s25 = sphi 0, %s23
      %s26 = sphi 0, %s24
      %s27 = sphi 0, %s25
      %s28 = sphi 0, %s26
      %s36 = sphi 0, %s36
      %s38 = sphi 0, %s36
      %s39 = sphi 0, %s38
      %s53 = sphi 0, %s39
      %s57 = sphi 0, %s57
      %s59 = sphi 0, %s57
      %s60 = sphi 0, %s59
      %s74 = sphi 0, %s60
      %s78 = sphi 0, %s78
      %s80 = sphi 0, %s78
      %s81 = sphi 0, %s80
      %s95 = sphi 0, %s81
      %s99 = sphi 0, %s99
      %s101 = sphi 0, %s99
      %s102 = sphi 0, %s101
      %s116 = sphi 0, %s102
      %s124 = sphi 0, %s126
      %s127 = sphi 0, %s124
      %s128 = sphi 0, %s127
      %s144 = sphi 0, %s128
    $region4: #{tpu_custom_call.1} parent=1 // loop_header_branch
      %19 = sbr.rel (%p17) target = $region8
    $region5: #{tpu_custom_call.1} parent=1 // loop_body
      %s21 = ssub.s32 %s16, 1
      %s22 = ssub.s32 %s16, 2
      %s29 = sadd.s32 1, %s24
      %p30 = scmp.ge.s32.totalorder %s29, 1
      %s31 = scalar_select %p30, 0, %s29
      %s32 = sadd.s32 1, %s23
      %s33 = scalar_select %p30, %s32, %s23
      %p34 = scmp.ge.s32.totalorder %s33, 2
      %s35 = scalar_select %p34, 0, %s33
      %s37 = sadd.s32 %s36, 1
      %p40 = scmp.eq.s32.totalorder %s16, 1
      %p41 = scmp.ne.s32.totalorder %s36, %s38
      %p42 = scmp.eq.s32.totalorder %s16, 0
      %p43 = por %p41, %p42
      %p44 = scmp.ne.s32.totalorder %s36, %s38
      %p45 = scmp.eq.s32.totalorder %s21, 1
      %p46 = por %p44, %p45
      %p47 = scmp.ne.s32.totalorder %s38, %s39
      %p48 = scmp.eq.s32.totalorder %s21, 0
      %p49 = por %p47, %p48
      %p50 = scmp.ne.s32.totalorder %s38, %s39
      %p51 = scmp.eq.s32.totalorder %s22, 1
      %p52 = por %p50, %p51
      %p54 = scmp.ne.s32.totalorder %s39, %s53
      %p55 = scmp.eq.s32.totalorder %s22, 0
      %p56 = por %p54, %p55
      %s58 = sadd.s32 %s57, 1
      %p61 = scmp.eq.s32.totalorder %s16, 1
      %p62 = scmp.ne.s32.totalorder %s57, %s59
      %p63 = scmp.eq.s32.totalorder %s16, 0
      %p64 = por %p62, %p63
      %p65 = scmp.ne.s32.totalorder %s57, %s59
      %p66 = scmp.eq.s32.totalorder %s21, 1
      %p67 = por %p65, %p66
      %p68 = scmp.ne.s32.totalorder %s59, %s60
      %p69 = scmp.eq.s32.totalorder %s21, 0
      %p70 = por %p68, %p69
      %p71 = scmp.ne.s32.totalorder %s59, %s60
      %p72 = scmp.eq.s32.totalorder %s22, 1
      %p73 = por %p71, %p72
      %p75 = scmp.ne.s32.totalorder %s60, %s74
      %p76 = scmp.eq.s32.totalorder %s22, 0
      %p77 = por %p75, %p76
      %s79 = sadd.s32 %s78, 1
      %p82 = scmp.eq.s32.totalorder %s16, 1
      %p83 = scmp.ne.s32.totalorder %s78, %s80
      %p84 = scmp.eq.s32.totalorder %s16, 0
      %p85 = por %p83, %p84
      %p86 = scmp.ne.s32.totalorder %s78, %s80
      %p87 = scmp.eq.s32.totalorder %s21, 1
      %p88 = por %p86, %p87
      %p89 = scmp.ne.s32.totalorder %s80, %s81
      %p90 = scmp.eq.s32.totalorder %s21, 0
      %p91 = por %p89, %p90
      %p92 = scmp.ne.s32.totalorder %s80, %s81
      %p93 = scmp.eq.s32.totalorder %s22, 1
      %p94 = por %p92, %p93
      %p96 = scmp.ne.s32.totalorder %s81, %s95
      %p97 = scmp.eq.s32.totalorder %s22, 0
      %p98 = por %p96, %p97
      %s100 = sadd.s32 %s99, 1
      %p103 = scmp.eq.s32.totalorder %s16, 1
      %p104 = scmp.ne.s32.totalorder %s99, %s101
      %p105 = scmp.eq.s32.totalorder %s16, 0
      %p106 = por %p104, %p105
      %p107 = scmp.ne.s32.totalorder %s99, %s101
      %p108 = scmp.eq.s32.totalorder %s21, 1
      %p109 = por %p107, %p108
      %p110 = scmp.ne.s32.totalorder %s101, %s102
      %p111 = scmp.eq.s32.totalorder %s21, 0
      %p112 = por %p110, %p111
      %p113 = scmp.ne.s32.totalorder %s101, %s102
      %p114 = scmp.eq.s32.totalorder %s22, 1
      %p115 = por %p113, %p114
      %p117 = scmp.ne.s32.totalorder %s102, %s116
      %p118 = scmp.eq.s32.totalorder %s22, 0
      %p119 = por %p117, %p118
      %s120 = ssub.s32 %s23, %s35
      %s121 = ssub.s32 %s24, %s31
      %s122 = sor.u32 %s120, %s121
      %p123 = scmp.eq.s32.totalorder %s122, 0
      %s125 = sadd.s32 %s124, 1
      %s126 = scalar_select %p123, %s124, %s125
      %p129 = pneg %p123
      %p130 = scmp.eq.s32.totalorder %s16, 1
      %p131 = por %p129, %p130
      %p132 = scmp.ne.s32.totalorder %s124, %s127
      %p133 = scmp.eq.s32.totalorder %s16, 0
      %p134 = por %p132, %p133
      %p135 = scmp.ne.s32.totalorder %s124, %s127
      %p136 = scmp.eq.s32.totalorder %s21, 1
      %p137 = por %p135, %p136
      %p138 = scmp.ne.s32.totalorder %s127, %s128
      %p139 = scmp.eq.s32.totalorder %s21, 0
      %p140 = por %p138, %p139
      %p141 = scmp.ne.s32.totalorder %s127, %s128
      %p142 = scmp.eq.s32.totalorder %s22, 1
      %p143 = por %p141, %p142
      %p145 = scmp.ne.s32.totalorder %s128, %s144
      %p146 = scmp.eq.s32.totalorder %s22, 0
      %p147 = por %p145, %p146
      %p148 = scmp.le.s32.totalorder 1, %s16
      %p149 = scmp.lt.s32.totalorder %s16, 3
      %p150 = pnand %p148, %p149
      %p151 = pneg %p150
      // Predicated region
      $region9: #{tpu_custom_call.1} parent=5 // pred_check
        _
      $region10: #{tpu_custom_call.1} parent=5 // pred_check_branch
        %153 = sbr.rel (%p150) target = $region12
      $region11: #{tpu_custom_call.1} parent=5 // pred_region
        %s154 = ssub.s32 %s16, 1
        // Predicated region
        $region13: #{tpu_custom_call.1} parent=11 // pred_check
          %p155 = pneg %p49
        $region14: #{tpu_custom_call.1} parent=11 // pred_check_branch
          %157 = sbr.rel (%p155) target = $region16
        $region15: #{tpu_custom_call.1} parent=11 // pred_region
          %159 = vsyncadd [#allocation7], 0
          %s160 = sshll.u32 %s1, 4
          %s161 = int_to_ptr.hbm [resolvable:$true] %s160
          %s162 = sshll.u32 [#allocation6], 4
          %s163 = int_to_ptr.vmem [resolvable:$true] %s162
          %168 = dma.hbm_to_vmem [thread:$0]  %s161, 18432, %s163, [#allocation7], 128, 128, 8
        $region16: #{tpu_custom_call.1} parent=11 // pred_fallthru
          _
        // Predicated region
        $region17: #{tpu_custom_call.1} parent=11 // pred_check
          %p169 = pneg %p70
        $region18: #{tpu_custom_call.1} parent=11 // pred_check_branch
          %171 = sbr.rel (%p169) target = $region20
        $region19: #{tpu_custom_call.1} parent=11 // pred_region
          _
        $region20: #{tpu_custom_call.1} parent=11 // pred_fallthru
          _
        // Predicated region
        $region21: #{tpu_custom_call.1} parent=11 // pred_check
          %p172 = pneg %p91
        $region22: #{tpu_custom_call.1} parent=11 // pred_check_branch
          %174 = sbr.rel (%p172) target = $region24
        $region23: #{tpu_custom_call.1} parent=11 // pred_region
          %176 = vsyncadd [#allocation10], 0
          %s177 = sshll.u32 %s3, 4
          %s178 = int_to_ptr.hbm [resolvable:$true] %s177
          %s179 = sshll.u32 [#allocation9], 4
          %s180 = int_to_ptr.vmem [resolvable:$true] %s179
          %185 = dma.hbm_to_vmem [thread:$0]  %s178, 18432, %s180, [#allocation10], 128, 128, 8
        $region24: #{tpu_custom_call.1} parent=11 // pred_fallthru
          _
        // Predicated region
        $region25: #{tpu_custom_call.1} parent=11 // pred_check
          %p186 = pneg %p112
        $region26: #{tpu_custom_call.1} parent=11 // pred_check_branch
          %188 = sbr.rel (%p186) target = $region28
        $region27: #{tpu_custom_call.1} parent=11 // pred_region
          _
        $region28: #{tpu_custom_call.1} parent=11 // pred_fallthru
          _
      $region12: #{tpu_custom_call.1} parent=5 // pred_fallthru
        _
      %p189 = scmp.lt.s32.totalorder %s16, 2
      // Predicated region
      $region29: #{tpu_custom_call.1} parent=5 // pred_check
        %p190 = pneg %p189
      $region30: #{tpu_custom_call.1} parent=5 // pred_check_branch
        %192 = sbr.rel (%p190) target = $region32
      $region31: #{tpu_custom_call.1} parent=5 // pred_region
        _
      $region32: #{tpu_custom_call.1} parent=5 // pred_fallthru
        _
      %p193 = scmp.le.s32.totalorder 1, %s16
      %p194 = scmp.lt.s32.totalorder %s16, 3
      %p195 = pnand %p193, %p194
      %p196 = pneg %p195
      // Predicated region
      $region33: #{tpu_custom_call.1} parent=5 // pred_check
        _
      $region34: #{tpu_custom_call.1} parent=5 // pred_check_branch
        %198 = sbr.rel (%p195) target = $region36
      $region35: #{tpu_custom_call.1} parent=5 // pred_region
        %s199 = ssub.s32 %s16, 1
        // Predicated region
        $region37: #{tpu_custom_call.1} parent=35 // pred_check
          %p200 = pneg %p49
        $region38: #{tpu_custom_call.1} parent=35 // pred_check_branch
          %202 = sbr.rel (%p200) target = $region40
        $region39: #{tpu_custom_call.1} parent=35 // pred_region
          %204 = dma.done [#allocation7], 18432
        $region40: #{tpu_custom_call.1} parent=35 // pred_fallthru
          _
        // Predicated region
        $region41: #{tpu_custom_call.1} parent=35 // pred_check
          %p205 = pneg %p91
        $region42: #{tpu_custom_call.1} parent=35 // pred_check_branch
          %207 = sbr.rel (%p205) target = $region44
        $region43: #{tpu_custom_call.1} parent=35 // pred_region
          %209 = dma.done [#allocation10], 18432
        $region44: #{tpu_custom_call.1} parent=35 // pred_fallthru
          _
        %p210 = pneg %p49
        %p211 = pneg %p46
        %p212 = pneg %p70
        %p213 = pneg %p67
        %p214 = pneg %p91
        %p215 = pneg %p88
        %p216 = pneg %p112
        %p217 = pneg %p109
        %p218 = pneg %p140
        %p219 = pneg %p137
        %s220 = sand.u32 %s127, 1
        %s221 = scalar_lea.sflag [#allocation8], %s220
        %s222 = sand.u32 %s127, 1
        %s223 = smul.addr %s222, 128
        %s224 = scalar_lea.vmem [#allocation11], %s223
        %s225 = smul.u32 16, %s26
        %p226 = scmp.eq.s32.totalorder %s26, 0
        // Predicated region
        $region45: #{tpu_custom_call.1} parent=35 // pred_check
          %p227 = pneg %p226
        $region46: #{tpu_custom_call.1} parent=35 // pred_check_branch
          %229 = sbr.rel (%p227) target = $region48
        $region47: #{tpu_custom_call.1} parent=35 // pred_region
          %230 = vst [vmem:[#allocation2] sm:$0xff] 0.0
          %231 = vst [vmem:[#allocation2 + $0x8] sm:$0xff] 0.0
          %s232 = scalar_lea.vmem [#allocation2], 144
          %233 = vst [vmem:[%s232] sm:$0xff] 0.0
          %234 = vst [vmem:[%s232 + $0x8] sm:$0xff] 0.0
          %s235 = smul.u32 %s25, 128
          %s236 = scalar_lea.hbm %s0, %s235
          %s237 = scalar_lea.vmem [#allocation2], 16
          // Predicated region
          $region49: #{tpu_custom_call.1} parent=47 // pred_check
            _
          $region50: #{tpu_custom_call.1} parent=47 // pred_check_branch
            %239 = sbr.rel target = $region52
          $region51: #{tpu_custom_call.1} parent=47 // pred_region
            %240 = sst [smem:[#allocation14]] [#allocation13]
            %241 = sst [smem:[#allocation15]] [#allocation12]
          $region52: #{tpu_custom_call.1} parent=47 // pred_fallthru
            _
          %243 = shalt.err (0)
          %s245 = sshll.u32 %s236, 4
          %s246 = int_to_ptr.hbm [resolvable:$true] %s245
          %s247 = sshll.u32 %s237, 4
          %s248 = int_to_ptr.vmem [resolvable:$true] %s247
          %250 = dma.hbm_to_vmem [thread:$0]  %s246, 2048, %s248, [#allocation5]
          %s251 = smul.u32 16, 8
          %s252 = smul.u32 %s251, 1
          %s253 = sshll.u32 %s252, 4
          %254 = dma.done [#allocation5], %s253
        $region48: #{tpu_custom_call.1} parent=35 // pred_fallthru
          _
        %s255 = smul.u32 %s26, 16
        %s256 = smul.u32 %s255, 8
        %s257 = scalar_lea.vmem [#allocation2], %s256
        %v258 = vld [vmem:[%s257] sm:$0xff]
        %v259 = vld [vmem:[%s257 + $0x8] sm:$0xff]
        %v260 = vld [vmem:[%s257 + $0x10] sm:$0xff]
        %v261 = vld [vmem:[%s257 + $0x18] sm:$0xff]
        %v262 = vld [vmem:[%s257 + $0x20] sm:$0xff]
        %v263 = vld [vmem:[%s257 + $0x28] sm:$0xff]
        %v264 = vld [vmem:[%s257 + $0x30] sm:$0xff]
        %v265 = vld [vmem:[%s257 + $0x38] sm:$0xff]
        %v266 = vld [vmem:[%s257 + $0x40] sm:$0xff]
        %v267 = vld [vmem:[%s257 + $0x48] sm:$0xff]
        %v268 = vld [vmem:[%s257 + $0x50] sm:$0xff]
        %v269 = vld [vmem:[%s257 + $0x58] sm:$0xff]
        %v270 = vld [vmem:[%s257 + $0x60] sm:$0xff]
        %v271 = vld [vmem:[%s257 + $0x68] sm:$0xff]
        %v272 = vld [vmem:[%s257 + $0x70] sm:$0xff]
        %v273 = vld [vmem:[%s257 + $0x78] sm:$0xff]
        %v274 = vld [vmem:[%s257 + $0x80] sm:$0xff]
        %v275 = vld [vmem:[%s257 + $0x88] sm:$0xff]
        %v276 = vld [vmem:[%s257 + $0x90] sm:$0xff]
        %v277 = vld [vmem:[%s257 + $0x98] sm:$0xff]
        %278 = vst [vmem:[#allocation3 + $0x8] sm:$0xff] %v258
        %279 = vst [vmem:[#allocation3 + $0x20] sm:$0xff] %v259
        %280 = vst [vmem:[#allocation3 + $0x38] sm:$0xff] %v260
        %281 = vst [vmem:[#allocation3 + $0x50] sm:$0xff] %v261
        %282 = vst [vmem:[#allocation3 + $0x68] sm:$0xff] %v262
        %283 = vst [vmem:[#allocation3 + $0x80] sm:$0xff] %v263
        %284 = vst [vmem:[#allocation3 + $0x98] sm:$0xff] %v264
        %285 = vst [vmem:[#allocation3 + $0xb0] sm:$0xff] %v265
        %286 = vst [vmem:[#allocation3 + $0xc8] sm:$0xff] %v266
        %287 = vst [vmem:[#allocation3 + $0xe0] sm:$0xff] %v267
        %288 = vst [vmem:[#allocation3 + $0xf8] sm:$0xff] %v268
        %289 = vst [vmem:[#allocation3 + $0x110] sm:$0xff] %v269
        %290 = vst [vmem:[#allocation3 + $0x128] sm:$0xff] %v270
        %291 = vst [vmem:[#allocation3 + $0x140] sm:$0xff] %v271
        %292 = vst [vmem:[#allocation3 + $0x158] sm:$0xff] %v272
        %293 = vst [vmem:[#allocation3 + $0x170] sm:$0xff] %v273
        %294 = vst [vmem:[#allocation3 + $0x188] sm:$0xff] %v274
        %295 = vst [vmem:[#allocation3 + $0x1a0] sm:$0xff] %v275
        %296 = vst [vmem:[#allocation3 + $0x1b8] sm:$0xff] %v276
        %297 = vst [vmem:[#allocation3 + $0x1d0] sm:$0xff] %v277
        %v298 = vrot.slane %v258, 7
        %v299 = vrot.slane %v259, 7
        %v300 = vrot.slane %v260, 7
        %v301 = vrot.slane %v261, 7
        %v302 = vrot.slane %v262, 7
        %v303 = vrot.slane %v263, 7
        %v304 = vrot.slane %v264, 7
        %v305 = vrot.slane %v265, 7
        %v306 = vrot.slane %v266, 7
        %v307 = vrot.slane %v267, 7
        %v308 = vrot.slane %v268, 7
        %v309 = vrot.slane %v269, 7
        %v310 = vrot.slane %v270, 7
        %v311 = vrot.slane %v271, 7
        %v312 = vrot.slane %v272, 7
        %v313 = vrot.slane %v273, 7
        %v314 = vrot.slane %v274, 7
        %v315 = vrot.slane %v275, 7
        %v316 = vrot.slane %v276, 7
        %v317 = vrot.slane %v277, 7
        %v318 = vlaneseq
        %v319 = vshrl.u32 %v318, 7
        %vm320 = vcmp.lt.s32.totalorder %v319, 1
        %v321 = vsel %vm320, %v316, %v317
        %v322 = vsel %vm320, %v315, %v316
        %v323 = vsel %vm320, %v314, %v315
        %v324 = vsel %vm320, %v313, %v314
        %v325 = vsel %vm320, %v312, %v313
        %v326 = vsel %vm320, %v311, %v312
        %v327 = vsel %vm320, %v310, %v311
        %v328 = vsel %vm320, %v309, %v310
        %v329 = vsel %vm320, %v308, %v309
        %v330 = vsel %vm320, %v307, %v308
        %v331 = vsel %vm320, %v306, %v307
        %v332 = vsel %vm320, %v305, %v306
        %v333 = vsel %vm320, %v304, %v305
        %v334 = vsel %vm320, %v303, %v304
        %v335 = vsel %vm320, %v302, %v303
        %v336 = vsel %vm320, %v301, %v302
        %v337 = vsel %vm320, %v300, %v301
        %v338 = vsel %vm320, %v299, %v300
        %v339 = vsel %vm320, %v298, %v299
        %v340 = vsel %vm320, %v317, %v298
        %341 = vst [vmem:[#allocation3] sm:$0xff] %v340
        %342 = vst [vmem:[#allocation3 + $0x18] sm:$0xff] %v339
        %343 = vst [vmem:[#allocation3 + $0x30] sm:$0xff] %v338
        %344 = vst [vmem:[#allocation3 + $0x48] sm:$0xff] %v337
        %345 = vst [vmem:[#allocation3 + $0x60] sm:$0xff] %v336
        %346 = vst [vmem:[#allocation3 + $0x78] sm:$0xff] %v335
        %347 = vst [vmem:[#allocation3 + $0x90] sm:$0xff] %v334
        %348 = vst [vmem:[#allocation3 + $0xa8] sm:$0xff] %v333
        %349 = vst [vmem:[#allocation3 + $0xc0] sm:$0xff] %v332
        %350 = vst [vmem:[#allocation3 + $0xd8] sm:$0xff] %v331
        %351 = vst [vmem:[#allocation3 + $0xf0] sm:$0xff] %v330
        %352 = vst [vmem:[#allocation3 + $0x108] sm:$0xff] %v329
        %353 = vst [vmem:[#allocation3 + $0x120] sm:$0xff] %v328
        %354 = vst [vmem:[#allocation3 + $0x138] sm:$0xff] %v327
        %355 = vst [vmem:[#allocation3 + $0x150] sm:$0xff] %v326
        %356 = vst [vmem:[#allocation3 + $0x168] sm:$0xff] %v325
        %357 = vst [vmem:[#allocation3 + $0x180] sm:$0xff] %v324
        %358 = vst [vmem:[#allocation3 + $0x198] sm:$0xff] %v323
        %359 = vst [vmem:[#allocation3 + $0x1b0] sm:$0xff] %v322
        %360 = vst [vmem:[#allocation3 + $0x1c8] sm:$0xff] %v321
        %v361 = vrot.slane %v258, 1
        %v362 = vrot.slane %v259, 1
        %v363 = vrot.slane %v260, 1
        %v364 = vrot.slane %v261, 1
        %v365 = vrot.slane %v262, 1
        %v366 = vrot.slane %v263, 1
        %v367 = vrot.slane %v264, 1
        %v368 = vrot.slane %v265, 1
        %v369 = vrot.slane %v266, 1
        %v370 = vrot.slane %v267, 1
        %v371 = vrot.slane %v268, 1
        %v372 = vrot.slane %v269, 1
        %v373 = vrot.slane %v270, 1
        %v374 = vrot.slane %v271, 1
        %v375 = vrot.slane %v272, 1
        %v376 = vrot.slane %v273, 1
        %v377 = vrot.slane %v274, 1
        %v378 = vrot.slane %v275, 1
        %v379 = vrot.slane %v276, 1
        %v380 = vrot.slane %v277, 1
        %vm381 = vcmp.lt.s32.totalorder %v319, 7
        %v382 = vsel %vm381, %v379, %v380
        %v383 = vsel %vm381, %v378, %v379
        %v384 = vsel %vm381, %v377, %v378
        %v385 = vsel %vm381, %v376, %v377
        %v386 = vsel %vm381, %v375, %v376
        %v387 = vsel %vm381, %v374, %v375
        %v388 = vsel %vm381, %v373, %v374
        %v389 = vsel %vm381, %v372, %v373
        %v390 = vsel %vm381, %v371, %v372
        %v391 = vsel %vm381, %v370, %v371
        %v392 = vsel %vm381, %v369, %v370
        %v393 = vsel %vm381, %v368, %v369
        %v394 = vsel %vm381, %v367, %v368
        %v395 = vsel %vm381, %v366, %v367
        %v396 = vsel %vm381, %v365, %v366
        %v397 = vsel %vm381, %v364, %v365
        %v398 = vsel %vm381, %v363, %v364
        %v399 = vsel %vm381, %v362, %v363
        %v400 = vsel %vm381, %v361, %v362
        %v401 = vsel %vm381, %v380, %v361
        %402 = vst [vmem:[#allocation3 + $0x10] sm:$0xff] %v400
        %403 = vst [vmem:[#allocation3 + $0x28] sm:$0xff] %v399
        %404 = vst [vmem:[#allocation3 + $0x40] sm:$0xff] %v398
        %405 = vst [vmem:[#allocation3 + $0x58] sm:$0xff] %v397
        %406 = vst [vmem:[#allocation3 + $0x70] sm:$0xff] %v396
        %407 = vst [vmem:[#allocation3 + $0x88] sm:$0xff] %v395
        %408 = vst [vmem:[#allocation3 + $0xa0] sm:$0xff] %v394
        %409 = vst [vmem:[#allocation3 + $0xb8] sm:$0xff] %v393
        %410 = vst [vmem:[#allocation3 + $0xd0] sm:$0xff] %v392
        %411 = vst [vmem:[#allocation3 + $0xe8] sm:$0xff] %v391
        %412 = vst [vmem:[#allocation3 + $0x100] sm:$0xff] %v390
        %413 = vst [vmem:[#allocation3 + $0x118] sm:$0xff] %v389
        %414 = vst [vmem:[#allocation3 + $0x130] sm:$0xff] %v388
        %415 = vst [vmem:[#allocation3 + $0x148] sm:$0xff] %v387
        %416 = vst [vmem:[#allocation3 + $0x160] sm:$0xff] %v386
        %417 = vst [vmem:[#allocation3 + $0x178] sm:$0xff] %v385
        %418 = vst [vmem:[#allocation3 + $0x190] sm:$0xff] %v384
        %419 = vst [vmem:[#allocation3 + $0x1a8] sm:$0xff] %v383
        %420 = vst [vmem:[#allocation3 + $0x1c0] sm:$0xff] %v382
        %421 = vst [vmem:[#allocation3 + $0x1d8] sm:$0xff] %v401
        %422 = vst [vmem:[#allocation3] sm:$0x1] 0.0
        %423 = vst [vmem:[#allocation3 + $0x18] sm:$0x1] 0.0
        %424 = vst [vmem:[#allocation3 + $0x30] sm:$0x1] 0.0
        %425 = vst [vmem:[#allocation3 + $0x48] sm:$0x1] 0.0
        %426 = vst [vmem:[#allocation3 + $0x60] sm:$0x1] 0.0
        %427 = vst [vmem:[#allocation3 + $0x78] sm:$0x1] 0.0
        %428 = vst [vmem:[#allocation3 + $0x90] sm:$0x1] 0.0
        %429 = vst [vmem:[#allocation3 + $0xa8] sm:$0x1] 0.0
        %430 = vst [vmem:[#allocation3 + $0xc0] sm:$0x1] 0.0
        %431 = vst [vmem:[#allocation3 + $0xd8] sm:$0x1] 0.0
        %432 = vst [vmem:[#allocation3 + $0xf0] sm:$0x1] 0.0
        %433 = vst [vmem:[#allocation3 + $0x108] sm:$0x1] 0.0
        %434 = vst [vmem:[#allocation3 + $0x120] sm:$0x1] 0.0
        %435 = vst [vmem:[#allocation3 + $0x138] sm:$0x1] 0.0
        %436 = vst [vmem:[#allocation3 + $0x150] sm:$0x1] 0.0
        %437 = vst [vmem:[#allocation3 + $0x168] sm:$0x1] 0.0
        %438 = vst [vmem:[#allocation3 + $0x180] sm:$0x1] 0.0
        %439 = vst [vmem:[#allocation3 + $0x198] sm:$0x1] 0.0
        %440 = vst [vmem:[#allocation3 + $0x1b0] sm:$0x1] 0.0
        %441 = vst [vmem:[#allocation3 + $0x1c8] sm:$0x1] 0.0
        %442 = vst [vmem:[#allocation3 + $0x17] sm:$0x1] 0.0
        %443 = vst [vmem:[#allocation3 + $0x2f] sm:$0x1] 0.0
        %444 = vst [vmem:[#allocation3 + $0x47] sm:$0x1] 0.0
        %445 = vst [vmem:[#allocation3 + $0x5f] sm:$0x1] 0.0
        %446 = vst [vmem:[#allocation3 + $0x77] sm:$0x1] 0.0
        %447 = vst [vmem:[#allocation3 + $0x8f] sm:$0x1] 0.0
        %448 = vst [vmem:[#allocation3 + $0xa7] sm:$0x1] 0.0
        %449 = vst [vmem:[#allocation3 + $0xbf] sm:$0x1] 0.0
        %450 = vst [vmem:[#allocation3 + $0xd7] sm:$0x1] 0.0
        %451 = vst [vmem:[#allocation3 + $0xef] sm:$0x1] 0.0
        %452 = vst [vmem:[#allocation3 + $0x107] sm:$0x1] 0.0
        %453 = vst [vmem:[#allocation3 + $0x11f] sm:$0x1] 0.0
        %454 = vst [vmem:[#allocation3 + $0x137] sm:$0x1] 0.0
        %455 = vst [vmem:[#allocation3 + $0x14f] sm:$0x1] 0.0
        %456 = vst [vmem:[#allocation3 + $0x167] sm:$0x1] 0.0
        %457 = vst [vmem:[#allocation3 + $0x17f] sm:$0x1] 0.0
        %458 = vst [vmem:[#allocation3 + $0x197] sm:$0x1] 0.0
        %459 = vst [vmem:[#allocation3 + $0x1af] sm:$0x1] 0.0
        %460 = vst [vmem:[#allocation3 + $0x1c7] sm:$0x1] 0.0
        %461 = vst [vmem:[#allocation3 + $0x1df] sm:$0x1] 0.0
        %v462 = vld [vmem:[#allocation3] sm:$0xff]
        %v463 = vld [vmem:[#allocation3 + $0x8] sm:$0xff]
        %v464 = vld [vmem:[#allocation3 + $0x10] sm:$0xff]
        %v465 = vld [vmem:[#allocation3 + $0x18] sm:$0xff]
        %v466 = vld [vmem:[#allocation3 + $0x20] sm:$0xff]
        %v467 = vld [vmem:[#allocation3 + $0x28] sm:$0xff]
        %v468 = vld [vmem:[#allocation3 + $0x30] sm:$0xff]
        %v469 = vld [vmem:[#allocation3 + $0x38] sm:$0xff]
        %v470 = vld [vmem:[#allocation3 + $0x40] sm:$0xff]
        %v471 = vld [vmem:[#allocation3 + $0x48] sm:$0xff]
        %v472 = vld [vmem:[#allocation3 + $0x50] sm:$0xff]
        %v473 = vld [vmem:[#allocation3 + $0x58] sm:$0xff]
        %v474 = vld [vmem:[#allocation3 + $0x60] sm:$0xff]
        %v475 = vld [vmem:[#allocation3 + $0x68] sm:$0xff]
        %v476 = vld [vmem:[#allocation3 + $0x70] sm:$0xff]
        %v477 = vld [vmem:[#allocation3 + $0x78] sm:$0xff]
        %v478 = vld [vmem:[#allocation3 + $0x80] sm:$0xff]
        %v479 = vld [vmem:[#allocation3 + $0x88] sm:$0xff]
        %v480 = vld [vmem:[#allocation3 + $0x90] sm:$0xff]
        %v481 = vld [vmem:[#allocation3 + $0x98] sm:$0xff]
        %v482 = vld [vmem:[#allocation3 + $0xa0] sm:$0xff]
        %v483 = vld [vmem:[#allocation3 + $0xa8] sm:$0xff]
        %v484 = vld [vmem:[#allocation3 + $0xb0] sm:$0xff]
        %v485 = vld [vmem:[#allocation3 + $0xb8] sm:$0xff]
        %v486 = vld [vmem:[#allocation3 + $0xc0] sm:$0xff]
        %v487 = vld [vmem:[#allocation3 + $0xc8] sm:$0xff]
        %v488 = vld [vmem:[#allocation3 + $0xd0] sm:$0xff]
        %v489 = vld [vmem:[#allocation3 + $0xd8] sm:$0xff]
        %v490 = vld [vmem:[#allocation3 + $0xe0] sm:$0xff]
        %v491 = vld [vmem:[#allocation3 + $0xe8] sm:$0xff]
        %v492 = vld [vmem:[#allocation3 + $0xf0] sm:$0xff]
        %v493 = vld [vmem:[#allocation3 + $0xf8] sm:$0xff]
        %v494 = vld [vmem:[#allocation3 + $0x100] sm:$0xff]
        %v495 = vld [vmem:[#allocation3 + $0x108] sm:$0xff]
        %v496 = vld [vmem:[#allocation3 + $0x110] sm:$0xff]
        %v497 = vld [vmem:[#allocation3 + $0x118] sm:$0xff]
        %v498 = vld [vmem:[#allocation3 + $0x120] sm:$0xff]
        %v499 = vld [vmem:[#allocation3 + $0x128] sm:$0xff]
        %v500 = vld [vmem:[#allocation3 + $0x130] sm:$0xff]
        %v501 = vld [vmem:[#allocation3 + $0x138] sm:$0xff]
        %v502 = vld [vmem:[#allocation3 + $0x140] sm:$0xff]
        %v503 = vld [vmem:[#allocation3 + $0x148] sm:$0xff]
        %v504 = vld [vmem:[#allocation3 + $0x150] sm:$0xff]
        %v505 = vld [vmem:[#allocation3 + $0x158] sm:$0xff]
        %v506 = vld [vmem:[#allocation3 + $0x160] sm:$0xff]
        %v507 = vld [vmem:[#allocation3 + $0x168] sm:$0xff]
        %v508 = vld [vmem:[#allocation3 + $0x170] sm:$0xff]
        %v509 = vld [vmem:[#allocation3 + $0x178] sm:$0xff]
        %v510 = vld [vmem:[#allocation3 + $0x180] sm:$0xff]
        %v511 = vld [vmem:[#allocation3 + $0x188] sm:$0xff]
        %v512 = vld [vmem:[#allocation3 + $0x190] sm:$0xff]
        %v513 = vld [vmem:[#allocation3 + $0x198] sm:$0xff]
        %v514 = vld [vmem:[#allocation3 + $0x1a0] sm:$0xff]
        %v515 = vld [vmem:[#allocation3 + $0x1a8] sm:$0xff]
        %v516 = vld [vmem:[#allocation6] sm:$0xff]
        %v517 = vld [vmem:[#allocation6 + $0x8] sm:$0xff]
        %v518 = vld [vmem:[#allocation6 + $0x10] sm:$0xff]
        %v519 = vld [vmem:[#allocation6 + $0x18] sm:$0xff]
        %v520 = vld [vmem:[#allocation6 + $0x20] sm:$0xff]
        %v521 = vld [vmem:[#allocation6 + $0x28] sm:$0xff]
        %v522 = vld [vmem:[#allocation6 + $0x30] sm:$0xff]
        %v523 = vld [vmem:[#allocation6 + $0x38] sm:$0xff]
        %v524 = vld [vmem:[#allocation6 + $0x40] sm:$0xff]
        %v525 = vld [vmem:[#allocation6 + $0x48] sm:$0xff]
        %v526 = vld [vmem:[#allocation6 + $0x50] sm:$0xff]
        %v527 = vld [vmem:[#allocation6 + $0x58] sm:$0xff]
        %v528 = vld [vmem:[#allocation6 + $0x60] sm:$0xff]
        %v529 = vld [vmem:[#allocation6 + $0x68] sm:$0xff]
        %v530 = vld [vmem:[#allocation6 + $0x70] sm:$0xff]
        %v531 = vld [vmem:[#allocation6 + $0x78] sm:$0xff]
        %v532 = vld [vmem:[#allocation6 + $0x80] sm:$0xff]
        %v533 = vld [vmem:[#allocation6 + $0x88] sm:$0xff]
        %v534 = vld [vmem:[#allocation6 + $0x90] sm:$0xff]
        %v535 = vld [vmem:[#allocation6 + $0x98] sm:$0xff]
        %v536 = vld [vmem:[#allocation6 + $0xa0] sm:$0xff]
        %v537 = vld [vmem:[#allocation6 + $0xa8] sm:$0xff]
        %v538 = vld [vmem:[#allocation6 + $0xb0] sm:$0xff]
        %v539 = vld [vmem:[#allocation6 + $0xb8] sm:$0xff]
        %v540 = vld [vmem:[#allocation6 + $0xc0] sm:$0xff]
        %v541 = vld [vmem:[#allocation6 + $0xc8] sm:$0xff]
        %v542 = vld [vmem:[#allocation6 + $0xd0] sm:$0xff]
        %v543 = vld [vmem:[#allocation6 + $0xd8] sm:$0xff]
        %v544 = vld [vmem:[#allocation6 + $0xe0] sm:$0xff]
        %v545 = vld [vmem:[#allocation6 + $0xe8] sm:$0xff]
        %v546 = vld [vmem:[#allocation6 + $0xf0] sm:$0xff]
        %v547 = vld [vmem:[#allocation6 + $0xf8] sm:$0xff]
        %v548 = vld [vmem:[#allocation6 + $0x100] sm:$0xff]
        %v549 = vld [vmem:[#allocation6 + $0x108] sm:$0xff]
        %v550 = vld [vmem:[#allocation6 + $0x110] sm:$0xff]
        %v551 = vld [vmem:[#allocation6 + $0x118] sm:$0xff]
        %v552 = vld [vmem:[#allocation6 + $0x120] sm:$0xff]
        %v553 = vld [vmem:[#allocation6 + $0x128] sm:$0xff]
        %v554 = vld [vmem:[#allocation6 + $0x130] sm:$0xff]
        %v555 = vld [vmem:[#allocation6 + $0x138] sm:$0xff]
        %v556 = vld [vmem:[#allocation6 + $0x140] sm:$0xff]
        %v557 = vld [vmem:[#allocation6 + $0x148] sm:$0xff]
        %v558 = vld [vmem:[#allocation6 + $0x150] sm:$0xff]
        %v559 = vld [vmem:[#allocation6 + $0x158] sm:$0xff]
        %v560 = vld [vmem:[#allocation6 + $0x160] sm:$0xff]
        %v561 = vld [vmem:[#allocation6 + $0x168] sm:$0xff]
        %v562 = vld [vmem:[#allocation6 + $0x170] sm:$0xff]
        %v563 = vld [vmem:[#allocation6 + $0x178] sm:$0xff]
        %s564 = scalar_lea.vmem [#allocation3], 24
        %v565 = vld [vmem:[%s564] sm:$0xff]
        %v566 = vld [vmem:[%s564 + $0x8] sm:$0xff]
        %v567 = vld [vmem:[%s564 + $0x10] sm:$0xff]
        %v568 = vld [vmem:[%s564 + $0x18] sm:$0xff]
        %v569 = vld [vmem:[%s564 + $0x20] sm:$0xff]
        %v570 = vld [vmem:[%s564 + $0x28] sm:$0xff]
        %v571 = vld [vmem:[%s564 + $0x30] sm:$0xff]
        %v572 = vld [vmem:[%s564 + $0x38] sm:$0xff]
        %v573 = vld [vmem:[%s564 + $0x40] sm:$0xff]
        %v574 = vld [vmem:[%s564 + $0x48] sm:$0xff]
        %v575 = vld [vmem:[%s564 + $0x50] sm:$0xff]
        %v576 = vld [vmem:[%s564 + $0x58] sm:$0xff]
        %v577 = vld [vmem:[%s564 + $0x60] sm:$0xff]
        %v578 = vld [vmem:[%s564 + $0x68] sm:$0xff]
        %v579 = vld [vmem:[%s564 + $0x70] sm:$0xff]
        %v580 = vld [vmem:[%s564 + $0x78] sm:$0xff]
        %v581 = vld [vmem:[%s564 + $0x80] sm:$0xff]
        %v582 = vld [vmem:[%s564 + $0x88] sm:$0xff]
        %v583 = vld [vmem:[%s564 + $0x90] sm:$0xff]
        %v584 = vld [vmem:[%s564 + $0x98] sm:$0xff]
        %v585 = vld [vmem:[%s564 + $0xa0] sm:$0xff]
        %v586 = vld [vmem:[%s564 + $0xa8] sm:$0xff]
        %v587 = vld [vmem:[%s564 + $0xb0] sm:$0xff]
        %v588 = vld [vmem:[%s564 + $0xb8] sm:$0xff]
        %v589 = vld [vmem:[%s564 + $0xc0] sm:$0xff]
        %v590 = vld [vmem:[%s564 + $0xc8] sm:$0xff]
        %v591 = vld [vmem:[%s564 + $0xd0] sm:$0xff]
        %v592 = vld [vmem:[%s564 + $0xd8] sm:$0xff]
        %v593 = vld [vmem:[%s564 + $0xe0] sm:$0xff]
        %v594 = vld [vmem:[%s564 + $0xe8] sm:$0xff]
        %v595 = vld [vmem:[%s564 + $0xf0] sm:$0xff]
        %v596 = vld [vmem:[%s564 + $0xf8] sm:$0xff]
        %v597 = vld [vmem:[%s564 + $0x100] sm:$0xff]
        %v598 = vld [vmem:[%s564 + $0x108] sm:$0xff]
        %v599 = vld [vmem:[%s564 + $0x110] sm:$0xff]
        %v600 = vld [vmem:[%s564 + $0x118] sm:$0xff]
        %v601 = vld [vmem:[%s564 + $0x120] sm:$0xff]
        %v602 = vld [vmem:[%s564 + $0x128] sm:$0xff]
        %v603 = vld [vmem:[%s564 + $0x130] sm:$0xff]
        %v604 = vld [vmem:[%s564 + $0x138] sm:$0xff]
        %v605 = vld [vmem:[%s564 + $0x140] sm:$0xff]
        %v606 = vld [vmem:[%s564 + $0x148] sm:$0xff]
        %v607 = vld [vmem:[%s564 + $0x150] sm:$0xff]
        %v608 = vld [vmem:[%s564 + $0x158] sm:$0xff]
        %v609 = vld [vmem:[%s564 + $0x160] sm:$0xff]
        %v610 = vld [vmem:[%s564 + $0x168] sm:$0xff]
        %v611 = vld [vmem:[%s564 + $0x170] sm:$0xff]
        %v612 = vld [vmem:[%s564 + $0x178] sm:$0xff]
        %v613 = vld [vmem:[%s564 + $0x180] sm:$0xff]
        %v614 = vld [vmem:[%s564 + $0x188] sm:$0xff]
        %v615 = vld [vmem:[%s564 + $0x190] sm:$0xff]
        %v616 = vld [vmem:[%s564 + $0x198] sm:$0xff]
        %v617 = vld [vmem:[%s564 + $0x1a0] sm:$0xff]
        %v618 = vld [vmem:[%s564 + $0x1a8] sm:$0xff]
        %s619 = scalar_lea.vmem [#allocation6], 384
        %v620 = vld [vmem:[%s619] sm:$0xff]
        %v621 = vld [vmem:[%s619 + $0x8] sm:$0xff]
        %v622 = vld [vmem:[%s619 + $0x10] sm:$0xff]
        %v623 = vld [vmem:[%s619 + $0x18] sm:$0xff]
        %v624 = vld [vmem:[%s619 + $0x20] sm:$0xff]
        %v625 = vld [vmem:[%s619 + $0x28] sm:$0xff]
        %v626 = vld [vmem:[%s619 + $0x30] sm:$0xff]
        %v627 = vld [vmem:[%s619 + $0x38] sm:$0xff]
        %v628 = vld [vmem:[%s619 + $0x40] sm:$0xff]
        %v629 = vld [vmem:[%s619 + $0x48] sm:$0xff]
        %v630 = vld [vmem:[%s619 + $0x50] sm:$0xff]
        %v631 = vld [vmem:[%s619 + $0x58] sm:$0xff]
        %v632 = vld [vmem:[%s619 + $0x60] sm:$0xff]
        %v633 = vld [vmem:[%s619 + $0x68] sm:$0xff]
        %v634 = vld [vmem:[%s619 + $0x70] sm:$0xff]
        %v635 = vld [vmem:[%s619 + $0x78] sm:$0xff]
        %v636 = vld [vmem:[%s619 + $0x80] sm:$0xff]
        %v637 = vld [vmem:[%s619 + $0x88] sm:$0xff]
        %v638 = vld [vmem:[%s619 + $0x90] sm:$0xff]
        %v639 = vld [vmem:[%s619 + $0x98] sm:$0xff]
        %v640 = vld [vmem:[%s619 + $0xa0] sm:$0xff]
        %v641 = vld [vmem:[%s619 + $0xa8] sm:$0xff]
        %v642 = vld [vmem:[%s619 + $0xb0] sm:$0xff]
        %v643 = vld [vmem:[%s619 + $0xb8] sm:$0xff]
        %v644 = vld [vmem:[%s619 + $0xc0] sm:$0xff]
        %v645 = vld [vmem:[%s619 + $0xc8] sm:$0xff]
        %v646 = vld [vmem:[%s619 + $0xd0] sm:$0xff]
        %v647 = vld [vmem:[%s619 + $0xd8] sm:$0xff]
        %v648 = vld [vmem:[%s619 + $0xe0] sm:$0xff]
        %v649 = vld [vmem:[%s619 + $0xe8] sm:$0xff]
        %v650 = vld [vmem:[%s619 + $0xf0] sm:$0xff]
        %v651 = vld [vmem:[%s619 + $0xf8] sm:$0xff]
        %v652 = vld [vmem:[%s619 + $0x100] sm:$0xff]
        %v653 = vld [vmem:[%s619 + $0x108] sm:$0xff]
        %v654 = vld [vmem:[%s619 + $0x110] sm:$0xff]
        %v655 = vld [vmem:[%s619 + $0x118] sm:$0xff]
        %v656 = vld [vmem:[%s619 + $0x120] sm:$0xff]
        %v657 = vld [vmem:[%s619 + $0x128] sm:$0xff]
        %v658 = vld [vmem:[%s619 + $0x130] sm:$0xff]
        %v659 = vld [vmem:[%s619 + $0x138] sm:$0xff]
        %v660 = vld [vmem:[%s619 + $0x140] sm:$0xff]
        %v661 = vld [vmem:[%s619 + $0x148] sm:$0xff]
        %v662 = vld [vmem:[%s619 + $0x150] sm:$0xff]
        %v663 = vld [vmem:[%s619 + $0x158] sm:$0xff]
        %v664 = vld [vmem:[%s619 + $0x160] sm:$0xff]
        %v665 = vld [vmem:[%s619 + $0x168] sm:$0xff]
        %v666 = vld [vmem:[%s619 + $0x170] sm:$0xff]
        %v667 = vld [vmem:[%s619 + $0x178] sm:$0xff]
        %668 = vmatpush.msra.mxu0 %v635
        %669 = vmatpush.msra.mxu0 %v634
        %670 = vmatpush.msra.mxu0 %v633
        %671 = vmatpush.msra.mxu0 %v632
        %672 = vmatpush.msra.mxu0 %v631
        %673 = vmatpush.msra.mxu0 %v630
        %674 = vmatpush.msra.mxu0 %v629
        %675 = vmatpush.msra.mxu0 %v628
        %676 = vmatpush.msra.mxu0 %v627
        %677 = vmatpush.msra.mxu0 %v626
        %678 = vmatpush.msra.mxu0 %v625
        %679 = vmatpush.msra.mxu0 %v624
        %680 = vmatpush.msra.mxu0 %v623
        %681 = vmatpush.msra.mxu0 %v622
        %682 = vmatpush.msra.mxu0 %v621
        %683 = vmatpush.msra.mxu0 %v620
        %684 = vmatmul.f32.gmra.mxu0 %v565
        %v685 = vpop.f32.mrf.mxu0
        %v686 = vadd.f32 0.0, %v685
        %687 = vmatmul.f32.gmra.mxu0 %v568
        %v688 = vpop.f32.mrf.mxu0
        %v689 = vadd.f32 0.0, %v688
        %690 = vmatmul.f32.gmra.mxu0 %v571
        %v691 = vpop.f32.mrf.mxu0
        %v692 = vadd.f32 0.0, %v691
        %693 = vmatmul.f32.gmra.mxu0 %v574
        %v694 = vpop.f32.mrf.mxu0
        %v695 = vadd.f32 0.0, %v694
        %696 = vmatmul.f32.gmra.mxu0 %v577
        %v697 = vpop.f32.mrf.mxu0
        %v698 = vadd.f32 0.0, %v697
        %699 = vmatmul.f32.gmra.mxu0 %v580
        %v700 = vpop.f32.mrf.mxu0
        %v701 = vadd.f32 0.0, %v700
        %702 = vmatmul.f32.gmra.mxu0 %v583
        %v703 = vpop.f32.mrf.mxu0
        %v704 = vadd.f32 0.0, %v703
        %705 = vmatmul.f32.gmra.mxu0 %v586
        %v706 = vpop.f32.mrf.mxu0
        %v707 = vadd.f32 0.0, %v706
        %708 = vmatmul.f32.gmra.mxu0 %v589
        %v709 = vpop.f32.mrf.mxu0
        %v710 = vadd.f32 0.0, %v709
        %711 = vmatmul.f32.gmra.mxu0 %v592
        %v712 = vpop.f32.mrf.mxu0
        %v713 = vadd.f32 0.0, %v712
        %714 = vmatmul.f32.gmra.mxu0 %v595
        %v715 = vpop.f32.mrf.mxu0
        %v716 = vadd.f32 0.0, %v715
        %717 = vmatmul.f32.gmra.mxu0 %v598
        %v718 = vpop.f32.mrf.mxu0
        %v719 = vadd.f32 0.0, %v718
        %720 = vmatmul.f32.gmra.mxu0 %v601
        %v721 = vpop.f32.mrf.mxu0
        %v722 = vadd.f32 0.0, %v721
        %723 = vmatmul.f32.gmra.mxu0 %v604
        %v724 = vpop.f32.mrf.mxu0
        %v725 = vadd.f32 0.0, %v724
        %726 = vmatmul.f32.gmra.mxu0 %v607
        %v727 = vpop.f32.mrf.mxu0
        %v728 = vadd.f32 0.0, %v727
        %729 = vmatmul.f32.gmra.mxu0 %v610
        %v730 = vpop.f32.mrf.mxu0
        %v731 = vadd.f32 0.0, %v730
        %732 = vmatmul.f32.gmra.mxu0 %v613
        %v733 = vpop.f32.mrf.mxu0
        %v734 = vadd.f32 0.0, %v733
        %735 = vmatmul.f32.gmra.mxu0 %v616
        %v736 = vpop.f32.mrf.mxu0
        %v737 = vadd.f32 0.0, %v736
        %738 = vdwg.mxu0
        %739 = vmatpush.msra.mxu0 %v651
        %740 = vmatpush.msra.mxu0 %v650
        %741 = vmatpush.msra.mxu0 %v649
        %742 = vmatpush.msra.mxu0 %v648
        %743 = vmatpush.msra.mxu0 %v647
        %744 = vmatpush.msra.mxu0 %v646
        %745 = vmatpush.msra.mxu0 %v645
        %746 = vmatpush.msra.mxu0 %v644
        %747 = vmatpush.msra.mxu0 %v643
        %748 = vmatpush.msra.mxu0 %v642
        %749 = vmatpush.msra.mxu0 %v641
        %750 = vmatpush.msra.mxu0 %v640
        %751 = vmatpush.msra.mxu0 %v639
        %752 = vmatpush.msra.mxu0 %v638
        %753 = vmatpush.msra.mxu0 %v637
        %754 = vmatpush.msra.mxu0 %v636
        %755 = vmatmul.f32.gmra.mxu0 %v566
        %v756 = vpop.f32.mrf.mxu0
        %v757 = vadd.f32 %v686, %v756
        %758 = vmatmul.f32.gmra.mxu0 %v569
        %v759 = vpop.f32.mrf.mxu0
        %v760 = vadd.f32 %v689, %v759
        %761 = vmatmul.f32.gmra.mxu0 %v572
        %v762 = vpop.f32.mrf.mxu0
        %v763 = vadd.f32 %v692, %v762
        %764 = vmatmul.f32.gmra.mxu0 %v575
        %v765 = vpop.f32.mrf.mxu0
        %v766 = vadd.f32 %v695, %v765
        %767 = vmatmul.f32.gmra.mxu0 %v578
        %v768 = vpop.f32.mrf.mxu0
        %v769 = vadd.f32 %v698, %v768
        %770 = vmatmul.f32.gmra.mxu0 %v581
        %v771 = vpop.f32.mrf.mxu0
        %v772 = vadd.f32 %v701, %v771
        %773 = vmatmul.f32.gmra.mxu0 %v584
        %v774 = vpop.f32.mrf.mxu0
        %v775 = vadd.f32 %v704, %v774
        %776 = vmatmul.f32.gmra.mxu0 %v587
        %v777 = vpop.f32.mrf.mxu0
        %v778 = vadd.f32 %v707, %v777
        %779 = vmatmul.f32.gmra.mxu0 %v590
        %v780 = vpop.f32.mrf.mxu0
        %v781 = vadd.f32 %v710, %v780
        %782 = vmatmul.f32.gmra.mxu0 %v593
        %v783 = vpop.f32.mrf.mxu0
        %v784 = vadd.f32 %v713, %v783
        %785 = vmatmul.f32.gmra.mxu0 %v596
        %v786 = vpop.f32.mrf.mxu0
        %v787 = vadd.f32 %v716, %v786
        %788 = vmatmul.f32.gmra.mxu0 %v599
        %v789 = vpop.f32.mrf.mxu0
        %v790 = vadd.f32 %v719, %v789
        %791 = vmatmul.f32.gmra.mxu0 %v602
        %v792 = vpop.f32.mrf.mxu0
        %v793 = vadd.f32 %v722, %v792
        %794 = vmatmul.f32.gmra.mxu0 %v605
        %v795 = vpop.f32.mrf.mxu0
        %v796 = vadd.f32 %v725, %v795
        %797 = vmatmul.f32.gmra.mxu0 %v608
        %v798 = vpop.f32.mrf.mxu0
        %v799 = vadd.f32 %v728, %v798
        %800 = vmatmul.f32.gmra.mxu0 %v611
        %v801 = vpop.f32.mrf.mxu0
        %v802 = vadd.f32 %v731, %v801
        %803 = vmatmul.f32.gmra.mxu0 %v614
        %v804 = vpop.f32.mrf.mxu0
        %v805 = vadd.f32 %v734, %v804
        %806 = vmatmul.f32.gmra.mxu0 %v617
        %v807 = vpop.f32.mrf.mxu0
        %v808 = vadd.f32 %v737, %v807
        %809 = vdwg.mxu0
        %810 = vmatpush.msra.mxu0 %v667
        %811 = vmatpush.msra.mxu0 %v666
        %812 = vmatpush.msra.mxu0 %v665
        %813 = vmatpush.msra.mxu0 %v664
        %814 = vmatpush.msra.mxu0 %v663
        %815 = vmatpush.msra.mxu0 %v662
        %816 = vmatpush.msra.mxu0 %v661
        %817 = vmatpush.msra.mxu0 %v660
        %818 = vmatpush.msra.mxu0 %v659
        %819 = vmatpush.msra.mxu0 %v658
        %820 = vmatpush.msra.mxu0 %v657
        %821 = vmatpush.msra.mxu0 %v656
        %822 = vmatpush.msra.mxu0 %v655
        %823 = vmatpush.msra.mxu0 %v654
        %824 = vmatpush.msra.mxu0 %v653
        %825 = vmatpush.msra.mxu0 %v652
        %826 = vmatmul.f32.gmra.mxu0 %v567
        %v827 = vpop.f32.mrf.mxu0
        %v828 = vadd.f32 %v757, %v827
        %829 = vmatmul.f32.gmra.mxu0 %v570
        %v830 = vpop.f32.mrf.mxu0
        %v831 = vadd.f32 %v760, %v830
        %832 = vmatmul.f32.gmra.mxu0 %v573
        %v833 = vpop.f32.mrf.mxu0
        %v834 = vadd.f32 %v763, %v833
        %835 = vmatmul.f32.gmra.mxu0 %v576
        %v836 = vpop.f32.mrf.mxu0
        %v837 = vadd.f32 %v766, %v836
        %838 = vmatmul.f32.gmra.mxu0 %v579
        %v839 = vpop.f32.mrf.mxu0
        %v840 = vadd.f32 %v769, %v839
        %841 = vmatmul.f32.gmra.mxu0 %v582
        %v842 = vpop.f32.mrf.mxu0
        %v843 = vadd.f32 %v772, %v842
        %844 = vmatmul.f32.gmra.mxu0 %v585
        %v845 = vpop.f32.mrf.mxu0
        %v846 = vadd.f32 %v775, %v845
        %847 = vmatmul.f32.gmra.mxu0 %v588
        %v848 = vpop.f32.mrf.mxu0
        %v849 = vadd.f32 %v778, %v848
        %850 = vmatmul.f32.gmra.mxu0 %v591
        %v851 = vpop.f32.mrf.mxu0
        %v852 = vadd.f32 %v781, %v851
        %853 = vmatmul.f32.gmra.mxu0 %v594
        %v854 = vpop.f32.mrf.mxu0
        %v855 = vadd.f32 %v784, %v854
        %856 = vmatmul.f32.gmra.mxu0 %v597
        %v857 = vpop.f32.mrf.mxu0
        %v858 = vadd.f32 %v787, %v857
        %859 = vmatmul.f32.gmra.mxu0 %v600
        %v860 = vpop.f32.mrf.mxu0
        %v861 = vadd.f32 %v790, %v860
        %862 = vmatmul.f32.gmra.mxu0 %v603
        %v863 = vpop.f32.mrf.mxu0
        %v864 = vadd.f32 %v793, %v863
        %865 = vmatmul.f32.gmra.mxu0 %v606
        %v866 = vpop.f32.mrf.mxu0
        %v867 = vadd.f32 %v796, %v866
        %868 = vmatmul.f32.gmra.mxu0 %v609
        %v869 = vpop.f32.mrf.mxu0
        %v870 = vadd.f32 %v799, %v869
        %871 = vmatmul.f32.gmra.mxu0 %v612
        %v872 = vpop.f32.mrf.mxu0
        %v873 = vadd.f32 %v802, %v872
        %874 = vmatmul.f32.gmra.mxu0 %v615
        %v875 = vpop.f32.mrf.mxu0
        %v876 = vadd.f32 %v805, %v875
        %877 = vmatmul.f32.gmra.mxu0 %v618
        %v878 = vpop.f32.mrf.mxu0
        %v879 = vadd.f32 %v808, %v878
        %880 = vdwg.mxu0
        %881 = vmatpush.msra.mxu0 %v531
        %882 = vmatpush.msra.mxu0 %v530
        %883 = vmatpush.msra.mxu0 %v529
        %884 = vmatpush.msra.mxu0 %v528
        %885 = vmatpush.msra.mxu0 %v527
        %886 = vmatpush.msra.mxu0 %v526
        %887 = vmatpush.msra.mxu0 %v525
        %888 = vmatpush.msra.mxu0 %v524
        %889 = vmatpush.msra.mxu0 %v523
        %890 = vmatpush.msra.mxu0 %v522
        %891 = vmatpush.msra.mxu0 %v521
        %892 = vmatpush.msra.mxu0 %v520
        %893 = vmatpush.msra.mxu0 %v519
        %894 = vmatpush.msra.mxu0 %v518
        %895 = vmatpush.msra.mxu0 %v517
        %896 = vmatpush.msra.mxu0 %v516
        %897 = vmatmul.f32.gmra.mxu0 %v462
        %v898 = vpop.f32.mrf.mxu0
        %v899 = vadd.f32 %v828, %v898
        %900 = vmatmul.f32.gmra.mxu0 %v465
        %v901 = vpop.f32.mrf.mxu0
        %v902 = vadd.f32 %v831, %v901
        %903 = vmatmul.f32.gmra.mxu0 %v468
        %v904 = vpop.f32.mrf.mxu0
        %v905 = vadd.f32 %v834, %v904
        %906 = vmatmul.f32.gmra.mxu0 %v471
        %v907 = vpop.f32.mrf.mxu0
        %v908 = vadd.f32 %v837, %v907
        %909 = vmatmul.f32.gmra.mxu0 %v474
        %v910 = vpop.f32.mrf.mxu0
        %v911 = vadd.f32 %v840, %v910
        %912 = vmatmul.f32.gmra.mxu0 %v477
        %v913 = vpop.f32.mrf.mxu0
        %v914 = vadd.f32 %v843, %v913
        %915 = vmatmul.f32.gmra.mxu0 %v480
        %v916 = vpop.f32.mrf.mxu0
        %v917 = vadd.f32 %v846, %v916
        %918 = vmatmul.f32.gmra.mxu0 %v483
        %v919 = vpop.f32.mrf.mxu0
        %v920 = vadd.f32 %v849, %v919
        %921 = vmatmul.f32.gmra.mxu0 %v486
        %v922 = vpop.f32.mrf.mxu0
        %v923 = vadd.f32 %v852, %v922
        %924 = vmatmul.f32.gmra.mxu0 %v489
        %v925 = vpop.f32.mrf.mxu0
        %v926 = vadd.f32 %v855, %v925
        %927 = vmatmul.f32.gmra.mxu0 %v492
        %v928 = vpop.f32.mrf.mxu0
        %v929 = vadd.f32 %v858, %v928
        %930 = vmatmul.f32.gmra.mxu0 %v495
        %v931 = vpop.f32.mrf.mxu0
        %v932 = vadd.f32 %v861, %v931
        %933 = vmatmul.f32.gmra.mxu0 %v498
        %v934 = vpop.f32.mrf.mxu0
        %v935 = vadd.f32 %v864, %v934
        %936 = vmatmul.f32.gmra.mxu0 %v501
        %v937 = vpop.f32.mrf.mxu0
        %v938 = vadd.f32 %v867, %v937
        %939 = vmatmul.f32.gmra.mxu0 %v504
        %v940 = vpop.f32.mrf.mxu0
        %v941 = vadd.f32 %v870, %v940
        %942 = vmatmul.f32.gmra.mxu0 %v507
        %v943 = vpop.f32.mrf.mxu0
        %v944 = vadd.f32 %v873, %v943
        %945 = vmatmul.f32.gmra.mxu0 %v510
        %v946 = vpop.f32.mrf.mxu0
        %v947 = vadd.f32 %v876, %v946
        %948 = vmatmul.f32.gmra.mxu0 %v513
        %v949 = vpop.f32.mrf.mxu0
        %v950 = vadd.f32 %v879, %v949
        %951 = vdwg.mxu0
        %952 = vmatpush.msra.mxu0 %v547
        %953 = vmatpush.msra.mxu0 %v546
        %954 = vmatpush.msra.mxu0 %v545
        %955 = vmatpush.msra.mxu0 %v544
        %956 = vmatpush.msra.mxu0 %v543
        %957 = vmatpush.msra.mxu0 %v542
        %958 = vmatpush.msra.mxu0 %v541
        %959 = vmatpush.msra.mxu0 %v540
        %960 = vmatpush.msra.mxu0 %v539
        %961 = vmatpush.msra.mxu0 %v538
        %962 = vmatpush.msra.mxu0 %v537
        %963 = vmatpush.msra.mxu0 %v536
        %964 = vmatpush.msra.mxu0 %v535
        %965 = vmatpush.msra.mxu0 %v534
        %966 = vmatpush.msra.mxu0 %v533
        %967 = vmatpush.msra.mxu0 %v532
        %968 = vmatmul.f32.gmra.mxu0 %v463
        %v969 = vpop.f32.mrf.mxu0
        %v970 = vadd.f32 %v899, %v969
        %971 = vmatmul.f32.gmra.mxu0 %v466
        %v972 = vpop.f32.mrf.mxu0
        %v973 = vadd.f32 %v902, %v972
        %974 = vmatmul.f32.gmra.mxu0 %v469
        %v975 = vpop.f32.mrf.mxu0
        %v976 = vadd.f32 %v905, %v975
        %977 = vmatmul.f32.gmra.mxu0 %v472
        %v978 = vpop.f32.mrf.mxu0
        %v979 = vadd.f32 %v908, %v978
        %980 = vmatmul.f32.gmra.mxu0 %v475
        %v981 = vpop.f32.mrf.mxu0
        %v982 = vadd.f32 %v911, %v981
        %983 = vmatmul.f32.gmra.mxu0 %v478
        %v984 = vpop.f32.mrf.mxu0
        %v985 = vadd.f32 %v914, %v984
        %986 = vmatmul.f32.gmra.mxu0 %v481
        %v987 = vpop.f32.mrf.mxu0
        %v988 = vadd.f32 %v917, %v987
        %989 = vmatmul.f32.gmra.mxu0 %v484
        %v990 = vpop.f32.mrf.mxu0
        %v991 = vadd.f32 %v920, %v990
        %992 = vmatmul.f32.gmra.mxu0 %v487
        %v993 = vpop.f32.mrf.mxu0
        %v994 = vadd.f32 %v923, %v993
        %995 = vmatmul.f32.gmra.mxu0 %v490
        %v996 = vpop.f32.mrf.mxu0
        %v997 = vadd.f32 %v926, %v996
        %998 = vmatmul.f32.gmra.mxu0 %v493
        %v999 = vpop.f32.mrf.mxu0
        %v1000 = vadd.f32 %v929, %v999
        %1001 = vmatmul.f32.gmra.mxu0 %v496
        %v1002 = vpop.f32.mrf.mxu0
        %v1003 = vadd.f32 %v932, %v1002
        %1004 = vmatmul.f32.gmra.mxu0 %v499
        %v1005 = vpop.f32.mrf.mxu0
        %v1006 = vadd.f32 %v935, %v1005
        %1007 = vmatmul.f32.gmra.mxu0 %v502
        %v1008 = vpop.f32.mrf.mxu0
        %v1009 = vadd.f32 %v938, %v1008
        %1010 = vmatmul.f32.gmra.mxu0 %v505
        %v1011 = vpop.f32.mrf.mxu0
        %v1012 = vadd.f32 %v941, %v1011
        %1013 = vmatmul.f32.gmra.mxu0 %v508
        %v1014 = vpop.f32.mrf.mxu0
        %v1015 = vadd.f32 %v944, %v1014
        %1016 = vmatmul.f32.gmra.mxu0 %v511
        %v1017 = vpop.f32.mrf.mxu0
        %v1018 = vadd.f32 %v947, %v1017
        %1019 = vmatmul.f32.gmra.mxu0 %v514
        %v1020 = vpop.f32.mrf.mxu0
        %v1021 = vadd.f32 %v950, %v1020
        %1022 = vdwg.mxu0
        %1023 = vmatpush.msra.mxu0 %v563
        %1024 = vmatpush.msra.mxu0 %v562
        %1025 = vmatpush.msra.mxu0 %v561
        %1026 = vmatpush.msra.mxu0 %v560
        %1027 = vmatpush.msra.mxu0 %v559
        %1028 = vmatpush.msra.mxu0 %v558
        %1029 = vmatpush.msra.mxu0 %v557
        %1030 = vmatpush.msra.mxu0 %v556
        %1031 = vmatpush.msra.mxu0 %v555
        %1032 = vmatpush.msra.mxu0 %v554
        %1033 = vmatpush.msra.mxu0 %v553
        %1034 = vmatpush.msra.mxu0 %v552
        %1035 = vmatpush.msra.mxu0 %v551
        %1036 = vmatpush.msra.mxu0 %v550
        %1037 = vmatpush.msra.mxu0 %v549
        %1038 = vmatpush.msra.mxu0 %v548
        %1039 = vmatmul.f32.gmra.mxu0 %v464
        %v1040 = vpop.f32.mrf.mxu0
        %v1041 = vadd.f32 %v970, %v1040
        %1042 = vmatmul.f32.gmra.mxu0 %v467
        %v1043 = vpop.f32.mrf.mxu0
        %v1044 = vadd.f32 %v973, %v1043
        %1045 = vmatmul.f32.gmra.mxu0 %v470
        %v1046 = vpop.f32.mrf.mxu0
        %v1047 = vadd.f32 %v976, %v1046
        %1048 = vmatmul.f32.gmra.mxu0 %v473
        %v1049 = vpop.f32.mrf.mxu0
        %v1050 = vadd.f32 %v979, %v1049
        %1051 = vmatmul.f32.gmra.mxu0 %v476
        %v1052 = vpop.f32.mrf.mxu0
        %v1053 = vadd.f32 %v982, %v1052
        %1054 = vmatmul.f32.gmra.mxu0 %v479
        %v1055 = vpop.f32.mrf.mxu0
        %v1056 = vadd.f32 %v985, %v1055
        %1057 = vmatmul.f32.gmra.mxu0 %v482
        %v1058 = vpop.f32.mrf.mxu0
        %v1059 = vadd.f32 %v988, %v1058
        %1060 = vmatmul.f32.gmra.mxu0 %v485
        %v1061 = vpop.f32.mrf.mxu0
        %v1062 = vadd.f32 %v991, %v1061
        %1063 = vmatmul.f32.gmra.mxu0 %v488
        %v1064 = vpop.f32.mrf.mxu0
        %v1065 = vadd.f32 %v994, %v1064
        %1066 = vmatmul.f32.gmra.mxu0 %v491
        %v1067 = vpop.f32.mrf.mxu0
        %v1068 = vadd.f32 %v997, %v1067
        %1069 = vmatmul.f32.gmra.mxu0 %v494
        %v1070 = vpop.f32.mrf.mxu0
        %v1071 = vadd.f32 %v1000, %v1070
        %1072 = vmatmul.f32.gmra.mxu0 %v497
        %v1073 = vpop.f32.mrf.mxu0
        %v1074 = vadd.f32 %v1003, %v1073
        %1075 = vmatmul.f32.gmra.mxu0 %v500
        %v1076 = vpop.f32.mrf.mxu0
        %v1077 = vadd.f32 %v1006, %v1076
        %1078 = vmatmul.f32.gmra.mxu0 %v503
        %v1079 = vpop.f32.mrf.mxu0
        %v1080 = vadd.f32 %v1009, %v1079
        %1081 = vmatmul.f32.gmra.mxu0 %v506
        %v1082 = vpop.f32.mrf.mxu0
        %v1083 = vadd.f32 %v1012, %v1082
        %1084 = vmatmul.f32.gmra.mxu0 %v509
        %v1085 = vpop.f32.mrf.mxu0
        %v1086 = vadd.f32 %v1015, %v1085
        %1087 = vmatmul.f32.gmra.mxu0 %v512
        %v1088 = vpop.f32.mrf.mxu0
        %v1089 = vadd.f32 %v1018, %v1088
        %1090 = vmatmul.f32.gmra.mxu0 %v515
        %v1091 = vpop.f32.mrf.mxu0
        %v1092 = vadd.f32 %v1021, %v1091
        %1093 = vdwg.mxu0
        %s1094 = scalar_lea.vmem [#allocation3], 48
        %v1095 = vld [vmem:[%s1094] sm:$0xff]
        %v1096 = vld [vmem:[%s1094 + $0x8] sm:$0xff]
        %v1097 = vld [vmem:[%s1094 + $0x10] sm:$0xff]
        %v1098 = vld [vmem:[%s1094 + $0x18] sm:$0xff]
        %v1099 = vld [vmem:[%s1094 + $0x20] sm:$0xff]
        %v1100 = vld [vmem:[%s1094 + $0x28] sm:$0xff]
        %v1101 = vld [vmem:[%s1094 + $0x30] sm:$0xff]
        %v1102 = vld [vmem:[%s1094 + $0x38] sm:$0xff]
        %v1103 = vld [vmem:[%s1094 + $0x40] sm:$0xff]
        %v1104 = vld [vmem:[%s1094 + $0x48] sm:$0xff]
        %v1105 = vld [vmem:[%s1094 + $0x50] sm:$0xff]
        %v1106 = vld [vmem:[%s1094 + $0x58] sm:$0xff]
        %v1107 = vld [vmem:[%s1094 + $0x60] sm:$0xff]
        %v1108 = vld [vmem:[%s1094 + $0x68] sm:$0xff]
        %v1109 = vld [vmem:[%s1094 + $0x70] sm:$0xff]
        %v1110 = vld [vmem:[%s1094 + $0x78] sm:$0xff]
        %v1111 = vld [vmem:[%s1094 + $0x80] sm:$0xff]
        %v1112 = vld [vmem:[%s1094 + $0x88] sm:$0xff]
        %v1113 = vld [vmem:[%s1094 + $0x90] sm:$0xff]
        %v1114 = vld [vmem:[%s1094 + $0x98] sm:$0xff]
        %v1115 = vld [vmem:[%s1094 + $0xa0] sm:$0xff]
        %v1116 = vld [vmem:[%s1094 + $0xa8] sm:$0xff]
        %v1117 = vld [vmem:[%s1094 + $0xb0] sm:$0xff]
        %v1118 = vld [vmem:[%s1094 + $0xb8] sm:$0xff]
        %v1119 = vld [vmem:[%s1094 + $0xc0] sm:$0xff]
        %v1120 = vld [vmem:[%s1094 + $0xc8] sm:$0xff]
        %v1121 = vld [vmem:[%s1094 + $0xd0] sm:$0xff]
        %v1122 = vld [vmem:[%s1094 + $0xd8] sm:$0xff]
        %v1123 = vld [vmem:[%s1094 + $0xe0] sm:$0xff]
        %v1124 = vld [vmem:[%s1094 + $0xe8] sm:$0xff]
        %v1125 = vld [vmem:[%s1094 + $0xf0] sm:$0xff]
        %v1126 = vld [vmem:[%s1094 + $0xf8] sm:$0xff]
        %v1127 = vld [vmem:[%s1094 + $0x100] sm:$0xff]
        %v1128 = vld [vmem:[%s1094 + $0x108] sm:$0xff]
        %v1129 = vld [vmem:[%s1094 + $0x110] sm:$0xff]
        %v1130 = vld [vmem:[%s1094 + $0x118] sm:$0xff]
        %v1131 = vld [vmem:[%s1094 + $0x120] sm:$0xff]
        %v1132 = vld [vmem:[%s1094 + $0x128] sm:$0xff]
        %v1133 = vld [vmem:[%s1094 + $0x130] sm:$0xff]
        %v1134 = vld [vmem:[%s1094 + $0x138] sm:$0xff]
        %v1135 = vld [vmem:[%s1094 + $0x140] sm:$0xff]
        %v1136 = vld [vmem:[%s1094 + $0x148] sm:$0xff]
        %v1137 = vld [vmem:[%s1094 + $0x150] sm:$0xff]
        %v1138 = vld [vmem:[%s1094 + $0x158] sm:$0xff]
        %v1139 = vld [vmem:[%s1094 + $0x160] sm:$0xff]
        %v1140 = vld [vmem:[%s1094 + $0x168] sm:$0xff]
        %v1141 = vld [vmem:[%s1094 + $0x170] sm:$0xff]
        %v1142 = vld [vmem:[%s1094 + $0x178] sm:$0xff]
        %v1143 = vld [vmem:[%s1094 + $0x180] sm:$0xff]
        %v1144 = vld [vmem:[%s1094 + $0x188] sm:$0xff]
        %v1145 = vld [vmem:[%s1094 + $0x190] sm:$0xff]
        %v1146 = vld [vmem:[%s1094 + $0x198] sm:$0xff]
        %v1147 = vld [vmem:[%s1094 + $0x1a0] sm:$0xff]
        %v1148 = vld [vmem:[%s1094 + $0x1a8] sm:$0xff]
        %s1149 = scalar_lea.vmem [#allocation6], 768
        %v1150 = vld [vmem:[%s1149] sm:$0xff]
        %v1151 = vld [vmem:[%s1149 + $0x8] sm:$0xff]
        %v1152 = vld [vmem:[%s1149 + $0x10] sm:$0xff]
        %v1153 = vld [vmem:[%s1149 + $0x18] sm:$0xff]
        %v1154 = vld [vmem:[%s1149 + $0x20] sm:$0xff]
        %v1155 = vld [vmem:[%s1149 + $0x28] sm:$0xff]
        %v1156 = vld [vmem:[%s1149 + $0x30] sm:$0xff]
        %v1157 = vld [vmem:[%s1149 + $0x38] sm:$0xff]
        %v1158 = vld [vmem:[%s1149 + $0x40] sm:$0xff]
        %v1159 = vld [vmem:[%s1149 + $0x48] sm:$0xff]
        %v1160 = vld [vmem:[%s1149 + $0x50] sm:$0xff]
        %v1161 = vld [vmem:[%s1149 + $0x58] sm:$0xff]
        %v1162 = vld [vmem:[%s1149 + $0x60] sm:$0xff]
        %v1163 = vld [vmem:[%s1149 + $0x68] sm:$0xff]
        %v1164 = vld [vmem:[%s1149 + $0x70] sm:$0xff]
        %v1165 = vld [vmem:[%s1149 + $0x78] sm:$0xff]
        %v1166 = vld [vmem:[%s1149 + $0x80] sm:$0xff]
        %v1167 = vld [vmem:[%s1149 + $0x88] sm:$0xff]
        %v1168 = vld [vmem:[%s1149 + $0x90] sm:$0xff]
        %v1169 = vld [vmem:[%s1149 + $0x98] sm:$0xff]
        %v1170 = vld [vmem:[%s1149 + $0xa0] sm:$0xff]
        %v1171 = vld [vmem:[%s1149 + $0xa8] sm:$0xff]
        %v1172 = vld [vmem:[%s1149 + $0xb0] sm:$0xff]
        %v1173 = vld [vmem:[%s1149 + $0xb8] sm:$0xff]
        %v1174 = vld [vmem:[%s1149 + $0xc0] sm:$0xff]
        %v1175 = vld [vmem:[%s1149 + $0xc8] sm:$0xff]
        %v1176 = vld [vmem:[%s1149 + $0xd0] sm:$0xff]
        %v1177 = vld [vmem:[%s1149 + $0xd8] sm:$0xff]
        %v1178 = vld [vmem:[%s1149 + $0xe0] sm:$0xff]
        %v1179 = vld [vmem:[%s1149 + $0xe8] sm:$0xff]
        %v1180 = vld [vmem:[%s1149 + $0xf0] sm:$0xff]
        %v1181 = vld [vmem:[%s1149 + $0xf8] sm:$0xff]
        %v1182 = vld [vmem:[%s1149 + $0x100] sm:$0xff]
        %v1183 = vld [vmem:[%s1149 + $0x108] sm:$0xff]
        %v1184 = vld [vmem:[%s1149 + $0x110] sm:$0xff]
        %v1185 = vld [vmem:[%s1149 + $0x118] sm:$0xff]
        %v1186 = vld [vmem:[%s1149 + $0x120] sm:$0xff]
        %v1187 = vld [vmem:[%s1149 + $0x128] sm:$0xff]
        %v1188 = vld [vmem:[%s1149 + $0x130] sm:$0xff]
        %v1189 = vld [vmem:[%s1149 + $0x138] sm:$0xff]
        %v1190 = vld [vmem:[%s1149 + $0x140] sm:$0xff]
        %v1191 = vld [vmem:[%s1149 + $0x148] sm:$0xff]
        %v1192 = vld [vmem:[%s1149 + $0x150] sm:$0xff]
        %v1193 = vld [vmem:[%s1149 + $0x158] sm:$0xff]
        %v1194 = vld [vmem:[%s1149 + $0x160] sm:$0xff]
        %v1195 = vld [vmem:[%s1149 + $0x168] sm:$0xff]
        %v1196 = vld [vmem:[%s1149 + $0x170] sm:$0xff]
        %v1197 = vld [vmem:[%s1149 + $0x178] sm:$0xff]
        %1198 = vmatpush.msra.mxu0 %v1165
        %1199 = vmatpush.msra.mxu0 %v1164
        %1200 = vmatpush.msra.mxu0 %v1163
        %1201 = vmatpush.msra.mxu0 %v1162
        %1202 = vmatpush.msra.mxu0 %v1161
        %1203 = vmatpush.msra.mxu0 %v1160
        %1204 = vmatpush.msra.mxu0 %v1159
        %1205 = vmatpush.msra.mxu0 %v1158
        %1206 = vmatpush.msra.mxu0 %v1157
        %1207 = vmatpush.msra.mxu0 %v1156
        %1208 = vmatpush.msra.mxu0 %v1155
        %1209 = vmatpush.msra.mxu0 %v1154
        %1210 = vmatpush.msra.mxu0 %v1153
        %1211 = vmatpush.msra.mxu0 %v1152
        %1212 = vmatpush.msra.mxu0 %v1151
        %1213 = vmatpush.msra.mxu0 %v1150
        %1214 = vmatmul.f32.gmra.mxu0 %v1095
        %v1215 = vpop.f32.mrf.mxu0
        %v1216 = vadd.f32 0.0, %v1215
        %1217 = vmatmul.f32.gmra.mxu0 %v1098
        %v1218 = vpop.f32.mrf.mxu0
        %v1219 = vadd.f32 0.0, %v1218
        %1220 = vmatmul.f32.gmra.mxu0 %v1101
        %v1221 = vpop.f32.mrf.mxu0
        %v1222 = vadd.f32 0.0, %v1221
        %1223 = vmatmul.f32.gmra.mxu0 %v1104
        %v1224 = vpop.f32.mrf.mxu0
        %v1225 = vadd.f32 0.0, %v1224
        %1226 = vmatmul.f32.gmra.mxu0 %v1107
        %v1227 = vpop.f32.mrf.mxu0
        %v1228 = vadd.f32 0.0, %v1227
        %1229 = vmatmul.f32.gmra.mxu0 %v1110
        %v1230 = vpop.f32.mrf.mxu0
        %v1231 = vadd.f32 0.0, %v1230
        %1232 = vmatmul.f32.gmra.mxu0 %v1113
        %v1233 = vpop.f32.mrf.mxu0
        %v1234 = vadd.f32 0.0, %v1233
        %1235 = vmatmul.f32.gmra.mxu0 %v1116
        %v1236 = vpop.f32.mrf.mxu0
        %v1237 = vadd.f32 0.0, %v1236
        %1238 = vmatmul.f32.gmra.mxu0 %v1119
        %v1239 = vpop.f32.mrf.mxu0
        %v1240 = vadd.f32 0.0, %v1239
        %1241 = vmatmul.f32.gmra.mxu0 %v1122
        %v1242 = vpop.f32.mrf.mxu0
        %v1243 = vadd.f32 0.0, %v1242
        %1244 = vmatmul.f32.gmra.mxu0 %v1125
        %v1245 = vpop.f32.mrf.mxu0
        %v1246 = vadd.f32 0.0, %v1245
        %1247 = vmatmul.f32.gmra.mxu0 %v1128
        %v1248 = vpop.f32.mrf.mxu0
        %v1249 = vadd.f32 0.0, %v1248
        %1250 = vmatmul.f32.gmra.mxu0 %v1131
        %v1251 = vpop.f32.mrf.mxu0
        %v1252 = vadd.f32 0.0, %v1251
        %1253 = vmatmul.f32.gmra.mxu0 %v1134
        %v1254 = vpop.f32.mrf.mxu0
        %v1255 = vadd.f32 0.0, %v1254
        %1256 = vmatmul.f32.gmra.mxu0 %v1137
        %v1257 = vpop.f32.mrf.mxu0
        %v1258 = vadd.f32 0.0, %v1257
        %1259 = vmatmul.f32.gmra.mxu0 %v1140
        %v1260 = vpop.f32.mrf.mxu0
        %v1261 = vadd.f32 0.0, %v1260
        %1262 = vmatmul.f32.gmra.mxu0 %v1143
        %v1263 = vpop.f32.mrf.mxu0
        %v1264 = vadd.f32 0.0, %v1263
        %1265 = vmatmul.f32.gmra.mxu0 %v1146
        %v1266 = vpop.f32.mrf.mxu0
        %v1267 = vadd.f32 0.0, %v1266
        %1268 = vdwg.mxu0
        %1269 = vmatpush.msra.mxu0 %v1181
        %1270 = vmatpush.msra.mxu0 %v1180
        %1271 = vmatpush.msra.mxu0 %v1179
        %1272 = vmatpush.msra.mxu0 %v1178
        %1273 = vmatpush.msra.mxu0 %v1177
        %1274 = vmatpush.msra.mxu0 %v1176
        %1275 = vmatpush.msra.mxu0 %v1175
        %1276 = vmatpush.msra.mxu0 %v1174
        %1277 = vmatpush.msra.mxu0 %v1173
        %1278 = vmatpush.msra.mxu0 %v1172
        %1279 = vmatpush.msra.mxu0 %v1171
        %1280 = vmatpush.msra.mxu0 %v1170
        %1281 = vmatpush.msra.mxu0 %v1169
        %1282 = vmatpush.msra.mxu0 %v1168
        %1283 = vmatpush.msra.mxu0 %v1167
        %1284 = vmatpush.msra.mxu0 %v1166
        %1285 = vmatmul.f32.gmra.mxu0 %v1096
        %v1286 = vpop.f32.mrf.mxu0
        %v1287 = vadd.f32 %v1216, %v1286
        %1288 = vmatmul.f32.gmra.mxu0 %v1099
        %v1289 = vpop.f32.mrf.mxu0
        %v1290 = vadd.f32 %v1219, %v1289
        %1291 = vmatmul.f32.gmra.mxu0 %v1102
        %v1292 = vpop.f32.mrf.mxu0
        %v1293 = vadd.f32 %v1222, %v1292
        %1294 = vmatmul.f32.gmra.mxu0 %v1105
        %v1295 = vpop.f32.mrf.mxu0
        %v1296 = vadd.f32 %v1225, %v1295
        %1297 = vmatmul.f32.gmra.mxu0 %v1108
        %v1298 = vpop.f32.mrf.mxu0
        %v1299 = vadd.f32 %v1228, %v1298
        %1300 = vmatmul.f32.gmra.mxu0 %v1111
        %v1301 = vpop.f32.mrf.mxu0
        %v1302 = vadd.f32 %v1231, %v1301
        %1303 = vmatmul.f32.gmra.mxu0 %v1114
        %v1304 = vpop.f32.mrf.mxu0
        %v1305 = vadd.f32 %v1234, %v1304
        %1306 = vmatmul.f32.gmra.mxu0 %v1117
        %v1307 = vpop.f32.mrf.mxu0
        %v1308 = vadd.f32 %v1237, %v1307
        %1309 = vmatmul.f32.gmra.mxu0 %v1120
        %v1310 = vpop.f32.mrf.mxu0
        %v1311 = vadd.f32 %v1240, %v1310
        %1312 = vmatmul.f32.gmra.mxu0 %v1123
        %v1313 = vpop.f32.mrf.mxu0
        %v1314 = vadd.f32 %v1243, %v1313
        %1315 = vmatmul.f32.gmra.mxu0 %v1126
        %v1316 = vpop.f32.mrf.mxu0
        %v1317 = vadd.f32 %v1246, %v1316
        %1318 = vmatmul.f32.gmra.mxu0 %v1129
        %v1319 = vpop.f32.mrf.mxu0
        %v1320 = vadd.f32 %v1249, %v1319
        %1321 = vmatmul.f32.gmra.mxu0 %v1132
        %v1322 = vpop.f32.mrf.mxu0
        %v1323 = vadd.f32 %v1252, %v1322
        %1324 = vmatmul.f32.gmra.mxu0 %v1135
        %v1325 = vpop.f32.mrf.mxu0
        %v1326 = vadd.f32 %v1255, %v1325
        %1327 = vmatmul.f32.gmra.mxu0 %v1138
        %v1328 = vpop.f32.mrf.mxu0
        %v1329 = vadd.f32 %v1258, %v1328
        %1330 = vmatmul.f32.gmra.mxu0 %v1141
        %v1331 = vpop.f32.mrf.mxu0
        %v1332 = vadd.f32 %v1261, %v1331
        %1333 = vmatmul.f32.gmra.mxu0 %v1144
        %v1334 = vpop.f32.mrf.mxu0
        %v1335 = vadd.f32 %v1264, %v1334
        %1336 = vmatmul.f32.gmra.mxu0 %v1147
        %v1337 = vpop.f32.mrf.mxu0
        %v1338 = vadd.f32 %v1267, %v1337
        %1339 = vdwg.mxu0
        %1340 = vmatpush.msra.mxu0 %v1197
        %1341 = vmatpush.msra.mxu0 %v1196
        %1342 = vmatpush.msra.mxu0 %v1195
        %1343 = vmatpush.msra.mxu0 %v1194
        %1344 = vmatpush.msra.mxu0 %v1193
        %1345 = vmatpush.msra.mxu0 %v1192
        %1346 = vmatpush.msra.mxu0 %v1191
        %1347 = vmatpush.msra.mxu0 %v1190
        %1348 = vmatpush.msra.mxu0 %v1189
        %1349 = vmatpush.msra.mxu0 %v1188
        %1350 = vmatpush.msra.mxu0 %v1187
        %1351 = vmatpush.msra.mxu0 %v1186
        %1352 = vmatpush.msra.mxu0 %v1185
        %1353 = vmatpush.msra.mxu0 %v1184
        %1354 = vmatpush.msra.mxu0 %v1183
        %1355 = vmatpush.msra.mxu0 %v1182
        %1356 = vmatmul.f32.gmra.mxu0 %v1097
        %v1357 = vpop.f32.mrf.mxu0
        %v1358 = vadd.f32 %v1287, %v1357
        %1359 = vmatmul.f32.gmra.mxu0 %v1100
        %v1360 = vpop.f32.mrf.mxu0
        %v1361 = vadd.f32 %v1290, %v1360
        %1362 = vmatmul.f32.gmra.mxu0 %v1103
        %v1363 = vpop.f32.mrf.mxu0
        %v1364 = vadd.f32 %v1293, %v1363
        %1365 = vmatmul.f32.gmra.mxu0 %v1106
        %v1366 = vpop.f32.mrf.mxu0
        %v1367 = vadd.f32 %v1296, %v1366
        %1368 = vmatmul.f32.gmra.mxu0 %v1109
        %v1369 = vpop.f32.mrf.mxu0
        %v1370 = vadd.f32 %v1299, %v1369
        %1371 = vmatmul.f32.gmra.mxu0 %v1112
        %v1372 = vpop.f32.mrf.mxu0
        %v1373 = vadd.f32 %v1302, %v1372
        %1374 = vmatmul.f32.gmra.mxu0 %v1115
        %v1375 = vpop.f32.mrf.mxu0
        %v1376 = vadd.f32 %v1305, %v1375
        %1377 = vmatmul.f32.gmra.mxu0 %v1118
        %v1378 = vpop.f32.mrf.mxu0
        %v1379 = vadd.f32 %v1308, %v1378
        %1380 = vmatmul.f32.gmra.mxu0 %v1121
        %v1381 = vpop.f32.mrf.mxu0
        %v1382 = vadd.f32 %v1311, %v1381
        %1383 = vmatmul.f32.gmra.mxu0 %v1124
        %v1384 = vpop.f32.mrf.mxu0
        %v1385 = vadd.f32 %v1314, %v1384
        %1386 = vmatmul.f32.gmra.mxu0 %v1127
        %v1387 = vpop.f32.mrf.mxu0
        %v1388 = vadd.f32 %v1317, %v1387
        %1389 = vmatmul.f32.gmra.mxu0 %v1130
        %v1390 = vpop.f32.mrf.mxu0
        %v1391 = vadd.f32 %v1320, %v1390
        %1392 = vmatmul.f32.gmra.mxu0 %v1133
        %v1393 = vpop.f32.mrf.mxu0
        %v1394 = vadd.f32 %v1323, %v1393
        %1395 = vmatmul.f32.gmra.mxu0 %v1136
        %v1396 = vpop.f32.mrf.mxu0
        %v1397 = vadd.f32 %v1326, %v1396
        %1398 = vmatmul.f32.gmra.mxu0 %v1139
        %v1399 = vpop.f32.mrf.mxu0
        %v1400 = vadd.f32 %v1329, %v1399
        %1401 = vmatmul.f32.gmra.mxu0 %v1142
        %v1402 = vpop.f32.mrf.mxu0
        %v1403 = vadd.f32 %v1332, %v1402
        %1404 = vmatmul.f32.gmra.mxu0 %v1145
        %v1405 = vpop.f32.mrf.mxu0
        %v1406 = vadd.f32 %v1335, %v1405
        %1407 = vmatmul.f32.gmra.mxu0 %v1148
        %v1408 = vpop.f32.mrf.mxu0
        %v1409 = vadd.f32 %v1338, %v1408
        %1410 = vdwg.mxu0
        %v1411 = vadd.f32 %v1041, %v1358
        %v1412 = vadd.f32 %v1044, %v1361
        %v1413 = vadd.f32 %v1047, %v1364
        %v1414 = vadd.f32 %v1050, %v1367
        %v1415 = vadd.f32 %v1053, %v1370
        %v1416 = vadd.f32 %v1056, %v1373
        %v1417 = vadd.f32 %v1059, %v1376
        %v1418 = vadd.f32 %v1062, %v1379
        %v1419 = vadd.f32 %v1065, %v1382
        %v1420 = vadd.f32 %v1068, %v1385
        %v1421 = vadd.f32 %v1071, %v1388
        %v1422 = vadd.f32 %v1074, %v1391
        %v1423 = vadd.f32 %v1077, %v1394
        %v1424 = vadd.f32 %v1080, %v1397
        %v1425 = vadd.f32 %v1083, %v1400
        %v1426 = vadd.f32 %v1086, %v1403
        %v1427 = vadd.f32 %v1089, %v1406
        %v1428 = vadd.f32 %v1092, %v1409
        %v1429 = vld [vmem:[%s2] sm:$0x1]
        %v1431 = vperm.slane %v1429, 0
        %v1433 = vadd.f32 %v1411, %v1431
        %v1434 = vadd.f32 %v1412, %v1431
        %v1435 = vadd.f32 %v1413, %v1431
        %v1436 = vadd.f32 %v1414, %v1431
        %v1437 = vadd.f32 %v1415, %v1431
        %v1438 = vadd.f32 %v1416, %v1431
        %v1439 = vadd.f32 %v1417, %v1431
        %v1440 = vadd.f32 %v1418, %v1431
        %v1441 = vadd.f32 %v1419, %v1431
        %v1442 = vadd.f32 %v1420, %v1431
        %v1443 = vadd.f32 %v1421, %v1431
        %v1444 = vadd.f32 %v1422, %v1431
        %v1445 = vadd.f32 %v1423, %v1431
        %v1446 = vadd.f32 %v1424, %v1431
        %v1447 = vadd.f32 %v1425, %v1431
        %v1448 = vadd.f32 %v1426, %v1431
        %v1449 = vadd.f32 %v1427, %v1431
        %v1450 = vadd.f32 %v1428, %v1431
        %v1451 = vmax.f32 %v1433, 0.0
        %v1452 = vmax.f32 %v1434, 0.0
        %v1453 = vmax.f32 %v1435, 0.0
        %v1454 = vmax.f32 %v1436, 0.0
        %v1455 = vmax.f32 %v1437, 0.0
        %v1456 = vmax.f32 %v1438, 0.0
        %v1457 = vmax.f32 %v1439, 0.0
        %v1458 = vmax.f32 %v1440, 0.0
        %v1459 = vmax.f32 %v1441, 0.0
        %v1460 = vmax.f32 %v1442, 0.0
        %v1461 = vmax.f32 %v1443, 0.0
        %v1462 = vmax.f32 %v1444, 0.0
        %v1463 = vmax.f32 %v1445, 0.0
        %v1464 = vmax.f32 %v1446, 0.0
        %v1465 = vmax.f32 %v1447, 0.0
        %v1466 = vmax.f32 %v1448, 0.0
        %v1467 = vmax.f32 %v1449, 0.0
        %v1468 = vmax.f32 %v1450, 0.0
        %1469 = vst [vmem:[#allocation4 + $0x8] sm:$0xff] %v1451
        %1470 = vst [vmem:[#allocation4 + $0x20] sm:$0xff] %v1452
        %1471 = vst [vmem:[#allocation4 + $0x38] sm:$0xff] %v1453
        %1472 = vst [vmem:[#allocation4 + $0x50] sm:$0xff] %v1454
        %1473 = vst [vmem:[#allocation4 + $0x68] sm:$0xff] %v1455
        %1474 = vst [vmem:[#allocation4 + $0x80] sm:$0xff] %v1456
        %1475 = vst [vmem:[#allocation4 + $0x98] sm:$0xff] %v1457
        %1476 = vst [vmem:[#allocation4 + $0xb0] sm:$0xff] %v1458
        %1477 = vst [vmem:[#allocation4 + $0xc8] sm:$0xff] %v1459
        %1478 = vst [vmem:[#allocation4 + $0xe0] sm:$0xff] %v1460
        %1479 = vst [vmem:[#allocation4 + $0xf8] sm:$0xff] %v1461
        %1480 = vst [vmem:[#allocation4 + $0x110] sm:$0xff] %v1462
        %1481 = vst [vmem:[#allocation4 + $0x128] sm:$0xff] %v1463
        %1482 = vst [vmem:[#allocation4 + $0x140] sm:$0xff] %v1464
        %1483 = vst [vmem:[#allocation4 + $0x158] sm:$0xff] %v1465
        %1484 = vst [vmem:[#allocation4 + $0x170] sm:$0xff] %v1466
        %1485 = vst [vmem:[#allocation4 + $0x188] sm:$0xff] %v1467
        %1486 = vst [vmem:[#allocation4 + $0x1a0] sm:$0xff] %v1468
        %v1487 = vrot.slane %v1451, 7
        %v1488 = vrot.slane %v1452, 7
        %v1489 = vrot.slane %v1453, 7
        %v1490 = vrot.slane %v1454, 7
        %v1491 = vrot.slane %v1455, 7
        %v1492 = vrot.slane %v1456, 7
        %v1493 = vrot.slane %v1457, 7
        %v1494 = vrot.slane %v1458, 7
        %v1495 = vrot.slane %v1459, 7
        %v1496 = vrot.slane %v1460, 7
        %v1497 = vrot.slane %v1461, 7
        %v1498 = vrot.slane %v1462, 7
        %v1499 = vrot.slane %v1463, 7
        %v1500 = vrot.slane %v1464, 7
        %v1501 = vrot.slane %v1465, 7
        %v1502 = vrot.slane %v1466, 7
        %v1503 = vrot.slane %v1467, 7
        %v1504 = vrot.slane %v1468, 7
        %v1505 = vsel %vm320, %v1503, %v1504
        %v1506 = vsel %vm320, %v1502, %v1503
        %v1507 = vsel %vm320, %v1501, %v1502
        %v1508 = vsel %vm320, %v1500, %v1501
        %v1509 = vsel %vm320, %v1499, %v1500
        %v1510 = vsel %vm320, %v1498, %v1499
        %v1511 = vsel %vm320, %v1497, %v1498
        %v1512 = vsel %vm320, %v1496, %v1497
        %v1513 = vsel %vm320, %v1495, %v1496
        %v1514 = vsel %vm320, %v1494, %v1495
        %v1515 = vsel %vm320, %v1493, %v1494
        %v1516 = vsel %vm320, %v1492, %v1493
        %v1517 = vsel %vm320, %v1491, %v1492
        %v1518 = vsel %vm320, %v1490, %v1491
        %v1519 = vsel %vm320, %v1489, %v1490
        %v1520 = vsel %vm320, %v1488, %v1489
        %v1521 = vsel %vm320, %v1487, %v1488
        %v1522 = vsel %vm320, %v1504, %v1487
        %1523 = vst [vmem:[#allocation4] sm:$0xff] %v1522
        %1524 = vst [vmem:[#allocation4 + $0x18] sm:$0xff] %v1521
        %1525 = vst [vmem:[#allocation4 + $0x30] sm:$0xff] %v1520
        %1526 = vst [vmem:[#allocation4 + $0x48] sm:$0xff] %v1519
        %1527 = vst [vmem:[#allocation4 + $0x60] sm:$0xff] %v1518
        %1528 = vst [vmem:[#allocation4 + $0x78] sm:$0xff] %v1517
        %1529 = vst [vmem:[#allocation4 + $0x90] sm:$0xff] %v1516
        %1530 = vst [vmem:[#allocation4 + $0xa8] sm:$0xff] %v1515
        %1531 = vst [vmem:[#allocation4 + $0xc0] sm:$0xff] %v1514
        %1532 = vst [vmem:[#allocation4 + $0xd8] sm:$0xff] %v1513
        %1533 = vst [vmem:[#allocation4 + $0xf0] sm:$0xff] %v1512
        %1534 = vst [vmem:[#allocation4 + $0x108] sm:$0xff] %v1511
        %1535 = vst [vmem:[#allocation4 + $0x120] sm:$0xff] %v1510
        %1536 = vst [vmem:[#allocation4 + $0x138] sm:$0xff] %v1509
        %1537 = vst [vmem:[#allocation4 + $0x150] sm:$0xff] %v1508
        %1538 = vst [vmem:[#allocation4 + $0x168] sm:$0xff] %v1507
        %1539 = vst [vmem:[#allocation4 + $0x180] sm:$0xff] %v1506
        %1540 = vst [vmem:[#allocation4 + $0x198] sm:$0xff] %v1505
        %v1541 = vrot.slane %v1451, 1
        %v1542 = vrot.slane %v1452, 1
        %v1543 = vrot.slane %v1453, 1
        %v1544 = vrot.slane %v1454, 1
        %v1545 = vrot.slane %v1455, 1
        %v1546 = vrot.slane %v1456, 1
        %v1547 = vrot.slane %v1457, 1
        %v1548 = vrot.slane %v1458, 1
        %v1549 = vrot.slane %v1459, 1
        %v1550 = vrot.slane %v1460, 1
        %v1551 = vrot.slane %v1461, 1
        %v1552 = vrot.slane %v1462, 1
        %v1553 = vrot.slane %v1463, 1
        %v1554 = vrot.slane %v1464, 1
        %v1555 = vrot.slane %v1465, 1
        %v1556 = vrot.slane %v1466, 1
        %v1557 = vrot.slane %v1467, 1
        %v1558 = vrot.slane %v1468, 1
        %v1559 = vsel %vm381, %v1557, %v1558
        %v1560 = vsel %vm381, %v1556, %v1557
        %v1561 = vsel %vm381, %v1555, %v1556
        %v1562 = vsel %vm381, %v1554, %v1555
        %v1563 = vsel %vm381, %v1553, %v1554
        %v1564 = vsel %vm381, %v1552, %v1553
        %v1565 = vsel %vm381, %v1551, %v1552
        %v1566 = vsel %vm381, %v1550, %v1551
        %v1567 = vsel %vm381, %v1549, %v1550
        %v1568 = vsel %vm381, %v1548, %v1549
        %v1569 = vsel %vm381, %v1547, %v1548
        %v1570 = vsel %vm381, %v1546, %v1547
        %v1571 = vsel %vm381, %v1545, %v1546
        %v1572 = vsel %vm381, %v1544, %v1545
        %v1573 = vsel %vm381, %v1543, %v1544
        %v1574 = vsel %vm381, %v1542, %v1543
        %v1575 = vsel %vm381, %v1541, %v1542
        %v1576 = vsel %vm381, %v1558, %v1541
        %1577 = vst [vmem:[#allocation4 + $0x10] sm:$0xff] %v1575
        %1578 = vst [vmem:[#allocation4 + $0x28] sm:$0xff] %v1574
        %1579 = vst [vmem:[#allocation4 + $0x40] sm:$0xff] %v1573
        %1580 = vst [vmem:[#allocation4 + $0x58] sm:$0xff] %v1572
        %1581 = vst [vmem:[#allocation4 + $0x70] sm:$0xff] %v1571
        %1582 = vst [vmem:[#allocation4 + $0x88] sm:$0xff] %v1570
        %1583 = vst [vmem:[#allocation4 + $0xa0] sm:$0xff] %v1569
        %1584 = vst [vmem:[#allocation4 + $0xb8] sm:$0xff] %v1568
        %1585 = vst [vmem:[#allocation4 + $0xd0] sm:$0xff] %v1567
        %1586 = vst [vmem:[#allocation4 + $0xe8] sm:$0xff] %v1566
        %1587 = vst [vmem:[#allocation4 + $0x100] sm:$0xff] %v1565
        %1588 = vst [vmem:[#allocation4 + $0x118] sm:$0xff] %v1564
        %1589 = vst [vmem:[#allocation4 + $0x130] sm:$0xff] %v1563
        %1590 = vst [vmem:[#allocation4 + $0x148] sm:$0xff] %v1562
        %1591 = vst [vmem:[#allocation4 + $0x160] sm:$0xff] %v1561
        %1592 = vst [vmem:[#allocation4 + $0x178] sm:$0xff] %v1560
        %1593 = vst [vmem:[#allocation4 + $0x190] sm:$0xff] %v1559
        %1594 = vst [vmem:[#allocation4 + $0x1a8] sm:$0xff] %v1576
        %1595 = vst [vmem:[#allocation4] sm:$0x1] 0.0
        %1596 = vst [vmem:[#allocation4 + $0x18] sm:$0x1] 0.0
        %1597 = vst [vmem:[#allocation4 + $0x30] sm:$0x1] 0.0
        %1598 = vst [vmem:[#allocation4 + $0x48] sm:$0x1] 0.0
        %1599 = vst [vmem:[#allocation4 + $0x60] sm:$0x1] 0.0
        %1600 = vst [vmem:[#allocation4 + $0x78] sm:$0x1] 0.0
        %1601 = vst [vmem:[#allocation4 + $0x90] sm:$0x1] 0.0
        %1602 = vst [vmem:[#allocation4 + $0xa8] sm:$0x1] 0.0
        %1603 = vst [vmem:[#allocation4 + $0xc0] sm:$0x1] 0.0
        %1604 = vst [vmem:[#allocation4 + $0xd8] sm:$0x1] 0.0
        %1605 = vst [vmem:[#allocation4 + $0xf0] sm:$0x1] 0.0
        %1606 = vst [vmem:[#allocation4 + $0x108] sm:$0x1] 0.0
        %1607 = vst [vmem:[#allocation4 + $0x120] sm:$0x1] 0.0
        %1608 = vst [vmem:[#allocation4 + $0x138] sm:$0x1] 0.0
        %1609 = vst [vmem:[#allocation4 + $0x150] sm:$0x1] 0.0
        %1610 = vst [vmem:[#allocation4 + $0x168] sm:$0x1] 0.0
        %1611 = vst [vmem:[#allocation4 + $0x180] sm:$0x1] 0.0
        %1612 = vst [vmem:[#allocation4 + $0x198] sm:$0x1] 0.0
        %1613 = vst [vmem:[#allocation4 + $0x17] sm:$0x1] 0.0
        %1614 = vst [vmem:[#allocation4 + $0x2f] sm:$0x1] 0.0
        %1615 = vst [vmem:[#allocation4 + $0x47] sm:$0x1] 0.0
        %1616 = vst [vmem:[#allocation4 + $0x5f] sm:$0x1] 0.0
        %1617 = vst [vmem:[#allocation4 + $0x77] sm:$0x1] 0.0
        %1618 = vst [vmem:[#allocation4 + $0x8f] sm:$0x1] 0.0
        %1619 = vst [vmem:[#allocation4 + $0xa7] sm:$0x1] 0.0
        %1620 = vst [vmem:[#allocation4 + $0xbf] sm:$0x1] 0.0
        %1621 = vst [vmem:[#allocation4 + $0xd7] sm:$0x1] 0.0
        %1622 = vst [vmem:[#allocation4 + $0xef] sm:$0x1] 0.0
        %1623 = vst [vmem:[#allocation4 + $0x107] sm:$0x1] 0.0
        %1624 = vst [vmem:[#allocation4 + $0x11f] sm:$0x1] 0.0
        %1625 = vst [vmem:[#allocation4 + $0x137] sm:$0x1] 0.0
        %1626 = vst [vmem:[#allocation4 + $0x14f] sm:$0x1] 0.0
        %1627 = vst [vmem:[#allocation4 + $0x167] sm:$0x1] 0.0
        %1628 = vst [vmem:[#allocation4 + $0x17f] sm:$0x1] 0.0
        %1629 = vst [vmem:[#allocation4 + $0x197] sm:$0x1] 0.0
        %1630 = vst [vmem:[#allocation4 + $0x1af] sm:$0x1] 0.0
        // Predicated region
        $region53: #{tpu_custom_call.1} parent=35 // pred_check
          %p1631 = pneg %p226
        $region54: #{tpu_custom_call.1} parent=35 // pred_check_branch
          %1633 = sbr.rel (%p1631) target = $region56
        $region55: #{tpu_custom_call.1} parent=35 // pred_region
          %1634 = vst [vmem:[#allocation4] sm:$0xff] 0.0
          %1635 = vst [vmem:[#allocation4 + $0x8] sm:$0xff] 0.0
          %1636 = vst [vmem:[#allocation4 + $0x10] sm:$0xff] 0.0
          %s1637 = scalar_lea.vmem [#allocation4], 408
          %1638 = vst [vmem:[%s1637] sm:$0xff] 0.0
          %1639 = vst [vmem:[%s1637 + $0x8] sm:$0xff] 0.0
          %1640 = vst [vmem:[%s1637 + $0x10] sm:$0xff] 0.0
        $region56: #{tpu_custom_call.1} parent=35 // pred_fallthru
          _
        %v1641 = vld [vmem:[#allocation4] sm:$0xff]
        %v1642 = vld [vmem:[#allocation4 + $0x8] sm:$0xff]
        %v1643 = vld [vmem:[#allocation4 + $0x10] sm:$0xff]
        %v1644 = vld [vmem:[#allocation4 + $0x18] sm:$0xff]
        %v1645 = vld [vmem:[#allocation4 + $0x20] sm:$0xff]
        %v1646 = vld [vmem:[#allocation4 + $0x28] sm:$0xff]
        %v1647 = vld [vmem:[#allocation4 + $0x30] sm:$0xff]
        %v1648 = vld [vmem:[#allocation4 + $0x38] sm:$0xff]
        %v1649 = vld [vmem:[#allocation4 + $0x40] sm:$0xff]
        %v1650 = vld [vmem:[#allocation4 + $0x48] sm:$0xff]
        %v1651 = vld [vmem:[#allocation4 + $0x50] sm:$0xff]
        %v1652 = vld [vmem:[#allocation4 + $0x58] sm:$0xff]
        %v1653 = vld [vmem:[#allocation4 + $0x60] sm:$0xff]
        %v1654 = vld [vmem:[#allocation4 + $0x68] sm:$0xff]
        %v1655 = vld [vmem:[#allocation4 + $0x70] sm:$0xff]
        %v1656 = vld [vmem:[#allocation4 + $0x78] sm:$0xff]
        %v1657 = vld [vmem:[#allocation4 + $0x80] sm:$0xff]
        %v1658 = vld [vmem:[#allocation4 + $0x88] sm:$0xff]
        %v1659 = vld [vmem:[#allocation4 + $0x90] sm:$0xff]
        %v1660 = vld [vmem:[#allocation4 + $0x98] sm:$0xff]
        %v1661 = vld [vmem:[#allocation4 + $0xa0] sm:$0xff]
        %v1662 = vld [vmem:[#allocation4 + $0xa8] sm:$0xff]
        %v1663 = vld [vmem:[#allocation4 + $0xb0] sm:$0xff]
        %v1664 = vld [vmem:[#allocation4 + $0xb8] sm:$0xff]
        %v1665 = vld [vmem:[#allocation4 + $0xc0] sm:$0xff]
        %v1666 = vld [vmem:[#allocation4 + $0xc8] sm:$0xff]
        %v1667 = vld [vmem:[#allocation4 + $0xd0] sm:$0xff]
        %v1668 = vld [vmem:[#allocation4 + $0xd8] sm:$0xff]
        %v1669 = vld [vmem:[#allocation4 + $0xe0] sm:$0xff]
        %v1670 = vld [vmem:[#allocation4 + $0xe8] sm:$0xff]
        %v1671 = vld [vmem:[#allocation4 + $0xf0] sm:$0xff]
        %v1672 = vld [vmem:[#allocation4 + $0xf8] sm:$0xff]
        %v1673 = vld [vmem:[#allocation4 + $0x100] sm:$0xff]
        %v1674 = vld [vmem:[#allocation4 + $0x108] sm:$0xff]
        %v1675 = vld [vmem:[#allocation4 + $0x110] sm:$0xff]
        %v1676 = vld [vmem:[#allocation4 + $0x118] sm:$0xff]
        %v1677 = vld [vmem:[#allocation4 + $0x120] sm:$0xff]
        %v1678 = vld [vmem:[#allocation4 + $0x128] sm:$0xff]
        %v1679 = vld [vmem:[#allocation4 + $0x130] sm:$0xff]
        %v1680 = vld [vmem:[#allocation4 + $0x138] sm:$0xff]
        %v1681 = vld [vmem:[#allocation4 + $0x140] sm:$0xff]
        %v1682 = vld [vmem:[#allocation4 + $0x148] sm:$0xff]
        %v1683 = vld [vmem:[#allocation4 + $0x150] sm:$0xff]
        %v1684 = vld [vmem:[#allocation4 + $0x158] sm:$0xff]
        %v1685 = vld [vmem:[#allocation4 + $0x160] sm:$0xff]
        %v1686 = vld [vmem:[#allocation4 + $0x168] sm:$0xff]
        %v1687 = vld [vmem:[#allocation4 + $0x170] sm:$0xff]
        %v1688 = vld [vmem:[#allocation4 + $0x178] sm:$0xff]
        %v1689 = vld [vmem:[#allocation9] sm:$0xff]
        %v1690 = vld [vmem:[#allocation9 + $0x8] sm:$0xff]
        %v1691 = vld [vmem:[#allocation9 + $0x10] sm:$0xff]
        %v1692 = vld [vmem:[#allocation9 + $0x18] sm:$0xff]
        %v1693 = vld [vmem:[#allocation9 + $0x20] sm:$0xff]
        %v1694 = vld [vmem:[#allocation9 + $0x28] sm:$0xff]
        %v1695 = vld [vmem:[#allocation9 + $0x30] sm:$0xff]
        %v1696 = vld [vmem:[#allocation9 + $0x38] sm:$0xff]
        %v1697 = vld [vmem:[#allocation9 + $0x40] sm:$0xff]
        %v1698 = vld [vmem:[#allocation9 + $0x48] sm:$0xff]
        %v1699 = vld [vmem:[#allocation9 + $0x50] sm:$0xff]
        %v1700 = vld [vmem:[#allocation9 + $0x58] sm:$0xff]
        %v1701 = vld [vmem:[#allocation9 + $0x60] sm:$0xff]
        %v1702 = vld [vmem:[#allocation9 + $0x68] sm:$0xff]
        %v1703 = vld [vmem:[#allocation9 + $0x70] sm:$0xff]
        %v1704 = vld [vmem:[#allocation9 + $0x78] sm:$0xff]
        %v1705 = vld [vmem:[#allocation9 + $0x80] sm:$0xff]
        %v1706 = vld [vmem:[#allocation9 + $0x88] sm:$0xff]
        %v1707 = vld [vmem:[#allocation9 + $0x90] sm:$0xff]
        %v1708 = vld [vmem:[#allocation9 + $0x98] sm:$0xff]
        %v1709 = vld [vmem:[#allocation9 + $0xa0] sm:$0xff]
        %v1710 = vld [vmem:[#allocation9 + $0xa8] sm:$0xff]
        %v1711 = vld [vmem:[#allocation9 + $0xb0] sm:$0xff]
        %v1712 = vld [vmem:[#allocation9 + $0xb8] sm:$0xff]
        %v1713 = vld [vmem:[#allocation9 + $0xc0] sm:$0xff]
        %v1714 = vld [vmem:[#allocation9 + $0xc8] sm:$0xff]
        %v1715 = vld [vmem:[#allocation9 + $0xd0] sm:$0xff]
        %v1716 = vld [vmem:[#allocation9 + $0xd8] sm:$0xff]
        %v1717 = vld [vmem:[#allocation9 + $0xe0] sm:$0xff]
        %v1718 = vld [vmem:[#allocation9 + $0xe8] sm:$0xff]
        %v1719 = vld [vmem:[#allocation9 + $0xf0] sm:$0xff]
        %v1720 = vld [vmem:[#allocation9 + $0xf8] sm:$0xff]
        %v1721 = vld [vmem:[#allocation9 + $0x100] sm:$0xff]
        %v1722 = vld [vmem:[#allocation9 + $0x108] sm:$0xff]
        %v1723 = vld [vmem:[#allocation9 + $0x110] sm:$0xff]
        %v1724 = vld [vmem:[#allocation9 + $0x118] sm:$0xff]
        %v1725 = vld [vmem:[#allocation9 + $0x120] sm:$0xff]
        %v1726 = vld [vmem:[#allocation9 + $0x128] sm:$0xff]
        %v1727 = vld [vmem:[#allocation9 + $0x130] sm:$0xff]
        %v1728 = vld [vmem:[#allocation9 + $0x138] sm:$0xff]
        %v1729 = vld [vmem:[#allocation9 + $0x140] sm:$0xff]
        %v1730 = vld [vmem:[#allocation9 + $0x148] sm:$0xff]
        %v1731 = vld [vmem:[#allocation9 + $0x150] sm:$0xff]
        %v1732 = vld [vmem:[#allocation9 + $0x158] sm:$0xff]
        %v1733 = vld [vmem:[#allocation9 + $0x160] sm:$0xff]
        %v1734 = vld [vmem:[#allocation9 + $0x168] sm:$0xff]
        %v1735 = vld [vmem:[#allocation9 + $0x170] sm:$0xff]
        %v1736 = vld [vmem:[#allocation9 + $0x178] sm:$0xff]
        %s1737 = scalar_lea.vmem [#allocation4], 24
        %v1738 = vld [vmem:[%s1737] sm:$0xff]
        %v1739 = vld [vmem:[%s1737 + $0x8] sm:$0xff]
        %v1740 = vld [vmem:[%s1737 + $0x10] sm:$0xff]
        %v1741 = vld [vmem:[%s1737 + $0x18] sm:$0xff]
        %v1742 = vld [vmem:[%s1737 + $0x20] sm:$0xff]
        %v1743 = vld [vmem:[%s1737 + $0x28] sm:$0xff]
        %v1744 = vld [vmem:[%s1737 + $0x30] sm:$0xff]
        %v1745 = vld [vmem:[%s1737 + $0x38] sm:$0xff]
        %v1746 = vld [vmem:[%s1737 + $0x40] sm:$0xff]
        %v1747 = vld [vmem:[%s1737 + $0x48] sm:$0xff]
        %v1748 = vld [vmem:[%s1737 + $0x50] sm:$0xff]
        %v1749 = vld [vmem:[%s1737 + $0x58] sm:$0xff]
        %v1750 = vld [vmem:[%s1737 + $0x60] sm:$0xff]
        %v1751 = vld [vmem:[%s1737 + $0x68] sm:$0xff]
        %v1752 = vld [vmem:[%s1737 + $0x70] sm:$0xff]
        %v1753 = vld [vmem:[%s1737 + $0x78] sm:$0xff]
        %v1754 = vld [vmem:[%s1737 + $0x80] sm:$0xff]
        %v1755 = vld [vmem:[%s1737 + $0x88] sm:$0xff]
        %v1756 = vld [vmem:[%s1737 + $0x90] sm:$0xff]
        %v1757 = vld [vmem:[%s1737 + $0x98] sm:$0xff]
        %v1758 = vld [vmem:[%s1737 + $0xa0] sm:$0xff]
        %v1759 = vld [vmem:[%s1737 + $0xa8] sm:$0xff]
        %v1760 = vld [vmem:[%s1737 + $0xb0] sm:$0xff]
        %v1761 = vld [vmem:[%s1737 + $0xb8] sm:$0xff]
        %v1762 = vld [vmem:[%s1737 + $0xc0] sm:$0xff]
        %v1763 = vld [vmem:[%s1737 + $0xc8] sm:$0xff]
        %v1764 = vld [vmem:[%s1737 + $0xd0] sm:$0xff]
        %v1765 = vld [vmem:[%s1737 + $0xd8] sm:$0xff]
        %v1766 = vld [vmem:[%s1737 + $0xe0] sm:$0xff]
        %v1767 = vld [vmem:[%s1737 + $0xe8] sm:$0xff]
        %v1768 = vld [vmem:[%s1737 + $0xf0] sm:$0xff]
        %v1769 = vld [vmem:[%s1737 + $0xf8] sm:$0xff]
        %v1770 = vld [vmem:[%s1737 + $0x100] sm:$0xff]
        %v1771 = vld [vmem:[%s1737 + $0x108] sm:$0xff]
        %v1772 = vld [vmem:[%s1737 + $0x110] sm:$0xff]
        %v1773 = vld [vmem:[%s1737 + $0x118] sm:$0xff]
        %v1774 = vld [vmem:[%s1737 + $0x120] sm:$0xff]
        %v1775 = vld [vmem:[%s1737 + $0x128] sm:$0xff]
        %v1776 = vld [vmem:[%s1737 + $0x130] sm:$0xff]
        %v1777 = vld [vmem:[%s1737 + $0x138] sm:$0xff]
        %v1778 = vld [vmem:[%s1737 + $0x140] sm:$0xff]
        %v1779 = vld [vmem:[%s1737 + $0x148] sm:$0xff]
        %v1780 = vld [vmem:[%s1737 + $0x150] sm:$0xff]
        %v1781 = vld [vmem:[%s1737 + $0x158] sm:$0xff]
        %v1782 = vld [vmem:[%s1737 + $0x160] sm:$0xff]
        %v1783 = vld [vmem:[%s1737 + $0x168] sm:$0xff]
        %v1784 = vld [vmem:[%s1737 + $0x170] sm:$0xff]
        %v1785 = vld [vmem:[%s1737 + $0x178] sm:$0xff]
        %s1786 = scalar_lea.vmem [#allocation9], 384
        %v1787 = vld [vmem:[%s1786] sm:$0xff]
        %v1788 = vld [vmem:[%s1786 + $0x8] sm:$0xff]
        %v1789 = vld [vmem:[%s1786 + $0x10] sm:$0xff]
        %v1790 = vld [vmem:[%s1786 + $0x18] sm:$0xff]
        %v1791 = vld [vmem:[%s1786 + $0x20] sm:$0xff]
        %v1792 = vld [vmem:[%s1786 + $0x28] sm:$0xff]
        %v1793 = vld [vmem:[%s1786 + $0x30] sm:$0xff]
        %v1794 = vld [vmem:[%s1786 + $0x38] sm:$0xff]
        %v1795 = vld [vmem:[%s1786 + $0x40] sm:$0xff]
        %v1796 = vld [vmem:[%s1786 + $0x48] sm:$0xff]
        %v1797 = vld [vmem:[%s1786 + $0x50] sm:$0xff]
        %v1798 = vld [vmem:[%s1786 + $0x58] sm:$0xff]
        %v1799 = vld [vmem:[%s1786 + $0x60] sm:$0xff]
        %v1800 = vld [vmem:[%s1786 + $0x68] sm:$0xff]
        %v1801 = vld [vmem:[%s1786 + $0x70] sm:$0xff]
        %v1802 = vld [vmem:[%s1786 + $0x78] sm:$0xff]
        %v1803 = vld [vmem:[%s1786 + $0x80] sm:$0xff]
        %v1804 = vld [vmem:[%s1786 + $0x88] sm:$0xff]
        %v1805 = vld [vmem:[%s1786 + $0x90] sm:$0xff]
        %v1806 = vld [vmem:[%s1786 + $0x98] sm:$0xff]
        %v1807 = vld [vmem:[%s1786 + $0xa0] sm:$0xff]
        %v1808 = vld [vmem:[%s1786 + $0xa8] sm:$0xff]
        %v1809 = vld [vmem:[%s1786 + $0xb0] sm:$0xff]
        %v1810 = vld [vmem:[%s1786 + $0xb8] sm:$0xff]
        %v1811 = vld [vmem:[%s1786 + $0xc0] sm:$0xff]
        %v1812 = vld [vmem:[%s1786 + $0xc8] sm:$0xff]
        %v1813 = vld [vmem:[%s1786 + $0xd0] sm:$0xff]
        %v1814 = vld [vmem:[%s1786 + $0xd8] sm:$0xff]
        %v1815 = vld [vmem:[%s1786 + $0xe0] sm:$0xff]
        %v1816 = vld [vmem:[%s1786 + $0xe8] sm:$0xff]
        %v1817 = vld [vmem:[%s1786 + $0xf0] sm:$0xff]
        %v1818 = vld [vmem:[%s1786 + $0xf8] sm:$0xff]
        %v1819 = vld [vmem:[%s1786 + $0x100] sm:$0xff]
        %v1820 = vld [vmem:[%s1786 + $0x108] sm:$0xff]
        %v1821 = vld [vmem:[%s1786 + $0x110] sm:$0xff]
        %v1822 = vld [vmem:[%s1786 + $0x118] sm:$0xff]
        %v1823 = vld [vmem:[%s1786 + $0x120] sm:$0xff]
        %v1824 = vld [vmem:[%s1786 + $0x128] sm:$0xff]
        %v1825 = vld [vmem:[%s1786 + $0x130] sm:$0xff]
        %v1826 = vld [vmem:[%s1786 + $0x138] sm:$0xff]
        %v1827 = vld [vmem:[%s1786 + $0x140] sm:$0xff]
        %v1828 = vld [vmem:[%s1786 + $0x148] sm:$0xff]
        %v1829 = vld [vmem:[%s1786 + $0x150] sm:$0xff]
        %v1830 = vld [vmem:[%s1786 + $0x158] sm:$0xff]
        %v1831 = vld [vmem:[%s1786 + $0x160] sm:$0xff]
        %v1832 = vld [vmem:[%s1786 + $0x168] sm:$0xff]
        %v1833 = vld [vmem:[%s1786 + $0x170] sm:$0xff]
        %v1834 = vld [vmem:[%s1786 + $0x178] sm:$0xff]
        %1835 = vmatpush.msra.mxu0 %v1802
        %1836 = vmatpush.msra.mxu0 %v1801
        %1837 = vmatpush.msra.mxu0 %v1800
        %1838 = vmatpush.msra.mxu0 %v1799
        %1839 = vmatpush.msra.mxu0 %v1798
        %1840 = vmatpush.msra.mxu0 %v1797
        %1841 = vmatpush.msra.mxu0 %v1796
        %1842 = vmatpush.msra.mxu0 %v1795
        %1843 = vmatpush.msra.mxu0 %v1794
        %1844 = vmatpush.msra.mxu0 %v1793
        %1845 = vmatpush.msra.mxu0 %v1792
        %1846 = vmatpush.msra.mxu0 %v1791
        %1847 = vmatpush.msra.mxu0 %v1790
        %1848 = vmatpush.msra.mxu0 %v1789
        %1849 = vmatpush.msra.mxu0 %v1788
        %1850 = vmatpush.msra.mxu0 %v1787
        %1851 = vmatmul.f32.gmra.mxu0 %v1738
        %v1852 = vpop.f32.mrf.mxu0
        %v1853 = vadd.f32 0.0, %v1852
        %1854 = vmatmul.f32.gmra.mxu0 %v1741
        %v1855 = vpop.f32.mrf.mxu0
        %v1856 = vadd.f32 0.0, %v1855
        %1857 = vmatmul.f32.gmra.mxu0 %v1744
        %v1858 = vpop.f32.mrf.mxu0
        %v1859 = vadd.f32 0.0, %v1858
        %1860 = vmatmul.f32.gmra.mxu0 %v1747
        %v1861 = vpop.f32.mrf.mxu0
        %v1862 = vadd.f32 0.0, %v1861
        %1863 = vmatmul.f32.gmra.mxu0 %v1750
        %v1864 = vpop.f32.mrf.mxu0
        %v1865 = vadd.f32 0.0, %v1864
        %1866 = vmatmul.f32.gmra.mxu0 %v1753
        %v1867 = vpop.f32.mrf.mxu0
        %v1868 = vadd.f32 0.0, %v1867
        %1869 = vmatmul.f32.gmra.mxu0 %v1756
        %v1870 = vpop.f32.mrf.mxu0
        %v1871 = vadd.f32 0.0, %v1870
        %1872 = vmatmul.f32.gmra.mxu0 %v1759
        %v1873 = vpop.f32.mrf.mxu0
        %v1874 = vadd.f32 0.0, %v1873
        %1875 = vmatmul.f32.gmra.mxu0 %v1762
        %v1876 = vpop.f32.mrf.mxu0
        %v1877 = vadd.f32 0.0, %v1876
        %1878 = vmatmul.f32.gmra.mxu0 %v1765
        %v1879 = vpop.f32.mrf.mxu0
        %v1880 = vadd.f32 0.0, %v1879
        %1881 = vmatmul.f32.gmra.mxu0 %v1768
        %v1882 = vpop.f32.mrf.mxu0
        %v1883 = vadd.f32 0.0, %v1882
        %1884 = vmatmul.f32.gmra.mxu0 %v1771
        %v1885 = vpop.f32.mrf.mxu0
        %v1886 = vadd.f32 0.0, %v1885
        %1887 = vmatmul.f32.gmra.mxu0 %v1774
        %v1888 = vpop.f32.mrf.mxu0
        %v1889 = vadd.f32 0.0, %v1888
        %1890 = vmatmul.f32.gmra.mxu0 %v1777
        %v1891 = vpop.f32.mrf.mxu0
        %v1892 = vadd.f32 0.0, %v1891
        %1893 = vmatmul.f32.gmra.mxu0 %v1780
        %v1894 = vpop.f32.mrf.mxu0
        %v1895 = vadd.f32 0.0, %v1894
        %1896 = vmatmul.f32.gmra.mxu0 %v1783
        %v1897 = vpop.f32.mrf.mxu0
        %v1898 = vadd.f32 0.0, %v1897
        %1899 = vdwg.mxu0
        %1900 = vmatpush.msra.mxu0 %v1818
        %1901 = vmatpush.msra.mxu0 %v1817
        %1902 = vmatpush.msra.mxu0 %v1816
        %1903 = vmatpush.msra.mxu0 %v1815
        %1904 = vmatpush.msra.mxu0 %v1814
        %1905 = vmatpush.msra.mxu0 %v1813
        %1906 = vmatpush.msra.mxu0 %v1812
        %1907 = vmatpush.msra.mxu0 %v1811
        %1908 = vmatpush.msra.mxu0 %v1810
        %1909 = vmatpush.msra.mxu0 %v1809
        %1910 = vmatpush.msra.mxu0 %v1808
        %1911 = vmatpush.msra.mxu0 %v1807
        %1912 = vmatpush.msra.mxu0 %v1806
        %1913 = vmatpush.msra.mxu0 %v1805
        %1914 = vmatpush.msra.mxu0 %v1804
        %1915 = vmatpush.msra.mxu0 %v1803
        %1916 = vmatmul.f32.gmra.mxu0 %v1739
        %v1917 = vpop.f32.mrf.mxu0
        %v1918 = vadd.f32 %v1853, %v1917
        %1919 = vmatmul.f32.gmra.mxu0 %v1742
        %v1920 = vpop.f32.mrf.mxu0
        %v1921 = vadd.f32 %v1856, %v1920
        %1922 = vmatmul.f32.gmra.mxu0 %v1745
        %v1923 = vpop.f32.mrf.mxu0
        %v1924 = vadd.f32 %v1859, %v1923
        %1925 = vmatmul.f32.gmra.mxu0 %v1748
        %v1926 = vpop.f32.mrf.mxu0
        %v1927 = vadd.f32 %v1862, %v1926
        %1928 = vmatmul.f32.gmra.mxu0 %v1751
        %v1929 = vpop.f32.mrf.mxu0
        %v1930 = vadd.f32 %v1865, %v1929
        %1931 = vmatmul.f32.gmra.mxu0 %v1754
        %v1932 = vpop.f32.mrf.mxu0
        %v1933 = vadd.f32 %v1868, %v1932
        %1934 = vmatmul.f32.gmra.mxu0 %v1757
        %v1935 = vpop.f32.mrf.mxu0
        %v1936 = vadd.f32 %v1871, %v1935
        %1937 = vmatmul.f32.gmra.mxu0 %v1760
        %v1938 = vpop.f32.mrf.mxu0
        %v1939 = vadd.f32 %v1874, %v1938
        %1940 = vmatmul.f32.gmra.mxu0 %v1763
        %v1941 = vpop.f32.mrf.mxu0
        %v1942 = vadd.f32 %v1877, %v1941
        %1943 = vmatmul.f32.gmra.mxu0 %v1766
        %v1944 = vpop.f32.mrf.mxu0
        %v1945 = vadd.f32 %v1880, %v1944
        %1946 = vmatmul.f32.gmra.mxu0 %v1769
        %v1947 = vpop.f32.mrf.mxu0
        %v1948 = vadd.f32 %v1883, %v1947
        %1949 = vmatmul.f32.gmra.mxu0 %v1772
        %v1950 = vpop.f32.mrf.mxu0
        %v1951 = vadd.f32 %v1886, %v1950
        %1952 = vmatmul.f32.gmra.mxu0 %v1775
        %v1953 = vpop.f32.mrf.mxu0
        %v1954 = vadd.f32 %v1889, %v1953
        %1955 = vmatmul.f32.gmra.mxu0 %v1778
        %v1956 = vpop.f32.mrf.mxu0
        %v1957 = vadd.f32 %v1892, %v1956
        %1958 = vmatmul.f32.gmra.mxu0 %v1781
        %v1959 = vpop.f32.mrf.mxu0
        %v1960 = vadd.f32 %v1895, %v1959
        %1961 = vmatmul.f32.gmra.mxu0 %v1784
        %v1962 = vpop.f32.mrf.mxu0
        %v1963 = vadd.f32 %v1898, %v1962
        %1964 = vdwg.mxu0
        %1965 = vmatpush.msra.mxu0 %v1834
        %1966 = vmatpush.msra.mxu0 %v1833
        %1967 = vmatpush.msra.mxu0 %v1832
        %1968 = vmatpush.msra.mxu0 %v1831
        %1969 = vmatpush.msra.mxu0 %v1830
        %1970 = vmatpush.msra.mxu0 %v1829
        %1971 = vmatpush.msra.mxu0 %v1828
        %1972 = vmatpush.msra.mxu0 %v1827
        %1973 = vmatpush.msra.mxu0 %v1826
        %1974 = vmatpush.msra.mxu0 %v1825
        %1975 = vmatpush.msra.mxu0 %v1824
        %1976 = vmatpush.msra.mxu0 %v1823
        %1977 = vmatpush.msra.mxu0 %v1822
        %1978 = vmatpush.msra.mxu0 %v1821
        %1979 = vmatpush.msra.mxu0 %v1820
        %1980 = vmatpush.msra.mxu0 %v1819
        %1981 = vmatmul.f32.gmra.mxu0 %v1740
        %v1982 = vpop.f32.mrf.mxu0
        %v1983 = vadd.f32 %v1918, %v1982
        %1984 = vmatmul.f32.gmra.mxu0 %v1743
        %v1985 = vpop.f32.mrf.mxu0
        %v1986 = vadd.f32 %v1921, %v1985
        %1987 = vmatmul.f32.gmra.mxu0 %v1746
        %v1988 = vpop.f32.mrf.mxu0
        %v1989 = vadd.f32 %v1924, %v1988
        %1990 = vmatmul.f32.gmra.mxu0 %v1749
        %v1991 = vpop.f32.mrf.mxu0
        %v1992 = vadd.f32 %v1927, %v1991
        %1993 = vmatmul.f32.gmra.mxu0 %v1752
        %v1994 = vpop.f32.mrf.mxu0
        %v1995 = vadd.f32 %v1930, %v1994
        %1996 = vmatmul.f32.gmra.mxu0 %v1755
        %v1997 = vpop.f32.mrf.mxu0
        %v1998 = vadd.f32 %v1933, %v1997
        %1999 = vmatmul.f32.gmra.mxu0 %v1758
        %v2000 = vpop.f32.mrf.mxu0
        %v2001 = vadd.f32 %v1936, %v2000
        %2002 = vmatmul.f32.gmra.mxu0 %v1761
        %v2003 = vpop.f32.mrf.mxu0
        %v2004 = vadd.f32 %v1939, %v2003
        %2005 = vmatmul.f32.gmra.mxu0 %v1764
        %v2006 = vpop.f32.mrf.mxu0
        %v2007 = vadd.f32 %v1942, %v2006
        %2008 = vmatmul.f32.gmra.mxu0 %v1767
        %v2009 = vpop.f32.mrf.mxu0
        %v2010 = vadd.f32 %v1945, %v2009
        %2011 = vmatmul.f32.gmra.mxu0 %v1770
        %v2012 = vpop.f32.mrf.mxu0
        %v2013 = vadd.f32 %v1948, %v2012
        %2014 = vmatmul.f32.gmra.mxu0 %v1773
        %v2015 = vpop.f32.mrf.mxu0
        %v2016 = vadd.f32 %v1951, %v2015
        %2017 = vmatmul.f32.gmra.mxu0 %v1776
        %v2018 = vpop.f32.mrf.mxu0
        %v2019 = vadd.f32 %v1954, %v2018
        %2020 = vmatmul.f32.gmra.mxu0 %v1779
        %v2021 = vpop.f32.mrf.mxu0
        %v2022 = vadd.f32 %v1957, %v2021
        %2023 = vmatmul.f32.gmra.mxu0 %v1782
        %v2024 = vpop.f32.mrf.mxu0
        %v2025 = vadd.f32 %v1960, %v2024
        %2026 = vmatmul.f32.gmra.mxu0 %v1785
        %v2027 = vpop.f32.mrf.mxu0
        %v2028 = vadd.f32 %v1963, %v2027
        %2029 = vdwg.mxu0
        %2030 = vmatpush.msra.mxu0 %v1704
        %2031 = vmatpush.msra.mxu0 %v1703
        %2032 = vmatpush.msra.mxu0 %v1702
        %2033 = vmatpush.msra.mxu0 %v1701
        %2034 = vmatpush.msra.mxu0 %v1700
        %2035 = vmatpush.msra.mxu0 %v1699
        %2036 = vmatpush.msra.mxu0 %v1698
        %2037 = vmatpush.msra.mxu0 %v1697
        %2038 = vmatpush.msra.mxu0 %v1696
        %2039 = vmatpush.msra.mxu0 %v1695
        %2040 = vmatpush.msra.mxu0 %v1694
        %2041 = vmatpush.msra.mxu0 %v1693
        %2042 = vmatpush.msra.mxu0 %v1692
        %2043 = vmatpush.msra.mxu0 %v1691
        %2044 = vmatpush.msra.mxu0 %v1690
        %2045 = vmatpush.msra.mxu0 %v1689
        %2046 = vmatmul.f32.gmra.mxu0 %v1641
        %v2047 = vpop.f32.mrf.mxu0
        %v2048 = vadd.f32 %v1983, %v2047
        %2049 = vmatmul.f32.gmra.mxu0 %v1644
        %v2050 = vpop.f32.mrf.mxu0
        %v2051 = vadd.f32 %v1986, %v2050
        %2052 = vmatmul.f32.gmra.mxu0 %v1647
        %v2053 = vpop.f32.mrf.mxu0
        %v2054 = vadd.f32 %v1989, %v2053
        %2055 = vmatmul.f32.gmra.mxu0 %v1650
        %v2056 = vpop.f32.mrf.mxu0
        %v2057 = vadd.f32 %v1992, %v2056
        %2058 = vmatmul.f32.gmra.mxu0 %v1653
        %v2059 = vpop.f32.mrf.mxu0
        %v2060 = vadd.f32 %v1995, %v2059
        %2061 = vmatmul.f32.gmra.mxu0 %v1656
        %v2062 = vpop.f32.mrf.mxu0
        %v2063 = vadd.f32 %v1998, %v2062
        %2064 = vmatmul.f32.gmra.mxu0 %v1659
        %v2065 = vpop.f32.mrf.mxu0
        %v2066 = vadd.f32 %v2001, %v2065
        %2067 = vmatmul.f32.gmra.mxu0 %v1662
        %v2068 = vpop.f32.mrf.mxu0
        %v2069 = vadd.f32 %v2004, %v2068
        %2070 = vmatmul.f32.gmra.mxu0 %v1665
        %v2071 = vpop.f32.mrf.mxu0
        %v2072 = vadd.f32 %v2007, %v2071
        %2073 = vmatmul.f32.gmra.mxu0 %v1668
        %v2074 = vpop.f32.mrf.mxu0
        %v2075 = vadd.f32 %v2010, %v2074
        %2076 = vmatmul.f32.gmra.mxu0 %v1671
        %v2077 = vpop.f32.mrf.mxu0
        %v2078 = vadd.f32 %v2013, %v2077
        %2079 = vmatmul.f32.gmra.mxu0 %v1674
        %v2080 = vpop.f32.mrf.mxu0
        %v2081 = vadd.f32 %v2016, %v2080
        %2082 = vmatmul.f32.gmra.mxu0 %v1677
        %v2083 = vpop.f32.mrf.mxu0
        %v2084 = vadd.f32 %v2019, %v2083
        %2085 = vmatmul.f32.gmra.mxu0 %v1680
        %v2086 = vpop.f32.mrf.mxu0
        %v2087 = vadd.f32 %v2022, %v2086
        %2088 = vmatmul.f32.gmra.mxu0 %v1683
        %v2089 = vpop.f32.mrf.mxu0
        %v2090 = vadd.f32 %v2025, %v2089
        %2091 = vmatmul.f32.gmra.mxu0 %v1686
        %v2092 = vpop.f32.mrf.mxu0
        %v2093 = vadd.f32 %v2028, %v2092
        %2094 = vdwg.mxu0
        %2095 = vmatpush.msra.mxu0 %v1720
        %2096 = vmatpush.msra.mxu0 %v1719
        %2097 = vmatpush.msra.mxu0 %v1718
        %2098 = vmatpush.msra.mxu0 %v1717
        %2099 = vmatpush.msra.mxu0 %v1716
        %2100 = vmatpush.msra.mxu0 %v1715
        %2101 = vmatpush.msra.mxu0 %v1714
        %2102 = vmatpush.msra.mxu0 %v1713
        %2103 = vmatpush.msra.mxu0 %v1712
        %2104 = vmatpush.msra.mxu0 %v1711
        %2105 = vmatpush.msra.mxu0 %v1710
        %2106 = vmatpush.msra.mxu0 %v1709
        %2107 = vmatpush.msra.mxu0 %v1708
        %2108 = vmatpush.msra.mxu0 %v1707
        %2109 = vmatpush.msra.mxu0 %v1706
        %2110 = vmatpush.msra.mxu0 %v1705
        %2111 = vmatmul.f32.gmra.mxu0 %v1642
        %v2112 = vpop.f32.mrf.mxu0
        %v2113 = vadd.f32 %v2048, %v2112
        %2114 = vmatmul.f32.gmra.mxu0 %v1645
        %v2115 = vpop.f32.mrf.mxu0
        %v2116 = vadd.f32 %v2051, %v2115
        %2117 = vmatmul.f32.gmra.mxu0 %v1648
        %v2118 = vpop.f32.mrf.mxu0
        %v2119 = vadd.f32 %v2054, %v2118
        %2120 = vmatmul.f32.gmra.mxu0 %v1651
        %v2121 = vpop.f32.mrf.mxu0
        %v2122 = vadd.f32 %v2057, %v2121
        %2123 = vmatmul.f32.gmra.mxu0 %v1654
        %v2124 = vpop.f32.mrf.mxu0
        %v2125 = vadd.f32 %v2060, %v2124
        %2126 = vmatmul.f32.gmra.mxu0 %v1657
        %v2127 = vpop.f32.mrf.mxu0
        %v2128 = vadd.f32 %v2063, %v2127
        %2129 = vmatmul.f32.gmra.mxu0 %v1660
        %v2130 = vpop.f32.mrf.mxu0
        %v2131 = vadd.f32 %v2066, %v2130
        %2132 = vmatmul.f32.gmra.mxu0 %v1663
        %v2133 = vpop.f32.mrf.mxu0
        %v2134 = vadd.f32 %v2069, %v2133
        %2135 = vmatmul.f32.gmra.mxu0 %v1666
        %v2136 = vpop.f32.mrf.mxu0
        %v2137 = vadd.f32 %v2072, %v2136
        %2138 = vmatmul.f32.gmra.mxu0 %v1669
        %v2139 = vpop.f32.mrf.mxu0
        %v2140 = vadd.f32 %v2075, %v2139
        %2141 = vmatmul.f32.gmra.mxu0 %v1672
        %v2142 = vpop.f32.mrf.mxu0
        %v2143 = vadd.f32 %v2078, %v2142
        %2144 = vmatmul.f32.gmra.mxu0 %v1675
        %v2145 = vpop.f32.mrf.mxu0
        %v2146 = vadd.f32 %v2081, %v2145
        %2147 = vmatmul.f32.gmra.mxu0 %v1678
        %v2148 = vpop.f32.mrf.mxu0
        %v2149 = vadd.f32 %v2084, %v2148
        %2150 = vmatmul.f32.gmra.mxu0 %v1681
        %v2151 = vpop.f32.mrf.mxu0
        %v2152 = vadd.f32 %v2087, %v2151
        %2153 = vmatmul.f32.gmra.mxu0 %v1684
        %v2154 = vpop.f32.mrf.mxu0
        %v2155 = vadd.f32 %v2090, %v2154
        %2156 = vmatmul.f32.gmra.mxu0 %v1687
        %v2157 = vpop.f32.mrf.mxu0
        %v2158 = vadd.f32 %v2093, %v2157
        %2159 = vdwg.mxu0
        %2160 = vmatpush.msra.mxu0 %v1736
        %2161 = vmatpush.msra.mxu0 %v1735
        %2162 = vmatpush.msra.mxu0 %v1734
        %2163 = vmatpush.msra.mxu0 %v1733
        %2164 = vmatpush.msra.mxu0 %v1732
        %2165 = vmatpush.msra.mxu0 %v1731
        %2166 = vmatpush.msra.mxu0 %v1730
        %2167 = vmatpush.msra.mxu0 %v1729
        %2168 = vmatpush.msra.mxu0 %v1728
        %2169 = vmatpush.msra.mxu0 %v1727
        %2170 = vmatpush.msra.mxu0 %v1726
        %2171 = vmatpush.msra.mxu0 %v1725
        %2172 = vmatpush.msra.mxu0 %v1724
        %2173 = vmatpush.msra.mxu0 %v1723
        %2174 = vmatpush.msra.mxu0 %v1722
        %2175 = vmatpush.msra.mxu0 %v1721
        %2176 = vmatmul.f32.gmra.mxu0 %v1643
        %v2177 = vpop.f32.mrf.mxu0
        %v2178 = vadd.f32 %v2113, %v2177
        %2179 = vmatmul.f32.gmra.mxu0 %v1646
        %v2180 = vpop.f32.mrf.mxu0
        %v2181 = vadd.f32 %v2116, %v2180
        %2182 = vmatmul.f32.gmra.mxu0 %v1649
        %v2183 = vpop.f32.mrf.mxu0
        %v2184 = vadd.f32 %v2119, %v2183
        %2185 = vmatmul.f32.gmra.mxu0 %v1652
        %v2186 = vpop.f32.mrf.mxu0
        %v2187 = vadd.f32 %v2122, %v2186
        %2188 = vmatmul.f32.gmra.mxu0 %v1655
        %v2189 = vpop.f32.mrf.mxu0
        %v2190 = vadd.f32 %v2125, %v2189
        %2191 = vmatmul.f32.gmra.mxu0 %v1658
        %v2192 = vpop.f32.mrf.mxu0
        %v2193 = vadd.f32 %v2128, %v2192
        %2194 = vmatmul.f32.gmra.mxu0 %v1661
        %v2195 = vpop.f32.mrf.mxu0
        %v2196 = vadd.f32 %v2131, %v2195
        %2197 = vmatmul.f32.gmra.mxu0 %v1664
        %v2198 = vpop.f32.mrf.mxu0
        %v2199 = vadd.f32 %v2134, %v2198
        %2200 = vmatmul.f32.gmra.mxu0 %v1667
        %v2201 = vpop.f32.mrf.mxu0
        %v2202 = vadd.f32 %v2137, %v2201
        %2203 = vmatmul.f32.gmra.mxu0 %v1670
        %v2204 = vpop.f32.mrf.mxu0
        %v2205 = vadd.f32 %v2140, %v2204
        %2206 = vmatmul.f32.gmra.mxu0 %v1673
        %v2207 = vpop.f32.mrf.mxu0
        %v2208 = vadd.f32 %v2143, %v2207
        %2209 = vmatmul.f32.gmra.mxu0 %v1676
        %v2210 = vpop.f32.mrf.mxu0
        %v2211 = vadd.f32 %v2146, %v2210
        %2212 = vmatmul.f32.gmra.mxu0 %v1679
        %v2213 = vpop.f32.mrf.mxu0
        %v2214 = vadd.f32 %v2149, %v2213
        %2215 = vmatmul.f32.gmra.mxu0 %v1682
        %v2216 = vpop.f32.mrf.mxu0
        %v2217 = vadd.f32 %v2152, %v2216
        %2218 = vmatmul.f32.gmra.mxu0 %v1685
        %v2219 = vpop.f32.mrf.mxu0
        %v2220 = vadd.f32 %v2155, %v2219
        %2221 = vmatmul.f32.gmra.mxu0 %v1688
        %v2222 = vpop.f32.mrf.mxu0
        %v2223 = vadd.f32 %v2158, %v2222
        %2224 = vdwg.mxu0
        %s2225 = scalar_lea.vmem [#allocation4], 48
        %v2226 = vld [vmem:[%s2225] sm:$0xff]
        %v2227 = vld [vmem:[%s2225 + $0x8] sm:$0xff]
        %v2228 = vld [vmem:[%s2225 + $0x10] sm:$0xff]
        %v2229 = vld [vmem:[%s2225 + $0x18] sm:$0xff]
        %v2230 = vld [vmem:[%s2225 + $0x20] sm:$0xff]
        %v2231 = vld [vmem:[%s2225 + $0x28] sm:$0xff]
        %v2232 = vld [vmem:[%s2225 + $0x30] sm:$0xff]
        %v2233 = vld [vmem:[%s2225 + $0x38] sm:$0xff]
        %v2234 = vld [vmem:[%s2225 + $0x40] sm:$0xff]
        %v2235 = vld [vmem:[%s2225 + $0x48] sm:$0xff]
        %v2236 = vld [vmem:[%s2225 + $0x50] sm:$0xff]
        %v2237 = vld [vmem:[%s2225 + $0x58] sm:$0xff]
        %v2238 = vld [vmem:[%s2225 + $0x60] sm:$0xff]
        %v2239 = vld [vmem:[%s2225 + $0x68] sm:$0xff]
        %v2240 = vld [vmem:[%s2225 + $0x70] sm:$0xff]
        %v2241 = vld [vmem:[%s2225 + $0x78] sm:$0xff]
        %v2242 = vld [vmem:[%s2225 + $0x80] sm:$0xff]
        %v2243 = vld [vmem:[%s2225 + $0x88] sm:$0xff]
        %v2244 = vld [vmem:[%s2225 + $0x90] sm:$0xff]
        %v2245 = vld [vmem:[%s2225 + $0x98] sm:$0xff]
        %v2246 = vld [vmem:[%s2225 + $0xa0] sm:$0xff]
        %v2247 = vld [vmem:[%s2225 + $0xa8] sm:$0xff]
        %v2248 = vld [vmem:[%s2225 + $0xb0] sm:$0xff]
        %v2249 = vld [vmem:[%s2225 + $0xb8] sm:$0xff]
        %v2250 = vld [vmem:[%s2225 + $0xc0] sm:$0xff]
        %v2251 = vld [vmem:[%s2225 + $0xc8] sm:$0xff]
        %v2252 = vld [vmem:[%s2225 + $0xd0] sm:$0xff]
        %v2253 = vld [vmem:[%s2225 + $0xd8] sm:$0xff]
        %v2254 = vld [vmem:[%s2225 + $0xe0] sm:$0xff]
        %v2255 = vld [vmem:[%s2225 + $0xe8] sm:$0xff]
        %v2256 = vld [vmem:[%s2225 + $0xf0] sm:$0xff]
        %v2257 = vld [vmem:[%s2225 + $0xf8] sm:$0xff]
        %v2258 = vld [vmem:[%s2225 + $0x100] sm:$0xff]
        %v2259 = vld [vmem:[%s2225 + $0x108] sm:$0xff]
        %v2260 = vld [vmem:[%s2225 + $0x110] sm:$0xff]
        %v2261 = vld [vmem:[%s2225 + $0x118] sm:$0xff]
        %v2262 = vld [vmem:[%s2225 + $0x120] sm:$0xff]
        %v2263 = vld [vmem:[%s2225 + $0x128] sm:$0xff]
        %v2264 = vld [vmem:[%s2225 + $0x130] sm:$0xff]
        %v2265 = vld [vmem:[%s2225 + $0x138] sm:$0xff]
        %v2266 = vld [vmem:[%s2225 + $0x140] sm:$0xff]
        %v2267 = vld [vmem:[%s2225 + $0x148] sm:$0xff]
        %v2268 = vld [vmem:[%s2225 + $0x150] sm:$0xff]
        %v2269 = vld [vmem:[%s2225 + $0x158] sm:$0xff]
        %v2270 = vld [vmem:[%s2225 + $0x160] sm:$0xff]
        %v2271 = vld [vmem:[%s2225 + $0x168] sm:$0xff]
        %v2272 = vld [vmem:[%s2225 + $0x170] sm:$0xff]
        %v2273 = vld [vmem:[%s2225 + $0x178] sm:$0xff]
        %s2274 = scalar_lea.vmem [#allocation9], 768
        %v2275 = vld [vmem:[%s2274] sm:$0xff]
        %v2276 = vld [vmem:[%s2274 + $0x8] sm:$0xff]
        %v2277 = vld [vmem:[%s2274 + $0x10] sm:$0xff]
        %v2278 = vld [vmem:[%s2274 + $0x18] sm:$0xff]
        %v2279 = vld [vmem:[%s2274 + $0x20] sm:$0xff]
        %v2280 = vld [vmem:[%s2274 + $0x28] sm:$0xff]
        %v2281 = vld [vmem:[%s2274 + $0x30] sm:$0xff]
        %v2282 = vld [vmem:[%s2274 + $0x38] sm:$0xff]
        %v2283 = vld [vmem:[%s2274 + $0x40] sm:$0xff]
        %v2284 = vld [vmem:[%s2274 + $0x48] sm:$0xff]
        %v2285 = vld [vmem:[%s2274 + $0x50] sm:$0xff]
        %v2286 = vld [vmem:[%s2274 + $0x58] sm:$0xff]
        %v2287 = vld [vmem:[%s2274 + $0x60] sm:$0xff]
        %v2288 = vld [vmem:[%s2274 + $0x68] sm:$0xff]
        %v2289 = vld [vmem:[%s2274 + $0x70] sm:$0xff]
        %v2290 = vld [vmem:[%s2274 + $0x78] sm:$0xff]
        %v2291 = vld [vmem:[%s2274 + $0x80] sm:$0xff]
        %v2292 = vld [vmem:[%s2274 + $0x88] sm:$0xff]
        %v2293 = vld [vmem:[%s2274 + $0x90] sm:$0xff]
        %v2294 = vld [vmem:[%s2274 + $0x98] sm:$0xff]
        %v2295 = vld [vmem:[%s2274 + $0xa0] sm:$0xff]
        %v2296 = vld [vmem:[%s2274 + $0xa8] sm:$0xff]
        %v2297 = vld [vmem:[%s2274 + $0xb0] sm:$0xff]
        %v2298 = vld [vmem:[%s2274 + $0xb8] sm:$0xff]
        %v2299 = vld [vmem:[%s2274 + $0xc0] sm:$0xff]
        %v2300 = vld [vmem:[%s2274 + $0xc8] sm:$0xff]
        %v2301 = vld [vmem:[%s2274 + $0xd0] sm:$0xff]
        %v2302 = vld [vmem:[%s2274 + $0xd8] sm:$0xff]
        %v2303 = vld [vmem:[%s2274 + $0xe0] sm:$0xff]
        %v2304 = vld [vmem:[%s2274 + $0xe8] sm:$0xff]
        %v2305 = vld [vmem:[%s2274 + $0xf0] sm:$0xff]
        %v2306 = vld [vmem:[%s2274 + $0xf8] sm:$0xff]
        %v2307 = vld [vmem:[%s2274 + $0x100] sm:$0xff]
        %v2308 = vld [vmem:[%s2274 + $0x108] sm:$0xff]
        %v2309 = vld [vmem:[%s2274 + $0x110] sm:$0xff]
        %v2310 = vld [vmem:[%s2274 + $0x118] sm:$0xff]
        %v2311 = vld [vmem:[%s2274 + $0x120] sm:$0xff]
        %v2312 = vld [vmem:[%s2274 + $0x128] sm:$0xff]
        %v2313 = vld [vmem:[%s2274 + $0x130] sm:$0xff]
        %v2314 = vld [vmem:[%s2274 + $0x138] sm:$0xff]
        %v2315 = vld [vmem:[%s2274 + $0x140] sm:$0xff]
        %v2316 = vld [vmem:[%s2274 + $0x148] sm:$0xff]
        %v2317 = vld [vmem:[%s2274 + $0x150] sm:$0xff]
        %v2318 = vld [vmem:[%s2274 + $0x158] sm:$0xff]
        %v2319 = vld [vmem:[%s2274 + $0x160] sm:$0xff]
        %v2320 = vld [vmem:[%s2274 + $0x168] sm:$0xff]
        %v2321 = vld [vmem:[%s2274 + $0x170] sm:$0xff]
        %v2322 = vld [vmem:[%s2274 + $0x178] sm:$0xff]
        %2323 = vmatpush.msra.mxu0 %v2290
        %2324 = vmatpush.msra.mxu0 %v2289
        %2325 = vmatpush.msra.mxu0 %v2288
        %2326 = vmatpush.msra.mxu0 %v2287
        %2327 = vmatpush.msra.mxu0 %v2286
        %2328 = vmatpush.msra.mxu0 %v2285
        %2329 = vmatpush.msra.mxu0 %v2284
        %2330 = vmatpush.msra.mxu0 %v2283
        %2331 = vmatpush.msra.mxu0 %v2282
        %2332 = vmatpush.msra.mxu0 %v2281
        %2333 = vmatpush.msra.mxu0 %v2280
        %2334 = vmatpush.msra.mxu0 %v2279
        %2335 = vmatpush.msra.mxu0 %v2278
        %2336 = vmatpush.msra.mxu0 %v2277
        %2337 = vmatpush.msra.mxu0 %v2276
        %2338 = vmatpush.msra.mxu0 %v2275
        %2339 = vmatmul.f32.gmra.mxu0 %v2226
        %v2340 = vpop.f32.mrf.mxu0
        %v2341 = vadd.f32 0.0, %v2340
        %2342 = vmatmul.f32.gmra.mxu0 %v2229
        %v2343 = vpop.f32.mrf.mxu0
        %v2344 = vadd.f32 0.0, %v2343
        %2345 = vmatmul.f32.gmra.mxu0 %v2232
        %v2346 = vpop.f32.mrf.mxu0
        %v2347 = vadd.f32 0.0, %v2346
        %2348 = vmatmul.f32.gmra.mxu0 %v2235
        %v2349 = vpop.f32.mrf.mxu0
        %v2350 = vadd.f32 0.0, %v2349
        %2351 = vmatmul.f32.gmra.mxu0 %v2238
        %v2352 = vpop.f32.mrf.mxu0
        %v2353 = vadd.f32 0.0, %v2352
        %2354 = vmatmul.f32.gmra.mxu0 %v2241
        %v2355 = vpop.f32.mrf.mxu0
        %v2356 = vadd.f32 0.0, %v2355
        %2357 = vmatmul.f32.gmra.mxu0 %v2244
        %v2358 = vpop.f32.mrf.mxu0
        %v2359 = vadd.f32 0.0, %v2358
        %2360 = vmatmul.f32.gmra.mxu0 %v2247
        %v2361 = vpop.f32.mrf.mxu0
        %v2362 = vadd.f32 0.0, %v2361
        %2363 = vmatmul.f32.gmra.mxu0 %v2250
        %v2364 = vpop.f32.mrf.mxu0
        %v2365 = vadd.f32 0.0, %v2364
        %2366 = vmatmul.f32.gmra.mxu0 %v2253
        %v2367 = vpop.f32.mrf.mxu0
        %v2368 = vadd.f32 0.0, %v2367
        %2369 = vmatmul.f32.gmra.mxu0 %v2256
        %v2370 = vpop.f32.mrf.mxu0
        %v2371 = vadd.f32 0.0, %v2370
        %2372 = vmatmul.f32.gmra.mxu0 %v2259
        %v2373 = vpop.f32.mrf.mxu0
        %v2374 = vadd.f32 0.0, %v2373
        %2375 = vmatmul.f32.gmra.mxu0 %v2262
        %v2376 = vpop.f32.mrf.mxu0
        %v2377 = vadd.f32 0.0, %v2376
        %2378 = vmatmul.f32.gmra.mxu0 %v2265
        %v2379 = vpop.f32.mrf.mxu0
        %v2380 = vadd.f32 0.0, %v2379
        %2381 = vmatmul.f32.gmra.mxu0 %v2268
        %v2382 = vpop.f32.mrf.mxu0
        %v2383 = vadd.f32 0.0, %v2382
        %2384 = vmatmul.f32.gmra.mxu0 %v2271
        %v2385 = vpop.f32.mrf.mxu0
        %v2386 = vadd.f32 0.0, %v2385
        %2387 = vdwg.mxu0
        %2388 = vmatpush.msra.mxu0 %v2306
        %2389 = vmatpush.msra.mxu0 %v2305
        %2390 = vmatpush.msra.mxu0 %v2304
        %2391 = vmatpush.msra.mxu0 %v2303
        %2392 = vmatpush.msra.mxu0 %v2302
        %2393 = vmatpush.msra.mxu0 %v2301
        %2394 = vmatpush.msra.mxu0 %v2300
        %2395 = vmatpush.msra.mxu0 %v2299
        %2396 = vmatpush.msra.mxu0 %v2298
        %2397 = vmatpush.msra.mxu0 %v2297
        %2398 = vmatpush.msra.mxu0 %v2296
        %2399 = vmatpush.msra.mxu0 %v2295
        %2400 = vmatpush.msra.mxu0 %v2294
        %2401 = vmatpush.msra.mxu0 %v2293
        %2402 = vmatpush.msra.mxu0 %v2292
        %2403 = vmatpush.msra.mxu0 %v2291
        %2404 = vmatmul.f32.gmra.mxu0 %v2227
        %v2405 = vpop.f32.mrf.mxu0
        %v2406 = vadd.f32 %v2341, %v2405
        %2407 = vmatmul.f32.gmra.mxu0 %v2230
        %v2408 = vpop.f32.mrf.mxu0
        %v2409 = vadd.f32 %v2344, %v2408
        %2410 = vmatmul.f32.gmra.mxu0 %v2233
        %v2411 = vpop.f32.mrf.mxu0
        %v2412 = vadd.f32 %v2347, %v2411
        %2413 = vmatmul.f32.gmra.mxu0 %v2236
        %v2414 = vpop.f32.mrf.mxu0
        %v2415 = vadd.f32 %v2350, %v2414
        %2416 = vmatmul.f32.gmra.mxu0 %v2239
        %v2417 = vpop.f32.mrf.mxu0
        %v2418 = vadd.f32 %v2353, %v2417
        %2419 = vmatmul.f32.gmra.mxu0 %v2242
        %v2420 = vpop.f32.mrf.mxu0
        %v2421 = vadd.f32 %v2356, %v2420
        %2422 = vmatmul.f32.gmra.mxu0 %v2245
        %v2423 = vpop.f32.mrf.mxu0
        %v2424 = vadd.f32 %v2359, %v2423
        %2425 = vmatmul.f32.gmra.mxu0 %v2248
        %v2426 = vpop.f32.mrf.mxu0
        %v2427 = vadd.f32 %v2362, %v2426
        %2428 = vmatmul.f32.gmra.mxu0 %v2251
        %v2429 = vpop.f32.mrf.mxu0
        %v2430 = vadd.f32 %v2365, %v2429
        %2431 = vmatmul.f32.gmra.mxu0 %v2254
        %v2432 = vpop.f32.mrf.mxu0
        %v2433 = vadd.f32 %v2368, %v2432
        %2434 = vmatmul.f32.gmra.mxu0 %v2257
        %v2435 = vpop.f32.mrf.mxu0
        %v2436 = vadd.f32 %v2371, %v2435
        %2437 = vmatmul.f32.gmra.mxu0 %v2260
        %v2438 = vpop.f32.mrf.mxu0
        %v2439 = vadd.f32 %v2374, %v2438
        %2440 = vmatmul.f32.gmra.mxu0 %v2263
        %v2441 = vpop.f32.mrf.mxu0
        %v2442 = vadd.f32 %v2377, %v2441
        %2443 = vmatmul.f32.gmra.mxu0 %v2266
        %v2444 = vpop.f32.mrf.mxu0
        %v2445 = vadd.f32 %v2380, %v2444
        %2446 = vmatmul.f32.gmra.mxu0 %v2269
        %v2447 = vpop.f32.mrf.mxu0
        %v2448 = vadd.f32 %v2383, %v2447
        %2449 = vmatmul.f32.gmra.mxu0 %v2272
        %v2450 = vpop.f32.mrf.mxu0
        %v2451 = vadd.f32 %v2386, %v2450
        %2452 = vdwg.mxu0
        %2453 = vmatpush.msra.mxu0 %v2322
        %2454 = vmatpush.msra.mxu0 %v2321
        %2455 = vmatpush.msra.mxu0 %v2320
        %2456 = vmatpush.msra.mxu0 %v2319
        %2457 = vmatpush.msra.mxu0 %v2318
        %2458 = vmatpush.msra.mxu0 %v2317
        %2459 = vmatpush.msra.mxu0 %v2316
        %2460 = vmatpush.msra.mxu0 %v2315
        %2461 = vmatpush.msra.mxu0 %v2314
        %2462 = vmatpush.msra.mxu0 %v2313
        %2463 = vmatpush.msra.mxu0 %v2312
        %2464 = vmatpush.msra.mxu0 %v2311
        %2465 = vmatpush.msra.mxu0 %v2310
        %2466 = vmatpush.msra.mxu0 %v2309
        %2467 = vmatpush.msra.mxu0 %v2308
        %2468 = vmatpush.msra.mxu0 %v2307
        %2469 = vmatmul.f32.gmra.mxu0 %v2228
        %v2470 = vpop.f32.mrf.mxu0
        %v2471 = vadd.f32 %v2406, %v2470
        %2472 = vmatmul.f32.gmra.mxu0 %v2231
        %v2473 = vpop.f32.mrf.mxu0
        %v2474 = vadd.f32 %v2409, %v2473
        %2475 = vmatmul.f32.gmra.mxu0 %v2234
        %v2476 = vpop.f32.mrf.mxu0
        %v2477 = vadd.f32 %v2412, %v2476
        %2478 = vmatmul.f32.gmra.mxu0 %v2237
        %v2479 = vpop.f32.mrf.mxu0
        %v2480 = vadd.f32 %v2415, %v2479
        %2481 = vmatmul.f32.gmra.mxu0 %v2240
        %v2482 = vpop.f32.mrf.mxu0
        %v2483 = vadd.f32 %v2418, %v2482
        %2484 = vmatmul.f32.gmra.mxu0 %v2243
        %v2485 = vpop.f32.mrf.mxu0
        %v2486 = vadd.f32 %v2421, %v2485
        %2487 = vmatmul.f32.gmra.mxu0 %v2246
        %v2488 = vpop.f32.mrf.mxu0
        %v2489 = vadd.f32 %v2424, %v2488
        %2490 = vmatmul.f32.gmra.mxu0 %v2249
        %v2491 = vpop.f32.mrf.mxu0
        %v2492 = vadd.f32 %v2427, %v2491
        %2493 = vmatmul.f32.gmra.mxu0 %v2252
        %v2494 = vpop.f32.mrf.mxu0
        %v2495 = vadd.f32 %v2430, %v2494
        %2496 = vmatmul.f32.gmra.mxu0 %v2255
        %v2497 = vpop.f32.mrf.mxu0
        %v2498 = vadd.f32 %v2433, %v2497
        %2499 = vmatmul.f32.gmra.mxu0 %v2258
        %v2500 = vpop.f32.mrf.mxu0
        %v2501 = vadd.f32 %v2436, %v2500
        %2502 = vmatmul.f32.gmra.mxu0 %v2261
        %v2503 = vpop.f32.mrf.mxu0
        %v2504 = vadd.f32 %v2439, %v2503
        %2505 = vmatmul.f32.gmra.mxu0 %v2264
        %v2506 = vpop.f32.mrf.mxu0
        %v2507 = vadd.f32 %v2442, %v2506
        %2508 = vmatmul.f32.gmra.mxu0 %v2267
        %v2509 = vpop.f32.mrf.mxu0
        %v2510 = vadd.f32 %v2445, %v2509
        %2511 = vmatmul.f32.gmra.mxu0 %v2270
        %v2512 = vpop.f32.mrf.mxu0
        %v2513 = vadd.f32 %v2448, %v2512
        %2514 = vmatmul.f32.gmra.mxu0 %v2273
        %v2515 = vpop.f32.mrf.mxu0
        %v2516 = vadd.f32 %v2451, %v2515
        %2517 = vdwg.mxu0
        %v2518 = vadd.f32 %v2178, %v2471
        %v2519 = vadd.f32 %v2181, %v2474
        %v2520 = vadd.f32 %v2184, %v2477
        %v2521 = vadd.f32 %v2187, %v2480
        %v2522 = vadd.f32 %v2190, %v2483
        %v2523 = vadd.f32 %v2193, %v2486
        %v2524 = vadd.f32 %v2196, %v2489
        %v2525 = vadd.f32 %v2199, %v2492
        %v2526 = vadd.f32 %v2202, %v2495
        %v2527 = vadd.f32 %v2205, %v2498
        %v2528 = vadd.f32 %v2208, %v2501
        %v2529 = vadd.f32 %v2211, %v2504
        %v2530 = vadd.f32 %v2214, %v2507
        %v2531 = vadd.f32 %v2217, %v2510
        %v2532 = vadd.f32 %v2220, %v2513
        %v2533 = vadd.f32 %v2223, %v2516
        %s2534 = sadd.s32 %s255, 2
        %s2535 = smul.u32 %s2534, 8
        %s2536 = scalar_lea.vmem [#allocation2], %s2535
        %v2537 = vld [vmem:[%s2536] sm:$0xff]
        %v2538 = vld [vmem:[%s2536 + $0x8] sm:$0xff]
        %v2539 = vld [vmem:[%s2536 + $0x10] sm:$0xff]
        %v2540 = vld [vmem:[%s2536 + $0x18] sm:$0xff]
        %v2541 = vld [vmem:[%s2536 + $0x20] sm:$0xff]
        %v2542 = vld [vmem:[%s2536 + $0x28] sm:$0xff]
        %v2543 = vld [vmem:[%s2536 + $0x30] sm:$0xff]
        %v2544 = vld [vmem:[%s2536 + $0x38] sm:$0xff]
        %v2545 = vld [vmem:[%s2536 + $0x40] sm:$0xff]
        %v2546 = vld [vmem:[%s2536 + $0x48] sm:$0xff]
        %v2547 = vld [vmem:[%s2536 + $0x50] sm:$0xff]
        %v2548 = vld [vmem:[%s2536 + $0x58] sm:$0xff]
        %v2549 = vld [vmem:[%s2536 + $0x60] sm:$0xff]
        %v2550 = vld [vmem:[%s2536 + $0x68] sm:$0xff]
        %v2551 = vld [vmem:[%s2536 + $0x70] sm:$0xff]
        %v2552 = vld [vmem:[%s2536 + $0x78] sm:$0xff]
        %v2553 = vld [vmem:[%s4] sm:$0x1]
        %v2555 = vperm.slane %v2553, 0
        %v2557 = vadd.f32 %v2518, %v2555
        %v2558 = vadd.f32 %v2519, %v2555
        %v2559 = vadd.f32 %v2520, %v2555
        %v2560 = vadd.f32 %v2521, %v2555
        %v2561 = vadd.f32 %v2522, %v2555
        %v2562 = vadd.f32 %v2523, %v2555
        %v2563 = vadd.f32 %v2524, %v2555
        %v2564 = vadd.f32 %v2525, %v2555
        %v2565 = vadd.f32 %v2526, %v2555
        %v2566 = vadd.f32 %v2527, %v2555
        %v2567 = vadd.f32 %v2528, %v2555
        %v2568 = vadd.f32 %v2529, %v2555
        %v2569 = vadd.f32 %v2530, %v2555
        %v2570 = vadd.f32 %v2531, %v2555
        %v2571 = vadd.f32 %v2532, %v2555
        %v2572 = vadd.f32 %v2533, %v2555
        %v2573 = vadd.f32 %v2557, %v2537
        %v2574 = vadd.f32 %v2558, %v2538
        %v2575 = vadd.f32 %v2559, %v2539
        %v2576 = vadd.f32 %v2560, %v2540
        %v2577 = vadd.f32 %v2561, %v2541
        %v2578 = vadd.f32 %v2562, %v2542
        %v2579 = vadd.f32 %v2563, %v2543
        %v2580 = vadd.f32 %v2564, %v2544
        %v2581 = vadd.f32 %v2565, %v2545
        %v2582 = vadd.f32 %v2566, %v2546
        %v2583 = vadd.f32 %v2567, %v2547
        %v2584 = vadd.f32 %v2568, %v2548
        %v2585 = vadd.f32 %v2569, %v2549
        %v2586 = vadd.f32 %v2570, %v2550
        %v2587 = vadd.f32 %v2571, %v2551
        %v2588 = vadd.f32 %v2572, %v2552
        %v2589 = vmax.f32 %v2573, 0.0
        %v2590 = vmax.f32 %v2574, 0.0
        %v2591 = vmax.f32 %v2575, 0.0
        %v2592 = vmax.f32 %v2576, 0.0
        %v2593 = vmax.f32 %v2577, 0.0
        %v2594 = vmax.f32 %v2578, 0.0
        %v2595 = vmax.f32 %v2579, 0.0
        %v2596 = vmax.f32 %v2580, 0.0
        %v2597 = vmax.f32 %v2581, 0.0
        %v2598 = vmax.f32 %v2582, 0.0
        %v2599 = vmax.f32 %v2583, 0.0
        %v2600 = vmax.f32 %v2584, 0.0
        %v2601 = vmax.f32 %v2585, 0.0
        %v2602 = vmax.f32 %v2586, 0.0
        %v2603 = vmax.f32 %v2587, 0.0
        %v2604 = vmax.f32 %v2588, 0.0
        %2605 = vst [vmem:[%s224] sm:$0xff] %v2589
        %2606 = vst [vmem:[%s224 + $0x8] sm:$0xff] %v2590
        %2607 = vst [vmem:[%s224 + $0x10] sm:$0xff] %v2591
        %2608 = vst [vmem:[%s224 + $0x18] sm:$0xff] %v2592
        %2609 = vst [vmem:[%s224 + $0x20] sm:$0xff] %v2593
        %2610 = vst [vmem:[%s224 + $0x28] sm:$0xff] %v2594
        %2611 = vst [vmem:[%s224 + $0x30] sm:$0xff] %v2595
        %2612 = vst [vmem:[%s224 + $0x38] sm:$0xff] %v2596
        %2613 = vst [vmem:[%s224 + $0x40] sm:$0xff] %v2597
        %2614 = vst [vmem:[%s224 + $0x48] sm:$0xff] %v2598
        %2615 = vst [vmem:[%s224 + $0x50] sm:$0xff] %v2599
        %2616 = vst [vmem:[%s224 + $0x58] sm:$0xff] %v2600
        %2617 = vst [vmem:[%s224 + $0x60] sm:$0xff] %v2601
        %2618 = vst [vmem:[%s224 + $0x68] sm:$0xff] %v2602
        %2619 = vst [vmem:[%s224 + $0x70] sm:$0xff] %v2603
        %2620 = vst [vmem:[%s224 + $0x78] sm:$0xff] %v2604
        %s2621 = sand.u32 %s127, 1
        %s2622 = scalar_lea.sflag [#allocation8], %s2621
        %s2623 = sand.u32 %s127, 1
        %s2624 = smul.addr %s2623, 128
        %s2625 = scalar_lea.vmem [#allocation11], %s2624
        // Predicated region
        $region57: #{tpu_custom_call.1} parent=35 // pred_check
          %p2626 = pneg %p137
        $region58: #{tpu_custom_call.1} parent=35 // pred_check_branch
          %2628 = sbr.rel (%p2626) target = $region60
        $region59: #{tpu_custom_call.1} parent=35 // pred_region
          %s2629 = smul.u32 16, %s26
          %2631 = vsyncadd %s2622, 0
          %s2632 = smul.addr %s25, 16
          %s2633 = sadd.s32 %s2629, %s2632
          %s2634 = smul.addr %s2633, 8
          %s2635 = scalar_lea.hbm %s5, %s2634
          %s2636 = sshll.u32 %s2625, 4
          %s2637 = int_to_ptr.vmem [resolvable:$true] %s2636
          %s2638 = sshll.u32 %s2635, 4
          %s2639 = int_to_ptr.hbm [resolvable:$true] %s2638
          %2644 = dma.vmem_to_hbm [thread:$0]  %s2637, 2048, %s2639, %s2622, 128, 128, 8
        $region60: #{tpu_custom_call.1} parent=35 // pred_fallthru
          _
      $region36: #{tpu_custom_call.1} parent=5 // pred_fallthru
        _
      %p2645 = scmp.le.s32.totalorder 2, %s16
      // Predicated region
      $region61: #{tpu_custom_call.1} parent=5 // pred_check
        %p2646 = pneg %p2645
      $region62: #{tpu_custom_call.1} parent=5 // pred_check_branch
        %2648 = sbr.rel (%p2646) target = $region64
      $region63: #{tpu_custom_call.1} parent=5 // pred_region
        %s2649 = ssub.s32 %s16, 2
        // Predicated region
        $region65: #{tpu_custom_call.1} parent=63 // pred_check
          %p2650 = pneg %p143
        $region66: #{tpu_custom_call.1} parent=63 // pred_check_branch
          %2652 = sbr.rel (%p2650) target = $region68
        $region67: #{tpu_custom_call.1} parent=63 // pred_region
          %s2653 = sand.u32 %s128, 1
          %s2654 = scalar_lea.sflag [#allocation8], %s2653
          %s2655 = sand.u32 %s128, 1
          %s2656 = smul.addr %s2655, 128
          %s2657 = scalar_lea.vmem [#allocation11], %s2656
          %2659 = dma.done %s2654, 2048
        $region68: #{tpu_custom_call.1} parent=63 // pred_fallthru
          _
      $region64: #{tpu_custom_call.1} parent=5 // pred_fallthru
        _
    $region6: #{tpu_custom_call.1} parent=1 // loop_footer
      %s20 = sadd.s32 1, %s16
    $region7: #{tpu_custom_call.1} parent=1 // loop_footer_branch
      %15 = sbr.rel target = $region3
    $region8: #{tpu_custom_call.1} parent=1 // loop_exit
      _
    %2660 = vsyncpa [#allocation7], 1
    %s2661 = scalar_lea.sflag [#allocation7], 1
    %2662 = vsyncpa %s2661, 1
    %2663 = vsyncpa [#allocation10], 1
    %2664 = vsyncpa [#allocation8], 1
    %s2665 = scalar_lea.sflag [#allocation8], 1
    %2666 = vsyncpa %s2665, 1
  %2667 = vsyncmov [#allocation5]
  %s2668 = vpop.sfrf %2667
  %p2669 = scmp.eq.s32.totalorder %s2668, 0
  %p2670 = pneg %p2669
  %2672 = shalt.err (%p2670)

// kernel: tpu_custom_call.1
$region0: #{tpu_custom_call.1}
  #allocation0 [shape = 'u32[]', space=smem, size = 0x4, offset = 0x4, fixed_abs, tag = 'smem constant byte address 0x4 - core index']
  #allocation1 [shape = 'u32[72,128]{1,0:T(1,128)}', space=vmem, size = 0x9000, scoped, tag = 'internal scratch']
  #allocation2 [shape = 'f32[20,8,128]{2,1,0:T(8,128)}', space=vmem, size = 0x14000, scoped, tag = 'scratch operand']
  #allocation3 [shape = 'f32[20,8,384]{2,1,0:T(8,128)}', space=vmem, size = 0x3c000, scoped, tag = 'scratch operand']
  #allocation4 [shape = 'f32[18,8,384]{2,1,0:T(8,128)}', space=vmem, size = 0x36000, scoped, tag = 'scratch operand']
  #allocation5 [shape = 's32[1]{0}', space=sflag, size = 0x4, scoped, tag = 'scratch operand']
  #allocation12 [shape = 's32[]', space=sflag, size = 0x4, offset = 0, fixed_abs, tag = 'sflag constant byte address 0x0 - dummy sync flag']
  #allocation13 [shape = 's32[]', space=sflag, size = 0x4, offset = 0, fixed_abs, tag = 'sflag constant byte address 0x0 - dummy sync flag']
  #allocation14 [shape = 'u32[]', space=smem, size = 0x4, offset = 0x44, fixed_abs, tag = 'smem constant byte address 0x44 - assertion arg 0']
  #allocation15 [shape = 'u32[]', space=smem, size = 0x4, offset = 0x48, fixed_abs, tag = 'smem constant byte address 0x48 - assertion arg 1']
  %s0 = inlined_call_operand.hbm [shape: f32[2,16,8,128], index: 0, kind: input, shape index: {}]
  %s1 = inlined_call_operand.hbm [shape: f32[3,384,128], index: 1, kind: input, shape index: {}]
  %s2 = inlined_call_operand.vmem [shape: f32[1,128], index: 2, kind: input, shape index: {}]
  %s3 = inlined_call_operand.hbm [shape: f32[3,384,128], index: 3, kind: input, shape index: {}]
  %s4 = inlined_call_operand.vmem [shape: f32[1,128], index: 4, kind: input, shape index: {}]
  %s5 = inlined_call_operand.hbm [shape: f32[2,16,8,128], index: 5, kind: output, shape index: {}]
  %s6 = sld [smem:[#allocation0]]
  $region69: #{tpu_custom_call.1} parent=0
    _
  %s8 = ssub.s32 1, %s6
  %s9 = scalar_select 0, %s8, %s6
  $region1: #{tpu_custom_call.1} parent=0
    #allocation6 [shape = 'u8[589824]{0}', space=vmem, size = 0x90000, scoped, tag = 'input window, operand 1, single buffered']
    #allocation7 [shape = 's32[2]{0}', space=sflag, size = 0x8, scoped, tag = 'scoped memory for tpu_custom_call.1']
    #allocation8 [shape = 's32[2]{0}', space=sflag, size = 0x8, scoped, tag = 'scoped memory for tpu_custom_call.1']
    #allocation9 [shape = 'u8[589824]{0}', space=vmem, size = 0x90000, scoped, tag = 'input window, operand 3, single buffered']
    #allocation10 [shape = 's32[1]{0}', space=sflag, size = 0x4, scoped, tag = 'scoped memory for tpu_custom_call.1']
    #allocation11 [shape = 'u8[131072]{0}', space=vmem, size = 0x20000, scoped, tag = 'output window, operand 0']
    %10 = vsyncpa [#allocation7], 0
    %11 = vsyncpa [#allocation10], 0
    %12 = vsyncpa [#allocation8], 0
    %s13 = scalar_lea.sflag [#allocation8], 1
    %14 = vsyncpa %s13, 0
    loop: start=0, step=1, limit=4
    $region2: #{tpu_custom_call.1} parent=1 // loop_pre_header
      _
    $region3: #{tpu_custom_call.1} parent=1 // loop_header
      %s16 = sphi 0, %s20
      %p17 = scmp.ge.s32.totalorder %s16, 4
      %s23 = sphi 0, %s35
      %s24 = sphi 0, %s31
      %s25 = sphi 0, %s23
      %s26 = sphi 0, %s24
      %s27 = sphi 0, %s25
      %s28 = sphi 0, %s26
      %s36 = sphi 0, %s36
      %s38 = sphi 0, %s36
      %s39 = sphi 0, %s38
      %s53 = sphi 0, %s39
      %s57 = sphi 0, %s57
      %s59 = sphi 0, %s57
      %s60 = sphi 0, %s59
      %s74 = sphi 0, %s60
      %s78 = sphi 0, %s78
      %s80 = sphi 0, %s78
      %s81 = sphi 0, %s80
      %s95 = sphi 0, %s81
      %s99 = sphi 0, %s99
      %s101 = sphi 0, %s99
      %s102 = sphi 0, %s101
      %s116 = sphi 0, %s102
      %s124 = sphi 0, %s126
      %s127 = sphi 0, %s124
      %s128 = sphi 0, %s127
      %s144 = sphi 0, %s128
    $region4: #{tpu_custom_call.1} parent=1 // loop_header_branch
      %19 = sbr.rel (%p17) target = $region8
    $region5: #{tpu_custom_call.1} parent=1 // loop_body
      %s21 = ssub.s32 %s16, 1
      %s22 = ssub.s32 %s16, 2
      %s29 = sadd.s32 1, %s24
      %p30 = scmp.ge.s32.totalorder %s29, 1
      %s31 = scalar_select %p30, 0, %s29
      %s32 = sadd.s32 1, %s23
      %s33 = scalar_select %p30, %s32, %s23
      %p34 = scmp.ge.s32.totalorder %s33, 2
      %s35 = scalar_select %p34, 0, %s33
      %s37 = sadd.s32 %s36, 1
      %p40 = scmp.eq.s32.totalorder %s16, 1
      %p41 = scmp.ne.s32.totalorder %s36, %s38
      %p42 = scmp.eq.s32.totalorder %s16, 0
      %p43 = por %p41, %p42
      %p44 = scmp.ne.s32.totalorder %s36, %s38
      %p45 = scmp.eq.s32.totalorder %s21, 1
      %p46 = por %p44, %p45
      %p47 = scmp.ne.s32.totalorder %s38, %s39
      %p48 = scmp.eq.s32.totalorder %s21, 0
      %p49 = por %p47, %p48
      %p50 = scmp.ne.s32.totalorder %s38, %s39
      %p51 = scmp.eq.s32.totalorder %s22, 1
      %p52 = por %p50, %p51
      %p54 = scmp.ne.s32.totalorder %s39, %s53
      %p55 = scmp.eq.s32.totalorder %s22, 0
      %p56 = por %p54, %p55
      %s58 = sadd.s32 %s57, 1
      %p61 = scmp.eq.s32.totalorder %s16, 1
      %p62 = scmp.ne.s32.totalorder %s57, %s59
      %p63 = scmp.eq.s32.totalorder %s16, 0
      %p64 = por %p62, %p63
      %p65 = scmp.ne.s32.totalorder %s57, %s59
      %p66 = scmp.eq.s32.totalorder %s21, 1
      %p67 = por %p65, %p66
      %p68 = scmp.ne.s32.totalorder %s59, %s60
      %p69 = scmp.eq.s32.totalorder %s21, 0
      %p70 = por %p68, %p69
      %p71 = scmp.ne.s32.totalorder %s59, %s60
      %p72 = scmp.eq.s32.totalorder %s22, 1
      %p73 = por %p71, %p72
      %p75 = scmp.ne.s32.totalorder %s60, %s74
      %p76 = scmp.eq.s32.totalorder %s22, 0
      %p77 = por %p75, %p76
      %s79 = sadd.s32 %s78, 1
      %p82 = scmp.eq.s32.totalorder %s16, 1
      %p83 = scmp.ne.s32.totalorder %s78, %s80
      %p84 = scmp.eq.s32.totalorder %s16, 0
      %p85 = por %p83, %p84
      %p86 = scmp.ne.s32.totalorder %s78, %s80
      %p87 = scmp.eq.s32.totalorder %s21, 1
      %p88 = por %p86, %p87
      %p89 = scmp.ne.s32.totalorder %s80, %s81
      %p90 = scmp.eq.s32.totalorder %s21, 0
      %p91 = por %p89, %p90
      %p92 = scmp.ne.s32.totalorder %s80, %s81
      %p93 = scmp.eq.s32.totalorder %s22, 1
      %p94 = por %p92, %p93
      %p96 = scmp.ne.s32.totalorder %s81, %s95
      %p97 = scmp.eq.s32.totalorder %s22, 0
      %p98 = por %p96, %p97
      %s100 = sadd.s32 %s99, 1
      %p103 = scmp.eq.s32.totalorder %s16, 1
      %p104 = scmp.ne.s32.totalorder %s99, %s101
      %p105 = scmp.eq.s32.totalorder %s16, 0
      %p106 = por %p104, %p105
      %p107 = scmp.ne.s32.totalorder %s99, %s101
      %p108 = scmp.eq.s32.totalorder %s21, 1
      %p109 = por %p107, %p108
      %p110 = scmp.ne.s32.totalorder %s101, %s102
      %p111 = scmp.eq.s32.totalorder %s21, 0
      %p112 = por %p110, %p111
      %p113 = scmp.ne.s32.totalorder %s101, %s102
      %p114 = scmp.eq.s32.totalorder %s22, 1
      %p115 = por %p113, %p114
      %p117 = scmp.ne.s32.totalorder %s102, %s116
      %p118 = scmp.eq.s32.totalorder %s22, 0
      %p119 = por %p117, %p118
      %s120 = ssub.s32 %s23, %s35
      %s121 = ssub.s32 %s24, %s31
      %s122 = sor.u32 %s120, %s121
      %p123 = scmp.eq.s32.totalorder %s122, 0
      %s125 = sadd.s32 %s124, 1
      %s126 = scalar_select %p123, %s124, %s125
      %p129 = pneg %p123
      %p130 = scmp.eq.s32.totalorder %s16, 1
      %p131 = por %p129, %p130
      %p132 = scmp.ne.s32.totalorder %s124, %s127
      %p133 = scmp.eq.s32.totalorder %s16, 0
      %p134 = por %p132, %p133
      %p135 = scmp.ne.s32.totalorder %s124, %s127
      %p136 = scmp.eq.s32.totalorder %s21, 1
      %p137 = por %p135, %p136
      %p138 = scmp.ne.s32.totalorder %s127, %s128
      %p139 = scmp.eq.s32.totalorder %s21, 0
      %p140 = por %p138, %p139
      %p141 = scmp.ne.s32.totalorder %s127, %s128
      %p142 = scmp.eq.s32.totalorder %s22, 1
      %p143 = por %p141, %p142
      %p145 = scmp.ne.s32.totalorder %s128, %s144
      %p146 = scmp.eq.s32.totalorder %s22, 0
      %p147 = por %p145, %p146
      %p148 = scmp.le.s32.totalorder 1, %s16
      %p149 = scmp.lt.s32.totalorder %s16, 3
      %p150 = pnand %p148, %p149
      %p151 = pneg %p150
      // Predicated region
      $region9: #{tpu_custom_call.1} parent=5 // pred_check
        _
      $region10: #{tpu_custom_call.1} parent=5 // pred_check_branch
        %153 = sbr.rel (%p150) target = $region12
      $region11: #{tpu_custom_call.1} parent=5 // pred_region
        %s154 = ssub.s32 %s16, 1
        // Predicated region
        $region13: #{tpu_custom_call.1} parent=11 // pred_check
          %p155 = pneg %p49
        $region14: #{tpu_custom_call.1} parent=11 // pred_check_branch
          %157 = sbr.rel (%p155) target = $region16
        $region15: #{tpu_custom_call.1} parent=11 // pred_region
          %159 = vsyncadd [#allocation7], 0
          %s160 = sshll.u32 %s1, 4
          %s161 = int_to_ptr.hbm [resolvable:$true] %s160
          %s162 = sshll.u32 [#allocation6], 4
          %s163 = int_to_ptr.vmem [resolvable:$true] %s162
          %168 = dma.hbm_to_vmem [thread:$0]  %s161, 18432, %s163, [#allocation7], 128, 128, 8
        $region16: #{tpu_custom_call.1} parent=11 // pred_fallthru
          _
        // Predicated region
        $region17: #{tpu_custom_call.1} parent=11 // pred_check
          %p169 = pneg %p70
        $region18: #{tpu_custom_call.1} parent=11 // pred_check_branch
          %171 = sbr.rel (%p169) target = $region20
        $region19: #{tpu_custom_call.1} parent=11 // pred_region
          _
        $region20: #{tpu_custom_call.1} parent=11 // pred_fallthru
          _
        // Predicated region
        $region21: #{tpu_custom_call.1} parent=11 // pred_check
          %p172 = pneg %p91
        $region22: #{tpu_custom_call.1} parent=11 // pred_check_branch
          %174 = sbr.rel (%p172) target = $region24
        $region23: #{tpu_custom_call.1} parent=11 // pred_region
          %176 = vsyncadd [#allocation10], 0
          %s177 = sshll.u32 %s3, 4
          %s178 = int_to_ptr.hbm [resolvable:$true] %s177
          %s179 = sshll.u32 [#allocation9], 4
          %s180 = int_to_ptr.vmem [resolvable:$true] %s179
          %185 = dma.hbm_to_vmem [thread:$0]  %s178, 18432, %s180, [#allocation10], 128, 128, 8
        $region24: #{tpu_custom_call.1} parent=11 // pred_fallthru
          _
        // Predicated region
        $region25: #{tpu_custom_call.1} parent=11 // pred_check
          %p186 = pneg %p112
        $region26: #{tpu_custom_call.1} parent=11 // pred_check_branch
          %188 = sbr.rel (%p186) target = $region28
        $region27: #{tpu_custom_call.1} parent=11 // pred_region
          _
        $region28: #{tpu_custom_call.1} parent=11 // pred_fallthru
          _
      $region12: #{tpu_custom_call.1} parent=5 // pred_fallthru
        _
      %p189 = scmp.lt.s32.totalorder %s16, 2
      // Predicated region
      $region29: #{tpu_custom_call.1} parent=5 // pred_check
        %p190 = pneg %p189
      $region30: #{tpu_custom_call.1} parent=5 // pred_check_branch
        %192 = sbr.rel (%p190) target = $region32
      $region31: #{tpu_custom_call.1} parent=5 // pred_region
        _
      $region32: #{tpu_custom_call.1} parent=5 // pred_fallthru
        _
      %p193 = scmp.le.s32.totalorder 1, %s16
      %p194 = scmp.lt.s32.totalorder %s16, 3
      %p195 = pnand %p193, %p194
      %p196 = pneg %p195
      // Predicated region
      $region33: #{tpu_custom_call.1} parent=5 // pred_check
        _
      $region34: #{tpu_custom_call.1} parent=5 // pred_check_branch
        %198 = sbr.rel (%p195) target = $region36
      $region35: #{tpu_custom_call.1} parent=5 // pred_region
        %s199 = ssub.s32 %s16, 1
        // Predicated region
        $region37: #{tpu_custom_call.1} parent=35 // pred_check
          %p200 = pneg %p49
        $region38: #{tpu_custom_call.1} parent=35 // pred_check_branch
          %202 = sbr.rel (%p200) target = $region40
        $region39: #{tpu_custom_call.1} parent=35 // pred_region
          %204 = dma.done [#allocation7], 18432
        $region40: #{tpu_custom_call.1} parent=35 // pred_fallthru
          _
        // Predicated region
        $region41: #{tpu_custom_call.1} parent=35 // pred_check
          %p205 = pneg %p91
        $region42: #{tpu_custom_call.1} parent=35 // pred_check_branch
          %207 = sbr.rel (%p205) target = $region44
        $region43: #{tpu_custom_call.1} parent=35 // pred_region
          %209 = dma.done [#allocation10], 18432
        $region44: #{tpu_custom_call.1} parent=35 // pred_fallthru
          _
        %p210 = pneg %p49
        %p211 = pneg %p46
        %p212 = pneg %p70
        %p213 = pneg %p67
        %p214 = pneg %p91
        %p215 = pneg %p88
        %p216 = pneg %p112
        %p217 = pneg %p109
        %p218 = pneg %p140
        %p219 = pneg %p137
        %s220 = sand.u32 %s127, 1
        %s221 = scalar_lea.sflag [#allocation8], %s220
        %s222 = sand.u32 %s127, 1
        %s223 = smul.addr %s222, 128
        %s224 = scalar_lea.vmem [#allocation11], %s223
        %s225 = smul.u32 16, %s26
        %p226 = scmp.eq.s32.totalorder %s26, 0
        // Predicated region
        $region45: #{tpu_custom_call.1} parent=35 // pred_check
          %p227 = pneg %p226
        $region46: #{tpu_custom_call.1} parent=35 // pred_check_branch
          %229 = sbr.rel (%p227) target = $region48
        $region47: #{tpu_custom_call.1} parent=35 // pred_region
          %230 = vst [vmem:[#allocation2] sm:$0xff] 0.0
          %231 = vst [vmem:[#allocation2 + $0x8] sm:$0xff] 0.0
          %s232 = scalar_lea.vmem [#allocation2], 144
          %233 = vst [vmem:[%s232] sm:$0xff] 0.0
          %234 = vst [vmem:[%s232 + $0x8] sm:$0xff] 0.0
          %s235 = smul.u32 %s25, 128
          %s236 = scalar_lea.hbm %s0, %s235
          %s237 = scalar_lea.vmem [#allocation2], 16
          // Predicated region
          $region49: #{tpu_custom_call.1} parent=47 // pred_check
            _
          $region50: #{tpu_custom_call.1} parent=47 // pred_check_branch
            %239 = sbr.rel target = $region52
          $region51: #{tpu_custom_call.1} parent=47 // pred_region
            %240 = sst [smem:[#allocation14]] [#allocation13]
            %241 = sst [smem:[#allocation15]] [#allocation12]
          $region52: #{tpu_custom_call.1} parent=47 // pred_fallthru
            _
          %243 = shalt.err (0)
          %s245 = sshll.u32 %s236, 4
          %s246 = int_to_ptr.hbm [resolvable:$true] %s245
          %s247 = sshll.u32 %s237, 4
          %s248 = int_to_ptr.vmem [resolvable:$true] %s247
          %250 = dma.hbm_to_vmem [thread:$0]  %s246, 2048, %s248, [#allocation5]
          %s251 = smul.u32 16, 8
          %s252 = smul.u32 %s251, 1
          %s253 = sshll.u32 %s252, 4
          %254 = dma.done [#allocation5], %s253
        $region48: #{tpu_custom_call.1} parent=35 // pred_fallthru
          _
        %s255 = smul.u32 %s26, 16
        %s256 = smul.u32 %s255, 8
        %s257 = scalar_lea.vmem [#allocation2], %s256
        %v258 = vld [vmem:[%s257] sm:$0xff]
        %v259 = vld [vmem:[%s257 + $0x8] sm:$0xff]
        %v260 = vld [vmem:[%s257 + $0x10] sm:$0xff]
        %v261 = vld [vmem:[%s257 + $0x18] sm:$0xff]
        %v262 = vld [vmem:[%s257 + $0x20] sm:$0xff]
        %v263 = vld [vmem:[%s257 + $0x28] sm:$0xff]
        %v264 = vld [vmem:[%s257 + $0x30] sm:$0xff]
        %v265 = vld [vmem:[%s257 + $0x38] sm:$0xff]
        %v266 = vld [vmem:[%s257 + $0x40] sm:$0xff]
        %v267 = vld [vmem:[%s257 + $0x48] sm:$0xff]
        %v268 = vld [vmem:[%s257 + $0x50] sm:$0xff]
        %v269 = vld [vmem:[%s257 + $0x58] sm:$0xff]
        %v270 = vld [vmem:[%s257 + $0x60] sm:$0xff]
        %v271 = vld [vmem:[%s257 + $0x68] sm:$0xff]
        %v272 = vld [vmem:[%s257 + $0x70] sm:$0xff]
        %v273 = vld [vmem:[%s257 + $0x78] sm:$0xff]
        %v274 = vld [vmem:[%s257 + $0x80] sm:$0xff]
        %v275 = vld [vmem:[%s257 + $0x88] sm:$0xff]
        %v276 = vld [vmem:[%s257 + $0x90] sm:$0xff]
        %v277 = vld [vmem:[%s257 + $0x98] sm:$0xff]
        %278 = vst [vmem:[#allocation3 + $0x8] sm:$0xff] %v258
        %279 = vst [vmem:[#allocation3 + $0x20] sm:$0xff] %v259
        %280 = vst [vmem:[#allocation3 + $0x38] sm:$0xff] %v260
        %281 = vst [vmem:[#allocation3 + $0x50] sm:$0xff] %v261
        %282 = vst [vmem:[#allocation3 + $0x68] sm:$0xff] %v262
        %283 = vst [vmem:[#allocation3 + $0x80] sm:$0xff] %v263
        %284 = vst [vmem:[#allocation3 + $0x98] sm:$0xff] %v264
        %285 = vst [vmem:[#allocation3 + $0xb0] sm:$0xff] %v265
        %286 = vst [vmem:[#allocation3 + $0xc8] sm:$0xff] %v266
        %287 = vst [vmem:[#allocation3 + $0xe0] sm:$0xff] %v267
        %288 = vst [vmem:[#allocation3 + $0xf8] sm:$0xff] %v268
        %289 = vst [vmem:[#allocation3 + $0x110] sm:$0xff] %v269
        %290 = vst [vmem:[#allocation3 + $0x128] sm:$0xff] %v270
        %291 = vst [vmem:[#allocation3 + $0x140] sm:$0xff] %v271
        %292 = vst [vmem:[#allocation3 + $0x158] sm:$0xff] %v272
        %293 = vst [vmem:[#allocation3 + $0x170] sm:$0xff] %v273
        %294 = vst [vmem:[#allocation3 + $0x188] sm:$0xff] %v274
        %295 = vst [vmem:[#allocation3 + $0x1a0] sm:$0xff] %v275
        %296 = vst [vmem:[#allocation3 + $0x1b8] sm:$0xff] %v276
        %297 = vst [vmem:[#allocation3 + $0x1d0] sm:$0xff] %v277
        %v298 = vrot.slane %v258, 7
        %v299 = vrot.slane %v259, 7
        %v300 = vrot.slane %v260, 7
        %v301 = vrot.slane %v261, 7
        %v302 = vrot.slane %v262, 7
        %v303 = vrot.slane %v263, 7
        %v304 = vrot.slane %v264, 7
        %v305 = vrot.slane %v265, 7
        %v306 = vrot.slane %v266, 7
        %v307 = vrot.slane %v267, 7
        %v308 = vrot.slane %v268, 7
        %v309 = vrot.slane %v269, 7
        %v310 = vrot.slane %v270, 7
        %v311 = vrot.slane %v271, 7
        %v312 = vrot.slane %v272, 7
        %v313 = vrot.slane %v273, 7
        %v314 = vrot.slane %v274, 7
        %v315 = vrot.slane %v275, 7
        %v316 = vrot.slane %v276, 7
        %v317 = vrot.slane %v277, 7
        %v318 = vlaneseq
        %v319 = vshrl.u32 %v318, 7
        %vm320 = vcmp.lt.s32.totalorder %v319, 1
        %v321 = vsel %vm320, %v316, %v317
        %v322 = vsel %vm320, %v315, %v316
        %v323 = vsel %vm320, %v314, %v315
        %v324 = vsel %vm320, %v313, %v314
        %v325 = vsel %vm320, %v312, %v313
        %v326 = vsel %vm320, %v311, %v312
        %v327 = vsel %vm320, %v310, %v311
        %v328 = vsel %vm320, %v309, %v310
        %v329 = vsel %vm320, %v308, %v309
        %v330 = vsel %vm320, %v307, %v308
        %v331 = vsel %vm320, %v306, %v307
        %v332 = vsel %vm320, %v305, %v306
        %v333 = vsel %vm320, %v304, %v305
        %v334 = vsel %vm320, %v303, %v304
        %v335 = vsel %vm320, %v302, %v303
        %v336 = vsel %vm320, %v301, %v302
        %v337 = vsel %vm320, %v300, %v301
        %v338 = vsel %vm320, %v299, %v300
        %v339 = vsel %vm320, %v298, %v299
        %v340 = vsel %vm320, %v317, %v298
        %341 = vst [vmem:[#allocation3] sm:$0xff] %v340
        %342 = vst [vmem:[#allocation3 + $0x18] sm:$0xff] %v339
        %343 = vst [vmem:[#allocation3 + $0x30] sm:$0xff] %v338
        %344 = vst [vmem:[#allocation3 + $0x48] sm:$0xff] %v337
        %345 = vst [vmem:[#allocation3 + $0x60] sm:$0xff] %v336
        %346 = vst [vmem:[#allocation3 + $0x78] sm:$0xff] %v335
        %347 = vst [vmem:[#allocation3 + $0x90] sm:$0xff] %v334
        %348 = vst [vmem:[#allocation3 + $0xa8] sm:$0xff] %v333
        %349 = vst [vmem:[#allocation3 + $0xc0] sm:$0xff] %v332
        %350 = vst [vmem:[#allocation3 + $0xd8] sm:$0xff] %v331
        %351 = vst [vmem:[#allocation3 + $0xf0] sm:$0xff] %v330
        %352 = vst [vmem:[#allocation3 + $0x108] sm:$0xff] %v329
        %353 = vst [vmem:[#allocation3 + $0x120] sm:$0xff] %v328
        %354 = vst [vmem:[#allocation3 + $0x138] sm:$0xff] %v327
        %355 = vst [vmem:[#allocation3 + $0x150] sm:$0xff] %v326
        %356 = vst [vmem:[#allocation3 + $0x168] sm:$0xff] %v325
        %357 = vst [vmem:[#allocation3 + $0x180] sm:$0xff] %v324
        %358 = vst [vmem:[#allocation3 + $0x198] sm:$0xff] %v323
        %359 = vst [vmem:[#allocation3 + $0x1b0] sm:$0xff] %v322
        %360 = vst [vmem:[#allocation3 + $0x1c8] sm:$0xff] %v321
        %v361 = vrot.slane %v258, 1
        %v362 = vrot.slane %v259, 1
        %v363 = vrot.slane %v260, 1
        %v364 = vrot.slane %v261, 1
        %v365 = vrot.slane %v262, 1
        %v366 = vrot.slane %v263, 1
        %v367 = vrot.slane %v264, 1
        %v368 = vrot.slane %v265, 1
        %v369 = vrot.slane %v266, 1
        %v370 = vrot.slane %v267, 1
        %v371 = vrot.slane %v268, 1
        %v372 = vrot.slane %v269, 1
        %v373 = vrot.slane %v270, 1
        %v374 = vrot.slane %v271, 1
        %v375 = vrot.slane %v272, 1
        %v376 = vrot.slane %v273, 1
        %v377 = vrot.slane %v274, 1
        %v378 = vrot.slane %v275, 1
        %v379 = vrot.slane %v276, 1
        %v380 = vrot.slane %v277, 1
        %vm381 = vcmp.lt.s32.totalorder %v319, 7
        %v382 = vsel %vm381, %v379, %v380
        %v383 = vsel %vm381, %v378, %v379
        %v384 = vsel %vm381, %v377, %v378
        %v385 = vsel %vm381, %v376, %v377
        %v386 = vsel %vm381, %v375, %v376
        %v387 = vsel %vm381, %v374, %v375
        %v388 = vsel %vm381, %v373, %v374
        %v389 = vsel %vm381, %v372, %v373
        %v390 = vsel %vm381, %v371, %v372
        %v391 = vsel %vm381, %v370, %v371
        %v392 = vsel %vm381, %v369, %v370
        %v393 = vsel %vm381, %v368, %v369
        %v394 = vsel %vm381, %v367, %v368
        %v395 = vsel %vm381, %v366, %v367
        %v396 = vsel %vm381, %v365, %v366
        %v397 = vsel %vm381, %v364, %v365
        %v398 = vsel %vm381, %v363, %v364
        %v399 = vsel %vm381, %v362, %v363
        %v400 = vsel %vm381, %v361, %v362
        %v401 = vsel %vm381, %v380, %v361
        %402 = vst [vmem:[#allocation3 + $0x10] sm:$0xff] %v400
        %403 = vst [vmem:[#allocation3 + $0x28] sm:$0xff] %v399
        %404 = vst [vmem:[#allocation3 + $0x40] sm:$0xff] %v398
        %405 = vst [vmem:[#allocation3 + $0x58] sm:$0xff] %v397
        %406 = vst [vmem:[#allocation3 + $0x70] sm:$0xff] %v396
        %407 = vst [vmem:[#allocation3 + $0x88] sm:$0xff] %v395
        %408 = vst [vmem:[#allocation3 + $0xa0] sm:$0xff] %v394
        %409 = vst [vmem:[#allocation3 + $0xb8] sm:$0xff] %v393
        %410 = vst [vmem:[#allocation3 + $0xd0] sm:$0xff] %v392
        %411 = vst [vmem:[#allocation3 + $0xe8] sm:$0xff] %v391
        %412 = vst [vmem:[#allocation3 + $0x100] sm:$0xff] %v390
        %413 = vst [vmem:[#allocation3 + $0x118] sm:$0xff] %v389
        %414 = vst [vmem:[#allocation3 + $0x130] sm:$0xff] %v388
        %415 = vst [vmem:[#allocation3 + $0x148] sm:$0xff] %v387
        %416 = vst [vmem:[#allocation3 + $0x160] sm:$0xff] %v386
        %417 = vst [vmem:[#allocation3 + $0x178] sm:$0xff] %v385
        %418 = vst [vmem:[#allocation3 + $0x190] sm:$0xff] %v384
        %419 = vst [vmem:[#allocation3 + $0x1a8] sm:$0xff] %v383
        %420 = vst [vmem:[#allocation3 + $0x1c0] sm:$0xff] %v382
        %421 = vst [vmem:[#allocation3 + $0x1d8] sm:$0xff] %v401
        %422 = vst [vmem:[#allocation3] sm:$0x1] 0.0
        %423 = vst [vmem:[#allocation3 + $0x18] sm:$0x1] 0.0
        %424 = vst [vmem:[#allocation3 + $0x30] sm:$0x1] 0.0
        %425 = vst [vmem:[#allocation3 + $0x48] sm:$0x1] 0.0
        %426 = vst [vmem:[#allocation3 + $0x60] sm:$0x1] 0.0
        %427 = vst [vmem:[#allocation3 + $0x78] sm:$0x1] 0.0
        %428 = vst [vmem:[#allocation3 + $0x90] sm:$0x1] 0.0
        %429 = vst [vmem:[#allocation3 + $0xa8] sm:$0x1] 0.0
        %430 = vst [vmem:[#allocation3 + $0xc0] sm:$0x1] 0.0
        %431 = vst [vmem:[#allocation3 + $0xd8] sm:$0x1] 0.0
        %432 = vst [vmem:[#allocation3 + $0xf0] sm:$0x1] 0.0
        %433 = vst [vmem:[#allocation3 + $0x108] sm:$0x1] 0.0
        %434 = vst [vmem:[#allocation3 + $0x120] sm:$0x1] 0.0
        %435 = vst [vmem:[#allocation3 + $0x138] sm:$0x1] 0.0
        %436 = vst [vmem:[#allocation3 + $0x150] sm:$0x1] 0.0
        %437 = vst [vmem:[#allocation3 + $0x168] sm:$0x1] 0.0
        %438 = vst [vmem:[#allocation3 + $0x180] sm:$0x1] 0.0
        %439 = vst [vmem:[#allocation3 + $0x198] sm:$0x1] 0.0
        %440 = vst [vmem:[#allocation3 + $0x1b0] sm:$0x1] 0.0
        %441 = vst [vmem:[#allocation3 + $0x1c8] sm:$0x1] 0.0
        %442 = vst [vmem:[#allocation3 + $0x17] sm:$0x1] 0.0
        %443 = vst [vmem:[#allocation3 + $0x2f] sm:$0x1] 0.0
        %444 = vst [vmem:[#allocation3 + $0x47] sm:$0x1] 0.0
        %445 = vst [vmem:[#allocation3 + $0x5f] sm:$0x1] 0.0
        %446 = vst [vmem:[#allocation3 + $0x77] sm:$0x1] 0.0
        %447 = vst [vmem:[#allocation3 + $0x8f] sm:$0x1] 0.0
        %448 = vst [vmem:[#allocation3 + $0xa7] sm:$0x1] 0.0
        %449 = vst [vmem:[#allocation3 + $0xbf] sm:$0x1] 0.0
        %450 = vst [vmem:[#allocation3 + $0xd7] sm:$0x1] 0.0
        %451 = vst [vmem:[#allocation3 + $0xef] sm:$0x1] 0.0
        %452 = vst [vmem:[#allocation3 + $0x107] sm:$0x1] 0.0
        %453 = vst [vmem:[#allocation3 + $0x11f] sm:$0x1] 0.0
        %454 = vst [vmem:[#allocation3 + $0x137] sm:$0x1] 0.0
        %455 = vst [vmem:[#allocation3 + $0x14f] sm:$0x1] 0.0
        %456 = vst [vmem:[#allocation3 + $0x167] sm:$0x1] 0.0
        %457 = vst [vmem:[#allocation3 + $0x17f] sm:$0x1] 0.0
        %458 = vst [vmem:[#allocation3 + $0x197] sm:$0x1] 0.0
        %459 = vst [vmem:[#allocation3 + $0x1af] sm:$0x1] 0.0
        %460 = vst [vmem:[#allocation3 + $0x1c7] sm:$0x1] 0.0
        %461 = vst [vmem:[#allocation3 + $0x1df] sm:$0x1] 0.0
        %v462 = vld [vmem:[#allocation3] sm:$0xff]
        %v463 = vld [vmem:[#allocation3 + $0x8] sm:$0xff]
        %v464 = vld [vmem:[#allocation3 + $0x10] sm:$0xff]
        %v465 = vld [vmem:[#allocation3 + $0x18] sm:$0xff]
        %v466 = vld [vmem:[#allocation3 + $0x20] sm:$0xff]
        %v467 = vld [vmem:[#allocation3 + $0x28] sm:$0xff]
        %v468 = vld [vmem:[#allocation3 + $0x30] sm:$0xff]
        %v469 = vld [vmem:[#allocation3 + $0x38] sm:$0xff]
        %v470 = vld [vmem:[#allocation3 + $0x40] sm:$0xff]
        %v471 = vld [vmem:[#allocation3 + $0x48] sm:$0xff]
        %v472 = vld [vmem:[#allocation3 + $0x50] sm:$0xff]
        %v473 = vld [vmem:[#allocation3 + $0x58] sm:$0xff]
        %v474 = vld [vmem:[#allocation3 + $0x60] sm:$0xff]
        %v475 = vld [vmem:[#allocation3 + $0x68] sm:$0xff]
        %v476 = vld [vmem:[#allocation3 + $0x70] sm:$0xff]
        %v477 = vld [vmem:[#allocation3 + $0x78] sm:$0xff]
        %v478 = vld [vmem:[#allocation3 + $0x80] sm:$0xff]
        %v479 = vld [vmem:[#allocation3 + $0x88] sm:$0xff]
        %v480 = vld [vmem:[#allocation3 + $0x90] sm:$0xff]
        %v481 = vld [vmem:[#allocation3 + $0x98] sm:$0xff]
        %v482 = vld [vmem:[#allocation3 + $0xa0] sm:$0xff]
        %v483 = vld [vmem:[#allocation3 + $0xa8] sm:$0xff]
        %v484 = vld [vmem:[#allocation3 + $0xb0] sm:$0xff]
        %v485 = vld [vmem:[#allocation3 + $0xb8] sm:$0xff]
        %v486 = vld [vmem:[#allocation3 + $0xc0] sm:$0xff]
        %v487 = vld [vmem:[#allocation3 + $0xc8] sm:$0xff]
        %v488 = vld [vmem:[#allocation3 + $0xd0] sm:$0xff]
        %v489 = vld [vmem:[#allocation3 + $0xd8] sm:$0xff]
        %v490 = vld [vmem:[#allocation3 + $0xe0] sm:$0xff]
        %v491 = vld [vmem:[#allocation3 + $0xe8] sm:$0xff]
        %v492 = vld [vmem:[#allocation3 + $0xf0] sm:$0xff]
        %v493 = vld [vmem:[#allocation3 + $0xf8] sm:$0xff]
        %v494 = vld [vmem:[#allocation3 + $0x100] sm:$0xff]
        %v495 = vld [vmem:[#allocation3 + $0x108] sm:$0xff]
        %v496 = vld [vmem:[#allocation3 + $0x110] sm:$0xff]
        %v497 = vld [vmem:[#allocation3 + $0x118] sm:$0xff]
        %v498 = vld [vmem:[#allocation3 + $0x120] sm:$0xff]
        %v499 = vld [vmem:[#allocation3 + $0x128] sm:$0xff]
        %v500 = vld [vmem:[#allocation3 + $0x130] sm:$0xff]
        %v501 = vld [vmem:[#allocation3 + $0x138] sm:$0xff]
        %v502 = vld [vmem:[#allocation3 + $0x140] sm:$0xff]
        %v503 = vld [vmem:[#allocation3 + $0x148] sm:$0xff]
        %v504 = vld [vmem:[#allocation3 + $0x150] sm:$0xff]
        %v505 = vld [vmem:[#allocation3 + $0x158] sm:$0xff]
        %v506 = vld [vmem:[#allocation3 + $0x160] sm:$0xff]
        %v507 = vld [vmem:[#allocation3 + $0x168] sm:$0xff]
        %v508 = vld [vmem:[#allocation3 + $0x170] sm:$0xff]
        %v509 = vld [vmem:[#allocation3 + $0x178] sm:$0xff]
        %v510 = vld [vmem:[#allocation3 + $0x180] sm:$0xff]
        %v511 = vld [vmem:[#allocation3 + $0x188] sm:$0xff]
        %v512 = vld [vmem:[#allocation3 + $0x190] sm:$0xff]
        %v513 = vld [vmem:[#allocation3 + $0x198] sm:$0xff]
        %v514 = vld [vmem:[#allocation3 + $0x1a0] sm:$0xff]
        %v515 = vld [vmem:[#allocation3 + $0x1a8] sm:$0xff]
        %v516 = vld [vmem:[#allocation6] sm:$0xff]
        %v517 = vld [vmem:[#allocation6 + $0x8] sm:$0xff]
        %v518 = vld [vmem:[#allocation6 + $0x10] sm:$0xff]
        %v519 = vld [vmem:[#allocation6 + $0x18] sm:$0xff]
        %v520 = vld [vmem:[#allocation6 + $0x20] sm:$0xff]
        %v521 = vld [vmem:[#allocation6 + $0x28] sm:$0xff]
        %v522 = vld [vmem:[#allocation6 + $0x30] sm:$0xff]
        %v523 = vld [vmem:[#allocation6 + $0x38] sm:$0xff]
        %v524 = vld [vmem:[#allocation6 + $0x40] sm:$0xff]
        %v525 = vld [vmem:[#allocation6 + $0x48] sm:$0xff]
        %v526 = vld [vmem:[#allocation6 + $0x50] sm:$0xff]
        %v527 = vld [vmem:[#allocation6 + $0x58] sm:$0xff]
        %v528 = vld [vmem:[#allocation6 + $0x60] sm:$0xff]
        %v529 = vld [vmem:[#allocation6 + $0x68] sm:$0xff]
        %v530 = vld [vmem:[#allocation6 + $0x70] sm:$0xff]
        %v531 = vld [vmem:[#allocation6 + $0x78] sm:$0xff]
        %v532 = vld [vmem:[#allocation6 + $0x80] sm:$0xff]
        %v533 = vld [vmem:[#allocation6 + $0x88] sm:$0xff]
        %v534 = vld [vmem:[#allocation6 + $0x90] sm:$0xff]
        %v535 = vld [vmem:[#allocation6 + $0x98] sm:$0xff]
        %v536 = vld [vmem:[#allocation6 + $0xa0] sm:$0xff]
        %v537 = vld [vmem:[#allocation6 + $0xa8] sm:$0xff]
        %v538 = vld [vmem:[#allocation6 + $0xb0] sm:$0xff]
        %v539 = vld [vmem:[#allocation6 + $0xb8] sm:$0xff]
        %v540 = vld [vmem:[#allocation6 + $0xc0] sm:$0xff]
        %v541 = vld [vmem:[#allocation6 + $0xc8] sm:$0xff]
        %v542 = vld [vmem:[#allocation6 + $0xd0] sm:$0xff]
        %v543 = vld [vmem:[#allocation6 + $0xd8] sm:$0xff]
        %v544 = vld [vmem:[#allocation6 + $0xe0] sm:$0xff]
        %v545 = vld [vmem:[#allocation6 + $0xe8] sm:$0xff]
        %v546 = vld [vmem:[#allocation6 + $0xf0] sm:$0xff]
        %v547 = vld [vmem:[#allocation6 + $0xf8] sm:$0xff]
        %v548 = vld [vmem:[#allocation6 + $0x100] sm:$0xff]
        %v549 = vld [vmem:[#allocation6 + $0x108] sm:$0xff]
        %v550 = vld [vmem:[#allocation6 + $0x110] sm:$0xff]
        %v551 = vld [vmem:[#allocation6 + $0x118] sm:$0xff]
        %v552 = vld [vmem:[#allocation6 + $0x120] sm:$0xff]
        %v553 = vld [vmem:[#allocation6 + $0x128] sm:$0xff]
        %v554 = vld [vmem:[#allocation6 + $0x130] sm:$0xff]
        %v555 = vld [vmem:[#allocation6 + $0x138] sm:$0xff]
        %v556 = vld [vmem:[#allocation6 + $0x140] sm:$0xff]
        %v557 = vld [vmem:[#allocation6 + $0x148] sm:$0xff]
        %v558 = vld [vmem:[#allocation6 + $0x150] sm:$0xff]
        %v559 = vld [vmem:[#allocation6 + $0x158] sm:$0xff]
        %v560 = vld [vmem:[#allocation6 + $0x160] sm:$0xff]
        %v561 = vld [vmem:[#allocation6 + $0x168] sm:$0xff]
        %v562 = vld [vmem:[#allocation6 + $0x170] sm:$0xff]
        %v563 = vld [vmem:[#allocation6 + $0x178] sm:$0xff]
        %s564 = scalar_lea.vmem [#allocation3], 24
        %v565 = vld [vmem:[%s564] sm:$0xff]
        %v566 = vld [vmem:[%s564 + $0x8] sm:$0xff]
        %v567 = vld [vmem:[%s564 + $0x10] sm:$0xff]
        %v568 = vld [vmem:[%s564 + $0x18] sm:$0xff]
        %v569 = vld [vmem:[%s564 + $0x20] sm:$0xff]
        %v570 = vld [vmem:[%s564 + $0x28] sm:$0xff]
        %v571 = vld [vmem:[%s564 + $0x30] sm:$0xff]
        %v572 = vld [vmem:[%s564 + $0x38] sm:$0xff]
        %v573 = vld [vmem:[%s564 + $0x40] sm:$0xff]
        %v574 = vld [vmem:[%s564 + $0x48] sm:$0xff]
        %v575 = vld [vmem:[%s564 + $0x50] sm:$0xff]
        %v576 = vld [vmem:[%s564 + $0x58] sm:$0xff]
        %v577 = vld [vmem:[%s564 + $0x60] sm:$0xff]
        %v578 = vld [vmem:[%s564 + $0x68] sm:$0xff]
        %v579 = vld [vmem:[%s564 + $0x70] sm:$0xff]
        %v580 = vld [vmem:[%s564 + $0x78] sm:$0xff]
        %v581 = vld [vmem:[%s564 + $0x80] sm:$0xff]
        %v582 = vld [vmem:[%s564 + $0x88] sm:$0xff]
        %v583 = vld [vmem:[%s564 + $0x90] sm:$0xff]
        %v584 = vld [vmem:[%s564 + $0x98] sm:$0xff]
        %v585 = vld [vmem:[%s564 + $0xa0] sm:$0xff]
        %v586 = vld [vmem:[%s564 + $0xa8] sm:$0xff]
        %v587 = vld [vmem:[%s564 + $0xb0] sm:$0xff]
        %v588 = vld [vmem:[%s564 + $0xb8] sm:$0xff]
        %v589 = vld [vmem:[%s564 + $0xc0] sm:$0xff]
        %v590 = vld [vmem:[%s564 + $0xc8] sm:$0xff]
        %v591 = vld [vmem:[%s564 + $0xd0] sm:$0xff]
        %v592 = vld [vmem:[%s564 + $0xd8] sm:$0xff]
        %v593 = vld [vmem:[%s564 + $0xe0] sm:$0xff]
        %v594 = vld [vmem:[%s564 + $0xe8] sm:$0xff]
        %v595 = vld [vmem:[%s564 + $0xf0] sm:$0xff]
        %v596 = vld [vmem:[%s564 + $0xf8] sm:$0xff]
        %v597 = vld [vmem:[%s564 + $0x100] sm:$0xff]
        %v598 = vld [vmem:[%s564 + $0x108] sm:$0xff]
        %v599 = vld [vmem:[%s564 + $0x110] sm:$0xff]
        %v600 = vld [vmem:[%s564 + $0x118] sm:$0xff]
        %v601 = vld [vmem:[%s564 + $0x120] sm:$0xff]
        %v602 = vld [vmem:[%s564 + $0x128] sm:$0xff]
        %v603 = vld [vmem:[%s564 + $0x130] sm:$0xff]
        %v604 = vld [vmem:[%s564 + $0x138] sm:$0xff]
        %v605 = vld [vmem:[%s564 + $0x140] sm:$0xff]
        %v606 = vld [vmem:[%s564 + $0x148] sm:$0xff]
        %v607 = vld [vmem:[%s564 + $0x150] sm:$0xff]
        %v608 = vld [vmem:[%s564 + $0x158] sm:$0xff]
        %v609 = vld [vmem:[%s564 + $0x160] sm:$0xff]
        %v610 = vld [vmem:[%s564 + $0x168] sm:$0xff]
        %v611 = vld [vmem:[%s564 + $0x170] sm:$0xff]
        %v612 = vld [vmem:[%s564 + $0x178] sm:$0xff]
        %v613 = vld [vmem:[%s564 + $0x180] sm:$0xff]
        %v614 = vld [vmem:[%s564 + $0x188] sm:$0xff]
        %v615 = vld [vmem:[%s564 + $0x190] sm:$0xff]
        %v616 = vld [vmem:[%s564 + $0x198] sm:$0xff]
        %v617 = vld [vmem:[%s564 + $0x1a0] sm:$0xff]
        %v618 = vld [vmem:[%s564 + $0x1a8] sm:$0xff]
        %s619 = scalar_lea.vmem [#allocation6], 384
        %v620 = vld [vmem:[%s619] sm:$0xff]
        %v621 = vld [vmem:[%s619 + $0x8] sm:$0xff]
        %v622 = vld [vmem:[%s619 + $0x10] sm:$0xff]
        %v623 = vld [vmem:[%s619 + $0x18] sm:$0xff]
        %v624 = vld [vmem:[%s619 + $0x20] sm:$0xff]
        %v625 = vld [vmem:[%s619 + $0x28] sm:$0xff]
        %v626 = vld [vmem:[%s619 + $0x30] sm:$0xff]
        %v627 = vld [vmem:[%s619 + $0x38] sm:$0xff]
        %v628 = vld [vmem:[%s619 + $0x40] sm:$0xff]
        %v629 = vld [vmem:[%s619 + $0x48] sm:$0xff]
        %v630 = vld [vmem:[%s619 + $0x50] sm:$0xff]
        %v631 = vld [vmem:[%s619 + $0x58] sm:$0xff]
        %v632 = vld [vmem:[%s619 + $0x60] sm:$0xff]
        %v633 = vld [vmem:[%s619 + $0x68] sm:$0xff]
        %v634 = vld [vmem:[%s619 + $0x70] sm:$0xff]
        %v635 = vld [vmem:[%s619 + $0x78] sm:$0xff]
        %v636 = vld [vmem:[%s619 + $0x80] sm:$0xff]
        %v637 = vld [vmem:[%s619 + $0x88] sm:$0xff]
        %v638 = vld [vmem:[%s619 + $0x90] sm:$0xff]
        %v639 = vld [vmem:[%s619 + $0x98] sm:$0xff]
        %v640 = vld [vmem:[%s619 + $0xa0] sm:$0xff]
        %v641 = vld [vmem:[%s619 + $0xa8] sm:$0xff]
        %v642 = vld [vmem:[%s619 + $0xb0] sm:$0xff]
        %v643 = vld [vmem:[%s619 + $0xb8] sm:$0xff]
        %v644 = vld [vmem:[%s619 + $0xc0] sm:$0xff]
        %v645 = vld [vmem:[%s619 + $0xc8] sm:$0xff]
        %v646 = vld [vmem:[%s619 + $0xd0] sm:$0xff]
        %v647 = vld [vmem:[%s619 + $0xd8] sm:$0xff]
        %v648 = vld [vmem:[%s619 + $0xe0] sm:$0xff]
        %v649 = vld [vmem:[%s619 + $0xe8] sm:$0xff]
        %v650 = vld [vmem:[%s619 + $0xf0] sm:$0xff]
        %v651 = vld [vmem:[%s619 + $0xf8] sm:$0xff]
        %v652 = vld [vmem:[%s619 + $0x100] sm:$0xff]
        %v653 = vld [vmem:[%s619 + $0x108] sm:$0xff]
        %v654 = vld [vmem:[%s619 + $0x110] sm:$0xff]
        %v655 = vld [vmem:[%s619 + $0x118] sm:$0xff]
        %v656 = vld [vmem:[%s619 + $0x120] sm:$0xff]
        %v657 = vld [vmem:[%s619 + $0x128] sm:$0xff]
        %v658 = vld [vmem:[%s619 + $0x130] sm:$0xff]
        %v659 = vld [vmem:[%s619 + $0x138] sm:$0xff]
        %v660 = vld [vmem:[%s619 + $0x140] sm:$0xff]
        %v661 = vld [vmem:[%s619 + $0x148] sm:$0xff]
        %v662 = vld [vmem:[%s619 + $0x150] sm:$0xff]
        %v663 = vld [vmem:[%s619 + $0x158] sm:$0xff]
        %v664 = vld [vmem:[%s619 + $0x160] sm:$0xff]
        %v665 = vld [vmem:[%s619 + $0x168] sm:$0xff]
        %v666 = vld [vmem:[%s619 + $0x170] sm:$0xff]
        %v667 = vld [vmem:[%s619 + $0x178] sm:$0xff]
        %668 = vmatpush.msra.mxu0 %v635
        %669 = vmatpush.msra.mxu0 %v634
        %670 = vmatpush.msra.mxu0 %v633
        %671 = vmatpush.msra.mxu0 %v632
        %672 = vmatpush.msra.mxu0 %v631
        %673 = vmatpush.msra.mxu0 %v630
        %674 = vmatpush.msra.mxu0 %v629
        %675 = vmatpush.msra.mxu0 %v628
        %676 = vmatpush.msra.mxu0 %v627
        %677 = vmatpush.msra.mxu0 %v626
        %678 = vmatpush.msra.mxu0 %v625
        %679 = vmatpush.msra.mxu0 %v624
        %680 = vmatpush.msra.mxu0 %v623
        %681 = vmatpush.msra.mxu0 %v622
        %682 = vmatpush.msra.mxu0 %v621
        %683 = vmatpush.msra.mxu0 %v620
        %684 = vmatmul.f32.gmra.mxu0 %v565
        %v685 = vpop.f32.mrf.mxu0
        %v686 = vadd.f32 0.0, %v685
        %687 = vmatmul.f32.gmra.mxu0 %v568
        %v688 = vpop.f32.mrf.mxu0
        %v689 = vadd.f32 0.0, %v688
        %690 = vmatmul.f32.gmra.mxu0 %v571
        %v691 = vpop.f32.mrf.mxu0
        %v692 = vadd.f32 0.0, %v691
        %693 = vmatmul.f32.gmra.mxu0 %v574
        %v694 = vpop.f32.mrf.mxu0
        %v695 = vadd.f32 0.0, %v694
        %696 = vmatmul.f32.gmra.mxu0 %v577
        %v697 = vpop.f32.mrf.mxu0
        %v698 = vadd.f32 0.0, %v697
        %699 = vmatmul.f32.gmra.mxu0 %v580
        %v700 = vpop.f32.mrf.mxu0
        %v701 = vadd.f32 0.0, %v700
        %702 = vmatmul.f32.gmra.mxu0 %v583
        %v703 = vpop.f32.mrf.mxu0
        %v704 = vadd.f32 0.0, %v703
        %705 = vmatmul.f32.gmra.mxu0 %v586
        %v706 = vpop.f32.mrf.mxu0
        %v707 = vadd.f32 0.0, %v706
        %708 = vmatmul.f32.gmra.mxu0 %v589
        %v709 = vpop.f32.mrf.mxu0
        %v710 = vadd.f32 0.0, %v709
        %711 = vmatmul.f32.gmra.mxu0 %v592
        %v712 = vpop.f32.mrf.mxu0
        %v713 = vadd.f32 0.0, %v712
        %714 = vmatmul.f32.gmra.mxu0 %v595
        %v715 = vpop.f32.mrf.mxu0
        %v716 = vadd.f32 0.0, %v715
        %717 = vmatmul.f32.gmra.mxu0 %v598
        %v718 = vpop.f32.mrf.mxu0
        %v719 = vadd.f32 0.0, %v718
        %720 = vmatmul.f32.gmra.mxu0 %v601
        %v721 = vpop.f32.mrf.mxu0
        %v722 = vadd.f32 0.0, %v721
        %723 = vmatmul.f32.gmra.mxu0 %v604
        %v724 = vpop.f32.mrf.mxu0
        %v725 = vadd.f32 0.0, %v724
        %726 = vmatmul.f32.gmra.mxu0 %v607
        %v727 = vpop.f32.mrf.mxu0
        %v728 = vadd.f32 0.0, %v727
        %729 = vmatmul.f32.gmra.mxu0 %v610
        %v730 = vpop.f32.mrf.mxu0
        %v731 = vadd.f32 0.0, %v730
        %732 = vmatmul.f32.gmra.mxu0 %v613
        %v733 = vpop.f32.mrf.mxu0
        %v734 = vadd.f32 0.0, %v733
        %735 = vmatmul.f32.gmra.mxu0 %v616
        %v736 = vpop.f32.mrf.mxu0
        %v737 = vadd.f32 0.0, %v736
        %738 = vdwg.mxu0
        %739 = vmatpush.msra.mxu0 %v651
        %740 = vmatpush.msra.mxu0 %v650
        %741 = vmatpush.msra.mxu0 %v649
        %742 = vmatpush.msra.mxu0 %v648
        %743 = vmatpush.msra.mxu0 %v647
        %744 = vmatpush.msra.mxu0 %v646
        %745 = vmatpush.msra.mxu0 %v645
        %746 = vmatpush.msra.mxu0 %v644
        %747 = vmatpush.msra.mxu0 %v643
        %748 = vmatpush.msra.mxu0 %v642
        %749 = vmatpush.msra.mxu0 %v641
        %750 = vmatpush.msra.mxu0 %v640
        %751 = vmatpush.msra.mxu0 %v639
        %752 = vmatpush.msra.mxu0 %v638
        %753 = vmatpush.msra.mxu0 %v637
        %754 = vmatpush.msra.mxu0 %v636
        %755 = vmatmul.f32.gmra.mxu0 %v566
        %v756 = vpop.f32.mrf.mxu0
        %v757 = vadd.f32 %v686, %v756
        %758 = vmatmul.f32.gmra.mxu0 %v569
        %v759 = vpop.f32.mrf.mxu0
        %v760 = vadd.f32 %v689, %v759
        %761 = vmatmul.f32.gmra.mxu0 %v572
        %v762 = vpop.f32.mrf.mxu0
        %v763 = vadd.f32 %v692, %v762
        %764 = vmatmul.f32.gmra.mxu0 %v575
        %v765 = vpop.f32.mrf.mxu0
        %v766 = vadd.f32 %v695, %v765
        %767 = vmatmul.f32.gmra.mxu0 %v578
        %v768 = vpop.f32.mrf.mxu0
        %v769 = vadd.f32 %v698, %v768
        %770 = vmatmul.f32.gmra.mxu0 %v581
        %v771 = vpop.f32.mrf.mxu0
        %v772 = vadd.f32 %v701, %v771
        %773 = vmatmul.f32.gmra.mxu0 %v584
        %v774 = vpop.f32.mrf.mxu0
        %v775 = vadd.f32 %v704, %v774
        %776 = vmatmul.f32.gmra.mxu0 %v587
        %v777 = vpop.f32.mrf.mxu0
        %v778 = vadd.f32 %v707, %v777
        %779 = vmatmul.f32.gmra.mxu0 %v590
        %v780 = vpop.f32.mrf.mxu0
        %v781 = vadd.f32 %v710, %v780
        %782 = vmatmul.f32.gmra.mxu0 %v593
        %v783 = vpop.f32.mrf.mxu0
        %v784 = vadd.f32 %v713, %v783
        %785 = vmatmul.f32.gmra.mxu0 %v596
        %v786 = vpop.f32.mrf.mxu0
        %v787 = vadd.f32 %v716, %v786
        %788 = vmatmul.f32.gmra.mxu0 %v599
        %v789 = vpop.f32.mrf.mxu0
        %v790 = vadd.f32 %v719, %v789
        %791 = vmatmul.f32.gmra.mxu0 %v602
        %v792 = vpop.f32.mrf.mxu0
        %v793 = vadd.f32 %v722, %v792
        %794 = vmatmul.f32.gmra.mxu0 %v605
        %v795 = vpop.f32.mrf.mxu0
        %v796 = vadd.f32 %v725, %v795
        %797 = vmatmul.f32.gmra.mxu0 %v608
        %v798 = vpop.f32.mrf.mxu0
        %v799 = vadd.f32 %v728, %v798
        %800 = vmatmul.f32.gmra.mxu0 %v611
        %v801 = vpop.f32.mrf.mxu0
        %v802 = vadd.f32 %v731, %v801
        %803 = vmatmul.f32.gmra.mxu0 %v614
        %v804 = vpop.f32.mrf.mxu0
        %v805 = vadd.f32 %v734, %v804
        %806 = vmatmul.f32.gmra.mxu0 %v617
        %v807 = vpop.f32.mrf.mxu0
        %v808 = vadd.f32 %v737, %v807
        %809 = vdwg.mxu0
        %810 = vmatpush.msra.mxu0 %v667
        %811 = vmatpush.msra.mxu0 %v666
        %812 = vmatpush.msra.mxu0 %v665
        %813 = vmatpush.msra.mxu0 %v664
        %814 = vmatpush.msra.mxu0 %v663
        %815 = vmatpush.msra.mxu0 %v662
        %816 = vmatpush.msra.mxu0 %v661
        %817 = vmatpush.msra.mxu0 %v660
        %818 = vmatpush.msra.mxu0 %v659
        %819 = vmatpush.msra.mxu0 %v658
        %820 = vmatpush.msra.mxu0 %v657
        %821 = vmatpush.msra.mxu0 %v656
        %822 = vmatpush.msra.mxu0 %v655
        %823 = vmatpush.msra.mxu0 %v654
        %824 = vmatpush.msra.mxu0 %v653
        %825 = vmatpush.msra.mxu0 %v652
        %826 = vmatmul.f32.gmra.mxu0 %v567
        %v827 = vpop.f32.mrf.mxu0
        %v828 = vadd.f32 %v757, %v827
        %829 = vmatmul.f32.gmra.mxu0 %v570
        %v830 = vpop.f32.mrf.mxu0
        %v831 = vadd.f32 %v760, %v830
        %832 = vmatmul.f32.gmra.mxu0 %v573
        %v833 = vpop.f32.mrf.mxu0
        %v834 = vadd.f32 %v763, %v833
        %835 = vmatmul.f32.gmra.mxu0 %v576
        %v836 = vpop.f32.mrf.mxu0
        %v837 = vadd.f32 %v766, %v836
        %838 = vmatmul.f32.gmra.mxu0 %v579
        %v839 = vpop.f32.mrf.mxu0
        %v840 = vadd.f32 %v769, %v839
        %841 = vmatmul.f32.gmra.mxu0 %v582
        %v842 = vpop.f32.mrf.mxu0
        %v843 = vadd.f32 %v772, %v842
        %844 = vmatmul.f32.gmra.mxu0 %v585
        %v845 = vpop.f32.mrf.mxu0
        %v846 = vadd.f32 %v775, %v845
        %847 = vmatmul.f32.gmra.mxu0 %v588
        %v848 = vpop.f32.mrf.mxu0
        %v849 = vadd.f32 %v778, %v848
        %850 = vmatmul.f32.gmra.mxu0 %v591
        %v851 = vpop.f32.mrf.mxu0
        %v852 = vadd.f32 %v781, %v851
        %853 = vmatmul.f32.gmra.mxu0 %v594
        %v854 = vpop.f32.mrf.mxu0
        %v855 = vadd.f32 %v784, %v854
        %856 = vmatmul.f32.gmra.mxu0 %v597
        %v857 = vpop.f32.mrf.mxu0
        %v858 = vadd.f32 %v787, %v857
        %859 = vmatmul.f32.gmra.mxu0 %v600
        %v860 = vpop.f32.mrf.mxu0
        %v861 = vadd.f32 %v790, %v860
        %862 = vmatmul.f32.gmra.mxu0 %v603
        %v863 = vpop.f32.mrf.mxu0
        %v864 = vadd.f32 %v793, %v863
        %865 = vmatmul.f32.gmra.mxu0 %v606
        %v866 = vpop.f32.mrf.mxu0
        %v867 = vadd.f32 %v796, %v866
        %868 = vmatmul.f32.gmra.mxu0 %v609
        %v869 = vpop.f32.mrf.mxu0
        %v870 = vadd.f32 %v799, %v869
        %871 = vmatmul.f32.gmra.mxu0 %v612
        %v872 = vpop.f32.mrf.mxu0
        %v873 = vadd.f32 %v802, %v872
        %874 = vmatmul.f32.gmra.mxu0 %v615
        %v875 = vpop.f32.mrf.mxu0
        %v876 = vadd.f32 %v805, %v875
        %877 = vmatmul.f32.gmra.mxu0 %v618
        %v878 = vpop.f32.mrf.mxu0
        %v879 = vadd.f32 %v808, %v878
        %880 = vdwg.mxu0
        %881 = vmatpush.msra.mxu0 %v531
        %882 = vmatpush.msra.mxu0 %v530
        %883 = vmatpush.msra.mxu0 %v529
        %884 = vmatpush.msra.mxu0 %v528
        %885 = vmatpush.msra.mxu0 %v527
        %886 = vmatpush.msra.mxu0 %v526
        %887 = vmatpush.msra.mxu0 %v525
        %888 = vmatpush.msra.mxu0 %v524
        %889 = vmatpush.msra.mxu0 %v523
        %890 = vmatpush.msra.mxu0 %v522
        %891 = vmatpush.msra.mxu0 %v521
        %892 = vmatpush.msra.mxu0 %v520
        %893 = vmatpush.msra.mxu0 %v519
        %894 = vmatpush.msra.mxu0 %v518
        %895 = vmatpush.msra.mxu0 %v517
        %896 = vmatpush.msra.mxu0 %v516
        %897 = vmatmul.f32.gmra.mxu0 %v462
        %v898 = vpop.f32.mrf.mxu0
        %v899 = vadd.f32 %v828, %v898
        %900 = vmatmul.f32.gmra.mxu0 %v465
        %v901 = vpop.f32.mrf.mxu0
        %v902 = vadd.f32 %v831, %v901
        %903 = vmatmul.f32.gmra.mxu0 %v468
        %v904 = vpop.f32.mrf.mxu0
        %v905 = vadd.f32 %v834, %v904
        %906 = vmatmul.f32.gmra.mxu0 %v471
        %v907 = vpop.f32.mrf.mxu0
        %v908 = vadd.f32 %v837, %v907
        %909 = vmatmul.f32.gmra.mxu0 %v474
        %v910 = vpop.f32.mrf.mxu0
        %v911 = vadd.f32 %v840, %v910
        %912 = vmatmul.f32.gmra.mxu0 %v477
        %v913 = vpop.f32.mrf.mxu0
        %v914 = vadd.f32 %v843, %v913
        %915 = vmatmul.f32.gmra.mxu0 %v480
        %v916 = vpop.f32.mrf.mxu0
        %v917 = vadd.f32 %v846, %v916
        %918 = vmatmul.f32.gmra.mxu0 %v483
        %v919 = vpop.f32.mrf.mxu0
        %v920 = vadd.f32 %v849, %v919
        %921 = vmatmul.f32.gmra.mxu0 %v486
        %v922 = vpop.f32.mrf.mxu0
        %v923 = vadd.f32 %v852, %v922
        %924 = vmatmul.f32.gmra.mxu0 %v489
        %v925 = vpop.f32.mrf.mxu0
        %v926 = vadd.f32 %v855, %v925
        %927 = vmatmul.f32.gmra.mxu0 %v492
        %v928 = vpop.f32.mrf.mxu0
        %v929 = vadd.f32 %v858, %v928
        %930 = vmatmul.f32.gmra.mxu0 %v495
        %v931 = vpop.f32.mrf.mxu0
        %v932 = vadd.f32 %v861, %v931
        %933 = vmatmul.f32.gmra.mxu0 %v498
        %v934 = vpop.f32.mrf.mxu0
        %v935 = vadd.f32 %v864, %v934
        %936 = vmatmul.f32.gmra.mxu0 %v501
        %v937 = vpop.f32.mrf.mxu0
        %v938 = vadd.f32 %v867, %v937
        %939 = vmatmul.f32.gmra.mxu0 %v504
        %v940 = vpop.f32.mrf.mxu0
        %v941 = vadd.f32 %v870, %v940
        %942 = vmatmul.f32.gmra.mxu0 %v507
        %v943 = vpop.f32.mrf.mxu0
        %v944 = vadd.f32 %v873, %v943
        %945 = vmatmul.f32.gmra.mxu0 %v510
        %v946 = vpop.f32.mrf.mxu0
        %v947 = vadd.f32 %v876, %v946
        %948 = vmatmul.f32.gmra.mxu0 %v513
        %v949 = vpop.f32.mrf.mxu0
        %v950 = vadd.f32 %v879, %v949
        %951 = vdwg.mxu0
        %952 = vmatpush.msra.mxu0 %v547
        %953 = vmatpush.msra.mxu0 %v546
        %954 = vmatpush.msra.mxu0 %v545
        %955 = vmatpush.msra.mxu0 %v544
        %956 = vmatpush.msra.mxu0 %v543
        %957 = vmatpush.msra.mxu0 %v542
        %958 = vmatpush.msra.mxu0 %v541
        %959 = vmatpush.msra.mxu0 %v540
        %960 = vmatpush.msra.mxu0 %v539
        %961 = vmatpush.msra.mxu0 %v538
        %962 = vmatpush.msra.mxu0 %v537
        %963 = vmatpush.msra.mxu0 %v536
        %964 = vmatpush.msra.mxu0 %v535
        %965 = vmatpush.msra.mxu0 %v534
        %966 = vmatpush.msra.mxu0 %v533
        %967 = vmatpush.msra.mxu0 %v532
        %968 = vmatmul.f32.gmra.mxu0 %v463
        %v969 = vpop.f32.mrf.mxu0
        %v970 = vadd.f32 %v899, %v969
        %971 = vmatmul.f32.gmra.mxu0 %v466
        %v972 = vpop.f32.mrf.mxu0
        %v973 = vadd.f32 %v902, %v972
        %974 = vmatmul.f32.gmra.mxu0 %v469
        %v975 = vpop.f32.mrf.mxu0
        %v976 = vadd.f32 %v905, %v975
        %977 = vmatmul.f32.gmra.mxu0 %v472
        %v978 = vpop.f32.mrf.mxu0
        %v979 = vadd.f32 %v908, %v978
        %980 = vmatmul.f32.gmra.mxu0 %v475
        %v981 = vpop.f32.mrf.mxu0
        %v982 = vadd.f32 %v911, %v981
        %983 = vmatmul.f32.gmra.mxu0 %v478
        %v984 = vpop.f32.mrf.mxu0
        %v985 = vadd.f32 %v914, %v984
        %986 = vmatmul.f32.gmra.mxu0 %v481
        %v987 = vpop.f32.mrf.mxu0
        %v988 = vadd.f32 %v917, %v987
        %989 = vmatmul.f32.gmra.mxu0 %v484
        %v990 = vpop.f32.mrf.mxu0
        %v991 = vadd.f32 %v920, %v990
        %992 = vmatmul.f32.gmra.mxu0 %v487
        %v993 = vpop.f32.mrf.mxu0
        %v994 = vadd.f32 %v923, %v993
        %995 = vmatmul.f32.gmra.mxu0 %v490
        %v996 = vpop.f32.mrf.mxu0
        %v997 = vadd.f32 %v926, %v996
        %998 = vmatmul.f32.gmra.mxu0 %v493
        %v999 = vpop.f32.mrf.mxu0
        %v1000 = vadd.f32 %v929, %v999
        %1001 = vmatmul.f32.gmra.mxu0 %v496
        %v1002 = vpop.f32.mrf.mxu0
        %v1003 = vadd.f32 %v932, %v1002
        %1004 = vmatmul.f32.gmra.mxu0 %v499
        %v1005 = vpop.f32.mrf.mxu0
        %v1006 = vadd.f32 %v935, %v1005
        %1007 = vmatmul.f32.gmra.mxu0 %v502
        %v1008 = vpop.f32.mrf.mxu0
        %v1009 = vadd.f32 %v938, %v1008
        %1010 = vmatmul.f32.gmra.mxu0 %v505
        %v1011 = vpop.f32.mrf.mxu0
        %v1012 = vadd.f32 %v941, %v1011
        %1013 = vmatmul.f32.gmra.mxu0 %v508
        %v1014 = vpop.f32.mrf.mxu0
        %v1015 = vadd.f32 %v944, %v1014
        %1016 = vmatmul.f32.gmra.mxu0 %v511
        %v1017 = vpop.f32.mrf.mxu0
        %v1018 = vadd.f32 %v947, %v1017
        %1019 = vmatmul.f32.gmra.mxu0 %v514
        %v1020 = vpop.f32.mrf.mxu0
        %v1021 = vadd.f32 %v950, %v1020
        %1022 = vdwg.mxu0
        %1023 = vmatpush.msra.mxu0 %v563
        %1024 = vmatpush.msra.mxu0 %v562
        %1025 = vmatpush.msra.mxu0 %v561
        %1026 = vmatpush.msra.mxu0 %v560
        %1027 = vmatpush.msra.mxu0 %v559
        %1028 = vmatpush.msra.mxu0 %v558
        %1029 = vmatpush.msra.mxu0 %v557
        %1030 = vmatpush.msra.mxu0 %v556
        %1031 = vmatpush.msra.mxu0 %v555
        %1032 = vmatpush.msra.mxu0 %v554
        %1033 = vmatpush.msra.mxu0 %v553
        %1034 = vmatpush.msra.mxu0 %v552
        %1035 = vmatpush.msra.mxu0 %v551
        %1036 = vmatpush.msra.mxu0 %v550
        %1037 = vmatpush.msra.mxu0 %v549
        %1038 = vmatpush.msra.mxu0 %v548
        %1039 = vmatmul.f32.gmra.mxu0 %v464
        %v1040 = vpop.f32.mrf.mxu0
        %v1041 = vadd.f32 %v970, %v1040
        %1042 = vmatmul.f32.gmra.mxu0 %v467
        %v1043 = vpop.f32.mrf.mxu0
        %v1044 = vadd.f32 %v973, %v1043
        %1045 = vmatmul.f32.gmra.mxu0 %v470
        %v1046 = vpop.f32.mrf.mxu0
        %v1047 = vadd.f32 %v976, %v1046
        %1048 = vmatmul.f32.gmra.mxu0 %v473
        %v1049 = vpop.f32.mrf.mxu0
        %v1050 = vadd.f32 %v979, %v1049
        %1051 = vmatmul.f32.gmra.mxu0 %v476
        %v1052 = vpop.f32.mrf.mxu0
        %v1053 = vadd.f32 %v982, %v1052
        %1054 = vmatmul.f32.gmra.mxu0 %v479
        %v1055 = vpop.f32.mrf.mxu0
        %v1056 = vadd.f32 %v985, %v1055
        %1057 = vmatmul.f32.gmra.mxu0 %v482
        %v1058 = vpop.f32.mrf.mxu0
        %v1059 = vadd.f32 %v988, %v1058
        %1060 = vmatmul.f32.gmra.mxu0 %v485
        %v1061 = vpop.f32.mrf.mxu0
        %v1062 = vadd.f32 %v991, %v1061
        %1063 = vmatmul.f32.gmra.mxu0 %v488
        %v1064 = vpop.f32.mrf.mxu0
        %v1065 = vadd.f32 %v994, %v1064
        %1066 = vmatmul.f32.gmra.mxu0 %v491
        %v1067 = vpop.f32.mrf.mxu0
        %v1068 = vadd.f32 %v997, %v1067
        %1069 = vmatmul.f32.gmra.mxu0 %v494
        %v1070 = vpop.f32.mrf.mxu0
        %v1071 = vadd.f32 %v1000, %v1070
        %1072 = vmatmul.f32.gmra.mxu0 %v497
        %v1073 = vpop.f32.mrf.mxu0
        %v1074 = vadd.f32 %v1003, %v1073
        %1075 = vmatmul.f32.gmra.mxu0 %v500
        %v1076 = vpop.f32.mrf.mxu0
        %v1077 = vadd.f32 %v1006, %v1076
        %1078 = vmatmul.f32.gmra.mxu0 %v503
        %v1079 = vpop.f32.mrf.mxu0
        %v1080 = vadd.f32 %v1009, %v1079
        %1081 = vmatmul.f32.gmra.mxu0 %v506
        %v1082 = vpop.f32.mrf.mxu0
        %v1083 = vadd.f32 %v1012, %v1082
        %1084 = vmatmul.f32.gmra.mxu0 %v509
        %v1085 = vpop.f32.mrf.mxu0
        %v1086 = vadd.f32 %v1015, %v1085
        %1087 = vmatmul.f32.gmra.mxu0 %v512
        %v1088 = vpop.f32.mrf.mxu0
        %v1089 = vadd.f32 %v1018, %v1088
        %1090 = vmatmul.f32.gmra.mxu0 %v515
        %v1091 = vpop.f32.mrf.mxu0
        %v1092 = vadd.f32 %v1021, %v1091
        %1093 = vdwg.mxu0
        %s1094 = scalar_lea.vmem [#allocation3], 48
        %v1095 = vld [vmem:[%s1094] sm:$0xff]
        %v1096 = vld [vmem:[%s1094 + $0x8] sm:$0xff]
        %v1097 = vld [vmem:[%s1094 + $0x10] sm:$0xff]
        %v1098 = vld [vmem:[%s1094 + $0x18] sm:$0xff]
        %v1099 = vld [vmem:[%s1094 + $0x20] sm:$0xff]
        %v1100 = vld [vmem:[%s1094 + $0x28] sm:$0xff]
        %v1101 = vld [vmem:[%s1094 + $0x30] sm:$0xff]
        %v1102 = vld [vmem:[%s1094 + $0x38] sm:$0xff]
        %v1103 = vld [vmem:[%s1094 + $0x40] sm:$0xff]
        %v1104 = vld [vmem:[%s1094 + $0x48] sm:$0xff]
        %v1105 = vld [vmem:[%s1094 + $0x50] sm:$0xff]
        %v1106 = vld [vmem:[%s1094 + $0x58] sm:$0xff]
        %v1107 = vld [vmem:[%s1094 + $0x60] sm:$0xff]
        %v1108 = vld [vmem:[%s1094 + $0x68] sm:$0xff]
        %v1109 = vld [vmem:[%s1094 + $0x70] sm:$0xff]
        %v1110 = vld [vmem:[%s1094 + $0x78] sm:$0xff]
        %v1111 = vld [vmem:[%s1094 + $0x80] sm:$0xff]
        %v1112 = vld [vmem:[%s1094 + $0x88] sm:$0xff]
        %v1113 = vld [vmem:[%s1094 + $0x90] sm:$0xff]
        %v1114 = vld [vmem:[%s1094 + $0x98] sm:$0xff]
        %v1115 = vld [vmem:[%s1094 + $0xa0] sm:$0xff]
        %v1116 = vld [vmem:[%s1094 + $0xa8] sm:$0xff]
        %v1117 = vld [vmem:[%s1094 + $0xb0] sm:$0xff]
        %v1118 = vld [vmem:[%s1094 + $0xb8] sm:$0xff]
        %v1119 = vld [vmem:[%s1094 + $0xc0] sm:$0xff]
        %v1120 = vld [vmem:[%s1094 + $0xc8] sm:$0xff]
        %v1121 = vld [vmem:[%s1094 + $0xd0] sm:$0xff]
        %v1122 = vld [vmem:[%s1094 + $0xd8] sm:$0xff]
        %v1123 = vld [vmem:[%s1094 + $0xe0] sm:$0xff]
        %v1124 = vld [vmem:[%s1094 + $0xe8] sm:$0xff]
        %v1125 = vld [vmem:[%s1094 + $0xf0] sm:$0xff]
        %v1126 = vld [vmem:[%s1094 + $0xf8] sm:$0xff]
        %v1127 = vld [vmem:[%s1094 + $0x100] sm:$0xff]
        %v1128 = vld [vmem:[%s1094 + $0x108] sm:$0xff]
        %v1129 = vld [vmem:[%s1094 + $0x110] sm:$0xff]
        %v1130 = vld [vmem:[%s1094 + $0x118] sm:$0xff]
        %v1131 = vld [vmem:[%s1094 + $0x120] sm:$0xff]
        %v1132 = vld [vmem:[%s1094 + $0x128] sm:$0xff]
        %v1133 = vld [vmem:[%s1094 + $0x130] sm:$0xff]
        %v1134 = vld [vmem:[%s1094 + $0x138] sm:$0xff]
        %v1135 = vld [vmem:[%s1094 + $0x140] sm:$0xff]
        %v1136 = vld [vmem:[%s1094 + $0x148] sm:$0xff]
        %v1137 = vld [vmem:[%s1094 + $0x150] sm:$0xff]
        %v1138 = vld [vmem:[%s1094 + $0x158] sm:$0xff]
        %v1139 = vld [vmem:[%s1094 + $0x160] sm:$0xff]
        %v1140 = vld [vmem:[%s1094 + $0x168] sm:$0xff]
        %v1141 = vld [vmem:[%s1094 + $0x170] sm:$0xff]
        %v1142 = vld [vmem:[%s1094 + $0x178] sm:$0xff]
        %v1143 = vld [vmem:[%s1094 + $0x180] sm:$0xff]
        %v1144 = vld [vmem:[%s1094 + $0x188] sm:$0xff]
        %v1145 = vld [vmem:[%s1094 + $0x190] sm:$0xff]
        %v1146 = vld [vmem:[%s1094 + $0x198] sm:$0xff]
        %v1147 = vld [vmem:[%s1094 + $0x1a0] sm:$0xff]
        %v1148 = vld [vmem:[%s1094 + $0x1a8] sm:$0xff]
        %s1149 = scalar_lea.vmem [#allocation6], 768
        %v1150 = vld [vmem:[%s1149] sm:$0xff]
        %v1151 = vld [vmem:[%s1149 + $0x8] sm:$0xff]
        %v1152 = vld [vmem:[%s1149 + $0x10] sm:$0xff]
        %v1153 = vld [vmem:[%s1149 + $0x18] sm:$0xff]
        %v1154 = vld [vmem:[%s1149 + $0x20] sm:$0xff]
        %v1155 = vld [vmem:[%s1149 + $0x28] sm:$0xff]
        %v1156 = vld [vmem:[%s1149 + $0x30] sm:$0xff]
        %v1157 = vld [vmem:[%s1149 + $0x38] sm:$0xff]
        %v1158 = vld [vmem:[%s1149 + $0x40] sm:$0xff]
        %v1159 = vld [vmem:[%s1149 + $0x48] sm:$0xff]
        %v1160 = vld [vmem:[%s1149 + $0x50] sm:$0xff]
        %v1161 = vld [vmem:[%s1149 + $0x58] sm:$0xff]
        %v1162 = vld [vmem:[%s1149 + $0x60] sm:$0xff]
        %v1163 = vld [vmem:[%s1149 + $0x68] sm:$0xff]
        %v1164 = vld [vmem:[%s1149 + $0x70] sm:$0xff]
        %v1165 = vld [vmem:[%s1149 + $0x78] sm:$0xff]
        %v1166 = vld [vmem:[%s1149 + $0x80] sm:$0xff]
        %v1167 = vld [vmem:[%s1149 + $0x88] sm:$0xff]
        %v1168 = vld [vmem:[%s1149 + $0x90] sm:$0xff]
        %v1169 = vld [vmem:[%s1149 + $0x98] sm:$0xff]
        %v1170 = vld [vmem:[%s1149 + $0xa0] sm:$0xff]
        %v1171 = vld [vmem:[%s1149 + $0xa8] sm:$0xff]
        %v1172 = vld [vmem:[%s1149 + $0xb0] sm:$0xff]
        %v1173 = vld [vmem:[%s1149 + $0xb8] sm:$0xff]
        %v1174 = vld [vmem:[%s1149 + $0xc0] sm:$0xff]
        %v1175 = vld [vmem:[%s1149 + $0xc8] sm:$0xff]
        %v1176 = vld [vmem:[%s1149 + $0xd0] sm:$0xff]
        %v1177 = vld [vmem:[%s1149 + $0xd8] sm:$0xff]
        %v1178 = vld [vmem:[%s1149 + $0xe0] sm:$0xff]
        %v1179 = vld [vmem:[%s1149 + $0xe8] sm:$0xff]
        %v1180 = vld [vmem:[%s1149 + $0xf0] sm:$0xff]
        %v1181 = vld [vmem:[%s1149 + $0xf8] sm:$0xff]
        %v1182 = vld [vmem:[%s1149 + $0x100] sm:$0xff]
        %v1183 = vld [vmem:[%s1149 + $0x108] sm:$0xff]
        %v1184 = vld [vmem:[%s1149 + $0x110] sm:$0xff]
        %v1185 = vld [vmem:[%s1149 + $0x118] sm:$0xff]
        %v1186 = vld [vmem:[%s1149 + $0x120] sm:$0xff]
        %v1187 = vld [vmem:[%s1149 + $0x128] sm:$0xff]
        %v1188 = vld [vmem:[%s1149 + $0x130] sm:$0xff]
        %v1189 = vld [vmem:[%s1149 + $0x138] sm:$0xff]
        %v1190 = vld [vmem:[%s1149 + $0x140] sm:$0xff]
        %v1191 = vld [vmem:[%s1149 + $0x148] sm:$0xff]
        %v1192 = vld [vmem:[%s1149 + $0x150] sm:$0xff]
        %v1193 = vld [vmem:[%s1149 + $0x158] sm:$0xff]
        %v1194 = vld [vmem:[%s1149 + $0x160] sm:$0xff]
        %v1195 = vld [vmem:[%s1149 + $0x168] sm:$0xff]
        %v1196 = vld [vmem:[%s1149 + $0x170] sm:$0xff]
        %v1197 = vld [vmem:[%s1149 + $0x178] sm:$0xff]
        %1198 = vmatpush.msra.mxu0 %v1165
        %1199 = vmatpush.msra.mxu0 %v1164
        %1200 = vmatpush.msra.mxu0 %v1163
        %1201 = vmatpush.msra.mxu0 %v1162
        %1202 = vmatpush.msra.mxu0 %v1161
        %1203 = vmatpush.msra.mxu0 %v1160
        %1204 = vmatpush.msra.mxu0 %v1159
        %1205 = vmatpush.msra.mxu0 %v1158
        %1206 = vmatpush.msra.mxu0 %v1157
        %1207 = vmatpush.msra.mxu0 %v1156
        %1208 = vmatpush.msra.mxu0 %v1155
        %1209 = vmatpush.msra.mxu0 %v1154
        %1210 = vmatpush.msra.mxu0 %v1153
        %1211 = vmatpush.msra.mxu0 %v1152
        %1212 = vmatpush.msra.mxu0 %v1151
        %1213 = vmatpush.msra.mxu0 %v1150
        %1214 = vmatmul.f32.gmra.mxu0 %v1095
        %v1215 = vpop.f32.mrf.mxu0
        %v1216 = vadd.f32 0.0, %v1215
        %1217 = vmatmul.f32.gmra.mxu0 %v1098
        %v1218 = vpop.f32.mrf.mxu0
        %v1219 = vadd.f32 0.0, %v1218
        %1220 = vmatmul.f32.gmra.mxu0 %v1101
        %v1221 = vpop.f32.mrf.mxu0
        %v1222 = vadd.f32 0.0, %v1221
        %1223 = vmatmul.f32.gmra.mxu0 %v1104
        %v1224 = vpop.f32.mrf.mxu0
        %v1225 = vadd.f32 0.0, %v1224
        %1226 = vmatmul.f32.gmra.mxu0 %v1107
        %v1227 = vpop.f32.mrf.mxu0
        %v1228 = vadd.f32 0.0, %v1227
        %1229 = vmatmul.f32.gmra.mxu0 %v1110
        %v1230 = vpop.f32.mrf.mxu0
        %v1231 = vadd.f32 0.0, %v1230
        %1232 = vmatmul.f32.gmra.mxu0 %v1113
        %v1233 = vpop.f32.mrf.mxu0
        %v1234 = vadd.f32 0.0, %v1233
        %1235 = vmatmul.f32.gmra.mxu0 %v1116
        %v1236 = vpop.f32.mrf.mxu0
        %v1237 = vadd.f32 0.0, %v1236
        %1238 = vmatmul.f32.gmra.mxu0 %v1119
        %v1239 = vpop.f32.mrf.mxu0
        %v1240 = vadd.f32 0.0, %v1239
        %1241 = vmatmul.f32.gmra.mxu0 %v1122
        %v1242 = vpop.f32.mrf.mxu0
        %v1243 = vadd.f32 0.0, %v1242
        %1244 = vmatmul.f32.gmra.mxu0 %v1125
        %v1245 = vpop.f32.mrf.mxu0
        %v1246 = vadd.f32 0.0, %v1245
        %1247 = vmatmul.f32.gmra.mxu0 %v1128
        %v1248 = vpop.f32.mrf.mxu0
        %v1249 = vadd.f32 0.0, %v1248
        %1250 = vmatmul.f32.gmra.mxu0 %v1131
        %v1251 = vpop.f32.mrf.mxu0
        %v1252 = vadd.f32 0.0, %v1251
        %1253 = vmatmul.f32.gmra.mxu0 %v1134
        %v1254 = vpop.f32.mrf.mxu0
        %v1255 = vadd.f32 0.0, %v1254
        %1256 = vmatmul.f32.gmra.mxu0 %v1137
        %v1257 = vpop.f32.mrf.mxu0
        %v1258 = vadd.f32 0.0, %v1257
        %1259 = vmatmul.f32.gmra.mxu0 %v1140
        %v1260 = vpop.f32.mrf.mxu0
        %v1261 = vadd.f32 0.0, %v1260
        %1262 = vmatmul.f32.gmra.mxu0 %v1143
        %v1263 = vpop.f32.mrf.mxu0
        %v1264 = vadd.f32 0.0, %v1263
        %1265 = vmatmul.f32.gmra.mxu0 %v1146
        %v1266 = vpop.f32.mrf.mxu0
        %v1267 = vadd.f32 0.0, %v1266
        %1268 = vdwg.mxu0
        %1269 = vmatpush.msra.mxu0 %v1181
        %1270 = vmatpush.msra.mxu0 %v1180
        %1271 = vmatpush.msra.mxu0 %v1179
        %1272 = vmatpush.msra.mxu0 %v1178
        %1273 = vmatpush.msra.mxu0 %v1177
        %1274 = vmatpush.msra.mxu0 %v1176
        %1275 = vmatpush.msra.mxu0 %v1175
        %1276 = vmatpush.msra.mxu0 %v1174
        %1277 = vmatpush.msra.mxu0 %v1173
        %1278 = vmatpush.msra.mxu0 %v1172
        %1279 = vmatpush.msra.mxu0 %v1171
        %1280 = vmatpush.msra.mxu0 %v1170
        %1281 = vmatpush.msra.mxu0 %v1169
        %1282 = vmatpush.msra.mxu0 %v1168
        %1283 = vmatpush.msra.mxu0 %v1167
        %1284 = vmatpush.msra.mxu0 %v1166
        %1285 = vmatmul.f32.gmra.mxu0 %v1096
        %v1286 = vpop.f32.mrf.mxu0
        %v1287 = vadd.f32 %v1216, %v1286
        %1288 = vmatmul.f32.gmra.mxu0 %v1099
        %v1289 = vpop.f32.mrf.mxu0
        %v1290 = vadd.f32 %v1219, %v1289
        %1291 = vmatmul.f32.gmra.mxu0 %v1102
        %v1292 = vpop.f32.mrf.mxu0
        %v1293 = vadd.f32 %v1222, %v1292
        %1294 = vmatmul.f32.gmra.mxu0 %v1105
        %v1295 = vpop.f32.mrf.mxu0
        %v1296 = vadd.f32 %v1225, %v1295
        %1297 = vmatmul.f32.gmra.mxu0 %v1108
        %v1298 = vpop.f32.mrf.mxu0
        %v1299 = vadd.f32 %v1228, %v1298
        %1300 = vmatmul.f32.gmra.mxu0 %v1111
        %v1301 = vpop.f32.mrf.mxu0
        %v1302 = vadd.f32 %v1231, %v1301
        %1303 = vmatmul.f32.gmra.mxu0 %v1114
        %v1304 = vpop.f32.mrf.mxu0
        %v1305 = vadd.f32 %v1234, %v1304
        %1306 = vmatmul.f32.gmra.mxu0 %v1117
        %v1307 = vpop.f32.mrf.mxu0
        %v1308 = vadd.f32 %v1237, %v1307
        %1309 = vmatmul.f32.gmra.mxu0 %v1120
        %v1310 = vpop.f32.mrf.mxu0
        %v1311 = vadd.f32 %v1240, %v1310
        %1312 = vmatmul.f32.gmra.mxu0 %v1123
        %v1313 = vpop.f32.mrf.mxu0
        %v1314 = vadd.f32 %v1243, %v1313
        %1315 = vmatmul.f32.gmra.mxu0 %v1126
        %v1316 = vpop.f32.mrf.mxu0
        %v1317 = vadd.f32 %v1246, %v1316
        %1318 = vmatmul.f32.gmra.mxu0 %v1129
        %v1319 = vpop.f32.mrf.mxu0
        %v1320 = vadd.f32 %v1249, %v1319
        %1321 = vmatmul.f32.gmra.mxu0 %v1132
        %v1322 = vpop.f32.mrf.mxu0
        %v1323 = vadd.f32 %v1252, %v1322
        %1324 = vmatmul.f32.gmra.mxu0 %v1135
        %v1325 = vpop.f32.mrf.mxu0
        %v1326 = vadd.f32 %v1255, %v1325
        %1327 = vmatmul.f32.gmra.mxu0 %v1138
        %v1328 = vpop.f32.mrf.mxu0
        %v1329 = vadd.f32 %v1258, %v1328
        %1330 = vmatmul.f32.gmra.mxu0 %v1141
        %v1331 = vpop.f32.mrf.mxu0
        %v1332 = vadd.f32 %v1261, %v1331
        %1333 = vmatmul.f32.gmra.mxu0 %v1144
        %v1334 = vpop.f32.mrf.mxu0
        %v1335 = vadd.f32 %v1264, %v1334
        %1336 = vmatmul.f32.gmra.mxu0 %v1147
        %v1337 = vpop.f32.mrf.mxu0
        %v1338 = vadd.f32 %v1267, %v1337
        %1339 = vdwg.mxu0
        %1340 = vmatpush.msra.mxu0 %v1197
        %1341 = vmatpush.msra.mxu0 %v1196
        %1342 = vmatpush.msra.mxu0 %v1195
        %1343 = vmatpush.msra.mxu0 %v1194
        %1344 = vmatpush.msra.mxu0 %v1193
        %1345 = vmatpush.msra.mxu0 %v1192
        %1346 = vmatpush.msra.mxu0 %v1191
        %1347 = vmatpush.msra.mxu0 %v1190
        %1348 = vmatpush.msra.mxu0 %v1189
        %1349 = vmatpush.msra.mxu0 %v1188
        %1350 = vmatpush.msra.mxu0 %v1187
        %1351 = vmatpush.msra.mxu0 %v1186
        %1352 = vmatpush.msra.mxu0 %v1185
        %1353 = vmatpush.msra.mxu0 %v1184
        %1354 = vmatpush.msra.mxu0 %v1183
        %1355 = vmatpush.msra.mxu0 %v1182
        %1356 = vmatmul.f32.gmra.mxu0 %v1097
        %v1357 = vpop.f32.mrf.mxu0
        %v1358 = vadd.f32 %v1287, %v1357
        %1359 = vmatmul.f32.gmra.mxu0 %v1100
        %v1360 = vpop.f32.mrf.mxu0
        %v1361 = vadd.f32 %v1290, %v1360
        %1362 = vmatmul.f32.gmra.mxu0 %v1103
        %v1363 = vpop.f32.mrf.mxu0
        %v1364 = vadd.f32 %v1293, %v1363
        %1365 = vmatmul.f32.gmra.mxu0 %v1106
        %v1366 = vpop.f32.mrf.mxu0
        %v1367 = vadd.f32 %v1296, %v1366
        %1368 = vmatmul.f32.gmra.mxu0 %v1109
        %v1369 = vpop.f32.mrf.mxu0
        %v1370 = vadd.f32 %v1299, %v1369
        %1371 = vmatmul.f32.gmra.mxu0 %v1112
        %v1372 = vpop.f32.mrf.mxu0
        %v1373 = vadd.f32 %v1302, %v1372
        %1374 = vmatmul.f32.gmra.mxu0 %v1115
        %v1375 = vpop.f32.mrf.mxu0
        %v1376 = vadd.f32 %v1305, %v1375
        %1377 = vmatmul.f32.gmra.mxu0 %v1118
        %v1378 = vpop.f32.mrf.mxu0
        %v1379 = vadd.f32 %v1308, %v1378
        %1380 = vmatmul.f32.gmra.mxu0 %v1121
        %v1381 = vpop.f32.mrf.mxu0
        %v1382 = vadd.f32 %v1311, %v1381
        %1383 = vmatmul.f32.gmra.mxu0 %v1124
        %v1384 = vpop.f32.mrf.mxu0
        %v1385 = vadd.f32 %v1314, %v1384
        %1386 = vmatmul.f32.gmra.mxu0 %v1127
        %v1387 = vpop.f32.mrf.mxu0
        %v1388 = vadd.f32 %v1317, %v1387
        %1389 = vmatmul.f32.gmra.mxu0 %v1130
        %v1390 = vpop.f32.mrf.mxu0
        %v1391 = vadd.f32 %v1320, %v1390
        %1392 = vmatmul.f32.gmra.mxu0 %v1133
        %v1393 = vpop.f32.mrf.mxu0
        %v1394 = vadd.f32 %v1323, %v1393
        %1395 = vmatmul.f32.gmra.mxu0 %v1136
        %v1396 = vpop.f32.mrf.mxu0
        %v1397 = vadd.f32 %v1326, %v1396
        %1398 = vmatmul.f32.gmra.mxu0 %v1139
        %v1399 = vpop.f32.mrf.mxu0
        %v1400 = vadd.f32 %v1329, %v1399
        %1401 = vmatmul.f32.gmra.mxu0 %v1142
        %v1402 = vpop.f32.mrf.mxu0
        %v1403 = vadd.f32 %v1332, %v1402
        %1404 = vmatmul.f32.gmra.mxu0 %v1145
        %v1405 = vpop.f32.mrf.mxu0
        %v1406 = vadd.f32 %v1335, %v1405
        %1407 = vmatmul.f32.gmra.mxu0 %v1148
        %v1408 = vpop.f32.mrf.mxu0
        %v1409 = vadd.f32 %v1338, %v1408
        %1410 = vdwg.mxu0
        %v1411 = vadd.f32 %v1041, %v1358
        %v1412 = vadd.f32 %v1044, %v1361
        %v1413 = vadd.f32 %v1047, %v1364
        %v1414 = vadd.f32 %v1050, %v1367
        %v1415 = vadd.f32 %v1053, %v1370
        %v1416 = vadd.f32 %v1056, %v1373
        %v1417 = vadd.f32 %v1059, %v1376
        %v1418 = vadd.f32 %v1062, %v1379
        %v1419 = vadd.f32 %v1065, %v1382
        %v1420 = vadd.f32 %v1068, %v1385
        %v1421 = vadd.f32 %v1071, %v1388
        %v1422 = vadd.f32 %v1074, %v1391
        %v1423 = vadd.f32 %v1077, %v1394
        %v1424 = vadd.f32 %v1080, %v1397
        %v1425 = vadd.f32 %v1083, %v1400
        %v1426 = vadd.f32 %v1086, %v1403
        %v1427 = vadd.f32 %v1089, %v1406
        %v1428 = vadd.f32 %v1092, %v1409
        %v1429 = vld [vmem:[%s2] sm:$0x1]
        %v1431 = vperm.slane %v1429, 0
        %v1433 = vadd.f32 %v1411, %v1431
        %v1434 = vadd.f32 %v1412, %v1431
        %v1435 = vadd.f32 %v1413, %v1431
        %v1436 = vadd.f32 %v1414, %v1431
        %v1437 = vadd.f32 %v1415, %v1431
        %v1438 = vadd.f32 %v1416, %v1431
        %v1439 = vadd.f32 %v1417, %v1431
        %v1440 = vadd.f32 %v1418, %v1431
        %v1441 = vadd.f32 %v1419, %v1431
        %v1442 = vadd.f32 %v1420, %v1431
        %v1443 = vadd.f32 %v1421, %v1431
        %v1444 = vadd.f32 %v1422, %v1431
        %v1445 = vadd.f32 %v1423, %v1431
        %v1446 = vadd.f32 %v1424, %v1431
        %v1447 = vadd.f32 %v1425, %v1431
        %v1448 = vadd.f32 %v1426, %v1431
        %v1449 = vadd.f32 %v1427, %v1431
        %v1450 = vadd.f32 %v1428, %v1431
        %v1451 = vmax.f32 %v1433, 0.0
        %v1452 = vmax.f32 %v1434, 0.0
        %v1453 = vmax.f32 %v1435, 0.0
        %v1454 = vmax.f32 %v1436, 0.0
        %v1455 = vmax.f32 %v1437, 0.0
        %v1456 = vmax.f32 %v1438, 0.0
        %v1457 = vmax.f32 %v1439, 0.0
        %v1458 = vmax.f32 %v1440, 0.0
        %v1459 = vmax.f32 %v1441, 0.0
        %v1460 = vmax.f32 %v1442, 0.0
        %v1461 = vmax.f32 %v1443, 0.0
        %v1462 = vmax.f32 %v1444, 0.0
        %v1463 = vmax.f32 %v1445, 0.0
        %v1464 = vmax.f32 %v1446, 0.0
        %v1465 = vmax.f32 %v1447, 0.0
        %v1466 = vmax.f32 %v1448, 0.0
        %v1467 = vmax.f32 %v1449, 0.0
        %v1468 = vmax.f32 %v1450, 0.0
        %1469 = vst [vmem:[#allocation4 + $0x8] sm:$0xff] %v1451
        %1470 = vst [vmem:[#allocation4 + $0x20] sm:$0xff] %v1452
        %1471 = vst [vmem:[#allocation4 + $0x38] sm:$0xff] %v1453
        %1472 = vst [vmem:[#allocation4 + $0x50] sm:$0xff] %v1454
        %1473 = vst [vmem:[#allocation4 + $0x68] sm:$0xff] %v1455
        %1474 = vst [vmem:[#allocation4 + $0x80] sm:$0xff] %v1456
        %1475 = vst [vmem:[#allocation4 + $0x98] sm:$0xff] %v1457
        %1476 = vst [vmem:[#allocation4 + $0xb0] sm:$0xff] %v1458
        %1477 = vst [vmem:[#allocation4 + $0xc8] sm:$0xff] %v1459
        %1478 = vst [vmem:[#allocation4 + $0xe0] sm:$0xff] %v1460
        %1479 = vst [vmem:[#allocation4 + $0xf8] sm:$0xff] %v1461
        %1480 = vst [vmem:[#allocation4 + $0x110] sm:$0xff] %v1462
        %1481 = vst [vmem:[#allocation4 + $0x128] sm:$0xff] %v1463
        %1482 = vst [vmem:[#allocation4 + $0x140] sm:$0xff] %v1464
        %1483 = vst [vmem:[#allocation4 + $0x158] sm:$0xff] %v1465
        %1484 = vst [vmem:[#allocation4 + $0x170] sm:$0xff] %v1466
        %1485 = vst [vmem:[#allocation4 + $0x188] sm:$0xff] %v1467
        %1486 = vst [vmem:[#allocation4 + $0x1a0] sm:$0xff] %v1468
        %v1487 = vrot.slane %v1451, 7
        %v1488 = vrot.slane %v1452, 7
        %v1489 = vrot.slane %v1453, 7
        %v1490 = vrot.slane %v1454, 7
        %v1491 = vrot.slane %v1455, 7
        %v1492 = vrot.slane %v1456, 7
        %v1493 = vrot.slane %v1457, 7
        %v1494 = vrot.slane %v1458, 7
        %v1495 = vrot.slane %v1459, 7
        %v1496 = vrot.slane %v1460, 7
        %v1497 = vrot.slane %v1461, 7
        %v1498 = vrot.slane %v1462, 7
        %v1499 = vrot.slane %v1463, 7
        %v1500 = vrot.slane %v1464, 7
        %v1501 = vrot.slane %v1465, 7
        %v1502 = vrot.slane %v1466, 7
        %v1503 = vrot.slane %v1467, 7
        %v1504 = vrot.slane %v1468, 7
        %v1505 = vsel %vm320, %v1503, %v1504
        %v1506 = vsel %vm320, %v1502, %v1503
        %v1507 = vsel %vm320, %v1501, %v1502
        %v1508 = vsel %vm320, %v1500, %v1501
        %v1509 = vsel %vm320, %v1499, %v1500
        %v1510 = vsel %vm320, %v1498, %v1499
        %v1511 = vsel %vm320, %v1497, %v1498
        %v1512 = vsel %vm320, %v1496, %v1497
        %v1513 = vsel %vm320, %v1495, %v1496
        %v1514 = vsel %vm320, %v1494, %v1495
        %v1515 = vsel %vm320, %v1493, %v1494
        %v1516 = vsel %vm320, %v1492, %v1493
        %v1517 = vsel %vm320, %v1491, %v1492
        %v1518 = vsel %vm320, %v1490, %v1491
        %v1519 = vsel %vm320, %v1489, %v1490
        %v1520 = vsel %vm320, %v1488, %v1489
        %v1521 = vsel %vm320, %v1487, %v1488
        %v1522 = vsel %vm320, %v1504, %v1487
        %1523 = vst [vmem:[#allocation4] sm:$0xff] %v1522
        %1524 = vst [vmem:[#allocation4 + $0x18] sm:$0xff] %v1521
        %1525 = vst [vmem:[#allocation4 + $0x30] sm:$0xff] %v1520
        %1526 = vst [vmem:[#allocation4 + $0x48] sm:$0xff] %v1519
        %1527 = vst [vmem:[#allocation4 + $0x60] sm:$0xff] %v1518
        %1528 = vst [vmem:[#allocation4 + $0x78] sm:$0xff] %v1517
        %1529 = vst [vmem:[#allocation4 + $0x90] sm:$0xff] %v1516
        %1530 = vst [vmem:[#allocation4 + $0xa8] sm:$0xff] %v1515
        %1531 = vst [vmem:[#allocation4 + $0xc0] sm:$0xff] %v1514
        %1532 = vst [vmem:[#allocation4 + $0xd8] sm:$0xff] %v1513
        %1533 = vst [vmem:[#allocation4 + $0xf0] sm:$0xff] %v1512
        %1534 = vst [vmem:[#allocation4 + $0x108] sm:$0xff] %v1511
        %1535 = vst [vmem:[#allocation4 + $0x120] sm:$0xff] %v1510
        %1536 = vst [vmem:[#allocation4 + $0x138] sm:$0xff] %v1509
        %1537 = vst [vmem:[#allocation4 + $0x150] sm:$0xff] %v1508
        %1538 = vst [vmem:[#allocation4 + $0x168] sm:$0xff] %v1507
        %1539 = vst [vmem:[#allocation4 + $0x180] sm:$0xff] %v1506
        %1540 = vst [vmem:[#allocation4 + $0x198] sm:$0xff] %v1505
        %v1541 = vrot.slane %v1451, 1
        %v1542 = vrot.slane %v1452, 1
        %v1543 = vrot.slane %v1453, 1
        %v1544 = vrot.slane %v1454, 1
        %v1545 = vrot.slane %v1455, 1
        %v1546 = vrot.slane %v1456, 1
        %v1547 = vrot.slane %v1457, 1
        %v1548 = vrot.slane %v1458, 1
        %v1549 = vrot.slane %v1459, 1
        %v1550 = vrot.slane %v1460, 1
        %v1551 = vrot.slane %v1461, 1
        %v1552 = vrot.slane %v1462, 1
        %v1553 = vrot.slane %v1463, 1
        %v1554 = vrot.slane %v1464, 1
        %v1555 = vrot.slane %v1465, 1
        %v1556 = vrot.slane %v1466, 1
        %v1557 = vrot.slane %v1467, 1
        %v1558 = vrot.slane %v1468, 1
        %v1559 = vsel %vm381, %v1557, %v1558
        %v1560 = vsel %vm381, %v1556, %v1557
        %v1561 = vsel %vm381, %v1555, %v1556
        %v1562 = vsel %vm381, %v1554, %v1555
        %v1563 = vsel %vm381, %v1553, %v1554
        %v1564 = vsel %vm381, %v1552, %v1553
        %v1565 = vsel %vm381, %v1551, %v1552
        %v1566 = vsel %vm381, %v1550, %v1551
        %v1567 = vsel %vm381, %v1549, %v1550
        %v1568 = vsel %vm381, %v1548, %v1549
        %v1569 = vsel %vm381, %v1547, %v1548
        %v1570 = vsel %vm381, %v1546, %v1547
        %v1571 = vsel %vm381, %v1545, %v1546
        %v1572 = vsel %vm381, %v1544, %v1545
        %v1573 = vsel %vm381, %v1543, %v1544
        %v1574 = vsel %vm381, %v1542, %v1543
        %v1575 = vsel %vm381, %v1541, %v1542
        %v1576 = vsel %vm381, %v1558, %v1541
        %1577 = vst [vmem:[#allocation4 + $0x10] sm:$0xff] %v1575
        %1578 = vst [vmem:[#allocation4 + $0x28] sm:$0xff] %v1574
        %1579 = vst [vmem:[#allocation4 + $0x40] sm:$0xff] %v1573
        %1580 = vst [vmem:[#allocation4 + $0x58] sm:$0xff] %v1572
        %1581 = vst [vmem:[#allocation4 + $0x70] sm:$0xff] %v1571
        %1582 = vst [vmem:[#allocation4 + $0x88] sm:$0xff] %v1570
        %1583 = vst [vmem:[#allocation4 + $0xa0] sm:$0xff] %v1569
        %1584 = vst [vmem:[#allocation4 + $0xb8] sm:$0xff] %v1568
        %1585 = vst [vmem:[#allocation4 + $0xd0] sm:$0xff] %v1567
        %1586 = vst [vmem:[#allocation4 + $0xe8] sm:$0xff] %v1566
        %1587 = vst [vmem:[#allocation4 + $0x100] sm:$0xff] %v1565
        %1588 = vst [vmem:[#allocation4 + $0x118] sm:$0xff] %v1564
        %1589 = vst [vmem:[#allocation4 + $0x130] sm:$0xff] %v1563
        %1590 = vst [vmem:[#allocation4 + $0x148] sm:$0xff] %v1562
        %1591 = vst [vmem:[#allocation4 + $0x160] sm:$0xff] %v1561
        %1592 = vst [vmem:[#allocation4 + $0x178] sm:$0xff] %v1560
        %1593 = vst [vmem:[#allocation4 + $0x190] sm:$0xff] %v1559
        %1594 = vst [vmem:[#allocation4 + $0x1a8] sm:$0xff] %v1576
        %1595 = vst [vmem:[#allocation4] sm:$0x1] 0.0
        %1596 = vst [vmem:[#allocation4 + $0x18] sm:$0x1] 0.0
        %1597 = vst [vmem:[#allocation4 + $0x30] sm:$0x1] 0.0
        %1598 = vst [vmem:[#allocation4 + $0x48] sm:$0x1] 0.0
        %1599 = vst [vmem:[#allocation4 + $0x60] sm:$0x1] 0.0
        %1600 = vst [vmem:[#allocation4 + $0x78] sm:$0x1] 0.0
        %1601 = vst [vmem:[#allocation4 + $0x90] sm:$0x1] 0.0
        %1602 = vst [vmem:[#allocation4 + $0xa8] sm:$0x1] 0.0
        %1603 = vst [vmem:[#allocation4 + $0xc0] sm:$0x1] 0.0
        %1604 = vst [vmem:[#allocation4 + $0xd8] sm:$0x1] 0.0
        %1605 = vst [vmem:[#allocation4 + $0xf0] sm:$0x1] 0.0
        %1606 = vst [vmem:[#allocation4 + $0x108] sm:$0x1] 0.0
        %1607 = vst [vmem:[#allocation4 + $0x120] sm:$0x1] 0.0
        %1608 = vst [vmem:[#allocation4 + $0x138] sm:$0x1] 0.0
        %1609 = vst [vmem:[#allocation4 + $0x150] sm:$0x1] 0.0
        %1610 = vst [vmem:[#allocation4 + $0x168] sm:$0x1] 0.0
        %1611 = vst [vmem:[#allocation4 + $0x180] sm:$0x1] 0.0
        %1612 = vst [vmem:[#allocation4 + $0x198] sm:$0x1] 0.0
        %1613 = vst [vmem:[#allocation4 + $0x17] sm:$0x1] 0.0
        %1614 = vst [vmem:[#allocation4 + $0x2f] sm:$0x1] 0.0
        %1615 = vst [vmem:[#allocation4 + $0x47] sm:$0x1] 0.0
        %1616 = vst [vmem:[#allocation4 + $0x5f] sm:$0x1] 0.0
        %1617 = vst [vmem:[#allocation4 + $0x77] sm:$0x1] 0.0
        %1618 = vst [vmem:[#allocation4 + $0x8f] sm:$0x1] 0.0
        %1619 = vst [vmem:[#allocation4 + $0xa7] sm:$0x1] 0.0
        %1620 = vst [vmem:[#allocation4 + $0xbf] sm:$0x1] 0.0
        %1621 = vst [vmem:[#allocation4 + $0xd7] sm:$0x1] 0.0
        %1622 = vst [vmem:[#allocation4 + $0xef] sm:$0x1] 0.0
        %1623 = vst [vmem:[#allocation4 + $0x107] sm:$0x1] 0.0
        %1624 = vst [vmem:[#allocation4 + $0x11f] sm:$0x1] 0.0
        %1625 = vst [vmem:[#allocation4 + $0x137] sm:$0x1] 0.0
        %1626 = vst [vmem:[#allocation4 + $0x14f] sm:$0x1] 0.0
        %1627 = vst [vmem:[#allocation4 + $0x167] sm:$0x1] 0.0
        %1628 = vst [vmem:[#allocation4 + $0x17f] sm:$0x1] 0.0
        %1629 = vst [vmem:[#allocation4 + $0x197] sm:$0x1] 0.0
        %1630 = vst [vmem:[#allocation4 + $0x1af] sm:$0x1] 0.0
        // Predicated region
        $region53: #{tpu_custom_call.1} parent=35 // pred_check
          %p1631 = pneg %p226
        $region54: #{tpu_custom_call.1} parent=35 // pred_check_branch
          %1633 = sbr.rel (%p1631) target = $region56
        $region55: #{tpu_custom_call.1} parent=35 // pred_region
          %1634 = vst [vmem:[#allocation4] sm:$0xff] 0.0
          %1635 = vst [vmem:[#allocation4 + $0x8] sm:$0xff] 0.0
          %1636 = vst [vmem:[#allocation4 + $0x10] sm:$0xff] 0.0
          %s1637 = scalar_lea.vmem [#allocation4], 408
          %1638 = vst [vmem:[%s1637] sm:$0xff] 0.0
          %1639 = vst [vmem:[%s1637 + $0x8] sm:$0xff] 0.0
          %1640 = vst [vmem:[%s1637 + $0x10] sm:$0xff] 0.0
        $region56: #{tpu_custom_call.1} parent=35 // pred_fallthru
          _
        %v1641 = vld [vmem:[#allocation4] sm:$0xff]
        %v1642 = vld [vmem:[#allocation4 + $0x8] sm:$0xff]
        %v1643 = vld [vmem:[#allocation4 + $0x10] sm:$0xff]
        %v1644 = vld [vmem:[#allocation4 + $0x18] sm:$0xff]
        %v1645 = vld [vmem:[#allocation4 + $0x20] sm:$0xff]
        %v1646 = vld [vmem:[#allocation4 + $0x28] sm:$0xff]
        %v1647 = vld [vmem:[#allocation4 + $0x30] sm:$0xff]
        %v1648 = vld [vmem:[#allocation4 + $0x38] sm:$0xff]
        %v1649 = vld [vmem:[#allocation4 + $0x40] sm:$0xff]
        %v1650 = vld [vmem:[#allocation4 + $0x48] sm:$0xff]
        %v1651 = vld [vmem:[#allocation4 + $0x50] sm:$0xff]
        %v1652 = vld [vmem:[#allocation4 + $0x58] sm:$0xff]
        %v1653 = vld [vmem:[#allocation4 + $0x60] sm:$0xff]
        %v1654 = vld [vmem:[#allocation4 + $0x68] sm:$0xff]
        %v1655 = vld [vmem:[#allocation4 + $0x70] sm:$0xff]
        %v1656 = vld [vmem:[#allocation4 + $0x78] sm:$0xff]
        %v1657 = vld [vmem:[#allocation4 + $0x80] sm:$0xff]
        %v1658 = vld [vmem:[#allocation4 + $0x88] sm:$0xff]
        %v1659 = vld [vmem:[#allocation4 + $0x90] sm:$0xff]
        %v1660 = vld [vmem:[#allocation4 + $0x98] sm:$0xff]
        %v1661 = vld [vmem:[#allocation4 + $0xa0] sm:$0xff]
        %v1662 = vld [vmem:[#allocation4 + $0xa8] sm:$0xff]
        %v1663 = vld [vmem:[#allocation4 + $0xb0] sm:$0xff]
        %v1664 = vld [vmem:[#allocation4 + $0xb8] sm:$0xff]
        %v1665 = vld [vmem:[#allocation4 + $0xc0] sm:$0xff]
        %v1666 = vld [vmem:[#allocation4 + $0xc8] sm:$0xff]
        %v1667 = vld [vmem:[#allocation4 + $0xd0] sm:$0xff]
        %v1668 = vld [vmem:[#allocation4 + $0xd8] sm:$0xff]
        %v1669 = vld [vmem:[#allocation4 + $0xe0] sm:$0xff]
        %v1670 = vld [vmem:[#allocation4 + $0xe8] sm:$0xff]
        %v1671 = vld [vmem:[#allocation4 + $0xf0] sm:$0xff]
        %v1672 = vld [vmem:[#allocation4 + $0xf8] sm:$0xff]
        %v1673 = vld [vmem:[#allocation4 + $0x100] sm:$0xff]
        %v1674 = vld [vmem:[#allocation4 + $0x108] sm:$0xff]
        %v1675 = vld [vmem:[#allocation4 + $0x110] sm:$0xff]
        %v1676 = vld [vmem:[#allocation4 + $0x118] sm:$0xff]
        %v1677 = vld [vmem:[#allocation4 + $0x120] sm:$0xff]
        %v1678 = vld [vmem:[#allocation4 + $0x128] sm:$0xff]
        %v1679 = vld [vmem:[#allocation4 + $0x130] sm:$0xff]
        %v1680 = vld [vmem:[#allocation4 + $0x138] sm:$0xff]
        %v1681 = vld [vmem:[#allocation4 + $0x140] sm:$0xff]
        %v1682 = vld [vmem:[#allocation4 + $0x148] sm:$0xff]
        %v1683 = vld [vmem:[#allocation4 + $0x150] sm:$0xff]
        %v1684 = vld [vmem:[#allocation4 + $0x158] sm:$0xff]
        %v1685 = vld [vmem:[#allocation4 + $0x160] sm:$0xff]
        %v1686 = vld [vmem:[#allocation4 + $0x168] sm:$0xff]
        %v1687 = vld [vmem:[#allocation4 + $0x170] sm:$0xff]
        %v1688 = vld [vmem:[#allocation4 + $0x178] sm:$0xff]
        %v1689 = vld [vmem:[#allocation9] sm:$0xff]
        %v1690 = vld [vmem:[#allocation9 + $0x8] sm:$0xff]
        %v1691 = vld [vmem:[#allocation9 + $0x10] sm:$0xff]
        %v1692 = vld [vmem:[#allocation9 + $0x18] sm:$0xff]
        %v1693 = vld [vmem:[#allocation9 + $0x20] sm:$0xff]
        %v1694 = vld [vmem:[#allocation9 + $0x28] sm:$0xff]
        %v1695 = vld [vmem:[#allocation9 + $0x30] sm:$0xff]
        %v1696 = vld [vmem:[#allocation9 + $0x38] sm:$0xff]
        %v1697 = vld [vmem:[#allocation9 + $0x40] sm:$0xff]
        %v1698 = vld [vmem:[#allocation9 + $0x48] sm:$0xff]
        %v1699 = vld [vmem:[#allocation9 + $0x50] sm:$0xff]
        %v1700 = vld [vmem:[#allocation9 + $0x58] sm:$0xff]
        %v1701 = vld [vmem:[#allocation9 + $0x60] sm:$0xff]
        %v1702 = vld [vmem:[#allocation9 + $0x68] sm:$0xff]
        %v1703 = vld [vmem:[#allocation9 + $0x70] sm:$0xff]
        %v1704 = vld [vmem:[#allocation9 + $0x78] sm:$0xff]
        %v1705 = vld [vmem:[#allocation9 + $0x80] sm:$0xff]
        %v1706 = vld [vmem:[#allocation9 + $0x88] sm:$0xff]
        %v1707 = vld [vmem:[#allocation9 + $0x90] sm:$0xff]
        %v1708 = vld [vmem:[#allocation9 + $0x98] sm:$0xff]
        %v1709 = vld [vmem:[#allocation9 + $0xa0] sm:$0xff]
        %v1710 = vld [vmem:[#allocation9 + $0xa8] sm:$0xff]
        %v1711 = vld [vmem:[#allocation9 + $0xb0] sm:$0xff]
        %v1712 = vld [vmem:[#allocation9 + $0xb8] sm:$0xff]
        %v1713 = vld [vmem:[#allocation9 + $0xc0] sm:$0xff]
        %v1714 = vld [vmem:[#allocation9 + $0xc8] sm:$0xff]
        %v1715 = vld [vmem:[#allocation9 + $0xd0] sm:$0xff]
        %v1716 = vld [vmem:[#allocation9 + $0xd8] sm:$0xff]
        %v1717 = vld [vmem:[#allocation9 + $0xe0] sm:$0xff]
        %v1718 = vld [vmem:[#allocation9 + $0xe8] sm:$0xff]
        %v1719 = vld [vmem:[#allocation9 + $0xf0] sm:$0xff]
        %v1720 = vld [vmem:[#allocation9 + $0xf8] sm:$0xff]
        %v1721 = vld [vmem:[#allocation9 + $0x100] sm:$0xff]
        %v1722 = vld [vmem:[#allocation9 + $0x108] sm:$0xff]
        %v1723 = vld [vmem:[#allocation9 + $0x110] sm:$0xff]
        %v1724 = vld [vmem:[#allocation9 + $0x118] sm:$0xff]
        %v1725 = vld [vmem:[#allocation9 + $0x120] sm:$0xff]
        %v1726 = vld [vmem:[#allocation9 + $0x128] sm:$0xff]
        %v1727 = vld [vmem:[#allocation9 + $0x130] sm:$0xff]
        %v1728 = vld [vmem:[#allocation9 + $0x138] sm:$0xff]
        %v1729 = vld [vmem:[#allocation9 + $0x140] sm:$0xff]
        %v1730 = vld [vmem:[#allocation9 + $0x148] sm:$0xff]
        %v1731 = vld [vmem:[#allocation9 + $0x150] sm:$0xff]
        %v1732 = vld [vmem:[#allocation9 + $0x158] sm:$0xff]
        %v1733 = vld [vmem:[#allocation9 + $0x160] sm:$0xff]
        %v1734 = vld [vmem:[#allocation9 + $0x168] sm:$0xff]
        %v1735 = vld [vmem:[#allocation9 + $0x170] sm:$0xff]
        %v1736 = vld [vmem:[#allocation9 + $0x178] sm:$0xff]
        %s1737 = scalar_lea.vmem [#allocation4], 24
        %v1738 = vld [vmem:[%s1737] sm:$0xff]
        %v1739 = vld [vmem:[%s1737 + $0x8] sm:$0xff]
        %v1740 = vld [vmem:[%s1737 + $0x10] sm:$0xff]
        %v1741 = vld [vmem:[%s1737 + $0x18] sm:$0xff]
        %v1742 = vld [vmem:[%s1737 + $0x20] sm:$0xff]
        %v1743 = vld [vmem:[%s1737 + $0x28] sm:$0xff]
        %v1744 = vld [vmem:[%s1737 + $0x30] sm:$0xff]
        %v1745 = vld [vmem:[%s1737 + $0x38] sm:$0xff]
        %v1746 = vld [vmem:[%s1737 + $0x40] sm:$0xff]
        %v1747 = vld [vmem:[%s1737 + $0x48] sm:$0xff]
        %v1748 = vld [vmem:[%s1737 + $0x50] sm:$0xff]
        %v1749 = vld [vmem:[%s1737 + $0x58] sm:$0xff]
        %v1750 = vld [vmem:[%s1737 + $0x60] sm:$0xff]
        %v1751 = vld [vmem:[%s1737 + $0x68] sm:$0xff]
        %v1752 = vld [vmem:[%s1737 + $0x70] sm:$0xff]
        %v1753 = vld [vmem:[%s1737 + $0x78] sm:$0xff]
        %v1754 = vld [vmem:[%s1737 + $0x80] sm:$0xff]
        %v1755 = vld [vmem:[%s1737 + $0x88] sm:$0xff]
        %v1756 = vld [vmem:[%s1737 + $0x90] sm:$0xff]
        %v1757 = vld [vmem:[%s1737 + $0x98] sm:$0xff]
        %v1758 = vld [vmem:[%s1737 + $0xa0] sm:$0xff]
        %v1759 = vld [vmem:[%s1737 + $0xa8] sm:$0xff]
        %v1760 = vld [vmem:[%s1737 + $0xb0] sm:$0xff]
        %v1761 = vld [vmem:[%s1737 + $0xb8] sm:$0xff]
        %v1762 = vld [vmem:[%s1737 + $0xc0] sm:$0xff]
        %v1763 = vld [vmem:[%s1737 + $0xc8] sm:$0xff]
        %v1764 = vld [vmem:[%s1737 + $0xd0] sm:$0xff]
        %v1765 = vld [vmem:[%s1737 + $0xd8] sm:$0xff]
        %v1766 = vld [vmem:[%s1737 + $0xe0] sm:$0xff]
        %v1767 = vld [vmem:[%s1737 + $0xe8] sm:$0xff]
        %v1768 = vld [vmem:[%s1737 + $0xf0] sm:$0xff]
        %v1769 = vld [vmem:[%s1737 + $0xf8] sm:$0xff]
        %v1770 = vld [vmem:[%s1737 + $0x100] sm:$0xff]
        %v1771 = vld [vmem:[%s1737 + $0x108] sm:$0xff]
        %v1772 = vld [vmem:[%s1737 + $0x110] sm:$0xff]
        %v1773 = vld [vmem:[%s1737 + $0x118] sm:$0xff]
        %v1774 = vld [vmem:[%s1737 + $0x120] sm:$0xff]
        %v1775 = vld [vmem:[%s1737 + $0x128] sm:$0xff]
        %v1776 = vld [vmem:[%s1737 + $0x130] sm:$0xff]
        %v1777 = vld [vmem:[%s1737 + $0x138] sm:$0xff]
        %v1778 = vld [vmem:[%s1737 + $0x140] sm:$0xff]
        %v1779 = vld [vmem:[%s1737 + $0x148] sm:$0xff]
        %v1780 = vld [vmem:[%s1737 + $0x150] sm:$0xff]
        %v1781 = vld [vmem:[%s1737 + $0x158] sm:$0xff]
        %v1782 = vld [vmem:[%s1737 + $0x160] sm:$0xff]
        %v1783 = vld [vmem:[%s1737 + $0x168] sm:$0xff]
        %v1784 = vld [vmem:[%s1737 + $0x170] sm:$0xff]
        %v1785 = vld [vmem:[%s1737 + $0x178] sm:$0xff]
        %s1786 = scalar_lea.vmem [#allocation9], 384
        %v1787 = vld [vmem:[%s1786] sm:$0xff]
        %v1788 = vld [vmem:[%s1786 + $0x8] sm:$0xff]
        %v1789 = vld [vmem:[%s1786 + $0x10] sm:$0xff]
        %v1790 = vld [vmem:[%s1786 + $0x18] sm:$0xff]
        %v1791 = vld [vmem:[%s1786 + $0x20] sm:$0xff]
        %v1792 = vld [vmem:[%s1786 + $0x28] sm:$0xff]
        %v1793 = vld [vmem:[%s1786 + $0x30] sm:$0xff]
        %v1794 = vld [vmem:[%s1786 + $0x38] sm:$0xff]
        %v1795 = vld [vmem:[%s1786 + $0x40] sm:$0xff]
        %v1796 = vld [vmem:[%s1786 + $0x48] sm:$0xff]
        %v1797 = vld [vmem:[%s1786 + $0x50] sm:$0xff]
        %v1798 = vld [vmem:[%s1786 + $0x58] sm:$0xff]
        %v1799 = vld [vmem:[%s1786 + $0x60] sm:$0xff]
        %v1800 = vld [vmem:[%s1786 + $0x68] sm:$0xff]
        %v1801 = vld [vmem:[%s1786 + $0x70] sm:$0xff]
        %v1802 = vld [vmem:[%s1786 + $0x78] sm:$0xff]
        %v1803 = vld [vmem:[%s1786 + $0x80] sm:$0xff]
        %v1804 = vld [vmem:[%s1786 + $0x88] sm:$0xff]
        %v1805 = vld [vmem:[%s1786 + $0x90] sm:$0xff]
        %v1806 = vld [vmem:[%s1786 + $0x98] sm:$0xff]
        %v1807 = vld [vmem:[%s1786 + $0xa0] sm:$0xff]
        %v1808 = vld [vmem:[%s1786 + $0xa8] sm:$0xff]
        %v1809 = vld [vmem:[%s1786 + $0xb0] sm:$0xff]
        %v1810 = vld [vmem:[%s1786 + $0xb8] sm:$0xff]
        %v1811 = vld [vmem:[%s1786 + $0xc0] sm:$0xff]
        %v1812 = vld [vmem:[%s1786 + $0xc8] sm:$0xff]
        %v1813 = vld [vmem:[%s1786 + $0xd0] sm:$0xff]
        %v1814 = vld [vmem:[%s1786 + $0xd8] sm:$0xff]
        %v1815 = vld [vmem:[%s1786 + $0xe0] sm:$0xff]
        %v1816 = vld [vmem:[%s1786 + $0xe8] sm:$0xff]
        %v1817 = vld [vmem:[%s1786 + $0xf0] sm:$0xff]
        %v1818 = vld [vmem:[%s1786 + $0xf8] sm:$0xff]
        %v1819 = vld [vmem:[%s1786 + $0x100] sm:$0xff]
        %v1820 = vld [vmem:[%s1786 + $0x108] sm:$0xff]
        %v1821 = vld [vmem:[%s1786 + $0x110] sm:$0xff]
        %v1822 = vld [vmem:[%s1786 + $0x118] sm:$0xff]
        %v1823 = vld [vmem:[%s1786 + $0x120] sm:$0xff]
        %v1824 = vld [vmem:[%s1786 + $0x128] sm:$0xff]
        %v1825 = vld [vmem:[%s1786 + $0x130] sm:$0xff]
        %v1826 = vld [vmem:[%s1786 + $0x138] sm:$0xff]
        %v1827 = vld [vmem:[%s1786 + $0x140] sm:$0xff]
        %v1828 = vld [vmem:[%s1786 + $0x148] sm:$0xff]
        %v1829 = vld [vmem:[%s1786 + $0x150] sm:$0xff]
        %v1830 = vld [vmem:[%s1786 + $0x158] sm:$0xff]
        %v1831 = vld [vmem:[%s1786 + $0x160] sm:$0xff]
        %v1832 = vld [vmem:[%s1786 + $0x168] sm:$0xff]
        %v1833 = vld [vmem:[%s1786 + $0x170] sm:$0xff]
        %v1834 = vld [vmem:[%s1786 + $0x178] sm:$0xff]
        %1835 = vmatpush.msra.mxu0 %v1802
        %1836 = vmatpush.msra.mxu0 %v1801
        %1837 = vmatpush.msra.mxu0 %v1800
        %1838 = vmatpush.msra.mxu0 %v1799
        %1839 = vmatpush.msra.mxu0 %v1798
        %1840 = vmatpush.msra.mxu0 %v1797
        %1841 = vmatpush.msra.mxu0 %v1796
        %1842 = vmatpush.msra.mxu0 %v1795
        %1843 = vmatpush.msra.mxu0 %v1794
        %1844 = vmatpush.msra.mxu0 %v1793
        %1845 = vmatpush.msra.mxu0 %v1792
        %1846 = vmatpush.msra.mxu0 %v1791
        %1847 = vmatpush.msra.mxu0 %v1790
        %1848 = vmatpush.msra.mxu0 %v1789
        %1849 = vmatpush.msra.mxu0 %v1788
        %1850 = vmatpush.msra.mxu0 %v1787
        %1851 = vmatmul.f32.gmra.mxu0 %v1738
        %v1852 = vpop.f32.mrf.mxu0
        %v1853 = vadd.f32 0.0, %v1852
        %1854 = vmatmul.f32.gmra.mxu0 %v1741
        %v1855 = vpop.f32.mrf.mxu0
        %v1856 = vadd.f32 0.0, %v1855
        %1857 = vmatmul.f32.gmra.mxu0 %v1744
        %v1858 = vpop.f32.mrf.mxu0
        %v1859 = vadd.f32 0.0, %v1858
        %1860 = vmatmul.f32.gmra.mxu0 %v1747
        %v1861 = vpop.f32.mrf.mxu0
        %v1862 = vadd.f32 0.0, %v1861
        %1863 = vmatmul.f32.gmra.mxu0 %v1750
        %v1864 = vpop.f32.mrf.mxu0
        %v1865 = vadd.f32 0.0, %v1864
        %1866 = vmatmul.f32.gmra.mxu0 %v1753
        %v1867 = vpop.f32.mrf.mxu0
        %v1868 = vadd.f32 0.0, %v1867
        %1869 = vmatmul.f32.gmra.mxu0 %v1756
        %v1870 = vpop.f32.mrf.mxu0
        %v1871 = vadd.f32 0.0, %v1870
        %1872 = vmatmul.f32.gmra.mxu0 %v1759
        %v1873 = vpop.f32.mrf.mxu0
        %v1874 = vadd.f32 0.0, %v1873
        %1875 = vmatmul.f32.gmra.mxu0 %v1762
        %v1876 = vpop.f32.mrf.mxu0
        %v1877 = vadd.f32 0.0, %v1876
        %1878 = vmatmul.f32.gmra.mxu0 %v1765
        %v1879 = vpop.f32.mrf.mxu0
        %v1880 = vadd.f32 0.0, %v1879
        %1881 = vmatmul.f32.gmra.mxu0 %v1768
        %v1882 = vpop.f32.mrf.mxu0
        %v1883 = vadd.f32 0.0, %v1882
        %1884 = vmatmul.f32.gmra.mxu0 %v1771
        %v1885 = vpop.f32.mrf.mxu0
        %v1886 = vadd.f32 0.0, %v1885
        %1887 = vmatmul.f32.gmra.mxu0 %v1774
        %v1888 = vpop.f32.mrf.mxu0
        %v1889 = vadd.f32 0.0, %v1888
        %1890 = vmatmul.f32.gmra.mxu0 %v1777
        %v1891 = vpop.f32.mrf.mxu0
        %v1892 = vadd.f32 0.0, %v1891
        %1893 = vmatmul.f32.gmra.mxu0 %v1780
        %v1894 = vpop.f32.mrf.mxu0
        %v1895 = vadd.f32 0.0, %v1894
        %1896 = vmatmul.f32.gmra.mxu0 %v1783
        %v1897 = vpop.f32.mrf.mxu0
        %v1898 = vadd.f32 0.0, %v1897
        %1899 = vdwg.mxu0
        %1900 = vmatpush.msra.mxu0 %v1818
        %1901 = vmatpush.msra.mxu0 %v1817
        %1902 = vmatpush.msra.mxu0 %v1816
        %1903 = vmatpush.msra.mxu0 %v1815
        %1904 = vmatpush.msra.mxu0 %v1814
        %1905 = vmatpush.msra.mxu0 %v1813
        %1906 = vmatpush.msra.mxu0 %v1812
        %1907 = vmatpush.msra.mxu0 %v1811
        %1908 = vmatpush.msra.mxu0 %v1810
        %1909 = vmatpush.msra.mxu0 %v1809
        %1910 = vmatpush.msra.mxu0 %v1808
        %1911 = vmatpush.msra.mxu0 %v1807
        %1912 = vmatpush.msra.mxu0 %v1806
        %1913 = vmatpush.msra.mxu0 %v1805
        %1914 = vmatpush.msra.mxu0 %v1804
        %1915 = vmatpush.msra.mxu0 %v1803
        %1916 = vmatmul.f32.gmra.mxu0 %v1739
        %v1917 = vpop.f32.mrf.mxu0
        %v1918 = vadd.f32 %v1853, %v1917
        %1919 = vmatmul.f32.gmra.mxu0 %v1742
        %v1920 = vpop.f32.mrf.mxu0
        %v1921 = vadd.f32 %v1856, %v1920
        %1922 = vmatmul.f32.gmra.mxu0 %v1745
        %v1923 = vpop.f32.mrf.mxu0
        %v1924 = vadd.f32 %v1859, %v1923
        %1925 = vmatmul.f32.gmra.mxu0 %v1748
        %v1926 = vpop.f32.mrf.mxu0
        %v1927 = vadd.f32 %v1862, %v1926
        %1928 = vmatmul.f32.gmra.mxu0 %v1751
        %v1929 = vpop.f32.mrf.mxu0
        %v1930 = vadd.f32 %v1865, %v1929
        %1931 = vmatmul.f32.gmra.mxu0 %v1754
        %v1932 = vpop.f32.mrf.mxu0
        %v1933 = vadd.f32 %v1868, %v1932
        %1934 = vmatmul.f32.gmra.mxu0 %v1757
        %v1935 = vpop.f32.mrf.mxu0
        %v1936 = vadd.f32 %v1871, %v1935
        %1937 = vmatmul.f32.gmra.mxu0 %v1760
        %v1938 = vpop.f32.mrf.mxu0
        %v1939 = vadd.f32 %v1874, %v1938
        %1940 = vmatmul.f32.gmra.mxu0 %v1763
        %v1941 = vpop.f32.mrf.mxu0
        %v1942 = vadd.f32 %v1877, %v1941
        %1943 = vmatmul.f32.gmra.mxu0 %v1766
        %v1944 = vpop.f32.mrf.mxu0
        %v1945 = vadd.f32 %v1880, %v1944
        %1946 = vmatmul.f32.gmra.mxu0 %v1769
        %v1947 = vpop.f32.mrf.mxu0
        %v1948 = vadd.f32 %v1883, %v1947
        %1949 = vmatmul.f32.gmra.mxu0 %v1772
        %v1950 = vpop.f32.mrf.mxu0
        %v1951 = vadd.f32 %v1886, %v1950
        %1952 = vmatmul.f32.gmra.mxu0 %v1775
        %v1953 = vpop.f32.mrf.mxu0
        %v1954 = vadd.f32 %v1889, %v1953
        %1955 = vmatmul.f32.gmra.mxu0 %v1778
        %v1956 = vpop.f32.mrf.mxu0
        %v1957 = vadd.f32 %v1892, %v1956
        %1958 = vmatmul.f32.gmra.mxu0 %v1781
        %v1959 = vpop.f32.mrf.mxu0
        %v1960 = vadd.f32 %v1895, %v1959
        %1961 = vmatmul.f32.gmra.mxu0 %v1784
        %v1962 = vpop.f32.mrf.mxu0
        %v1963 = vadd.f32 %v1898, %v1962
        %1964 = vdwg.mxu0
        %1965 = vmatpush.msra.mxu0 %v1834
        %1966 = vmatpush.msra.mxu0 %v1833
        %1967 = vmatpush.msra.mxu0 %v1832
        %1968 = vmatpush.msra.mxu0 %v1831
        %1969 = vmatpush.msra.mxu0 %v1830
        %1970 = vmatpush.msra.mxu0 %v1829
        %1971 = vmatpush.msra.mxu0 %v1828
        %1972 = vmatpush.msra.mxu0 %v1827
        %1973 = vmatpush.msra.mxu0 %v1826
        %1974 = vmatpush.msra.mxu0 %v1825
        %1975 = vmatpush.msra.mxu0 %v1824
        %1976 = vmatpush.msra.mxu0 %v1823
        %1977 = vmatpush.msra.mxu0 %v1822
        %1978 = vmatpush.msra.mxu0 %v1821
        %1979 = vmatpush.msra.mxu0 %v1820
        %1980 = vmatpush.msra.mxu0 %v1819
        %1981 = vmatmul.f32.gmra.mxu0 %v1740
        %v1982 = vpop.f32.mrf.mxu0
        %v1983 = vadd.f32 %v1918, %v1982
        %1984 = vmatmul.f32.gmra.mxu0 %v1743
        %v1985 = vpop.f32.mrf.mxu0
        %v1986 = vadd.f32 %v1921, %v1985
        %1987 = vmatmul.f32.gmra.mxu0 %v1746
        %v1988 = vpop.f32.mrf.mxu0
        %v1989 = vadd.f32 %v1924, %v1988
        %1990 = vmatmul.f32.gmra.mxu0 %v1749
        %v1991 = vpop.f32.mrf.mxu0
        %v1992 = vadd.f32 %v1927, %v1991
        %1993 = vmatmul.f32.gmra.mxu0 %v1752
        %v1994 = vpop.f32.mrf.mxu0
        %v1995 = vadd.f32 %v1930, %v1994
        %1996 = vmatmul.f32.gmra.mxu0 %v1755
        %v1997 = vpop.f32.mrf.mxu0
        %v1998 = vadd.f32 %v1933, %v1997
        %1999 = vmatmul.f32.gmra.mxu0 %v1758
        %v2000 = vpop.f32.mrf.mxu0
        %v2001 = vadd.f32 %v1936, %v2000
        %2002 = vmatmul.f32.gmra.mxu0 %v1761
        %v2003 = vpop.f32.mrf.mxu0
        %v2004 = vadd.f32 %v1939, %v2003
        %2005 = vmatmul.f32.gmra.mxu0 %v1764
        %v2006 = vpop.f32.mrf.mxu0
        %v2007 = vadd.f32 %v1942, %v2006
        %2008 = vmatmul.f32.gmra.mxu0 %v1767
        %v2009 = vpop.f32.mrf.mxu0
        %v2010 = vadd.f32 %v1945, %v2009
        %2011 = vmatmul.f32.gmra.mxu0 %v1770
        %v2012 = vpop.f32.mrf.mxu0
        %v2013 = vadd.f32 %v1948, %v2012
        %2014 = vmatmul.f32.gmra.mxu0 %v1773
        %v2015 = vpop.f32.mrf.mxu0
        %v2016 = vadd.f32 %v1951, %v2015
        %2017 = vmatmul.f32.gmra.mxu0 %v1776
        %v2018 = vpop.f32.mrf.mxu0
        %v2019 = vadd.f32 %v1954, %v2018
        %2020 = vmatmul.f32.gmra.mxu0 %v1779
        %v2021 = vpop.f32.mrf.mxu0
        %v2022 = vadd.f32 %v1957, %v2021
        %2023 = vmatmul.f32.gmra.mxu0 %v1782
        %v2024 = vpop.f32.mrf.mxu0
        %v2025 = vadd.f32 %v1960, %v2024
        %2026 = vmatmul.f32.gmra.mxu0 %v1785
        %v2027 = vpop.f32.mrf.mxu0
        %v2028 = vadd.f32 %v1963, %v2027
        %2029 = vdwg.mxu0
        %2030 = vmatpush.msra.mxu0 %v1704
        %2031 = vmatpush.msra.mxu0 %v1703
        %2032 = vmatpush.msra.mxu0 %v1702
        %2033 = vmatpush.msra.mxu0 %v1701
        %2034 = vmatpush.msra.mxu0 %v1700
        %2035 = vmatpush.msra.mxu0 %v1699
        %2036 = vmatpush.msra.mxu0 %v1698
        %2037 = vmatpush.msra.mxu0 %v1697
        %2038 = vmatpush.msra.mxu0 %v1696
        %2039 = vmatpush.msra.mxu0 %v1695
        %2040 = vmatpush.msra.mxu0 %v1694
        %2041 = vmatpush.msra.mxu0 %v1693
        %2042 = vmatpush.msra.mxu0 %v1692
        %2043 = vmatpush.msra.mxu0 %v1691
        %2044 = vmatpush.msra.mxu0 %v1690
        %2045 = vmatpush.msra.mxu0 %v1689
        %2046 = vmatmul.f32.gmra.mxu0 %v1641
        %v2047 = vpop.f32.mrf.mxu0
        %v2048 = vadd.f32 %v1983, %v2047
        %2049 = vmatmul.f32.gmra.mxu0 %v1644
        %v2050 = vpop.f32.mrf.mxu0
        %v2051 = vadd.f32 %v1986, %v2050
        %2052 = vmatmul.f32.gmra.mxu0 %v1647
        %v2053 = vpop.f32.mrf.mxu0
        %v2054 = vadd.f32 %v1989, %v2053
        %2055 = vmatmul.f32.gmra.mxu0 %v1650
        %v2056 = vpop.f32.mrf.mxu0
        %v2057 = vadd.f32 %v1992, %v2056
        %2058 = vmatmul.f32.gmra.mxu0 %v1653
        %v2059 = vpop.f32.mrf.mxu0
        %v2060 = vadd.f32 %v1995, %v2059
        %2061 = vmatmul.f32.gmra.mxu0 %v1656
        %v2062 = vpop.f32.mrf.mxu0
        %v2063 = vadd.f32 %v1998, %v2062
        %2064 = vmatmul.f32.gmra.mxu0 %v1659
        %v2065 = vpop.f32.mrf.mxu0
        %v2066 = vadd.f32 %v2001, %v2065
        %2067 = vmatmul.f32.gmra.mxu0 %v1662
        %v2068 = vpop.f32.mrf.mxu0
        %v2069 = vadd.f32 %v2004, %v2068
        %2070 = vmatmul.f32.gmra.mxu0 %v1665
        %v2071 = vpop.f32.mrf.mxu0
        %v2072 = vadd.f32 %v2007, %v2071
        %2073 = vmatmul.f32.gmra.mxu0 %v1668
        %v2074 = vpop.f32.mrf.mxu0
        %v2075 = vadd.f32 %v2010, %v2074
        %2076 = vmatmul.f32.gmra.mxu0 %v1671
        %v2077 = vpop.f32.mrf.mxu0
        %v2078 = vadd.f32 %v2013, %v2077
        %2079 = vmatmul.f32.gmra.mxu0 %v1674
        %v2080 = vpop.f32.mrf.mxu0
        %v2081 = vadd.f32 %v2016, %v2080
        %2082 = vmatmul.f32.gmra.mxu0 %v1677
        %v2083 = vpop.f32.mrf.mxu0
        %v2084 = vadd.f32 %v2019, %v2083
        %2085 = vmatmul.f32.gmra.mxu0 %v1680
        %v2086 = vpop.f32.mrf.mxu0
        %v2087 = vadd.f32 %v2022, %v2086
        %2088 = vmatmul.f32.gmra.mxu0 %v1683
        %v2089 = vpop.f32.mrf.mxu0
        %v2090 = vadd.f32 %v2025, %v2089
        %2091 = vmatmul.f32.gmra.mxu0 %v1686
        %v2092 = vpop.f32.mrf.mxu0
        %v2093 = vadd.f32 %v2028, %v2092
        %2094 = vdwg.mxu0
        %2095 = vmatpush.msra.mxu0 %v1720
        %2096 = vmatpush.msra.mxu0 %v1719
        %2097 = vmatpush.msra.mxu0 %v1718
        %2098 = vmatpush.msra.mxu0 %v1717
        %2099 = vmatpush.msra.mxu0 %v1716
        %2100 = vmatpush.msra.mxu0 %v1715
        %2101 = vmatpush.msra.mxu0 %v1714
        %2102 = vmatpush.msra.mxu0 %v1713
        %2103 = vmatpush.msra.mxu0 %v1712
        %2104 = vmatpush.msra.mxu0 %v1711
        %2105 = vmatpush.msra.mxu0 %v1710
        %2106 = vmatpush.msra.mxu0 %v1709
        %2107 = vmatpush.msra.mxu0 %v1708
        %2108 = vmatpush.msra.mxu0 %v1707
        %2109 = vmatpush.msra.mxu0 %v1706
        %2110 = vmatpush.msra.mxu0 %v1705
        %2111 = vmatmul.f32.gmra.mxu0 %v1642
        %v2112 = vpop.f32.mrf.mxu0
        %v2113 = vadd.f32 %v2048, %v2112
        %2114 = vmatmul.f32.gmra.mxu0 %v1645
        %v2115 = vpop.f32.mrf.mxu0
        %v2116 = vadd.f32 %v2051, %v2115
        %2117 = vmatmul.f32.gmra.mxu0 %v1648
        %v2118 = vpop.f32.mrf.mxu0
        %v2119 = vadd.f32 %v2054, %v2118
        %2120 = vmatmul.f32.gmra.mxu0 %v1651
        %v2121 = vpop.f32.mrf.mxu0
        %v2122 = vadd.f32 %v2057, %v2121
        %2123 = vmatmul.f32.gmra.mxu0 %v1654
        %v2124 = vpop.f32.mrf.mxu0
        %v2125 = vadd.f32 %v2060, %v2124
        %2126 = vmatmul.f32.gmra.mxu0 %v1657
        %v2127 = vpop.f32.mrf.mxu0
        %v2128 = vadd.f32 %v2063, %v2127
        %2129 = vmatmul.f32.gmra.mxu0 %v1660
        %v2130 = vpop.f32.mrf.mxu0
        %v2131 = vadd.f32 %v2066, %v2130
        %2132 = vmatmul.f32.gmra.mxu0 %v1663
        %v2133 = vpop.f32.mrf.mxu0
        %v2134 = vadd.f32 %v2069, %v2133
        %2135 = vmatmul.f32.gmra.mxu0 %v1666
        %v2136 = vpop.f32.mrf.mxu0
        %v2137 = vadd.f32 %v2072, %v2136
        %2138 = vmatmul.f32.gmra.mxu0 %v1669
        %v2139 = vpop.f32.mrf.mxu0
        %v2140 = vadd.f32 %v2075, %v2139
        %2141 = vmatmul.f32.gmra.mxu0 %v1672
        %v2142 = vpop.f32.mrf.mxu0
        %v2143 = vadd.f32 %v2078, %v2142
        %2144 = vmatmul.f32.gmra.mxu0 %v1675
        %v2145 = vpop.f32.mrf.mxu0
        %v2146 = vadd.f32 %v2081, %v2145
        %2147 = vmatmul.f32.gmra.mxu0 %v1678
        %v2148 = vpop.f32.mrf.mxu0
        %v2149 = vadd.f32 %v2084, %v2148
        %2150 = vmatmul.f32.gmra.mxu0 %v1681
        %v2151 = vpop.f32.mrf.mxu0
        %v2152 = vadd.f32 %v2087, %v2151
        %2153 = vmatmul.f32.gmra.mxu0 %v1684
        %v2154 = vpop.f32.mrf.mxu0
        %v2155 = vadd.f32 %v2090, %v2154
        %2156 = vmatmul.f32.gmra.mxu0 %v1687
        %v2157 = vpop.f32.mrf.mxu0
        %v2158 = vadd.f32 %v2093, %v2157
        %2159 = vdwg.mxu0
        %2160 = vmatpush.msra.mxu0 %v1736
        %2161 = vmatpush.msra.mxu0 %v1735
        %2162 = vmatpush.msra.mxu0 %v1734
        %2163 = vmatpush.msra.mxu0 %v1733
        %2164 = vmatpush.msra.mxu0 %v1732
        %2165 = vmatpush.msra.mxu0 %v1731
        %2166 = vmatpush.msra.mxu0 %v1730
        %2167 = vmatpush.msra.mxu0 %v1729
        %2168 = vmatpush.msra.mxu0 %v1728
        %2169 = vmatpush.msra.mxu0 %v1727
        %2170 = vmatpush.msra.mxu0 %v1726
        %2171 = vmatpush.msra.mxu0 %v1725
        %2172 = vmatpush.msra.mxu0 %v1724
        %2173 = vmatpush.msra.mxu0 %v1723
        %2174 = vmatpush.msra.mxu0 %v1722
        %2175 = vmatpush.msra.mxu0 %v1721
        %2176 = vmatmul.f32.gmra.mxu0 %v1643
        %v2177 = vpop.f32.mrf.mxu0
        %v2178 = vadd.f32 %v2113, %v2177
        %2179 = vmatmul.f32.gmra.mxu0 %v1646
        %v2180 = vpop.f32.mrf.mxu0
        %v2181 = vadd.f32 %v2116, %v2180
        %2182 = vmatmul.f32.gmra.mxu0 %v1649
        %v2183 = vpop.f32.mrf.mxu0
        %v2184 = vadd.f32 %v2119, %v2183
        %2185 = vmatmul.f32.gmra.mxu0 %v1652
        %v2186 = vpop.f32.mrf.mxu0
        %v2187 = vadd.f32 %v2122, %v2186
        %2188 = vmatmul.f32.gmra.mxu0 %v1655
        %v2189 = vpop.f32.mrf.mxu0
        %v2190 = vadd.f32 %v2125, %v2189
        %2191 = vmatmul.f32.gmra.mxu0 %v1658
        %v2192 = vpop.f32.mrf.mxu0
        %v2193 = vadd.f32 %v2128, %v2192
        %2194 = vmatmul.f32.gmra.mxu0 %v1661
        %v2195 = vpop.f32.mrf.mxu0
        %v2196 = vadd.f32 %v2131, %v2195
        %2197 = vmatmul.f32.gmra.mxu0 %v1664
        %v2198 = vpop.f32.mrf.mxu0
        %v2199 = vadd.f32 %v2134, %v2198
        %2200 = vmatmul.f32.gmra.mxu0 %v1667
        %v2201 = vpop.f32.mrf.mxu0
        %v2202 = vadd.f32 %v2137, %v2201
        %2203 = vmatmul.f32.gmra.mxu0 %v1670
        %v2204 = vpop.f32.mrf.mxu0
        %v2205 = vadd.f32 %v2140, %v2204
        %2206 = vmatmul.f32.gmra.mxu0 %v1673
        %v2207 = vpop.f32.mrf.mxu0
        %v2208 = vadd.f32 %v2143, %v2207
        %2209 = vmatmul.f32.gmra.mxu0 %v1676
        %v2210 = vpop.f32.mrf.mxu0
        %v2211 = vadd.f32 %v2146, %v2210
        %2212 = vmatmul.f32.gmra.mxu0 %v1679
        %v2213 = vpop.f32.mrf.mxu0
        %v2214 = vadd.f32 %v2149, %v2213
        %2215 = vmatmul.f32.gmra.mxu0 %v1682
        %v2216 = vpop.f32.mrf.mxu0
        %v2217 = vadd.f32 %v2152, %v2216
        %2218 = vmatmul.f32.gmra.mxu0 %v1685
        %v2219 = vpop.f32.mrf.mxu0
        %v2220 = vadd.f32 %v2155, %v2219
        %2221 = vmatmul.f32.gmra.mxu0 %v1688
        %v2222 = vpop.f32.mrf.mxu0
        %v2223 = vadd.f32 %v2158, %v2222
        %2224 = vdwg.mxu0
        %s2225 = scalar_lea.vmem [#allocation4], 48
        %v2226 = vld [vmem:[%s2225] sm:$0xff]
        %v2227 = vld [vmem:[%s2225 + $0x8] sm:$0xff]
        %v2228 = vld [vmem:[%s2225 + $0x10] sm:$0xff]
        %v2229 = vld [vmem:[%s2225 + $0x18] sm:$0xff]
        %v2230 = vld [vmem:[%s2225 + $0x20] sm:$0xff]
        %v2231 = vld [vmem:[%s2225 + $0x28] sm:$0xff]
        %v2232 = vld [vmem:[%s2225 + $0x30] sm:$0xff]
        %v2233 = vld [vmem:[%s2225 + $0x38] sm:$0xff]
        %v2234 = vld [vmem:[%s2225 + $0x40] sm:$0xff]
        %v2235 = vld [vmem:[%s2225 + $0x48] sm:$0xff]
        %v2236 = vld [vmem:[%s2225 + $0x50] sm:$0xff]
        %v2237 = vld [vmem:[%s2225 + $0x58] sm:$0xff]
        %v2238 = vld [vmem:[%s2225 + $0x60] sm:$0xff]
        %v2239 = vld [vmem:[%s2225 + $0x68] sm:$0xff]
        %v2240 = vld [vmem:[%s2225 + $0x70] sm:$0xff]
        %v2241 = vld [vmem:[%s2225 + $0x78] sm:$0xff]
        %v2242 = vld [vmem:[%s2225 + $0x80] sm:$0xff]
        %v2243 = vld [vmem:[%s2225 + $0x88] sm:$0xff]
        %v2244 = vld [vmem:[%s2225 + $0x90] sm:$0xff]
        %v2245 = vld [vmem:[%s2225 + $0x98] sm:$0xff]
        %v2246 = vld [vmem:[%s2225 + $0xa0] sm:$0xff]
        %v2247 = vld [vmem:[%s2225 + $0xa8] sm:$0xff]
        %v2248 = vld [vmem:[%s2225 + $0xb0] sm:$0xff]
        %v2249 = vld [vmem:[%s2225 + $0xb8] sm:$0xff]
        %v2250 = vld [vmem:[%s2225 + $0xc0] sm:$0xff]
        %v2251 = vld [vmem:[%s2225 + $0xc8] sm:$0xff]
        %v2252 = vld [vmem:[%s2225 + $0xd0] sm:$0xff]
        %v2253 = vld [vmem:[%s2225 + $0xd8] sm:$0xff]
        %v2254 = vld [vmem:[%s2225 + $0xe0] sm:$0xff]
        %v2255 = vld [vmem:[%s2225 + $0xe8] sm:$0xff]
        %v2256 = vld [vmem:[%s2225 + $0xf0] sm:$0xff]
        %v2257 = vld [vmem:[%s2225 + $0xf8] sm:$0xff]
        %v2258 = vld [vmem:[%s2225 + $0x100] sm:$0xff]
        %v2259 = vld [vmem:[%s2225 + $0x108] sm:$0xff]
        %v2260 = vld [vmem:[%s2225 + $0x110] sm:$0xff]
        %v2261 = vld [vmem:[%s2225 + $0x118] sm:$0xff]
        %v2262 = vld [vmem:[%s2225 + $0x120] sm:$0xff]
        %v2263 = vld [vmem:[%s2225 + $0x128] sm:$0xff]
        %v2264 = vld [vmem:[%s2225 + $0x130] sm:$0xff]
        %v2265 = vld [vmem:[%s2225 + $0x138] sm:$0xff]
        %v2266 = vld [vmem:[%s2225 + $0x140] sm:$0xff]
        %v2267 = vld [vmem:[%s2225 + $0x148] sm:$0xff]
        %v2268 = vld [vmem:[%s2225 + $0x150] sm:$0xff]
        %v2269 = vld [vmem:[%s2225 + $0x158] sm:$0xff]
        %v2270 = vld [vmem:[%s2225 + $0x160] sm:$0xff]
        %v2271 = vld [vmem:[%s2225 + $0x168] sm:$0xff]
        %v2272 = vld [vmem:[%s2225 + $0x170] sm:$0xff]
        %v2273 = vld [vmem:[%s2225 + $0x178] sm:$0xff]
        %s2274 = scalar_lea.vmem [#allocation9], 768
        %v2275 = vld [vmem:[%s2274] sm:$0xff]
        %v2276 = vld [vmem:[%s2274 + $0x8] sm:$0xff]
        %v2277 = vld [vmem:[%s2274 + $0x10] sm:$0xff]
        %v2278 = vld [vmem:[%s2274 + $0x18] sm:$0xff]
        %v2279 = vld [vmem:[%s2274 + $0x20] sm:$0xff]
        %v2280 = vld [vmem:[%s2274 + $0x28] sm:$0xff]
        %v2281 = vld [vmem:[%s2274 + $0x30] sm:$0xff]
        %v2282 = vld [vmem:[%s2274 + $0x38] sm:$0xff]
        %v2283 = vld [vmem:[%s2274 + $0x40] sm:$0xff]
        %v2284 = vld [vmem:[%s2274 + $0x48] sm:$0xff]
        %v2285 = vld [vmem:[%s2274 + $0x50] sm:$0xff]
        %v2286 = vld [vmem:[%s2274 + $0x58] sm:$0xff]
        %v2287 = vld [vmem:[%s2274 + $0x60] sm:$0xff]
        %v2288 = vld [vmem:[%s2274 + $0x68] sm:$0xff]
        %v2289 = vld [vmem:[%s2274 + $0x70] sm:$0xff]
        %v2290 = vld [vmem:[%s2274 + $0x78] sm:$0xff]
        %v2291 = vld [vmem:[%s2274 + $0x80] sm:$0xff]
        %v2292 = vld [vmem:[%s2274 + $0x88] sm:$0xff]
        %v2293 = vld [vmem:[%s2274 + $0x90] sm:$0xff]
        %v2294 = vld [vmem:[%s2274 + $0x98] sm:$0xff]
        %v2295 = vld [vmem:[%s2274 + $0xa0] sm:$0xff]
        %v2296 = vld [vmem:[%s2274 + $0xa8] sm:$0xff]
        %v2297 = vld [vmem:[%s2274 + $0xb0] sm:$0xff]
        %v2298 = vld [vmem:[%s2274 + $0xb8] sm:$0xff]
        %v2299 = vld [vmem:[%s2274 + $0xc0] sm:$0xff]
        %v2300 = vld [vmem:[%s2274 + $0xc8] sm:$0xff]
        %v2301 = vld [vmem:[%s2274 + $0xd0] sm:$0xff]
        %v2302 = vld [vmem:[%s2274 + $0xd8] sm:$0xff]
        %v2303 = vld [vmem:[%s2274 + $0xe0] sm:$0xff]
        %v2304 = vld [vmem:[%s2274 + $0xe8] sm:$0xff]
        %v2305 = vld [vmem:[%s2274 + $0xf0] sm:$0xff]
        %v2306 = vld [vmem:[%s2274 + $0xf8] sm:$0xff]
        %v2307 = vld [vmem:[%s2274 + $0x100] sm:$0xff]
        %v2308 = vld [vmem:[%s2274 + $0x108] sm:$0xff]
        %v2309 = vld [vmem:[%s2274 + $0x110] sm:$0xff]
        %v2310 = vld [vmem:[%s2274 + $0x118] sm:$0xff]
        %v2311 = vld [vmem:[%s2274 + $0x120] sm:$0xff]
        %v2312 = vld [vmem:[%s2274 + $0x128] sm:$0xff]
        %v2313 = vld [vmem:[%s2274 + $0x130] sm:$0xff]
        %v2314 = vld [vmem:[%s2274 + $0x138] sm:$0xff]
        %v2315 = vld [vmem:[%s2274 + $0x140] sm:$0xff]
        %v2316 = vld [vmem:[%s2274 + $0x148] sm:$0xff]
        %v2317 = vld [vmem:[%s2274 + $0x150] sm:$0xff]
        %v2318 = vld [vmem:[%s2274 + $0x158] sm:$0xff]
        %v2319 = vld [vmem:[%s2274 + $0x160] sm:$0xff]
        %v2320 = vld [vmem:[%s2274 + $0x168] sm:$0xff]
        %v2321 = vld [vmem:[%s2274 + $0x170] sm:$0xff]
        %v2322 = vld [vmem:[%s2274 + $0x178] sm:$0xff]
        %2323 = vmatpush.msra.mxu0 %v2290
        %2324 = vmatpush.msra.mxu0 %v2289
        %2325 = vmatpush.msra.mxu0 %v2288
        %2326 = vmatpush.msra.mxu0 %v2287
        %2327 = vmatpush.msra.mxu0 %v2286
        %2328 = vmatpush.msra.mxu0 %v2285
        %2329 = vmatpush.msra.mxu0 %v2284
        %2330 = vmatpush.msra.mxu0 %v2283
        %2331 = vmatpush.msra.mxu0 %v2282
        %2332 = vmatpush.msra.mxu0 %v2281
        %2333 = vmatpush.msra.mxu0 %v2280
        %2334 = vmatpush.msra.mxu0 %v2279
        %2335 = vmatpush.msra.mxu0 %v2278
        %2336 = vmatpush.msra.mxu0 %v2277
        %2337 = vmatpush.msra.mxu0 %v2276
        %2338 = vmatpush.msra.mxu0 %v2275
        %2339 = vmatmul.f32.gmra.mxu0 %v2226
        %v2340 = vpop.f32.mrf.mxu0
        %v2341 = vadd.f32 0.0, %v2340
        %2342 = vmatmul.f32.gmra.mxu0 %v2229
        %v2343 = vpop.f32.mrf.mxu0
        %v2344 = vadd.f32 0.0, %v2343
        %2345 = vmatmul.f32.gmra.mxu0 %v2232
        %v2346 = vpop.f32.mrf.mxu0
        %v2347 = vadd.f32 0.0, %v2346
        %2348 = vmatmul.f32.gmra.mxu0 %v2235
        %v2349 = vpop.f32.mrf.mxu0
        %v2350 = vadd.f32 0.0, %v2349
        %2351 = vmatmul.f32.gmra.mxu0 %v2238
        %v2352 = vpop.f32.mrf.mxu0
        %v2353 = vadd.f32 0.0, %v2352
        %2354 = vmatmul.f32.gmra.mxu0 %v2241
        %v2355 = vpop.f32.mrf.mxu0
        %v2356 = vadd.f32 0.0, %v2355
        %2357 = vmatmul.f32.gmra.mxu0 %v2244
        %v2358 = vpop.f32.mrf.mxu0
        %v2359 = vadd.f32 0.0, %v2358
        %2360 = vmatmul.f32.gmra.mxu0 %v2247
        %v2361 = vpop.f32.mrf.mxu0
        %v2362 = vadd.f32 0.0, %v2361
        %2363 = vmatmul.f32.gmra.mxu0 %v2250
        %v2364 = vpop.f32.mrf.mxu0
        %v2365 = vadd.f32 0.0, %v2364
        %2366 = vmatmul.f32.gmra.mxu0 %v2253
        %v2367 = vpop.f32.mrf.mxu0
        %v2368 = vadd.f32 0.0, %v2367
        %2369 = vmatmul.f32.gmra.mxu0 %v2256
        %v2370 = vpop.f32.mrf.mxu0
        %v2371 = vadd.f32 0.0, %v2370
        %2372 = vmatmul.f32.gmra.mxu0 %v2259
        %v2373 = vpop.f32.mrf.mxu0
        %v2374 = vadd.f32 0.0, %v2373
        %2375 = vmatmul.f32.gmra.mxu0 %v2262
        %v2376 = vpop.f32.mrf.mxu0
        %v2377 = vadd.f32 0.0, %v2376
        %2378 = vmatmul.f32.gmra.mxu0 %v2265
        %v2379 = vpop.f32.mrf.mxu0
        %v2380 = vadd.f32 0.0, %v2379
        %2381 = vmatmul.f32.gmra.mxu0 %v2268
        %v2382 = vpop.f32.mrf.mxu0
        %v2383 = vadd.f32 0.0, %v2382
        %2384 = vmatmul.f32.gmra.mxu0 %v2271
        %v2385 = vpop.f32.mrf.mxu0
        %v2386 = vadd.f32 0.0, %v2385
        %2387 = vdwg.mxu0
        %2388 = vmatpush.msra.mxu0 %v2306
        %2389 = vmatpush.msra.mxu0 %v2305
        %2390 = vmatpush.msra.mxu0 %v2304
        %2391 = vmatpush.msra.mxu0 %v2303
        %2392 = vmatpush.msra.mxu0 %v2302
        %2393 = vmatpush.msra.mxu0 %v2301
        %2394 = vmatpush.msra.mxu0 %v2300
        %2395 = vmatpush.msra.mxu0 %v2299
        %2396 = vmatpush.msra.mxu0 %v2298
        %2397 = vmatpush.msra.mxu0 %v2297
        %2398 = vmatpush.msra.mxu0 %v2296
        %2399 = vmatpush.msra.mxu0 %v2295
        %2400 = vmatpush.msra.mxu0 %v2294
        %2401 = vmatpush.msra.mxu0 %v2293
        %2402 = vmatpush.msra.mxu0 %v2292
        %2403 = vmatpush.msra.mxu0 %v2291
        %2404 = vmatmul.f32.gmra.mxu0 %v2227
        %v2405 = vpop.f32.mrf.mxu0
        %v2406 = vadd.f32 %v2341, %v2405
        %2407 = vmatmul.f32.gmra.mxu0 %v2230
        %v2408 = vpop.f32.mrf.mxu0
        %v2409 = vadd.f32 %v2344, %v2408
        %2410 = vmatmul.f32.gmra.mxu0 %v2233
        %v2411 = vpop.f32.mrf.mxu0
        %v2412 = vadd.f32 %v2347, %v2411
        %2413 = vmatmul.f32.gmra.mxu0 %v2236
        %v2414 = vpop.f32.mrf.mxu0
        %v2415 = vadd.f32 %v2350, %v2414
        %2416 = vmatmul.f32.gmra.mxu0 %v2239
        %v2417 = vpop.f32.mrf.mxu0
        %v2418 = vadd.f32 %v2353, %v2417
        %2419 = vmatmul.f32.gmra.mxu0 %v2242
        %v2420 = vpop.f32.mrf.mxu0
        %v2421 = vadd.f32 %v2356, %v2420
        %2422 = vmatmul.f32.gmra.mxu0 %v2245
        %v2423 = vpop.f32.mrf.mxu0
        %v2424 = vadd.f32 %v2359, %v2423
        %2425 = vmatmul.f32.gmra.mxu0 %v2248
        %v2426 = vpop.f32.mrf.mxu0
        %v2427 = vadd.f32 %v2362, %v2426
        %2428 = vmatmul.f32.gmra.mxu0 %v2251
        %v2429 = vpop.f32.mrf.mxu0
        %v2430 = vadd.f32 %v2365, %v2429
        %2431 = vmatmul.f32.gmra.mxu0 %v2254
        %v2432 = vpop.f32.mrf.mxu0
        %v2433 = vadd.f32 %v2368, %v2432
        %2434 = vmatmul.f32.gmra.mxu0 %v2257
        %v2435 = vpop.f32.mrf.mxu0
        %v2436 = vadd.f32 %v2371, %v2435
        %2437 = vmatmul.f32.gmra.mxu0 %v2260
        %v2438 = vpop.f32.mrf.mxu0
        %v2439 = vadd.f32 %v2374, %v2438
        %2440 = vmatmul.f32.gmra.mxu0 %v2263
        %v2441 = vpop.f32.mrf.mxu0
        %v2442 = vadd.f32 %v2377, %v2441
        %2443 = vmatmul.f32.gmra.mxu0 %v2266
        %v2444 = vpop.f32.mrf.mxu0
        %v2445 = vadd.f32 %v2380, %v2444
        %2446 = vmatmul.f32.gmra.mxu0 %v2269
        %v2447 = vpop.f32.mrf.mxu0
        %v2448 = vadd.f32 %v2383, %v2447
        %2449 = vmatmul.f32.gmra.mxu0 %v2272
        %v2450 = vpop.f32.mrf.mxu0
        %v2451 = vadd.f32 %v2386, %v2450
        %2452 = vdwg.mxu0
        %2453 = vmatpush.msra.mxu0 %v2322
        %2454 = vmatpush.msra.mxu0 %v2321
        %2455 = vmatpush.msra.mxu0 %v2320
        %2456 = vmatpush.msra.mxu0 %v2319
        %2457 = vmatpush.msra.mxu0 %v2318
        %2458 = vmatpush.msra.mxu0 %v2317
        %2459 = vmatpush.msra.mxu0 %v2316
        %2460 = vmatpush.msra.mxu0 %v2315
        %2461 = vmatpush.msra.mxu0 %v2314
        %2462 = vmatpush.msra.mxu0 %v2313
        %2463 = vmatpush.msra.mxu0 %v2312
        %2464 = vmatpush.msra.mxu0 %v2311
        %2465 = vmatpush.msra.mxu0 %v2310
        %2466 = vmatpush.msra.mxu0 %v2309
        %2467 = vmatpush.msra.mxu0 %v2308
        %2468 = vmatpush.msra.mxu0 %v2307
        %2469 = vmatmul.f32.gmra.mxu0 %v2228
        %v2470 = vpop.f32.mrf.mxu0
        %v2471 = vadd.f32 %v2406, %v2470
        %2472 = vmatmul.f32.gmra.mxu0 %v2231
        %v2473 = vpop.f32.mrf.mxu0
        %v2474 = vadd.f32 %v2409, %v2473
        %2475 = vmatmul.f32.gmra.mxu0 %v2234
        %v2476 = vpop.f32.mrf.mxu0
        %v2477 = vadd.f32 %v2412, %v2476
        %2478 = vmatmul.f32.gmra.mxu0 %v2237
        %v2479 = vpop.f32.mrf.mxu0
        %v2480 = vadd.f32 %v2415, %v2479
        %2481 = vmatmul.f32.gmra.mxu0 %v2240
        %v2482 = vpop.f32.mrf.mxu0
        %v2483 = vadd.f32 %v2418, %v2482
        %2484 = vmatmul.f32.gmra.mxu0 %v2243
        %v2485 = vpop.f32.mrf.mxu0
        %v2486 = vadd.f32 %v2421, %v2485
        %2487 = vmatmul.f32.gmra.mxu0 %v2246
        %v2488 = vpop.f32.mrf.mxu0
        %v2489 = vadd.f32 %v2424, %v2488
        %2490 = vmatmul.f32.gmra.mxu0 %v2249
        %v2491 = vpop.f32.mrf.mxu0
        %v2492 = vadd.f32 %v2427, %v2491
        %2493 = vmatmul.f32.gmra.mxu0 %v2252
        %v2494 = vpop.f32.mrf.mxu0
        %v2495 = vadd.f32 %v2430, %v2494
        %2496 = vmatmul.f32.gmra.mxu0 %v2255
        %v2497 = vpop.f32.mrf.mxu0
        %v2498 = vadd.f32 %v2433, %v2497
        %2499 = vmatmul.f32.gmra.mxu0 %v2258
        %v2500 = vpop.f32.mrf.mxu0
        %v2501 = vadd.f32 %v2436, %v2500
        %2502 = vmatmul.f32.gmra.mxu0 %v2261
        %v2503 = vpop.f32.mrf.mxu0
        %v2504 = vadd.f32 %v2439, %v2503
        %2505 = vmatmul.f32.gmra.mxu0 %v2264
        %v2506 = vpop.f32.mrf.mxu0
        %v2507 = vadd.f32 %v2442, %v2506
        %2508 = vmatmul.f32.gmra.mxu0 %v2267
        %v2509 = vpop.f32.mrf.mxu0
        %v2510 = vadd.f32 %v2445, %v2509
        %2511 = vmatmul.f32.gmra.mxu0 %v2270
        %v2512 = vpop.f32.mrf.mxu0
        %v2513 = vadd.f32 %v2448, %v2512
        %2514 = vmatmul.f32.gmra.mxu0 %v2273
        %v2515 = vpop.f32.mrf.mxu0
        %v2516 = vadd.f32 %v2451, %v2515
        %2517 = vdwg.mxu0
        %v2518 = vadd.f32 %v2178, %v2471
        %v2519 = vadd.f32 %v2181, %v2474
        %v2520 = vadd.f32 %v2184, %v2477
        %v2521 = vadd.f32 %v2187, %v2480
        %v2522 = vadd.f32 %v2190, %v2483
        %v2523 = vadd.f32 %v2193, %v2486
        %v2524 = vadd.f32 %v2196, %v2489
        %v2525 = vadd.f32 %v2199, %v2492
        %v2526 = vadd.f32 %v2202, %v2495
        %v2527 = vadd.f32 %v2205, %v2498
        %v2528 = vadd.f32 %v2208, %v2501
        %v2529 = vadd.f32 %v2211, %v2504
        %v2530 = vadd.f32 %v2214, %v2507
        %v2531 = vadd.f32 %v2217, %v2510
        %v2532 = vadd.f32 %v2220, %v2513
        %v2533 = vadd.f32 %v2223, %v2516
        %s2534 = sadd.s32 %s255, 2
        %s2535 = smul.u32 %s2534, 8
        %s2536 = scalar_lea.vmem [#allocation2], %s2535
        %v2537 = vld [vmem:[%s2536] sm:$0xff]
        %v2538 = vld [vmem:[%s2536 + $0x8] sm:$0xff]
        %v2539 = vld [vmem:[%s2536 + $0x10] sm:$0xff]
        %v2540 = vld [vmem:[%s2536 + $0x18] sm:$0xff]
        %v2541 = vld [vmem:[%s2536 + $0x20] sm:$0xff]
        %v2542 = vld [vmem:[%s2536 + $0x28] sm:$0xff]
        %v2543 = vld [vmem:[%s2536 + $0x30] sm:$0xff]
        %v2544 = vld [vmem:[%s2536 + $0x38] sm:$0xff]
        %v2545 = vld [vmem:[%s2536 + $0x40] sm:$0xff]
        %v2546 = vld [vmem:[%s2536 + $0x48] sm:$0xff]
        %v2547 = vld [vmem:[%s2536 + $0x50] sm:$0xff]
        %v2548 = vld [vmem:[%s2536 + $0x58] sm:$0xff]
        %v2549 = vld [vmem:[%s2536 + $0x60] sm:$0xff]
        %v2550 = vld [vmem:[%s2536 + $0x68] sm:$0xff]
        %v2551 = vld [vmem:[%s2536 + $0x70] sm:$0xff]
        %v2552 = vld [vmem:[%s2536 + $0x78] sm:$0xff]
        %v2553 = vld [vmem:[%s4] sm:$0x1]
        %v2555 = vperm.slane %v2553, 0
        %v2557 = vadd.f32 %v2518, %v2555
        %v2558 = vadd.f32 %v2519, %v2555
        %v2559 = vadd.f32 %v2520, %v2555
        %v2560 = vadd.f32 %v2521, %v2555
        %v2561 = vadd.f32 %v2522, %v2555
        %v2562 = vadd.f32 %v2523, %v2555
        %v2563 = vadd.f32 %v2524, %v2555
        %v2564 = vadd.f32 %v2525, %v2555
        %v2565 = vadd.f32 %v2526, %v2555
        %v2566 = vadd.f32 %v2527, %v2555
        %v2567 = vadd.f32 %v2528, %v2555
        %v2568 = vadd.f32 %v2529, %v2555
        %v2569 = vadd.f32 %v2530, %v2555
        %v2570 = vadd.f32 %v2531, %v2555
        %v2571 = vadd.f32 %v2532, %v2555
        %v2572 = vadd.f32 %v2533, %v2555
        %v2573 = vadd.f32 %v2557, %v2537
        %v2574 = vadd.f32 %v2558, %v2538
        %v2575 = vadd.f32 %v2559, %v2539
        %v2576 = vadd.f32 %v2560, %v2540
        %v2577 = vadd.f32 %v2561, %v2541
        %v2578 = vadd.f32 %v2562, %v2542
        %v2579 = vadd.f32 %v2563, %v2543
        %v2580 = vadd.f32 %v2564, %v2544
        %v2581 = vadd.f32 %v2565, %v2545
        %v2582 = vadd.f32 %v2566, %v2546
        %v2583 = vadd.f32 %v2567, %v2547
        %v2584 = vadd.f32 %v2568, %v2548
        %v2585 = vadd.f32 %v2569, %v2549
        %v2586 = vadd.f32 %v2570, %v2550
        %v2587 = vadd.f32 %v2571, %v2551
        %v2588 = vadd.f32 %v2572, %v2552
        %v2589 = vmax.f32 %v2573, 0.0
        %v2590 = vmax.f32 %v2574, 0.0
        %v2591 = vmax.f32 %v2575, 0.0
        %v2592 = vmax.f32 %v2576, 0.0
        %v2593 = vmax.f32 %v2577, 0.0
        %v2594 = vmax.f32 %v2578, 0.0
        %v2595 = vmax.f32 %v2579, 0.0
        %v2596 = vmax.f32 %v2580, 0.0
        %v2597 = vmax.f32 %v2581, 0.0
        %v2598 = vmax.f32 %v2582, 0.0
        %v2599 = vmax.f32 %v2583, 0.0
        %v2600 = vmax.f32 %v2584, 0.0
        %v2601 = vmax.f32 %v2585, 0.0
        %v2602 = vmax.f32 %v2586, 0.0
        %v2603 = vmax.f32 %v2587, 0.0
        %v2604 = vmax.f32 %v2588, 0.0
        %2605 = vst [vmem:[%s224] sm:$0xff] %v2589
        %2606 = vst [vmem:[%s224 + $0x8] sm:$0xff] %v2590
        %2607 = vst [vmem:[%s224 + $0x10] sm:$0xff] %v2591
        %2608 = vst [vmem:[%s224 + $0x18] sm:$0xff] %v2592
        %2609 = vst [vmem:[%s224 + $0x20] sm:$0xff] %v2593
        %2610 = vst [vmem:[%s224 + $0x28] sm:$0xff] %v2594
        %2611 = vst [vmem:[%s224 + $0x30] sm:$0xff] %v2595
        %2612 = vst [vmem:[%s224 + $0x38] sm:$0xff] %v2596
        %2613 = vst [vmem:[%s224 + $0x40] sm:$0xff] %v2597
        %2614 = vst [vmem:[%s224 + $0x48] sm:$0xff] %v2598
        %2615 = vst [vmem:[%s224 + $0x50] sm:$0xff] %v2599
        %2616 = vst [vmem:[%s224 + $0x58] sm:$0xff] %v2600
        %2617 = vst [vmem:[%s224 + $0x60] sm:$0xff] %v2601
        %2618 = vst [vmem:[%s224 + $0x68] sm:$0xff] %v2602
        %2619 = vst [vmem:[%s224 + $0x70] sm:$0xff] %v2603
        %2620 = vst [vmem:[%s224 + $0x78] sm:$0xff] %v2604
        %s2621 = sand.u32 %s127, 1
        %s2622 = scalar_lea.sflag [#allocation8], %s2621
        %s2623 = sand.u32 %s127, 1
        %s2624 = smul.addr %s2623, 128
        %s2625 = scalar_lea.vmem [#allocation11], %s2624
        // Predicated region
        $region57: #{tpu_custom_call.1} parent=35 // pred_check
          %p2626 = pneg %p137
        $region58: #{tpu_custom_call.1} parent=35 // pred_check_branch
          %2628 = sbr.rel (%p2626) target = $region60
        $region59: #{tpu_custom_call.1} parent=35 // pred_region
          %s2629 = smul.u32 16, %s26
          %2631 = vsyncadd %s2622, 0
          %s2632 = smul.addr %s25, 16
          %s2633 = sadd.s32 %s2629, %s2632
          %s2634 = smul.addr %s2633, 8
          %s2635 = scalar_lea.hbm %s5, %s2634
          %s2636 = sshll.u32 %s2625, 4
          %s2637 = int_to_ptr.vmem [resolvable:$true] %s2636
          %s2638 = sshll.u32 %s2635, 4
          %s2639 = int_to_ptr.hbm [resolvable:$true] %s2638
          %2644 = dma.vmem_to_hbm [thread:$0]  %s2637, 2048, %s2639, %s2622, 128, 128, 8
        $region60: #{tpu_custom_call.1} parent=35 // pred_fallthru
          _
      $region36: #{tpu_custom_call.1} parent=5 // pred_fallthru
        _
      %p2645 = scmp.le.s32.totalorder 2, %s16
      // Predicated region
      $region61: #{tpu_custom_call.1} parent=5 // pred_check
        %p2646 = pneg %p2645
      $region62: #{tpu_custom_call.1} parent=5 // pred_check_branch
        %2648 = sbr.rel (%p2646) target = $region64
      $region63: #{tpu_custom_call.1} parent=5 // pred_region
        %s2649 = ssub.s32 %s16, 2
        // Predicated region
        $region65: #{tpu_custom_call.1} parent=63 // pred_check
          %p2650 = pneg %p143
        $region66: #{tpu_custom_call.1} parent=63 // pred_check_branch
          %2652 = sbr.rel (%p2650) target = $region68
        $region67: #{tpu_custom_call.1} parent=63 // pred_region
          %s2653 = sand.u32 %s128, 1
          %s2654 = scalar_lea.sflag [#allocation8], %s2653
          %s2655 = sand.u32 %s128, 1
          %s2656 = smul.addr %s2655, 128
          %s2657 = scalar_lea.vmem [#allocation11], %s2656
          %2659 = dma.done %s2654, 2048
        $region68: #{tpu_custom_call.1} parent=63 // pred_fallthru
          _
      $region64: #{tpu_custom_call.1} parent=5 // pred_fallthru
        _
    $region6: #{tpu_custom_call.1} parent=1 // loop_footer
      %s20 = sadd.s32 1, %s16
    $region7: #{tpu_custom_call.1} parent=1 // loop_footer_branch
      %15 = sbr.rel target = $region3
    $region8: #{tpu_custom_call.1} parent=1 // loop_exit
      _
    %2660 = vsyncpa [#allocation7], 1
    %s2661 = scalar_lea.sflag [#allocation7], 1
    %2662 = vsyncpa %s2661, 1
    %2663 = vsyncpa [#allocation10], 1
    %2664 = vsyncpa [#allocation8], 1
    %s2665 = scalar_lea.sflag [#allocation8], 1
    %2666 = vsyncpa %s2665, 1
  %2667 = vsyncmov [#allocation5]
  %s2668 = vpop.sfrf %2667
  %p2669 = scmp.eq.s32.totalorder %s2668, 0
  %p2670 = pneg %p2669
  %2672 = shalt.err (%p2670)

</llo_original>
